<compile_context>
chip_gen: v6e
topology: v6e:2x2x1
jax: 0.10.0
libtpu: 0.0.40
codegen_flags: <defaults>
</compile_context>

<pallas_src>
import functools

import jax
import jax.numpy as jnp
from jax import lax
from jax.experimental import pallas as pl
from jax.experimental.pallas import tpu as pltpu


def _disc_fused_kernel(x_ref, w_ref, b_ref, wl_ref, bl_ref, o_ref, lhs_ref, *, ksize):
    # x_ref  : (TB, S, D)        bf16 activations (TB whole sequences)
    # w_ref  : (KD_pad, C)       im2col conv weights: row k*D+d, col c = w_conv[c, 0, k, d]; zero-padded rows (bf16)
    # b_ref  : (1, C)            conv bias (f32)
    # wl_ref : (1, C)            linear weight row (f32)
    # bl_ref : (1, 1)            linear bias (f32)
    # o_ref  : (TB*S//C, 1)      final logits for this tile (f32)
    # lhs_ref: (TB, S, KD_pad)   bf16 im2col scratch (VMEM)
    tb, s_len, d_in = x_ref.shape
    kd_pad, c = w_ref.shape
    pad = (ksize - 1) // 2
    rows = tb * s_len
    kd = ksize * d_in

    # Zero the contraction-padding lanes. Written every step (cheap: rows*32 bf16 lanes) so the
    # kernel stays correct when the parallel grid is split across TensorCores (per-core scratch
    # never sees program_id 0).
    if kd_pad > kd:
        lhs_ref[:, :, kd:] = jnp.zeros((tb, s_len, kd_pad - kd), lhs_ref.dtype)

    # Build the im2col LHS: tap k holds x shifted by (k - pad) along the sequence axis, with the
    # conv's zero padding realized by storing zeros at the sequence edges. Shifts/masks operate on
    # (rows, D) bf16 input data only.
    for k in range(ksize):
        d = k - pad
        c0, c1 = k * d_in, (k + 1) * d_in
        if d == 0:
            lhs_ref[:, :, c0:c1] = x_ref[...]
        elif d > 0:
            lhs_ref[:, 0:s_len - d, c0:c1] = x_ref[:, d:, :]
            lhs_ref[:, s_len - d:, c0:c1] = jnp.zeros((tb, d, d_in), lhs_ref.dtype)
        else:  # d < 0
            lhs_ref[:, 0:-d, c0:c1] = jnp.zeros((tb, -d, d_in), lhs_ref.dtype)
            lhs_ref[:, -d:, c0:c1] = x_ref[:, 0:s_len + d, :]

    # One MXU matmul with a lane-dense 128-deep contraction, f32 accumulation.
    lhs = lhs_ref[...].reshape(rows, kd_pad)
    acc = jnp.dot(lhs, w_ref[...], preferred_element_type=jnp.float32)       # (rows, C) f32

    # Conv bias + ReLU, then max over the C channels (the torch.max(dim=1)).
    acc = jnp.maximum(acc + b_ref[...], 0.0)

    # Lane-dense regroup: (rows, C) -> (rows//128, 128, C) is a leading-dim-only reshape (free);
    # the lane reduction leaves the maxima as (rows//128, 128) == the PyTorch `.view(-1, 128)`
    # rows of this tile. (Kept per review: XLU has slack after the matmul fix.)
    m = jnp.max(acc.reshape(rows // c, c, c), axis=-1)                        # (R, 128)

    # Fused Linear(128 -> 1):  y = m @ w_lin.T + b_lin  (done as a lane reduction).
    o_ref[...] = jnp.sum(m * wl_ref[...], axis=-1, keepdims=True) + bl_ref[...]


def _pick_tile_batch(B, S, C, max_rows=16384):
    """How many whole sequences each grid step processes.

    Targets ~8K-16K rows/step to amortize the ~600-cycle per-step overhead; capped at 16K rows so
    the per-step working set (~1.5 KiB/row incl. im2col scratch + f32 matmul output) stays well
    under v7x's 64 MiB VMEM.
    """
    total_rows = B * S
    best = None
    for tb in range(1, B + 1):
        if B % tb:
            continue
        rows, grid = tb * S, B // tb
        if rows % C:
            continue                              # tile must hold whole .view(-1, C) output rows
        if (rows // C) % 8 and grid != 1:
            continue                              # keep the (rows//C, 1) output block sublane-legal
        score = (
            rows <= max_rows,                     # v7x-safe VMEM budget
            rows >= 8192 or rows == total_rows,   # amortize per-step grid overhead
            grid % 2 == 0,                        # even grid keeps both v7x TensorCores busy
            min(rows, max_rows),                  # bigger tiles amortize better
            -grid,
        )
        if best is None or score > best[0]:
            best = (score, tb)
    if best is None:
        raise ValueError("need tb*S % 128 == 0 for some divisor tb of B "
                         "(the PyTorch .view(-1, 128) already requires B*S % 128 == 0)")
    return best[1]


def discriminator_forward(x, w_conv, b_conv, w_lin, b_lin, kernel_size=3, tile_batch=None):
    """Forward pass of the PyTorch `Discriminator` as a single fused Pallas TPU kernel."""
    B, S, D = x.shape
    K = kernel_size
    C = w_conv.shape[0]                       # out_channels = 128
    N = B * S
    assert K % 2 == 1
    assert N % C == 0, "required by the PyTorch .view(-1, out_channels)"

    TB = _pick_tile_batch(B, S, C) if tile_batch is None else tile_batch
    TN = TB * S
    assert B % TB == 0 and TN % C == 0
    assert (TN // C) % 8 == 0 or B == TB
    # TODO(synk): very long sequences (single-sequence tile exceeding VMEM, S >~ 100K rows) would
    # need seq-axis tiling with a K-1 halo; this kernel tiles whole sequences per grid step.

    KD = K * D
    KD_pad = max(128, ((KD + 127) // 128) * 128)   # pad contraction to a lane-dense 128 multiple

    # Tiny host/XLA-side parameter relayouts: im2col weight row k*D+d, col c = w_conv[c, 0, k, d].
    w_rows = jnp.transpose(w_conv.reshape(C, K, D), (1, 2, 0)).reshape(KD, C)
    if KD_pad > KD:
        w_rows = jnp.concatenate([w_rows, jnp.zeros((KD_pad - KD, C), w_rows.dtype)], axis=0)
    w_im2col = w_rows.astype(jnp.bfloat16)                                   # (KD_pad, C)
    b_row = b_conv.reshape(1, C).astype(jnp.float32)
    wl_row = w_lin.reshape(1, C).astype(jnp.float32)
    bl = b_lin.reshape(1, 1).astype(jnp.float32)
    x_bf = x.astype(jnp.bfloat16)             # bf16 activations: native MXU rate, half the HBM bytes

    kernel = functools.partial(_disc_fused_kernel, ksize=K)

    return pl.pallas_call(
        kernel,
        out_shape=jax.ShapeDtypeStruct((N // C, 1), jnp.float32),
        grid=(B // TB,),
        in_specs=[
            pl.BlockSpec((TB, S, D), lambda i: (i, 0, 0)),       # streamed activations
            pl.BlockSpec((KD_pad, C), lambda i: (0, 0)),         # im2col conv weights (VMEM-resident)
            pl.BlockSpec((1, C), lambda i: (0, 0)),              # conv bias
            pl.BlockSpec((1, C), lambda i: (0, 0)),              # linear weight row
            pl.BlockSpec((1, 1), lambda i: (0, 0)),              # linear bias
        ],
        out_specs=pl.BlockSpec((TN // C, 1), lambda i: (i, 0)),
        scratch_shapes=[pltpu.VMEM((TB, S, KD_pad), jnp.bfloat16)],   # im2col LHS
        compiler_params=pltpu.CompilerParams(
            dimension_semantics=("parallel",),
            vmem_limit_bytes=48 * 1024 * 1024,   # >> v5e's 16 MiB default, < v7x's 64 MiB physical
        ),
    )(x_bf, w_im2col, b_row, wl_row, bl)


def reference_forward(x, w_conv, b_conv, w_lin, b_lin, kernel_size=3):
    """Plain-JAX f32 (HIGHEST precision) reference mirroring the PyTorch forward."""
    B, S, D = x.shape
    C = w_conv.shape[0]
    pad = (kernel_size - 1) // 2
    y = lax.conv_general_dilated(
        x.reshape(B, 1, S, D).astype(jnp.float32),
        w_conv.astype(jnp.float32),
        window_strides=(1, 1),
        padding=((pad, pad), (0, 0)),
        dimension_numbers=("NCHW", "OIHW", "NCHW"),
        precision=lax.Precision.HIGHEST,
    )
    y = jnp.maximum(y + b_conv.reshape(1, -1, 1, 1), 0.0)     # bias + ReLU
    m = jnp.max(y, axis=1).reshape(-1, C)                     # max over channels, .view(-1, 128)
    return jnp.dot(m, w_lin.T, precision=lax.Precision.HIGHEST) + b_lin


if __name__ == "__main__":
    # Module-consistent small shapes: hidden_dim=32, kernel_size=3; B*S must be a
    # multiple of 128 for the PyTorch .view(-1, 128).
    B, S, D, K, C = 4, 512, 32, 3, 128

    key = jax.random.PRNGKey(0)
    k1, k2, k3, k4, k5 = jax.random.split(key, 5)
    w_conv = jax.random.normal(k1, (C, 1, K, D), jnp.float32) * 0.05
    b_conv = jax.random.normal(k2, (C,), jnp.float32) * 0.05
    w_lin = jax.random.normal(k3, (1, C), jnp.float32) * 0.05
    b_lin = jax.random.normal(k4, (1,), jnp.float32) * 0.05
    # Activations kept in bf16 (the kernel's MXU input dtype / half the HBM traffic).
    x = jax.random.normal(k5, (B, S, D), jnp.float32).astype(jnp.bfloat16)

    out = jax.block_until_ready(
        discriminator_forward(x, w_conv, b_conv, w_lin, b_lin, kernel_size=K))

    # f32 reference on the same (bf16-rounded) inputs the kernel consumed.
    ref = jax.block_until_ready(
        reference_forward(x.astype(jnp.float32),
                          w_conv.astype(jnp.bfloat16).astype(jnp.float32),
                          b_conv, w_lin, b_lin, kernel_size=K))

    assert out.shape == (B * S // C, 1), out.shape
    assert jnp.allclose(out, ref, rtol=1e-2, atol=1e-2), (out, ref)
    print("KERNEL_OK")
</pallas_src>

<mosaic_0001>
module attributes {stable_mosaic.version = 11 : i64} {
  func.func @_disc_fused_kernel(%arg0: i32, %arg1: memref<4x512x32xbf16, #tpu.memory_space<vmem>>, %arg2: memref<128x128xbf16, #tpu.memory_space<vmem>>, %arg3: memref<1x128xf32, #tpu.memory_space<vmem>>, %arg4: memref<1x128xf32, #tpu.memory_space<vmem>>, %arg5: memref<1x1xf32, #tpu.memory_space<vmem>>, %arg6: memref<16x1xf32, #tpu.memory_space<vmem>>, %arg7: memref<4x512x128xbf16, #tpu.memory_space<vmem>>) attributes {dimension_semantics = [#tpu.dimension_semantics<parallel>], iteration_bounds = array<i64: 1>, scalar_prefetch = 0 : i64, scratch_operands = 1 : i64, tpu.core_type = #tpu.core_type<tc>, window_params = [{transform_indices = @transform_0, window_bounds = array<i64: 4, 512, 32>}, {pipeline_mode = #tpu.pipeline_mode<synchronous>, transform_indices = @transform_1, window_bounds = array<i64: 128, 128>}, {pipeline_mode = #tpu.pipeline_mode<synchronous>, transform_indices = @transform_2, window_bounds = array<i64: 1, 128>}, {pipeline_mode = #tpu.pipeline_mode<synchronous>, transform_indices = @transform_3, window_bounds = array<i64: 1, 128>}, {pipeline_mode = #tpu.pipeline_mode<synchronous>, transform_indices = @transform_4, window_bounds = array<i64: 1, 1>}, {transform_indices = @transform_5, window_bounds = array<i64: 16, 1>}]} {
    %cst = arith.constant 0.000000e+00 : bf16
    %0 = vector.broadcast %cst : bf16 to vector<4x512x32xbf16>
    %c0 = arith.constant 0 : index
    %c0_0 = arith.constant 0 : index
    %c96 = arith.constant 96 : index
    %1 = vector.load %arg7[%c0, %c0_0, %c96] : memref<4x512x128xbf16, #tpu.memory_space<vmem>>, vector<4x512x32xbf16>
    tpu.vector_store %arg7[%c0, %c0_0, %c96], %0 {strides = array<i32>} : memref<4x512x128xbf16, #tpu.memory_space<vmem>>, vector<4x512x32xbf16>,
    %cst_1 = arith.constant 0.000000e+00 : bf16
    %2 = vector.broadcast %cst_1 : bf16 to vector<4x1x32xbf16>
    %c0_2 = arith.constant 0 : index
    %c0_3 = arith.constant 0 : index
    %c0_4 = arith.constant 0 : index
    %3 = vector.load %arg7[%c0_2, %c0_3, %c0_4] : memref<4x512x128xbf16, #tpu.memory_space<vmem>>, vector<4x1x32xbf16>
    tpu.vector_store %arg7[%c0_2, %c0_3, %c0_4], %2 {strides = array<i32>} : memref<4x512x128xbf16, #tpu.memory_space<vmem>>, vector<4x1x32xbf16>,
    %c0_5 = arith.constant 0 : index
    %c0_6 = arith.constant 0 : index
    %c0_7 = arith.constant 0 : index
    %4 = vector.load %arg1[%c0_5, %c0_6, %c0_7] : memref<4x512x32xbf16, #tpu.memory_space<vmem>>, vector<4x511x32xbf16>
    %c0_8 = arith.constant 0 : index
    %c1 = arith.constant 1 : index
    %c0_9 = arith.constant 0 : index
    %5 = vector.load %arg7[%c0_8, %c1, %c0_9] : memref<4x512x128xbf16, #tpu.memory_space<vmem>>, vector<4x511x32xbf16>
    tpu.vector_store %arg7[%c0_8, %c1, %c0_9], %4 {strides = array<i32>} : memref<4x512x128xbf16, #tpu.memory_space<vmem>>, vector<4x511x32xbf16>,
    %c0_10 = arith.constant 0 : index
    %c0_11 = arith.constant 0 : index
    %c0_12 = arith.constant 0 : index
    %6 = vector.load %arg1[%c0_10, %c0_11, %c0_12] : memref<4x512x32xbf16, #tpu.memory_space<vmem>>, vector<4x512x32xbf16>
    %c0_13 = arith.constant 0 : index
    %c0_14 = arith.constant 0 : index
    %c32 = arith.constant 32 : index
    %7 = vector.load %arg7[%c0_13, %c0_14, %c32] : memref<4x512x128xbf16, #tpu.memory_space<vmem>>, vector<4x512x32xbf16>
    tpu.vector_store %arg7[%c0_13, %c0_14, %c32], %6 {strides = array<i32>} : memref<4x512x128xbf16, #tpu.memory_space<vmem>>, vector<4x512x32xbf16>,
    %c0_15 = arith.constant 0 : index
    %c1_16 = arith.constant 1 : index
    %c0_17 = arith.constant 0 : index
    %8 = vector.load %arg1[%c0_15, %c1_16, %c0_17] : memref<4x512x32xbf16, #tpu.memory_space<vmem>>, vector<4x511x32xbf16>
    %c0_18 = arith.constant 0 : index
    %c0_19 = arith.constant 0 : index
    %c64 = arith.constant 64 : index
    %9 = vector.load %arg7[%c0_18, %c0_19, %c64] : memref<4x512x128xbf16, #tpu.memory_space<vmem>>, vector<4x511x32xbf16>
    tpu.vector_store %arg7[%c0_18, %c0_19, %c64], %8 {strides = array<i32>} : memref<4x512x128xbf16, #tpu.memory_space<vmem>>, vector<4x511x32xbf16>,
    %cst_20 = arith.constant 0.000000e+00 : bf16
    %10 = vector.broadcast %cst_20 : bf16 to vector<4x1x32xbf16>
    %c0_21 = arith.constant 0 : index
    %c511 = arith.constant 511 : index
    %c64_22 = arith.constant 64 : index
    %11 = vector.load %arg7[%c0_21, %c511, %c64_22] : memref<4x512x128xbf16, #tpu.memory_space<vmem>>, vector<4x1x32xbf16>
    tpu.vector_store %arg7[%c0_21, %c511, %c64_22], %10 {strides = array<i32>} : memref<4x512x128xbf16, #tpu.memory_space<vmem>>, vector<4x1x32xbf16>,
    %c0_23 = arith.constant 0 : index
    %c0_24 = arith.constant 0 : index
    %c0_25 = arith.constant 0 : index
    %12 = vector.load %arg7[%c0_23, %c0_24, %c0_25] : memref<4x512x128xbf16, #tpu.memory_space<vmem>>, vector<4x512x128xbf16>
    %13 = vector.shape_cast %12 : vector<4x512x128xbf16> to vector<2048x128xbf16>
    %c0_26 = arith.constant 0 : index
    %c0_27 = arith.constant 0 : index
    %14 = vector.load %arg2[%c0_26, %c0_27] : memref<128x128xbf16, #tpu.memory_space<vmem>>, vector<128x128xbf16>
    %cst_28 = arith.constant dense<0.000000e+00> : vector<2048x128xf32>
    %15 = tpu.matmul %13, %14, %cst_28 {dimension_numbers = #tpu.dot_dimension_numbers<[1], [0], [0], [1], [0, 0, 1, 1], [], []>} : vector<2048x128xbf16>, vector<128x128xbf16>, vector<2048x128xf32> -> vector<2048x128xf32>
    %c0_29 = arith.constant 0 : index
    %c0_30 = arith.constant 0 : index
    %16 = vector.load %arg3[%c0_29, %c0_30] : memref<1x128xf32, #tpu.memory_space<vmem>>, vector<1x128xf32>
    %17 = vector.broadcast %16 : vector<1x128xf32> to vector<2048x128xf32>
    %18 = arith.addf %15, %17 : vector<2048x128xf32>
    %cst_31 = arith.constant 0.000000e+00 : f32
    %19 = vector.broadcast %cst_31 : f32 to vector<2048x128xf32>
    %20 = arith.maximumf %18, %19 : vector<2048x128xf32>
    %21 = vector.shape_cast %20 : vector<2048x128xf32> to vector<16x128x128xf32>
    %cst_32 = arith.constant dense<0xFF800000> : vector<16x128xf32>
    %22 = vector.multi_reduction <maximumf>, %21, %cst_32 [2] : vector<16x128x128xf32> to vector<16x128xf32>
    %c0_33 = arith.constant 0 : index
    %c0_34 = arith.constant 0 : index
    %23 = vector.load %arg4[%c0_33, %c0_34] : memref<1x128xf32, #tpu.memory_space<vmem>>, vector<1x128xf32>
    %24 = vector.broadcast %23 : vector<1x128xf32> to vector<16x128xf32>
    %25 = arith.mulf %22, %24 : vector<16x128xf32>
    %cst_35 = arith.constant dense<0.000000e+00> : vector<16xf32>
    %26 = vector.multi_reduction <add>, %25, %cst_35 [1] : vector<16x128xf32> to vector<16xf32>
    %27 = vector.shape_cast %26 : vector<16xf32> to vector<16x1xf32>
    %c0_36 = arith.constant 0 : index
    %c0_37 = arith.constant 0 : index
    %28 = vector.load %arg5[%c0_36, %c0_37] : memref<1x1xf32, #tpu.memory_space<vmem>>, vector<1x1xf32>
    %29 = vector.broadcast %28 : vector<1x1xf32> to vector<16x1xf32>
    %30 = arith.addf %27, %29 : vector<16x1xf32>
    %c0_38 = arith.constant 0 : index
    %c0_39 = arith.constant 0 : index
    %31 = vector.load %arg6[%c0_38, %c0_39] : memref<16x1xf32, #tpu.memory_space<vmem>>, vector<16x1xf32>
    tpu.vector_store %arg6[%c0_38, %c0_39], %30 {strides = array<i32>} : memref<16x1xf32, #tpu.memory_space<vmem>>, vector<16x1xf32>,
    return
  }
  func.func @transform_0(%arg0: i32) -> (i32, i32, i32) {
    %c0_i32 = arith.constant 0 : i32
    %c0_i32_0 = arith.constant 0 : i32
    %c0_i32_1 = arith.constant 0 : i32
    return %arg0, %c0_i32, %c0_i32_0 : i32, i32, i32
  }
  func.func @transform_1(%arg0: i32) -> (i32, i32) {
    %c0_i32 = arith.constant 0 : i32
    %c0_i32_0 = arith.constant 0 : i32
    %c0_i32_1 = arith.constant 0 : i32
    return %c0_i32, %c0_i32_0 : i32, i32
  }
  func.func @transform_2(%arg0: i32) -> (i32, i32) {
    %c0_i32 = arith.constant 0 : i32
    %c0_i32_0 = arith.constant 0 : i32
    %c0_i32_1 = arith.constant 0 : i32
    return %c0_i32, %c0_i32_0 : i32, i32
  }
  func.func @transform_3(%arg0: i32) -> (i32, i32) {
    %c0_i32 = arith.constant 0 : i32
    %c0_i32_0 = arith.constant 0 : i32
    %c0_i32_1 = arith.constant 0 : i32
    return %c0_i32, %c0_i32_0 : i32, i32
  }
  func.func @transform_4(%arg0: i32) -> (i32, i32) {
    %c0_i32 = arith.constant 0 : i32
    %c0_i32_0 = arith.constant 0 : i32
    %c0_i32_1 = arith.constant 0 : i32
    return %c0_i32, %c0_i32_0 : i32, i32
  }
  func.func @transform_5(%arg0: i32) -> (i32, i32) {
    %c0_i32 = arith.constant 0 : i32
    %c0_i32_0 = arith.constant 0 : i32
    return %arg0, %c0_i32 : i32, i32
  }
}

</mosaic_0001>

<llo_original>
// kernel: tpu_custom_call.1
$region0: #{tpu_custom_call.1}
  #allocation0 [shape = 'u32[]', space=smem, size = 0x4, offset = 0x4, fixed_abs, tag = 'smem constant byte address 0x4 - core index']
  #allocation1 [shape = 'u32[144,128]{1,0:T(1,128)}', space=vmem, size = 0x12000, scoped, tag = 'internal scratch']
  #allocation2 [shape = 'bf16[4,512,128]{2,1,0:T(8,128)(2,1)}', space=vmem, size = 0x80000, scoped, tag = 'scratch operand']
  #allocation3 [shape = 'f32[1,1]{1,0:T(1,128)S(1)}', space=vmem, size = 0x200, scoped, tag = 'scoped memory for tpu_custom_call.1']
  %s0 = inlined_call_operand.vmem [shape: bf16[4,512,32], index: 0, kind: input, shape index: {}]
  %s1 = inlined_call_operand.vmem [shape: bf16[128,128], index: 1, kind: input, shape index: {}]
  %s2 = inlined_call_operand.vmem [shape: f32[1,128], index: 2, kind: input, shape index: {}]
  %s3 = inlined_call_operand.vmem [shape: f32[1,128], index: 3, kind: input, shape index: {}]
  %s4 = inlined_call_operand.<no memory space> [shape: f32[1,1], index: 4, kind: input, shape index: {}]
  %s5 = inlined_call_operand.vmem [shape: f32[16,1], index: 5, kind: output, shape index: {}]
  %s6 = sld [smem:[#allocation0]]
  $region30: #{tpu_custom_call.1} parent=0
    _
  %s8 = ssub.s32 1, %s6
  %s9 = scalar_select 0, %s8, %s6
  %v10 = vstv %s4
  %11 = vst [vmem:[#allocation3] sm:$0x1] %v10
  // Predicated region
  $region2: #{tpu_custom_call.1} parent=0 // pred_check
    _
  $region3: #{tpu_custom_call.1} parent=0 // pred_check_branch
    %13 = sbr.rel (0) target = $region5
  $region4: #{tpu_custom_call.1} parent=0 // pred_region
    _
  $region5: #{tpu_custom_call.1} parent=0 // pred_fallthru
    _
  // Predicated region
  $region6: #{tpu_custom_call.1} parent=0 // pred_check
    _
  $region7: #{tpu_custom_call.1} parent=0 // pred_check_branch
    %15 = sbr.rel (0) target = $region9
  $region8: #{tpu_custom_call.1} parent=0 // pred_region
    _
  $region9: #{tpu_custom_call.1} parent=0 // pred_fallthru
    _
  // Predicated region
  $region10: #{tpu_custom_call.1} parent=0 // pred_check
    _
  $region11: #{tpu_custom_call.1} parent=0 // pred_check_branch
    %17 = sbr.rel (0) target = $region13
  $region12: #{tpu_custom_call.1} parent=0 // pred_region
    _
  $region13: #{tpu_custom_call.1} parent=0 // pred_fallthru
    _
  // Predicated region
  $region14: #{tpu_custom_call.1} parent=0 // pred_check
    _
  $region15: #{tpu_custom_call.1} parent=0 // pred_check_branch
    %19 = sbr.rel (0) target = $region17
  $region16: #{tpu_custom_call.1} parent=0 // pred_region
    _
  $region17: #{tpu_custom_call.1} parent=0 // pred_fallthru
    _
  // Predicated region
  $region18: #{tpu_custom_call.1} parent=0 // pred_check
    _
  $region19: #{tpu_custom_call.1} parent=0 // pred_check_branch
    %21 = sbr.rel (0) target = $region21
  $region20: #{tpu_custom_call.1} parent=0 // pred_region
    _
  $region21: #{tpu_custom_call.1} parent=0 // pred_fallthru
    _
  %vm23 = vcmask 1044224
  %24 = vst.msk [vmem:[#allocation2] sm:$0xf] %vm23, 0
  %25 = vst.msk [vmem:[#allocation2 + $0x4] sm:$0xf] %vm23, 0
  %26 = vst.msk [vmem:[#allocation2 + $0x8] sm:$0xf] %vm23, 0
  %27 = vst.msk [vmem:[#allocation2 + $0xc] sm:$0xf] %vm23, 0
  %28 = vst.msk [vmem:[#allocation2 + $0x10] sm:$0xf] %vm23, 0
  %29 = vst.msk [vmem:[#allocation2 + $0x14] sm:$0xf] %vm23, 0
  %30 = vst.msk [vmem:[#allocation2 + $0x18] sm:$0xf] %vm23, 0
  %31 = vst.msk [vmem:[#allocation2 + $0x1c] sm:$0xf] %vm23, 0
  %32 = vst.msk [vmem:[#allocation2 + $0x20] sm:$0xf] %vm23, 0
  %33 = vst.msk [vmem:[#allocation2 + $0x24] sm:$0xf] %vm23, 0
  %34 = vst.msk [vmem:[#allocation2 + $0x28] sm:$0xf] %vm23, 0
  %35 = vst.msk [vmem:[#allocation2 + $0x2c] sm:$0xf] %vm23, 0
  %36 = vst.msk [vmem:[#allocation2 + $0x30] sm:$0xf] %vm23, 0
  %37 = vst.msk [vmem:[#allocation2 + $0x34] sm:$0xf] %vm23, 0
  %38 = vst.msk [vmem:[#allocation2 + $0x38] sm:$0xf] %vm23, 0
  %39 = vst.msk [vmem:[#allocation2 + $0x3c] sm:$0xf] %vm23, 0
  %40 = vst.msk [vmem:[#allocation2 + $0x40] sm:$0xf] %vm23, 0
  %41 = vst.msk [vmem:[#allocation2 + $0x44] sm:$0xf] %vm23, 0
  %42 = vst.msk [vmem:[#allocation2 + $0x48] sm:$0xf] %vm23, 0
  %43 = vst.msk [vmem:[#allocation2 + $0x4c] sm:$0xf] %vm23, 0
  %44 = vst.msk [vmem:[#allocation2 + $0x50] sm:$0xf] %vm23, 0
  %45 = vst.msk [vmem:[#allocation2 + $0x54] sm:$0xf] %vm23, 0
  %46 = vst.msk [vmem:[#allocation2 + $0x58] sm:$0xf] %vm23, 0
  %47 = vst.msk [vmem:[#allocation2 + $0x5c] sm:$0xf] %vm23, 0
  %48 = vst.msk [vmem:[#allocation2 + $0x60] sm:$0xf] %vm23, 0
  %49 = vst.msk [vmem:[#allocation2 + $0x64] sm:$0xf] %vm23, 0
  %50 = vst.msk [vmem:[#allocation2 + $0x68] sm:$0xf] %vm23, 0
  %51 = vst.msk [vmem:[#allocation2 + $0x6c] sm:$0xf] %vm23, 0
  %52 = vst.msk [vmem:[#allocation2 + $0x70] sm:$0xf] %vm23, 0
  %53 = vst.msk [vmem:[#allocation2 + $0x74] sm:$0xf] %vm23, 0
  %54 = vst.msk [vmem:[#allocation2 + $0x78] sm:$0xf] %vm23, 0
  %55 = vst.msk [vmem:[#allocation2 + $0x7c] sm:$0xf] %vm23, 0
  %56 = vst.msk [vmem:[#allocation2 + $0x80] sm:$0xf] %vm23, 0
  %57 = vst.msk [vmem:[#allocation2 + $0x84] sm:$0xf] %vm23, 0
  %58 = vst.msk [vmem:[#allocation2 + $0x88] sm:$0xf] %vm23, 0
  %59 = vst.msk [vmem:[#allocation2 + $0x8c] sm:$0xf] %vm23, 0
  %60 = vst.msk [vmem:[#allocation2 + $0x90] sm:$0xf] %vm23, 0
  %61 = vst.msk [vmem:[#allocation2 + $0x94] sm:$0xf] %vm23, 0
  %62 = vst.msk [vmem:[#allocation2 + $0x98] sm:$0xf] %vm23, 0
  %63 = vst.msk [vmem:[#allocation2 + $0x9c] sm:$0xf] %vm23, 0
  %64 = vst.msk [vmem:[#allocation2 + $0xa0] sm:$0xf] %vm23, 0
  %65 = vst.msk [vmem:[#allocation2 + $0xa4] sm:$0xf] %vm23, 0
  %66 = vst.msk [vmem:[#allocation2 + $0xa8] sm:$0xf] %vm23, 0
  %67 = vst.msk [vmem:[#allocation2 + $0xac] sm:$0xf] %vm23, 0
  %68 = vst.msk [vmem:[#allocation2 + $0xb0] sm:$0xf] %vm23, 0
  %69 = vst.msk [vmem:[#allocation2 + $0xb4] sm:$0xf] %vm23, 0
  %70 = vst.msk [vmem:[#allocation2 + $0xb8] sm:$0xf] %vm23, 0
  %71 = vst.msk [vmem:[#allocation2 + $0xbc] sm:$0xf] %vm23, 0
  %72 = vst.msk [vmem:[#allocation2 + $0xc0] sm:$0xf] %vm23, 0
  %73 = vst.msk [vmem:[#allocation2 + $0xc4] sm:$0xf] %vm23, 0
  %74 = vst.msk [vmem:[#allocation2 + $0xc8] sm:$0xf] %vm23, 0
  %75 = vst.msk [vmem:[#allocation2 + $0xcc] sm:$0xf] %vm23, 0
  %76 = vst.msk [vmem:[#allocation2 + $0xd0] sm:$0xf] %vm23, 0
  %77 = vst.msk [vmem:[#allocation2 + $0xd4] sm:$0xf] %vm23, 0
  %78 = vst.msk [vmem:[#allocation2 + $0xd8] sm:$0xf] %vm23, 0
  %79 = vst.msk [vmem:[#allocation2 + $0xdc] sm:$0xf] %vm23, 0
  %80 = vst.msk [vmem:[#allocation2 + $0xe0] sm:$0xf] %vm23, 0
  %81 = vst.msk [vmem:[#allocation2 + $0xe4] sm:$0xf] %vm23, 0
  %82 = vst.msk [vmem:[#allocation2 + $0xe8] sm:$0xf] %vm23, 0
  %83 = vst.msk [vmem:[#allocation2 + $0xec] sm:$0xf] %vm23, 0
  %84 = vst.msk [vmem:[#allocation2 + $0xf0] sm:$0xf] %vm23, 0
  %85 = vst.msk [vmem:[#allocation2 + $0xf4] sm:$0xf] %vm23, 0
  %86 = vst.msk [vmem:[#allocation2 + $0xf8] sm:$0xf] %vm23, 0
  %87 = vst.msk [vmem:[#allocation2 + $0xfc] sm:$0xf] %vm23, 0
  %88 = vst.msk [vmem:[#allocation2 + $0x100] sm:$0xf] %vm23, 0
  %89 = vst.msk [vmem:[#allocation2 + $0x104] sm:$0xf] %vm23, 0
  %90 = vst.msk [vmem:[#allocation2 + $0x108] sm:$0xf] %vm23, 0
  %91 = vst.msk [vmem:[#allocation2 + $0x10c] sm:$0xf] %vm23, 0
  %92 = vst.msk [vmem:[#allocation2 + $0x110] sm:$0xf] %vm23, 0
  %93 = vst.msk [vmem:[#allocation2 + $0x114] sm:$0xf] %vm23, 0
  %94 = vst.msk [vmem:[#allocation2 + $0x118] sm:$0xf] %vm23, 0
  %95 = vst.msk [vmem:[#allocation2 + $0x11c] sm:$0xf] %vm23, 0
  %96 = vst.msk [vmem:[#allocation2 + $0x120] sm:$0xf] %vm23, 0
  %97 = vst.msk [vmem:[#allocation2 + $0x124] sm:$0xf] %vm23, 0
  %98 = vst.msk [vmem:[#allocation2 + $0x128] sm:$0xf] %vm23, 0
  %99 = vst.msk [vmem:[#allocation2 + $0x12c] sm:$0xf] %vm23, 0
  %100 = vst.msk [vmem:[#allocation2 + $0x130] sm:$0xf] %vm23, 0
  %101 = vst.msk [vmem:[#allocation2 + $0x134] sm:$0xf] %vm23, 0
  %102 = vst.msk [vmem:[#allocation2 + $0x138] sm:$0xf] %vm23, 0
  %103 = vst.msk [vmem:[#allocation2 + $0x13c] sm:$0xf] %vm23, 0
  %104 = vst.msk [vmem:[#allocation2 + $0x140] sm:$0xf] %vm23, 0
  %105 = vst.msk [vmem:[#allocation2 + $0x144] sm:$0xf] %vm23, 0
  %106 = vst.msk [vmem:[#allocation2 + $0x148] sm:$0xf] %vm23, 0
  %107 = vst.msk [vmem:[#allocation2 + $0x14c] sm:$0xf] %vm23, 0
  %108 = vst.msk [vmem:[#allocation2 + $0x150] sm:$0xf] %vm23, 0
  %109 = vst.msk [vmem:[#allocation2 + $0x154] sm:$0xf] %vm23, 0
  %110 = vst.msk [vmem:[#allocation2 + $0x158] sm:$0xf] %vm23, 0
  %111 = vst.msk [vmem:[#allocation2 + $0x15c] sm:$0xf] %vm23, 0
  %112 = vst.msk [vmem:[#allocation2 + $0x160] sm:$0xf] %vm23, 0
  %113 = vst.msk [vmem:[#allocation2 + $0x164] sm:$0xf] %vm23, 0
  %114 = vst.msk [vmem:[#allocation2 + $0x168] sm:$0xf] %vm23, 0
  %115 = vst.msk [vmem:[#allocation2 + $0x16c] sm:$0xf] %vm23, 0
  %116 = vst.msk [vmem:[#allocation2 + $0x170] sm:$0xf] %vm23, 0
  %117 = vst.msk [vmem:[#allocation2 + $0x174] sm:$0xf] %vm23, 0
  %118 = vst.msk [vmem:[#allocation2 + $0x178] sm:$0xf] %vm23, 0
  %119 = vst.msk [vmem:[#allocation2 + $0x17c] sm:$0xf] %vm23, 0
  %120 = vst.msk [vmem:[#allocation2 + $0x180] sm:$0xf] %vm23, 0
  %121 = vst.msk [vmem:[#allocation2 + $0x184] sm:$0xf] %vm23, 0
  %122 = vst.msk [vmem:[#allocation2 + $0x188] sm:$0xf] %vm23, 0
  %123 = vst.msk [vmem:[#allocation2 + $0x18c] sm:$0xf] %vm23, 0
  %124 = vst.msk [vmem:[#allocation2 + $0x190] sm:$0xf] %vm23, 0
  %125 = vst.msk [vmem:[#allocation2 + $0x194] sm:$0xf] %vm23, 0
  %126 = vst.msk [vmem:[#allocation2 + $0x198] sm:$0xf] %vm23, 0
  %127 = vst.msk [vmem:[#allocation2 + $0x19c] sm:$0xf] %vm23, 0
  %128 = vst.msk [vmem:[#allocation2 + $0x1a0] sm:$0xf] %vm23, 0
  %129 = vst.msk [vmem:[#allocation2 + $0x1a4] sm:$0xf] %vm23, 0
  %130 = vst.msk [vmem:[#allocation2 + $0x1a8] sm:$0xf] %vm23, 0
  %131 = vst.msk [vmem:[#allocation2 + $0x1ac] sm:$0xf] %vm23, 0
  %132 = vst.msk [vmem:[#allocation2 + $0x1b0] sm:$0xf] %vm23, 0
  %133 = vst.msk [vmem:[#allocation2 + $0x1b4] sm:$0xf] %vm23, 0
  %134 = vst.msk [vmem:[#allocation2 + $0x1b8] sm:$0xf] %vm23, 0
  %135 = vst.msk [vmem:[#allocation2 + $0x1bc] sm:$0xf] %vm23, 0
  %136 = vst.msk [vmem:[#allocation2 + $0x1c0] sm:$0xf] %vm23, 0
  %137 = vst.msk [vmem:[#allocation2 + $0x1c4] sm:$0xf] %vm23, 0
  %138 = vst.msk [vmem:[#allocation2 + $0x1c8] sm:$0xf] %vm23, 0
  %139 = vst.msk [vmem:[#allocation2 + $0x1cc] sm:$0xf] %vm23, 0
  %140 = vst.msk [vmem:[#allocation2 + $0x1d0] sm:$0xf] %vm23, 0
  %141 = vst.msk [vmem:[#allocation2 + $0x1d4] sm:$0xf] %vm23, 0
  %142 = vst.msk [vmem:[#allocation2 + $0x1d8] sm:$0xf] %vm23, 0
  %143 = vst.msk [vmem:[#allocation2 + $0x1dc] sm:$0xf] %vm23, 0
  %144 = vst.msk [vmem:[#allocation2 + $0x1e0] sm:$0xf] %vm23, 0
  %145 = vst.msk [vmem:[#allocation2 + $0x1e4] sm:$0xf] %vm23, 0
  %146 = vst.msk [vmem:[#allocation2 + $0x1e8] sm:$0xf] %vm23, 0
  %147 = vst.msk [vmem:[#allocation2 + $0x1ec] sm:$0xf] %vm23, 0
  %148 = vst.msk [vmem:[#allocation2 + $0x1f0] sm:$0xf] %vm23, 0
  %149 = vst.msk [vmem:[#allocation2 + $0x1f4] sm:$0xf] %vm23, 0
  %150 = vst.msk [vmem:[#allocation2 + $0x1f8] sm:$0xf] %vm23, 0
  %151 = vst.msk [vmem:[#allocation2 + $0x1fc] sm:$0xf] %vm23, 0
  %152 = vst.msk [vmem:[#allocation2 + $0x200] sm:$0xf] %vm23, 0
  %153 = vst.msk [vmem:[#allocation2 + $0x204] sm:$0xf] %vm23, 0
  %154 = vst.msk [vmem:[#allocation2 + $0x208] sm:$0xf] %vm23, 0
  %155 = vst.msk [vmem:[#allocation2 + $0x20c] sm:$0xf] %vm23, 0
  %156 = vst.msk [vmem:[#allocation2 + $0x210] sm:$0xf] %vm23, 0
  %157 = vst.msk [vmem:[#allocation2 + $0x214] sm:$0xf] %vm23, 0
  %158 = vst.msk [vmem:[#allocation2 + $0x218] sm:$0xf] %vm23, 0
  %159 = vst.msk [vmem:[#allocation2 + $0x21c] sm:$0xf] %vm23, 0
  %160 = vst.msk [vmem:[#allocation2 + $0x220] sm:$0xf] %vm23, 0
  %161 = vst.msk [vmem:[#allocation2 + $0x224] sm:$0xf] %vm23, 0
  %162 = vst.msk [vmem:[#allocation2 + $0x228] sm:$0xf] %vm23, 0
  %163 = vst.msk [vmem:[#allocation2 + $0x22c] sm:$0xf] %vm23, 0
  %164 = vst.msk [vmem:[#allocation2 + $0x230] sm:$0xf] %vm23, 0
  %165 = vst.msk [vmem:[#allocation2 + $0x234] sm:$0xf] %vm23, 0
  %166 = vst.msk [vmem:[#allocation2 + $0x238] sm:$0xf] %vm23, 0
  %167 = vst.msk [vmem:[#allocation2 + $0x23c] sm:$0xf] %vm23, 0
  %168 = vst.msk [vmem:[#allocation2 + $0x240] sm:$0xf] %vm23, 0
  %169 = vst.msk [vmem:[#allocation2 + $0x244] sm:$0xf] %vm23, 0
  %170 = vst.msk [vmem:[#allocation2 + $0x248] sm:$0xf] %vm23, 0
  %171 = vst.msk [vmem:[#allocation2 + $0x24c] sm:$0xf] %vm23, 0
  %172 = vst.msk [vmem:[#allocation2 + $0x250] sm:$0xf] %vm23, 0
  %173 = vst.msk [vmem:[#allocation2 + $0x254] sm:$0xf] %vm23, 0
  %174 = vst.msk [vmem:[#allocation2 + $0x258] sm:$0xf] %vm23, 0
  %175 = vst.msk [vmem:[#allocation2 + $0x25c] sm:$0xf] %vm23, 0
  %176 = vst.msk [vmem:[#allocation2 + $0x260] sm:$0xf] %vm23, 0
  %177 = vst.msk [vmem:[#allocation2 + $0x264] sm:$0xf] %vm23, 0
  %178 = vst.msk [vmem:[#allocation2 + $0x268] sm:$0xf] %vm23, 0
  %179 = vst.msk [vmem:[#allocation2 + $0x26c] sm:$0xf] %vm23, 0
  %180 = vst.msk [vmem:[#allocation2 + $0x270] sm:$0xf] %vm23, 0
  %181 = vst.msk [vmem:[#allocation2 + $0x274] sm:$0xf] %vm23, 0
  %182 = vst.msk [vmem:[#allocation2 + $0x278] sm:$0xf] %vm23, 0
  %183 = vst.msk [vmem:[#allocation2 + $0x27c] sm:$0xf] %vm23, 0
  %184 = vst.msk [vmem:[#allocation2 + $0x280] sm:$0xf] %vm23, 0
  %185 = vst.msk [vmem:[#allocation2 + $0x284] sm:$0xf] %vm23, 0
  %186 = vst.msk [vmem:[#allocation2 + $0x288] sm:$0xf] %vm23, 0
  %187 = vst.msk [vmem:[#allocation2 + $0x28c] sm:$0xf] %vm23, 0
  %188 = vst.msk [vmem:[#allocation2 + $0x290] sm:$0xf] %vm23, 0
  %189 = vst.msk [vmem:[#allocation2 + $0x294] sm:$0xf] %vm23, 0
  %190 = vst.msk [vmem:[#allocation2 + $0x298] sm:$0xf] %vm23, 0
  %191 = vst.msk [vmem:[#allocation2 + $0x29c] sm:$0xf] %vm23, 0
  %192 = vst.msk [vmem:[#allocation2 + $0x2a0] sm:$0xf] %vm23, 0
  %193 = vst.msk [vmem:[#allocation2 + $0x2a4] sm:$0xf] %vm23, 0
  %194 = vst.msk [vmem:[#allocation2 + $0x2a8] sm:$0xf] %vm23, 0
  %195 = vst.msk [vmem:[#allocation2 + $0x2ac] sm:$0xf] %vm23, 0
  %196 = vst.msk [vmem:[#allocation2 + $0x2b0] sm:$0xf] %vm23, 0
  %197 = vst.msk [vmem:[#allocation2 + $0x2b4] sm:$0xf] %vm23, 0
  %198 = vst.msk [vmem:[#allocation2 + $0x2b8] sm:$0xf] %vm23, 0
  %199 = vst.msk [vmem:[#allocation2 + $0x2bc] sm:$0xf] %vm23, 0
  %200 = vst.msk [vmem:[#allocation2 + $0x2c0] sm:$0xf] %vm23, 0
  %201 = vst.msk [vmem:[#allocation2 + $0x2c4] sm:$0xf] %vm23, 0
  %202 = vst.msk [vmem:[#allocation2 + $0x2c8] sm:$0xf] %vm23, 0
  %203 = vst.msk [vmem:[#allocation2 + $0x2cc] sm:$0xf] %vm23, 0
  %204 = vst.msk [vmem:[#allocation2 + $0x2d0] sm:$0xf] %vm23, 0
  %205 = vst.msk [vmem:[#allocation2 + $0x2d4] sm:$0xf] %vm23, 0
  %206 = vst.msk [vmem:[#allocation2 + $0x2d8] sm:$0xf] %vm23, 0
  %207 = vst.msk [vmem:[#allocation2 + $0x2dc] sm:$0xf] %vm23, 0
  %208 = vst.msk [vmem:[#allocation2 + $0x2e0] sm:$0xf] %vm23, 0
  %209 = vst.msk [vmem:[#allocation2 + $0x2e4] sm:$0xf] %vm23, 0
  %210 = vst.msk [vmem:[#allocation2 + $0x2e8] sm:$0xf] %vm23, 0
  %211 = vst.msk [vmem:[#allocation2 + $0x2ec] sm:$0xf] %vm23, 0
  %212 = vst.msk [vmem:[#allocation2 + $0x2f0] sm:$0xf] %vm23, 0
  %213 = vst.msk [vmem:[#allocation2 + $0x2f4] sm:$0xf] %vm23, 0
  %214 = vst.msk [vmem:[#allocation2 + $0x2f8] sm:$0xf] %vm23, 0
  %215 = vst.msk [vmem:[#allocation2 + $0x2fc] sm:$0xf] %vm23, 0
  %216 = vst.msk [vmem:[#allocation2 + $0x300] sm:$0xf] %vm23, 0
  %217 = vst.msk [vmem:[#allocation2 + $0x304] sm:$0xf] %vm23, 0
  %218 = vst.msk [vmem:[#allocation2 + $0x308] sm:$0xf] %vm23, 0
  %219 = vst.msk [vmem:[#allocation2 + $0x30c] sm:$0xf] %vm23, 0
  %220 = vst.msk [vmem:[#allocation2 + $0x310] sm:$0xf] %vm23, 0
  %221 = vst.msk [vmem:[#allocation2 + $0x314] sm:$0xf] %vm23, 0
  %222 = vst.msk [vmem:[#allocation2 + $0x318] sm:$0xf] %vm23, 0
  %223 = vst.msk [vmem:[#allocation2 + $0x31c] sm:$0xf] %vm23, 0
  %224 = vst.msk [vmem:[#allocation2 + $0x320] sm:$0xf] %vm23, 0
  %225 = vst.msk [vmem:[#allocation2 + $0x324] sm:$0xf] %vm23, 0
  %226 = vst.msk [vmem:[#allocation2 + $0x328] sm:$0xf] %vm23, 0
  %227 = vst.msk [vmem:[#allocation2 + $0x32c] sm:$0xf] %vm23, 0
  %228 = vst.msk [vmem:[#allocation2 + $0x330] sm:$0xf] %vm23, 0
  %229 = vst.msk [vmem:[#allocation2 + $0x334] sm:$0xf] %vm23, 0
  %230 = vst.msk [vmem:[#allocation2 + $0x338] sm:$0xf] %vm23, 0
  %231 = vst.msk [vmem:[#allocation2 + $0x33c] sm:$0xf] %vm23, 0
  %232 = vst.msk [vmem:[#allocation2 + $0x340] sm:$0xf] %vm23, 0
  %233 = vst.msk [vmem:[#allocation2 + $0x344] sm:$0xf] %vm23, 0
  %234 = vst.msk [vmem:[#allocation2 + $0x348] sm:$0xf] %vm23, 0
  %235 = vst.msk [vmem:[#allocation2 + $0x34c] sm:$0xf] %vm23, 0
  %236 = vst.msk [vmem:[#allocation2 + $0x350] sm:$0xf] %vm23, 0
  %237 = vst.msk [vmem:[#allocation2 + $0x354] sm:$0xf] %vm23, 0
  %238 = vst.msk [vmem:[#allocation2 + $0x358] sm:$0xf] %vm23, 0
  %239 = vst.msk [vmem:[#allocation2 + $0x35c] sm:$0xf] %vm23, 0
  %240 = vst.msk [vmem:[#allocation2 + $0x360] sm:$0xf] %vm23, 0
  %241 = vst.msk [vmem:[#allocation2 + $0x364] sm:$0xf] %vm23, 0
  %242 = vst.msk [vmem:[#allocation2 + $0x368] sm:$0xf] %vm23, 0
  %243 = vst.msk [vmem:[#allocation2 + $0x36c] sm:$0xf] %vm23, 0
  %244 = vst.msk [vmem:[#allocation2 + $0x370] sm:$0xf] %vm23, 0
  %245 = vst.msk [vmem:[#allocation2 + $0x374] sm:$0xf] %vm23, 0
  %246 = vst.msk [vmem:[#allocation2 + $0x378] sm:$0xf] %vm23, 0
  %247 = vst.msk [vmem:[#allocation2 + $0x37c] sm:$0xf] %vm23, 0
  %248 = vst.msk [vmem:[#allocation2 + $0x380] sm:$0xf] %vm23, 0
  %249 = vst.msk [vmem:[#allocation2 + $0x384] sm:$0xf] %vm23, 0
  %250 = vst.msk [vmem:[#allocation2 + $0x388] sm:$0xf] %vm23, 0
  %251 = vst.msk [vmem:[#allocation2 + $0x38c] sm:$0xf] %vm23, 0
  %252 = vst.msk [vmem:[#allocation2 + $0x390] sm:$0xf] %vm23, 0
  %253 = vst.msk [vmem:[#allocation2 + $0x394] sm:$0xf] %vm23, 0
  %254 = vst.msk [vmem:[#allocation2 + $0x398] sm:$0xf] %vm23, 0
  %255 = vst.msk [vmem:[#allocation2 + $0x39c] sm:$0xf] %vm23, 0
  %256 = vst.msk [vmem:[#allocation2 + $0x3a0] sm:$0xf] %vm23, 0
  %257 = vst.msk [vmem:[#allocation2 + $0x3a4] sm:$0xf] %vm23, 0
  %258 = vst.msk [vmem:[#allocation2 + $0x3a8] sm:$0xf] %vm23, 0
  %259 = vst.msk [vmem:[#allocation2 + $0x3ac] sm:$0xf] %vm23, 0
  %260 = vst.msk [vmem:[#allocation2 + $0x3b0] sm:$0xf] %vm23, 0
  %261 = vst.msk [vmem:[#allocation2 + $0x3b4] sm:$0xf] %vm23, 0
  %262 = vst.msk [vmem:[#allocation2 + $0x3b8] sm:$0xf] %vm23, 0
  %263 = vst.msk [vmem:[#allocation2 + $0x3bc] sm:$0xf] %vm23, 0
  %264 = vst.msk [vmem:[#allocation2 + $0x3c0] sm:$0xf] %vm23, 0
  %265 = vst.msk [vmem:[#allocation2 + $0x3c4] sm:$0xf] %vm23, 0
  %266 = vst.msk [vmem:[#allocation2 + $0x3c8] sm:$0xf] %vm23, 0
  %267 = vst.msk [vmem:[#allocation2 + $0x3cc] sm:$0xf] %vm23, 0
  %268 = vst.msk [vmem:[#allocation2 + $0x3d0] sm:$0xf] %vm23, 0
  %269 = vst.msk [vmem:[#allocation2 + $0x3d4] sm:$0xf] %vm23, 0
  %270 = vst.msk [vmem:[#allocation2 + $0x3d8] sm:$0xf] %vm23, 0
  %271 = vst.msk [vmem:[#allocation2 + $0x3dc] sm:$0xf] %vm23, 0
  %272 = vst.msk [vmem:[#allocation2 + $0x3e0] sm:$0xf] %vm23, 0
  %273 = vst.msk [vmem:[#allocation2 + $0x3e4] sm:$0xf] %vm23, 0
  %274 = vst.msk [vmem:[#allocation2 + $0x3e8] sm:$0xf] %vm23, 0
  %275 = vst.msk [vmem:[#allocation2 + $0x3ec] sm:$0xf] %vm23, 0
  %276 = vst.msk [vmem:[#allocation2 + $0x3f0] sm:$0xf] %vm23, 0
  %277 = vst.msk [vmem:[#allocation2 + $0x3f4] sm:$0xf] %vm23, 0
  %278 = vst.msk [vmem:[#allocation2 + $0x3f8] sm:$0xf] %vm23, 0
  %279 = vst.msk [vmem:[#allocation2 + $0x3fc] sm:$0xf] %vm23, 0
  %vm280 = vcmask 253952
  %vm281 = vsmask.f32 256
  %vm282 = vmand %vm280, %vm281
  %v283 = vld [vmem:[#allocation2] sm:$0x1]
  %v284 = vsel %vm282, 0, %v283
  %285 = vst [vmem:[#allocation2] sm:$0x1] %v284
  %v286 = vld [vmem:[#allocation2 + $0x100] sm:$0x1]
  %v287 = vsel %vm282, 0, %v286
  %288 = vst [vmem:[#allocation2 + $0x100] sm:$0x1] %v287
  %v289 = vld [vmem:[#allocation2 + $0x200] sm:$0x1]
  %v290 = vsel %vm282, 0, %v289
  %291 = vst [vmem:[#allocation2 + $0x200] sm:$0x1] %v290
  %v292 = vld [vmem:[#allocation2 + $0x300] sm:$0x1]
  %v293 = vsel %vm282, 0, %v292
  %294 = vst [vmem:[#allocation2 + $0x300] sm:$0x1] %v293
  %v295 = vld [vmem:[%s0] sm:$0xf]
  %v296 = vld [vmem:[%s0 + $0x4] sm:$0xf]
  %v297 = vld [vmem:[%s0 + $0x8] sm:$0xf]
  %v298 = vld [vmem:[%s0 + $0xc] sm:$0xf]
  %v299 = vld [vmem:[%s0 + $0x10] sm:$0xf]
  %v300 = vld [vmem:[%s0 + $0x14] sm:$0xf]
  %v301 = vld [vmem:[%s0 + $0x18] sm:$0xf]
  %v302 = vld [vmem:[%s0 + $0x1c] sm:$0xf]
  %v303 = vld [vmem:[%s0 + $0x20] sm:$0xf]
  %v304 = vld [vmem:[%s0 + $0x24] sm:$0xf]
  %v305 = vld [vmem:[%s0 + $0x28] sm:$0xf]
  %v306 = vld [vmem:[%s0 + $0x2c] sm:$0xf]
  %v307 = vld [vmem:[%s0 + $0x30] sm:$0xf]
  %v308 = vld [vmem:[%s0 + $0x34] sm:$0xf]
  %v309 = vld [vmem:[%s0 + $0x38] sm:$0xf]
  %v310 = vld [vmem:[%s0 + $0x3c] sm:$0xf]
  %v311 = vld [vmem:[%s0 + $0x40] sm:$0xf]
  %v312 = vld [vmem:[%s0 + $0x44] sm:$0xf]
  %v313 = vld [vmem:[%s0 + $0x48] sm:$0xf]
  %v314 = vld [vmem:[%s0 + $0x4c] sm:$0xf]
  %v315 = vld [vmem:[%s0 + $0x50] sm:$0xf]
  %v316 = vld [vmem:[%s0 + $0x54] sm:$0xf]
  %v317 = vld [vmem:[%s0 + $0x58] sm:$0xf]
  %v318 = vld [vmem:[%s0 + $0x5c] sm:$0xf]
  %v319 = vld [vmem:[%s0 + $0x60] sm:$0xf]
  %v320 = vld [vmem:[%s0 + $0x64] sm:$0xf]
  %v321 = vld [vmem:[%s0 + $0x68] sm:$0xf]
  %v322 = vld [vmem:[%s0 + $0x6c] sm:$0xf]
  %v323 = vld [vmem:[%s0 + $0x70] sm:$0xf]
  %v324 = vld [vmem:[%s0 + $0x74] sm:$0xf]
  %v325 = vld [vmem:[%s0 + $0x78] sm:$0xf]
  %v326 = vld [vmem:[%s0 + $0x7c] sm:$0xf]
  %v327 = vld [vmem:[%s0 + $0x80] sm:$0xf]
  %v328 = vld [vmem:[%s0 + $0x84] sm:$0xf]
  %v329 = vld [vmem:[%s0 + $0x88] sm:$0xf]
  %v330 = vld [vmem:[%s0 + $0x8c] sm:$0xf]
  %v331 = vld [vmem:[%s0 + $0x90] sm:$0xf]
  %v332 = vld [vmem:[%s0 + $0x94] sm:$0xf]
  %v333 = vld [vmem:[%s0 + $0x98] sm:$0xf]
  %v334 = vld [vmem:[%s0 + $0x9c] sm:$0xf]
  %v335 = vld [vmem:[%s0 + $0xa0] sm:$0xf]
  %v336 = vld [vmem:[%s0 + $0xa4] sm:$0xf]
  %v337 = vld [vmem:[%s0 + $0xa8] sm:$0xf]
  %v338 = vld [vmem:[%s0 + $0xac] sm:$0xf]
  %v339 = vld [vmem:[%s0 + $0xb0] sm:$0xf]
  %v340 = vld [vmem:[%s0 + $0xb4] sm:$0xf]
  %v341 = vld [vmem:[%s0 + $0xb8] sm:$0xf]
  %v342 = vld [vmem:[%s0 + $0xbc] sm:$0xf]
  %v343 = vld [vmem:[%s0 + $0xc0] sm:$0xf]
  %v344 = vld [vmem:[%s0 + $0xc4] sm:$0xf]
  %v345 = vld [vmem:[%s0 + $0xc8] sm:$0xf]
  %v346 = vld [vmem:[%s0 + $0xcc] sm:$0xf]
  %v347 = vld [vmem:[%s0 + $0xd0] sm:$0xf]
  %v348 = vld [vmem:[%s0 + $0xd4] sm:$0xf]
  %v349 = vld [vmem:[%s0 + $0xd8] sm:$0xf]
  %v350 = vld [vmem:[%s0 + $0xdc] sm:$0xf]
  %v351 = vld [vmem:[%s0 + $0xe0] sm:$0xf]
  %v352 = vld [vmem:[%s0 + $0xe4] sm:$0xf]
  %v353 = vld [vmem:[%s0 + $0xe8] sm:$0xf]
  %v354 = vld [vmem:[%s0 + $0xec] sm:$0xf]
  %v355 = vld [vmem:[%s0 + $0xf0] sm:$0xf]
  %v356 = vld [vmem:[%s0 + $0xf4] sm:$0xf]
  %v357 = vld [vmem:[%s0 + $0xf8] sm:$0xf]
  %v358 = vld [vmem:[%s0 + $0xfc] sm:$0xf]
  %v359 = vld [vmem:[%s0 + $0x100] sm:$0xf]
  %v360 = vld [vmem:[%s0 + $0x104] sm:$0xf]
  %v361 = vld [vmem:[%s0 + $0x108] sm:$0xf]
  %v362 = vld [vmem:[%s0 + $0x10c] sm:$0xf]
  %v363 = vld [vmem:[%s0 + $0x110] sm:$0xf]
  %v364 = vld [vmem:[%s0 + $0x114] sm:$0xf]
  %v365 = vld [vmem:[%s0 + $0x118] sm:$0xf]
  %v366 = vld [vmem:[%s0 + $0x11c] sm:$0xf]
  %v367 = vld [vmem:[%s0 + $0x120] sm:$0xf]
  %v368 = vld [vmem:[%s0 + $0x124] sm:$0xf]
  %v369 = vld [vmem:[%s0 + $0x128] sm:$0xf]
  %v370 = vld [vmem:[%s0 + $0x12c] sm:$0xf]
  %v371 = vld [vmem:[%s0 + $0x130] sm:$0xf]
  %v372 = vld [vmem:[%s0 + $0x134] sm:$0xf]
  %v373 = vld [vmem:[%s0 + $0x138] sm:$0xf]
  %v374 = vld [vmem:[%s0 + $0x13c] sm:$0xf]
  %v375 = vld [vmem:[%s0 + $0x140] sm:$0xf]
  %v376 = vld [vmem:[%s0 + $0x144] sm:$0xf]
  %v377 = vld [vmem:[%s0 + $0x148] sm:$0xf]
  %v378 = vld [vmem:[%s0 + $0x14c] sm:$0xf]
  %v379 = vld [vmem:[%s0 + $0x150] sm:$0xf]
  %v380 = vld [vmem:[%s0 + $0x154] sm:$0xf]
  %v381 = vld [vmem:[%s0 + $0x158] sm:$0xf]
  %v382 = vld [vmem:[%s0 + $0x15c] sm:$0xf]
  %v383 = vld [vmem:[%s0 + $0x160] sm:$0xf]
  %v384 = vld [vmem:[%s0 + $0x164] sm:$0xf]
  %v385 = vld [vmem:[%s0 + $0x168] sm:$0xf]
  %v386 = vld [vmem:[%s0 + $0x16c] sm:$0xf]
  %v387 = vld [vmem:[%s0 + $0x170] sm:$0xf]
  %v388 = vld [vmem:[%s0 + $0x174] sm:$0xf]
  %v389 = vld [vmem:[%s0 + $0x178] sm:$0xf]
  %v390 = vld [vmem:[%s0 + $0x17c] sm:$0xf]
  %v391 = vld [vmem:[%s0 + $0x180] sm:$0xf]
  %v392 = vld [vmem:[%s0 + $0x184] sm:$0xf]
  %v393 = vld [vmem:[%s0 + $0x188] sm:$0xf]
  %v394 = vld [vmem:[%s0 + $0x18c] sm:$0xf]
  %v395 = vld [vmem:[%s0 + $0x190] sm:$0xf]
  %v396 = vld [vmem:[%s0 + $0x194] sm:$0xf]
  %v397 = vld [vmem:[%s0 + $0x198] sm:$0xf]
  %v398 = vld [vmem:[%s0 + $0x19c] sm:$0xf]
  %v399 = vld [vmem:[%s0 + $0x1a0] sm:$0xf]
  %v400 = vld [vmem:[%s0 + $0x1a4] sm:$0xf]
  %v401 = vld [vmem:[%s0 + $0x1a8] sm:$0xf]
  %v402 = vld [vmem:[%s0 + $0x1ac] sm:$0xf]
  %v403 = vld [vmem:[%s0 + $0x1b0] sm:$0xf]
  %v404 = vld [vmem:[%s0 + $0x1b4] sm:$0xf]
  %v405 = vld [vmem:[%s0 + $0x1b8] sm:$0xf]
  %v406 = vld [vmem:[%s0 + $0x1bc] sm:$0xf]
  %v407 = vld [vmem:[%s0 + $0x1c0] sm:$0xf]
  %v408 = vld [vmem:[%s0 + $0x1c4] sm:$0xf]
  %v409 = vld [vmem:[%s0 + $0x1c8] sm:$0xf]
  %v410 = vld [vmem:[%s0 + $0x1cc] sm:$0xf]
  %v411 = vld [vmem:[%s0 + $0x1d0] sm:$0xf]
  %v412 = vld [vmem:[%s0 + $0x1d4] sm:$0xf]
  %v413 = vld [vmem:[%s0 + $0x1d8] sm:$0xf]
  %v414 = vld [vmem:[%s0 + $0x1dc] sm:$0xf]
  %v415 = vld [vmem:[%s0 + $0x1e0] sm:$0xf]
  %v416 = vld [vmem:[%s0 + $0x1e4] sm:$0xf]
  %v417 = vld [vmem:[%s0 + $0x1e8] sm:$0xf]
  %v418 = vld [vmem:[%s0 + $0x1ec] sm:$0xf]
  %v419 = vld [vmem:[%s0 + $0x1f0] sm:$0xf]
  %v420 = vld [vmem:[%s0 + $0x1f4] sm:$0xf]
  %v421 = vld [vmem:[%s0 + $0x1f8] sm:$0xf]
  %v422 = vld [vmem:[%s0 + $0x1fc] sm:$0xf]
  %v423 = vld [vmem:[%s0 + $0x200] sm:$0xf]
  %v424 = vld [vmem:[%s0 + $0x204] sm:$0xf]
  %v425 = vld [vmem:[%s0 + $0x208] sm:$0xf]
  %v426 = vld [vmem:[%s0 + $0x20c] sm:$0xf]
  %v427 = vld [vmem:[%s0 + $0x210] sm:$0xf]
  %v428 = vld [vmem:[%s0 + $0x214] sm:$0xf]
  %v429 = vld [vmem:[%s0 + $0x218] sm:$0xf]
  %v430 = vld [vmem:[%s0 + $0x21c] sm:$0xf]
  %v431 = vld [vmem:[%s0 + $0x220] sm:$0xf]
  %v432 = vld [vmem:[%s0 + $0x224] sm:$0xf]
  %v433 = vld [vmem:[%s0 + $0x228] sm:$0xf]
  %v434 = vld [vmem:[%s0 + $0x22c] sm:$0xf]
  %v435 = vld [vmem:[%s0 + $0x230] sm:$0xf]
  %v436 = vld [vmem:[%s0 + $0x234] sm:$0xf]
  %v437 = vld [vmem:[%s0 + $0x238] sm:$0xf]
  %v438 = vld [vmem:[%s0 + $0x23c] sm:$0xf]
  %v439 = vld [vmem:[%s0 + $0x240] sm:$0xf]
  %v440 = vld [vmem:[%s0 + $0x244] sm:$0xf]
  %v441 = vld [vmem:[%s0 + $0x248] sm:$0xf]
  %v442 = vld [vmem:[%s0 + $0x24c] sm:$0xf]
  %v443 = vld [vmem:[%s0 + $0x250] sm:$0xf]
  %v444 = vld [vmem:[%s0 + $0x254] sm:$0xf]
  %v445 = vld [vmem:[%s0 + $0x258] sm:$0xf]
  %v446 = vld [vmem:[%s0 + $0x25c] sm:$0xf]
  %v447 = vld [vmem:[%s0 + $0x260] sm:$0xf]
  %v448 = vld [vmem:[%s0 + $0x264] sm:$0xf]
  %v449 = vld [vmem:[%s0 + $0x268] sm:$0xf]
  %v450 = vld [vmem:[%s0 + $0x26c] sm:$0xf]
  %v451 = vld [vmem:[%s0 + $0x270] sm:$0xf]
  %v452 = vld [vmem:[%s0 + $0x274] sm:$0xf]
  %v453 = vld [vmem:[%s0 + $0x278] sm:$0xf]
  %v454 = vld [vmem:[%s0 + $0x27c] sm:$0xf]
  %v455 = vld [vmem:[%s0 + $0x280] sm:$0xf]
  %v456 = vld [vmem:[%s0 + $0x284] sm:$0xf]
  %v457 = vld [vmem:[%s0 + $0x288] sm:$0xf]
  %v458 = vld [vmem:[%s0 + $0x28c] sm:$0xf]
  %v459 = vld [vmem:[%s0 + $0x290] sm:$0xf]
  %v460 = vld [vmem:[%s0 + $0x294] sm:$0xf]
  %v461 = vld [vmem:[%s0 + $0x298] sm:$0xf]
  %v462 = vld [vmem:[%s0 + $0x29c] sm:$0xf]
  %v463 = vld [vmem:[%s0 + $0x2a0] sm:$0xf]
  %v464 = vld [vmem:[%s0 + $0x2a4] sm:$0xf]
  %v465 = vld [vmem:[%s0 + $0x2a8] sm:$0xf]
  %v466 = vld [vmem:[%s0 + $0x2ac] sm:$0xf]
  %v467 = vld [vmem:[%s0 + $0x2b0] sm:$0xf]
  %v468 = vld [vmem:[%s0 + $0x2b4] sm:$0xf]
  %v469 = vld [vmem:[%s0 + $0x2b8] sm:$0xf]
  %v470 = vld [vmem:[%s0 + $0x2bc] sm:$0xf]
  %v471 = vld [vmem:[%s0 + $0x2c0] sm:$0xf]
  %v472 = vld [vmem:[%s0 + $0x2c4] sm:$0xf]
  %v473 = vld [vmem:[%s0 + $0x2c8] sm:$0xf]
  %v474 = vld [vmem:[%s0 + $0x2cc] sm:$0xf]
  %v475 = vld [vmem:[%s0 + $0x2d0] sm:$0xf]
  %v476 = vld [vmem:[%s0 + $0x2d4] sm:$0xf]
  %v477 = vld [vmem:[%s0 + $0x2d8] sm:$0xf]
  %v478 = vld [vmem:[%s0 + $0x2dc] sm:$0xf]
  %v479 = vld [vmem:[%s0 + $0x2e0] sm:$0xf]
  %v480 = vld [vmem:[%s0 + $0x2e4] sm:$0xf]
  %v481 = vld [vmem:[%s0 + $0x2e8] sm:$0xf]
  %v482 = vld [vmem:[%s0 + $0x2ec] sm:$0xf]
  %v483 = vld [vmem:[%s0 + $0x2f0] sm:$0xf]
  %v484 = vld [vmem:[%s0 + $0x2f4] sm:$0xf]
  %v485 = vld [vmem:[%s0 + $0x2f8] sm:$0xf]
  %v486 = vld [vmem:[%s0 + $0x2fc] sm:$0xf]
  %v487 = vld [vmem:[%s0 + $0x300] sm:$0xf]
  %v488 = vld [vmem:[%s0 + $0x304] sm:$0xf]
  %v489 = vld [vmem:[%s0 + $0x308] sm:$0xf]
  %v490 = vld [vmem:[%s0 + $0x30c] sm:$0xf]
  %v491 = vld [vmem:[%s0 + $0x310] sm:$0xf]
  %v492 = vld [vmem:[%s0 + $0x314] sm:$0xf]
  %v493 = vld [vmem:[%s0 + $0x318] sm:$0xf]
  %v494 = vld [vmem:[%s0 + $0x31c] sm:$0xf]
  %v495 = vld [vmem:[%s0 + $0x320] sm:$0xf]
  %v496 = vld [vmem:[%s0 + $0x324] sm:$0xf]
  %v497 = vld [vmem:[%s0 + $0x328] sm:$0xf]
  %v498 = vld [vmem:[%s0 + $0x32c] sm:$0xf]
  %v499 = vld [vmem:[%s0 + $0x330] sm:$0xf]
  %v500 = vld [vmem:[%s0 + $0x334] sm:$0xf]
  %v501 = vld [vmem:[%s0 + $0x338] sm:$0xf]
  %v502 = vld [vmem:[%s0 + $0x33c] sm:$0xf]
  %v503 = vld [vmem:[%s0 + $0x340] sm:$0xf]
  %v504 = vld [vmem:[%s0 + $0x344] sm:$0xf]
  %v505 = vld [vmem:[%s0 + $0x348] sm:$0xf]
  %v506 = vld [vmem:[%s0 + $0x34c] sm:$0xf]
  %v507 = vld [vmem:[%s0 + $0x350] sm:$0xf]
  %v508 = vld [vmem:[%s0 + $0x354] sm:$0xf]
  %v509 = vld [vmem:[%s0 + $0x358] sm:$0xf]
  %v510 = vld [vmem:[%s0 + $0x35c] sm:$0xf]
  %v511 = vld [vmem:[%s0 + $0x360] sm:$0xf]
  %v512 = vld [vmem:[%s0 + $0x364] sm:$0xf]
  %v513 = vld [vmem:[%s0 + $0x368] sm:$0xf]
  %v514 = vld [vmem:[%s0 + $0x36c] sm:$0xf]
  %v515 = vld [vmem:[%s0 + $0x370] sm:$0xf]
  %v516 = vld [vmem:[%s0 + $0x374] sm:$0xf]
  %v517 = vld [vmem:[%s0 + $0x378] sm:$0xf]
  %v518 = vld [vmem:[%s0 + $0x37c] sm:$0xf]
  %v519 = vld [vmem:[%s0 + $0x380] sm:$0xf]
  %v520 = vld [vmem:[%s0 + $0x384] sm:$0xf]
  %v521 = vld [vmem:[%s0 + $0x388] sm:$0xf]
  %v522 = vld [vmem:[%s0 + $0x38c] sm:$0xf]
  %v523 = vld [vmem:[%s0 + $0x390] sm:$0xf]
  %v524 = vld [vmem:[%s0 + $0x394] sm:$0xf]
  %v525 = vld [vmem:[%s0 + $0x398] sm:$0xf]
  %v526 = vld [vmem:[%s0 + $0x39c] sm:$0xf]
  %v527 = vld [vmem:[%s0 + $0x3a0] sm:$0xf]
  %v528 = vld [vmem:[%s0 + $0x3a4] sm:$0xf]
  %v529 = vld [vmem:[%s0 + $0x3a8] sm:$0xf]
  %v530 = vld [vmem:[%s0 + $0x3ac] sm:$0xf]
  %v531 = vld [vmem:[%s0 + $0x3b0] sm:$0xf]
  %v532 = vld [vmem:[%s0 + $0x3b4] sm:$0xf]
  %v533 = vld [vmem:[%s0 + $0x3b8] sm:$0xf]
  %v534 = vld [vmem:[%s0 + $0x3bc] sm:$0xf]
  %v535 = vld [vmem:[%s0 + $0x3c0] sm:$0xf]
  %v536 = vld [vmem:[%s0 + $0x3c4] sm:$0xf]
  %v537 = vld [vmem:[%s0 + $0x3c8] sm:$0xf]
  %v538 = vld [vmem:[%s0 + $0x3cc] sm:$0xf]
  %v539 = vld [vmem:[%s0 + $0x3d0] sm:$0xf]
  %v540 = vld [vmem:[%s0 + $0x3d4] sm:$0xf]
  %v541 = vld [vmem:[%s0 + $0x3d8] sm:$0xf]
  %v542 = vld [vmem:[%s0 + $0x3dc] sm:$0xf]
  %v543 = vld [vmem:[%s0 + $0x3e0] sm:$0xf]
  %v544 = vld [vmem:[%s0 + $0x3e4] sm:$0xf]
  %v545 = vld [vmem:[%s0 + $0x3e8] sm:$0xf]
  %v546 = vld [vmem:[%s0 + $0x3ec] sm:$0xf]
  %v547 = vld [vmem:[%s0 + $0x3f0] sm:$0xf]
  %v548 = vld [vmem:[%s0 + $0x3f4] sm:$0xf]
  %v549 = vld [vmem:[%s0 + $0x3f8] sm:$0xf]
  %v550 = vld [vmem:[%s0 + $0x3fc] sm:$0xf]
  %vm551 = vsmask.f32 4368
  %vm552 = vmor %vm281, %vm551
  %v554 = vshrl.u32 %v295, 16
  %v556 = vrot.slane %v554, 7
  %v557 = vshll.u32 %v295, 16
  %v559 = vor.u32 %v556, %v557
  %v560 = vrot.slane %v556, 4
  %v562 = vshrl.u32 %v296, 16
  %v564 = vrot.slane %v562, 7
  %v565 = vshll.u32 %v296, 16
  %v567 = vor.u32 %v564, %v565
  %v568 = vsel %vm552, %v560, %v567
  %v569 = vrot.slane %v564, 4
  %v571 = vshrl.u32 %v297, 16
  %v573 = vrot.slane %v571, 7
  %v574 = vshll.u32 %v297, 16
  %v576 = vor.u32 %v573, %v574
  %v577 = vsel %vm552, %v569, %v576
  %v578 = vrot.slane %v573, 4
  %v580 = vshrl.u32 %v298, 16
  %v582 = vrot.slane %v580, 7
  %v583 = vshll.u32 %v298, 16
  %v585 = vor.u32 %v582, %v583
  %v586 = vsel %vm552, %v578, %v585
  %v587 = vrot.slane %v582, 4
  %v589 = vshrl.u32 %v299, 16
  %v591 = vrot.slane %v589, 7
  %v592 = vshll.u32 %v299, 16
  %v594 = vor.u32 %v591, %v592
  %v595 = vsel %vm552, %v587, %v594
  %v596 = vrot.slane %v591, 4
  %v598 = vshrl.u32 %v300, 16
  %v600 = vrot.slane %v598, 7
  %v601 = vshll.u32 %v300, 16
  %v603 = vor.u32 %v600, %v601
  %v604 = vsel %vm552, %v596, %v603
  %v605 = vrot.slane %v600, 4
  %v607 = vshrl.u32 %v301, 16
  %v609 = vrot.slane %v607, 7
  %v610 = vshll.u32 %v301, 16
  %v612 = vor.u32 %v609, %v610
  %v613 = vsel %vm552, %v605, %v612
  %v614 = vrot.slane %v609, 4
  %v616 = vshrl.u32 %v302, 16
  %v618 = vrot.slane %v616, 7
  %v619 = vshll.u32 %v302, 16
  %v621 = vor.u32 %v618, %v619
  %v622 = vsel %vm552, %v614, %v621
  %v623 = vrot.slane %v618, 4
  %v625 = vshrl.u32 %v303, 16
  %v627 = vrot.slane %v625, 7
  %v628 = vshll.u32 %v303, 16
  %v630 = vor.u32 %v627, %v628
  %v631 = vsel %vm552, %v623, %v630
  %v632 = vrot.slane %v627, 4
  %v634 = vshrl.u32 %v304, 16
  %v636 = vrot.slane %v634, 7
  %v637 = vshll.u32 %v304, 16
  %v639 = vor.u32 %v636, %v637
  %v640 = vsel %vm552, %v632, %v639
  %v641 = vrot.slane %v636, 4
  %v643 = vshrl.u32 %v305, 16
  %v645 = vrot.slane %v643, 7
  %v646 = vshll.u32 %v305, 16
  %v648 = vor.u32 %v645, %v646
  %v649 = vsel %vm552, %v641, %v648
  %v650 = vrot.slane %v645, 4
  %v652 = vshrl.u32 %v306, 16
  %v654 = vrot.slane %v652, 7
  %v655 = vshll.u32 %v306, 16
  %v657 = vor.u32 %v654, %v655
  %v658 = vsel %vm552, %v650, %v657
  %v659 = vrot.slane %v654, 4
  %v661 = vshrl.u32 %v307, 16
  %v663 = vrot.slane %v661, 7
  %v664 = vshll.u32 %v307, 16
  %v666 = vor.u32 %v663, %v664
  %v667 = vsel %vm552, %v659, %v666
  %v668 = vrot.slane %v663, 4
  %v670 = vshrl.u32 %v308, 16
  %v672 = vrot.slane %v670, 7
  %v673 = vshll.u32 %v308, 16
  %v675 = vor.u32 %v672, %v673
  %v676 = vsel %vm552, %v668, %v675
  %v677 = vrot.slane %v672, 4
  %v679 = vshrl.u32 %v309, 16
  %v681 = vrot.slane %v679, 7
  %v682 = vshll.u32 %v309, 16
  %v684 = vor.u32 %v681, %v682
  %v685 = vsel %vm552, %v677, %v684
  %v686 = vrot.slane %v681, 4
  %v688 = vshrl.u32 %v310, 16
  %v690 = vrot.slane %v688, 7
  %v691 = vshll.u32 %v310, 16
  %v693 = vor.u32 %v690, %v691
  %v694 = vsel %vm552, %v686, %v693
  %v695 = vrot.slane %v690, 4
  %v697 = vshrl.u32 %v311, 16
  %v699 = vrot.slane %v697, 7
  %v700 = vshll.u32 %v311, 16
  %v702 = vor.u32 %v699, %v700
  %v703 = vsel %vm552, %v695, %v702
  %v704 = vrot.slane %v699, 4
  %v706 = vshrl.u32 %v312, 16
  %v708 = vrot.slane %v706, 7
  %v709 = vshll.u32 %v312, 16
  %v711 = vor.u32 %v708, %v709
  %v712 = vsel %vm552, %v704, %v711
  %v713 = vrot.slane %v708, 4
  %v715 = vshrl.u32 %v313, 16
  %v717 = vrot.slane %v715, 7
  %v718 = vshll.u32 %v313, 16
  %v720 = vor.u32 %v717, %v718
  %v721 = vsel %vm552, %v713, %v720
  %v722 = vrot.slane %v717, 4
  %v724 = vshrl.u32 %v314, 16
  %v726 = vrot.slane %v724, 7
  %v727 = vshll.u32 %v314, 16
  %v729 = vor.u32 %v726, %v727
  %v730 = vsel %vm552, %v722, %v729
  %v731 = vrot.slane %v726, 4
  %v733 = vshrl.u32 %v315, 16
  %v735 = vrot.slane %v733, 7
  %v736 = vshll.u32 %v315, 16
  %v738 = vor.u32 %v735, %v736
  %v739 = vsel %vm552, %v731, %v738
  %v740 = vrot.slane %v735, 4
  %v742 = vshrl.u32 %v316, 16
  %v744 = vrot.slane %v742, 7
  %v745 = vshll.u32 %v316, 16
  %v747 = vor.u32 %v744, %v745
  %v748 = vsel %vm552, %v740, %v747
  %v749 = vrot.slane %v744, 4
  %v751 = vshrl.u32 %v317, 16
  %v753 = vrot.slane %v751, 7
  %v754 = vshll.u32 %v317, 16
  %v756 = vor.u32 %v753, %v754
  %v757 = vsel %vm552, %v749, %v756
  %v758 = vrot.slane %v753, 4
  %v760 = vshrl.u32 %v318, 16
  %v762 = vrot.slane %v760, 7
  %v763 = vshll.u32 %v318, 16
  %v765 = vor.u32 %v762, %v763
  %v766 = vsel %vm552, %v758, %v765
  %v767 = vrot.slane %v762, 4
  %v769 = vshrl.u32 %v319, 16
  %v771 = vrot.slane %v769, 7
  %v772 = vshll.u32 %v319, 16
  %v774 = vor.u32 %v771, %v772
  %v775 = vsel %vm552, %v767, %v774
  %v776 = vrot.slane %v771, 4
  %v778 = vshrl.u32 %v320, 16
  %v780 = vrot.slane %v778, 7
  %v781 = vshll.u32 %v320, 16
  %v783 = vor.u32 %v780, %v781
  %v784 = vsel %vm552, %v776, %v783
  %v785 = vrot.slane %v780, 4
  %v787 = vshrl.u32 %v321, 16
  %v789 = vrot.slane %v787, 7
  %v790 = vshll.u32 %v321, 16
  %v792 = vor.u32 %v789, %v790
  %v793 = vsel %vm552, %v785, %v792
  %v794 = vrot.slane %v789, 4
  %v796 = vshrl.u32 %v322, 16
  %v798 = vrot.slane %v796, 7
  %v799 = vshll.u32 %v322, 16
  %v801 = vor.u32 %v798, %v799
  %v802 = vsel %vm552, %v794, %v801
  %v803 = vrot.slane %v798, 4
  %v805 = vshrl.u32 %v323, 16
  %v807 = vrot.slane %v805, 7
  %v808 = vshll.u32 %v323, 16
  %v810 = vor.u32 %v807, %v808
  %v811 = vsel %vm552, %v803, %v810
  %v812 = vrot.slane %v807, 4
  %v814 = vshrl.u32 %v324, 16
  %v816 = vrot.slane %v814, 7
  %v817 = vshll.u32 %v324, 16
  %v819 = vor.u32 %v816, %v817
  %v820 = vsel %vm552, %v812, %v819
  %v821 = vrot.slane %v816, 4
  %v823 = vshrl.u32 %v325, 16
  %v825 = vrot.slane %v823, 7
  %v826 = vshll.u32 %v325, 16
  %v828 = vor.u32 %v825, %v826
  %v829 = vsel %vm552, %v821, %v828
  %v830 = vrot.slane %v825, 4
  %v832 = vshrl.u32 %v326, 16
  %v834 = vrot.slane %v832, 7
  %v835 = vshll.u32 %v326, 16
  %v837 = vor.u32 %v834, %v835
  %v838 = vsel %vm552, %v830, %v837
  %v839 = vrot.slane %v834, 4
  %v841 = vshrl.u32 %v327, 16
  %v843 = vrot.slane %v841, 7
  %v844 = vshll.u32 %v327, 16
  %v846 = vor.u32 %v843, %v844
  %v847 = vsel %vm552, %v839, %v846
  %v848 = vrot.slane %v843, 4
  %v850 = vshrl.u32 %v328, 16
  %v852 = vrot.slane %v850, 7
  %v853 = vshll.u32 %v328, 16
  %v855 = vor.u32 %v852, %v853
  %v856 = vsel %vm552, %v848, %v855
  %v857 = vrot.slane %v852, 4
  %v859 = vshrl.u32 %v329, 16
  %v861 = vrot.slane %v859, 7
  %v862 = vshll.u32 %v329, 16
  %v864 = vor.u32 %v861, %v862
  %v865 = vsel %vm552, %v857, %v864
  %v866 = vrot.slane %v861, 4
  %v868 = vshrl.u32 %v330, 16
  %v870 = vrot.slane %v868, 7
  %v871 = vshll.u32 %v330, 16
  %v873 = vor.u32 %v870, %v871
  %v874 = vsel %vm552, %v866, %v873
  %v875 = vrot.slane %v870, 4
  %v877 = vshrl.u32 %v331, 16
  %v879 = vrot.slane %v877, 7
  %v880 = vshll.u32 %v331, 16
  %v882 = vor.u32 %v879, %v880
  %v883 = vsel %vm552, %v875, %v882
  %v884 = vrot.slane %v879, 4
  %v886 = vshrl.u32 %v332, 16
  %v888 = vrot.slane %v886, 7
  %v889 = vshll.u32 %v332, 16
  %v891 = vor.u32 %v888, %v889
  %v892 = vsel %vm552, %v884, %v891
  %v893 = vrot.slane %v888, 4
  %v895 = vshrl.u32 %v333, 16
  %v897 = vrot.slane %v895, 7
  %v898 = vshll.u32 %v333, 16
  %v900 = vor.u32 %v897, %v898
  %v901 = vsel %vm552, %v893, %v900
  %v902 = vrot.slane %v897, 4
  %v904 = vshrl.u32 %v334, 16
  %v906 = vrot.slane %v904, 7
  %v907 = vshll.u32 %v334, 16
  %v909 = vor.u32 %v906, %v907
  %v910 = vsel %vm552, %v902, %v909
  %v911 = vrot.slane %v906, 4
  %v913 = vshrl.u32 %v335, 16
  %v915 = vrot.slane %v913, 7
  %v916 = vshll.u32 %v335, 16
  %v918 = vor.u32 %v915, %v916
  %v919 = vsel %vm552, %v911, %v918
  %v920 = vrot.slane %v915, 4
  %v922 = vshrl.u32 %v336, 16
  %v924 = vrot.slane %v922, 7
  %v925 = vshll.u32 %v336, 16
  %v927 = vor.u32 %v924, %v925
  %v928 = vsel %vm552, %v920, %v927
  %v929 = vrot.slane %v924, 4
  %v931 = vshrl.u32 %v337, 16
  %v933 = vrot.slane %v931, 7
  %v934 = vshll.u32 %v337, 16
  %v936 = vor.u32 %v933, %v934
  %v937 = vsel %vm552, %v929, %v936
  %v938 = vrot.slane %v933, 4
  %v940 = vshrl.u32 %v338, 16
  %v942 = vrot.slane %v940, 7
  %v943 = vshll.u32 %v338, 16
  %v945 = vor.u32 %v942, %v943
  %v946 = vsel %vm552, %v938, %v945
  %v947 = vrot.slane %v942, 4
  %v949 = vshrl.u32 %v339, 16
  %v951 = vrot.slane %v949, 7
  %v952 = vshll.u32 %v339, 16
  %v954 = vor.u32 %v951, %v952
  %v955 = vsel %vm552, %v947, %v954
  %v956 = vrot.slane %v951, 4
  %v958 = vshrl.u32 %v340, 16
  %v960 = vrot.slane %v958, 7
  %v961 = vshll.u32 %v340, 16
  %v963 = vor.u32 %v960, %v961
  %v964 = vsel %vm552, %v956, %v963
  %v965 = vrot.slane %v960, 4
  %v967 = vshrl.u32 %v341, 16
  %v969 = vrot.slane %v967, 7
  %v970 = vshll.u32 %v341, 16
  %v972 = vor.u32 %v969, %v970
  %v973 = vsel %vm552, %v965, %v972
  %v974 = vrot.slane %v969, 4
  %v976 = vshrl.u32 %v342, 16
  %v978 = vrot.slane %v976, 7
  %v979 = vshll.u32 %v342, 16
  %v981 = vor.u32 %v978, %v979
  %v982 = vsel %vm552, %v974, %v981
  %v983 = vrot.slane %v978, 4
  %v985 = vshrl.u32 %v343, 16
  %v987 = vrot.slane %v985, 7
  %v988 = vshll.u32 %v343, 16
  %v990 = vor.u32 %v987, %v988
  %v991 = vsel %vm552, %v983, %v990
  %v992 = vrot.slane %v987, 4
  %v994 = vshrl.u32 %v344, 16
  %v996 = vrot.slane %v994, 7
  %v997 = vshll.u32 %v344, 16
  %v999 = vor.u32 %v996, %v997
  %v1000 = vsel %vm552, %v992, %v999
  %v1001 = vrot.slane %v996, 4
  %v1003 = vshrl.u32 %v345, 16
  %v1005 = vrot.slane %v1003, 7
  %v1006 = vshll.u32 %v345, 16
  %v1008 = vor.u32 %v1005, %v1006
  %v1009 = vsel %vm552, %v1001, %v1008
  %v1010 = vrot.slane %v1005, 4
  %v1012 = vshrl.u32 %v346, 16
  %v1014 = vrot.slane %v1012, 7
  %v1015 = vshll.u32 %v346, 16
  %v1017 = vor.u32 %v1014, %v1015
  %v1018 = vsel %vm552, %v1010, %v1017
  %v1019 = vrot.slane %v1014, 4
  %v1021 = vshrl.u32 %v347, 16
  %v1023 = vrot.slane %v1021, 7
  %v1024 = vshll.u32 %v347, 16
  %v1026 = vor.u32 %v1023, %v1024
  %v1027 = vsel %vm552, %v1019, %v1026
  %v1028 = vrot.slane %v1023, 4
  %v1030 = vshrl.u32 %v348, 16
  %v1032 = vrot.slane %v1030, 7
  %v1033 = vshll.u32 %v348, 16
  %v1035 = vor.u32 %v1032, %v1033
  %v1036 = vsel %vm552, %v1028, %v1035
  %v1037 = vrot.slane %v1032, 4
  %v1039 = vshrl.u32 %v349, 16
  %v1041 = vrot.slane %v1039, 7
  %v1042 = vshll.u32 %v349, 16
  %v1044 = vor.u32 %v1041, %v1042
  %v1045 = vsel %vm552, %v1037, %v1044
  %v1046 = vrot.slane %v1041, 4
  %v1048 = vshrl.u32 %v350, 16
  %v1050 = vrot.slane %v1048, 7
  %v1051 = vshll.u32 %v350, 16
  %v1053 = vor.u32 %v1050, %v1051
  %v1054 = vsel %vm552, %v1046, %v1053
  %v1055 = vrot.slane %v1050, 4
  %v1057 = vshrl.u32 %v351, 16
  %v1059 = vrot.slane %v1057, 7
  %v1060 = vshll.u32 %v351, 16
  %v1062 = vor.u32 %v1059, %v1060
  %v1063 = vsel %vm552, %v1055, %v1062
  %v1064 = vrot.slane %v1059, 4
  %v1066 = vshrl.u32 %v352, 16
  %v1068 = vrot.slane %v1066, 7
  %v1069 = vshll.u32 %v352, 16
  %v1071 = vor.u32 %v1068, %v1069
  %v1072 = vsel %vm552, %v1064, %v1071
  %v1073 = vrot.slane %v1068, 4
  %v1075 = vshrl.u32 %v353, 16
  %v1077 = vrot.slane %v1075, 7
  %v1078 = vshll.u32 %v353, 16
  %v1080 = vor.u32 %v1077, %v1078
  %v1081 = vsel %vm552, %v1073, %v1080
  %v1082 = vrot.slane %v1077, 4
  %v1084 = vshrl.u32 %v354, 16
  %v1086 = vrot.slane %v1084, 7
  %v1087 = vshll.u32 %v354, 16
  %v1089 = vor.u32 %v1086, %v1087
  %v1090 = vsel %vm552, %v1082, %v1089
  %v1091 = vrot.slane %v1086, 4
  %v1093 = vshrl.u32 %v355, 16
  %v1095 = vrot.slane %v1093, 7
  %v1096 = vshll.u32 %v355, 16
  %v1098 = vor.u32 %v1095, %v1096
  %v1099 = vsel %vm552, %v1091, %v1098
  %v1100 = vrot.slane %v1095, 4
  %v1102 = vshrl.u32 %v356, 16
  %v1104 = vrot.slane %v1102, 7
  %v1105 = vshll.u32 %v356, 16
  %v1107 = vor.u32 %v1104, %v1105
  %v1108 = vsel %vm552, %v1100, %v1107
  %v1109 = vrot.slane %v1104, 4
  %v1111 = vshrl.u32 %v357, 16
  %v1113 = vrot.slane %v1111, 7
  %v1114 = vshll.u32 %v357, 16
  %v1116 = vor.u32 %v1113, %v1114
  %v1117 = vsel %vm552, %v1109, %v1116
  %v1118 = vrot.slane %v1113, 4
  %v1120 = vshrl.u32 %v358, 16
  %v1122 = vrot.slane %v1120, 7
  %v1123 = vshll.u32 %v358, 16
  %v1125 = vor.u32 %v1122, %v1123
  %v1126 = vsel %vm552, %v1118, %v1125
  %v1128 = vshrl.u32 %v359, 16
  %v1130 = vrot.slane %v1128, 7
  %v1131 = vshll.u32 %v359, 16
  %v1133 = vor.u32 %v1130, %v1131
  %v1134 = vrot.slane %v1130, 4
  %v1136 = vshrl.u32 %v360, 16
  %v1138 = vrot.slane %v1136, 7
  %v1139 = vshll.u32 %v360, 16
  %v1141 = vor.u32 %v1138, %v1139
  %v1142 = vsel %vm552, %v1134, %v1141
  %v1143 = vrot.slane %v1138, 4
  %v1145 = vshrl.u32 %v361, 16
  %v1147 = vrot.slane %v1145, 7
  %v1148 = vshll.u32 %v361, 16
  %v1150 = vor.u32 %v1147, %v1148
  %v1151 = vsel %vm552, %v1143, %v1150
  %v1152 = vrot.slane %v1147, 4
  %v1154 = vshrl.u32 %v362, 16
  %v1156 = vrot.slane %v1154, 7
  %v1157 = vshll.u32 %v362, 16
  %v1159 = vor.u32 %v1156, %v1157
  %v1160 = vsel %vm552, %v1152, %v1159
  %v1161 = vrot.slane %v1156, 4
  %v1163 = vshrl.u32 %v363, 16
  %v1165 = vrot.slane %v1163, 7
  %v1166 = vshll.u32 %v363, 16
  %v1168 = vor.u32 %v1165, %v1166
  %v1169 = vsel %vm552, %v1161, %v1168
  %v1170 = vrot.slane %v1165, 4
  %v1172 = vshrl.u32 %v364, 16
  %v1174 = vrot.slane %v1172, 7
  %v1175 = vshll.u32 %v364, 16
  %v1177 = vor.u32 %v1174, %v1175
  %v1178 = vsel %vm552, %v1170, %v1177
  %v1179 = vrot.slane %v1174, 4
  %v1181 = vshrl.u32 %v365, 16
  %v1183 = vrot.slane %v1181, 7
  %v1184 = vshll.u32 %v365, 16
  %v1186 = vor.u32 %v1183, %v1184
  %v1187 = vsel %vm552, %v1179, %v1186
  %v1188 = vrot.slane %v1183, 4
  %v1190 = vshrl.u32 %v366, 16
  %v1192 = vrot.slane %v1190, 7
  %v1193 = vshll.u32 %v366, 16
  %v1195 = vor.u32 %v1192, %v1193
  %v1196 = vsel %vm552, %v1188, %v1195
  %v1197 = vrot.slane %v1192, 4
  %v1199 = vshrl.u32 %v367, 16
  %v1201 = vrot.slane %v1199, 7
  %v1202 = vshll.u32 %v367, 16
  %v1204 = vor.u32 %v1201, %v1202
  %v1205 = vsel %vm552, %v1197, %v1204
  %v1206 = vrot.slane %v1201, 4
  %v1208 = vshrl.u32 %v368, 16
  %v1210 = vrot.slane %v1208, 7
  %v1211 = vshll.u32 %v368, 16
  %v1213 = vor.u32 %v1210, %v1211
  %v1214 = vsel %vm552, %v1206, %v1213
  %v1215 = vrot.slane %v1210, 4
  %v1217 = vshrl.u32 %v369, 16
  %v1219 = vrot.slane %v1217, 7
  %v1220 = vshll.u32 %v369, 16
  %v1222 = vor.u32 %v1219, %v1220
  %v1223 = vsel %vm552, %v1215, %v1222
  %v1224 = vrot.slane %v1219, 4
  %v1226 = vshrl.u32 %v370, 16
  %v1228 = vrot.slane %v1226, 7
  %v1229 = vshll.u32 %v370, 16
  %v1231 = vor.u32 %v1228, %v1229
  %v1232 = vsel %vm552, %v1224, %v1231
  %v1233 = vrot.slane %v1228, 4
  %v1235 = vshrl.u32 %v371, 16
  %v1237 = vrot.slane %v1235, 7
  %v1238 = vshll.u32 %v371, 16
  %v1240 = vor.u32 %v1237, %v1238
  %v1241 = vsel %vm552, %v1233, %v1240
  %v1242 = vrot.slane %v1237, 4
  %v1244 = vshrl.u32 %v372, 16
  %v1246 = vrot.slane %v1244, 7
  %v1247 = vshll.u32 %v372, 16
  %v1249 = vor.u32 %v1246, %v1247
  %v1250 = vsel %vm552, %v1242, %v1249
  %v1251 = vrot.slane %v1246, 4
  %v1253 = vshrl.u32 %v373, 16
  %v1255 = vrot.slane %v1253, 7
  %v1256 = vshll.u32 %v373, 16
  %v1258 = vor.u32 %v1255, %v1256
  %v1259 = vsel %vm552, %v1251, %v1258
  %v1260 = vrot.slane %v1255, 4
  %v1262 = vshrl.u32 %v374, 16
  %v1264 = vrot.slane %v1262, 7
  %v1265 = vshll.u32 %v374, 16
  %v1267 = vor.u32 %v1264, %v1265
  %v1268 = vsel %vm552, %v1260, %v1267
  %v1269 = vrot.slane %v1264, 4
  %v1271 = vshrl.u32 %v375, 16
  %v1273 = vrot.slane %v1271, 7
  %v1274 = vshll.u32 %v375, 16
  %v1276 = vor.u32 %v1273, %v1274
  %v1277 = vsel %vm552, %v1269, %v1276
  %v1278 = vrot.slane %v1273, 4
  %v1280 = vshrl.u32 %v376, 16
  %v1282 = vrot.slane %v1280, 7
  %v1283 = vshll.u32 %v376, 16
  %v1285 = vor.u32 %v1282, %v1283
  %v1286 = vsel %vm552, %v1278, %v1285
  %v1287 = vrot.slane %v1282, 4
  %v1289 = vshrl.u32 %v377, 16
  %v1291 = vrot.slane %v1289, 7
  %v1292 = vshll.u32 %v377, 16
  %v1294 = vor.u32 %v1291, %v1292
  %v1295 = vsel %vm552, %v1287, %v1294
  %v1296 = vrot.slane %v1291, 4
  %v1298 = vshrl.u32 %v378, 16
  %v1300 = vrot.slane %v1298, 7
  %v1301 = vshll.u32 %v378, 16
  %v1303 = vor.u32 %v1300, %v1301
  %v1304 = vsel %vm552, %v1296, %v1303
  %v1305 = vrot.slane %v1300, 4
  %v1307 = vshrl.u32 %v379, 16
  %v1309 = vrot.slane %v1307, 7
  %v1310 = vshll.u32 %v379, 16
  %v1312 = vor.u32 %v1309, %v1310
  %v1313 = vsel %vm552, %v1305, %v1312
  %v1314 = vrot.slane %v1309, 4
  %v1316 = vshrl.u32 %v380, 16
  %v1318 = vrot.slane %v1316, 7
  %v1319 = vshll.u32 %v380, 16
  %v1321 = vor.u32 %v1318, %v1319
  %v1322 = vsel %vm552, %v1314, %v1321
  %v1323 = vrot.slane %v1318, 4
  %v1325 = vshrl.u32 %v381, 16
  %v1327 = vrot.slane %v1325, 7
  %v1328 = vshll.u32 %v381, 16
  %v1330 = vor.u32 %v1327, %v1328
  %v1331 = vsel %vm552, %v1323, %v1330
  %v1332 = vrot.slane %v1327, 4
  %v1334 = vshrl.u32 %v382, 16
  %v1336 = vrot.slane %v1334, 7
  %v1337 = vshll.u32 %v382, 16
  %v1339 = vor.u32 %v1336, %v1337
  %v1340 = vsel %vm552, %v1332, %v1339
  %v1341 = vrot.slane %v1336, 4
  %v1343 = vshrl.u32 %v383, 16
  %v1345 = vrot.slane %v1343, 7
  %v1346 = vshll.u32 %v383, 16
  %v1348 = vor.u32 %v1345, %v1346
  %v1349 = vsel %vm552, %v1341, %v1348
  %v1350 = vrot.slane %v1345, 4
  %v1352 = vshrl.u32 %v384, 16
  %v1354 = vrot.slane %v1352, 7
  %v1355 = vshll.u32 %v384, 16
  %v1357 = vor.u32 %v1354, %v1355
  %v1358 = vsel %vm552, %v1350, %v1357
  %v1359 = vrot.slane %v1354, 4
  %v1361 = vshrl.u32 %v385, 16
  %v1363 = vrot.slane %v1361, 7
  %v1364 = vshll.u32 %v385, 16
  %v1366 = vor.u32 %v1363, %v1364
  %v1367 = vsel %vm552, %v1359, %v1366
  %v1368 = vrot.slane %v1363, 4
  %v1370 = vshrl.u32 %v386, 16
  %v1372 = vrot.slane %v1370, 7
  %v1373 = vshll.u32 %v386, 16
  %v1375 = vor.u32 %v1372, %v1373
  %v1376 = vsel %vm552, %v1368, %v1375
  %v1377 = vrot.slane %v1372, 4
  %v1379 = vshrl.u32 %v387, 16
  %v1381 = vrot.slane %v1379, 7
  %v1382 = vshll.u32 %v387, 16
  %v1384 = vor.u32 %v1381, %v1382
  %v1385 = vsel %vm552, %v1377, %v1384
  %v1386 = vrot.slane %v1381, 4
  %v1388 = vshrl.u32 %v388, 16
  %v1390 = vrot.slane %v1388, 7
  %v1391 = vshll.u32 %v388, 16
  %v1393 = vor.u32 %v1390, %v1391
  %v1394 = vsel %vm552, %v1386, %v1393
  %v1395 = vrot.slane %v1390, 4
  %v1397 = vshrl.u32 %v389, 16
  %v1399 = vrot.slane %v1397, 7
  %v1400 = vshll.u32 %v389, 16
  %v1402 = vor.u32 %v1399, %v1400
  %v1403 = vsel %vm552, %v1395, %v1402
  %v1404 = vrot.slane %v1399, 4
  %v1406 = vshrl.u32 %v390, 16
  %v1408 = vrot.slane %v1406, 7
  %v1409 = vshll.u32 %v390, 16
  %v1411 = vor.u32 %v1408, %v1409
  %v1412 = vsel %vm552, %v1404, %v1411
  %v1413 = vrot.slane %v1408, 4
  %v1415 = vshrl.u32 %v391, 16
  %v1417 = vrot.slane %v1415, 7
  %v1418 = vshll.u32 %v391, 16
  %v1420 = vor.u32 %v1417, %v1418
  %v1421 = vsel %vm552, %v1413, %v1420
  %v1422 = vrot.slane %v1417, 4
  %v1424 = vshrl.u32 %v392, 16
  %v1426 = vrot.slane %v1424, 7
  %v1427 = vshll.u32 %v392, 16
  %v1429 = vor.u32 %v1426, %v1427
  %v1430 = vsel %vm552, %v1422, %v1429
  %v1431 = vrot.slane %v1426, 4
  %v1433 = vshrl.u32 %v393, 16
  %v1435 = vrot.slane %v1433, 7
  %v1436 = vshll.u32 %v393, 16
  %v1438 = vor.u32 %v1435, %v1436
  %v1439 = vsel %vm552, %v1431, %v1438
  %v1440 = vrot.slane %v1435, 4
  %v1442 = vshrl.u32 %v394, 16
  %v1444 = vrot.slane %v1442, 7
  %v1445 = vshll.u32 %v394, 16
  %v1447 = vor.u32 %v1444, %v1445
  %v1448 = vsel %vm552, %v1440, %v1447
  %v1449 = vrot.slane %v1444, 4
  %v1451 = vshrl.u32 %v395, 16
  %v1453 = vrot.slane %v1451, 7
  %v1454 = vshll.u32 %v395, 16
  %v1456 = vor.u32 %v1453, %v1454
  %v1457 = vsel %vm552, %v1449, %v1456
  %v1458 = vrot.slane %v1453, 4
  %v1460 = vshrl.u32 %v396, 16
  %v1462 = vrot.slane %v1460, 7
  %v1463 = vshll.u32 %v396, 16
  %v1465 = vor.u32 %v1462, %v1463
  %v1466 = vsel %vm552, %v1458, %v1465
  %v1467 = vrot.slane %v1462, 4
  %v1469 = vshrl.u32 %v397, 16
  %v1471 = vrot.slane %v1469, 7
  %v1472 = vshll.u32 %v397, 16
  %v1474 = vor.u32 %v1471, %v1472
  %v1475 = vsel %vm552, %v1467, %v1474
  %v1476 = vrot.slane %v1471, 4
  %v1478 = vshrl.u32 %v398, 16
  %v1480 = vrot.slane %v1478, 7
  %v1481 = vshll.u32 %v398, 16
  %v1483 = vor.u32 %v1480, %v1481
  %v1484 = vsel %vm552, %v1476, %v1483
  %v1485 = vrot.slane %v1480, 4
  %v1487 = vshrl.u32 %v399, 16
  %v1489 = vrot.slane %v1487, 7
  %v1490 = vshll.u32 %v399, 16
  %v1492 = vor.u32 %v1489, %v1490
  %v1493 = vsel %vm552, %v1485, %v1492
  %v1494 = vrot.slane %v1489, 4
  %v1496 = vshrl.u32 %v400, 16
  %v1498 = vrot.slane %v1496, 7
  %v1499 = vshll.u32 %v400, 16
  %v1501 = vor.u32 %v1498, %v1499
  %v1502 = vsel %vm552, %v1494, %v1501
  %v1503 = vrot.slane %v1498, 4
  %v1505 = vshrl.u32 %v401, 16
  %v1507 = vrot.slane %v1505, 7
  %v1508 = vshll.u32 %v401, 16
  %v1510 = vor.u32 %v1507, %v1508
  %v1511 = vsel %vm552, %v1503, %v1510
  %v1512 = vrot.slane %v1507, 4
  %v1514 = vshrl.u32 %v402, 16
  %v1516 = vrot.slane %v1514, 7
  %v1517 = vshll.u32 %v402, 16
  %v1519 = vor.u32 %v1516, %v1517
  %v1520 = vsel %vm552, %v1512, %v1519
  %v1521 = vrot.slane %v1516, 4
  %v1523 = vshrl.u32 %v403, 16
  %v1525 = vrot.slane %v1523, 7
  %v1526 = vshll.u32 %v403, 16
  %v1528 = vor.u32 %v1525, %v1526
  %v1529 = vsel %vm552, %v1521, %v1528
  %v1530 = vrot.slane %v1525, 4
  %v1532 = vshrl.u32 %v404, 16
  %v1534 = vrot.slane %v1532, 7
  %v1535 = vshll.u32 %v404, 16
  %v1537 = vor.u32 %v1534, %v1535
  %v1538 = vsel %vm552, %v1530, %v1537
  %v1539 = vrot.slane %v1534, 4
  %v1541 = vshrl.u32 %v405, 16
  %v1543 = vrot.slane %v1541, 7
  %v1544 = vshll.u32 %v405, 16
  %v1546 = vor.u32 %v1543, %v1544
  %v1547 = vsel %vm552, %v1539, %v1546
  %v1548 = vrot.slane %v1543, 4
  %v1550 = vshrl.u32 %v406, 16
  %v1552 = vrot.slane %v1550, 7
  %v1553 = vshll.u32 %v406, 16
  %v1555 = vor.u32 %v1552, %v1553
  %v1556 = vsel %vm552, %v1548, %v1555
  %v1557 = vrot.slane %v1552, 4
  %v1559 = vshrl.u32 %v407, 16
  %v1561 = vrot.slane %v1559, 7
  %v1562 = vshll.u32 %v407, 16
  %v1564 = vor.u32 %v1561, %v1562
  %v1565 = vsel %vm552, %v1557, %v1564
  %v1566 = vrot.slane %v1561, 4
  %v1568 = vshrl.u32 %v408, 16
  %v1570 = vrot.slane %v1568, 7
  %v1571 = vshll.u32 %v408, 16
  %v1573 = vor.u32 %v1570, %v1571
  %v1574 = vsel %vm552, %v1566, %v1573
  %v1575 = vrot.slane %v1570, 4
  %v1577 = vshrl.u32 %v409, 16
  %v1579 = vrot.slane %v1577, 7
  %v1580 = vshll.u32 %v409, 16
  %v1582 = vor.u32 %v1579, %v1580
  %v1583 = vsel %vm552, %v1575, %v1582
  %v1584 = vrot.slane %v1579, 4
  %v1586 = vshrl.u32 %v410, 16
  %v1588 = vrot.slane %v1586, 7
  %v1589 = vshll.u32 %v410, 16
  %v1591 = vor.u32 %v1588, %v1589
  %v1592 = vsel %vm552, %v1584, %v1591
  %v1593 = vrot.slane %v1588, 4
  %v1595 = vshrl.u32 %v411, 16
  %v1597 = vrot.slane %v1595, 7
  %v1598 = vshll.u32 %v411, 16
  %v1600 = vor.u32 %v1597, %v1598
  %v1601 = vsel %vm552, %v1593, %v1600
  %v1602 = vrot.slane %v1597, 4
  %v1604 = vshrl.u32 %v412, 16
  %v1606 = vrot.slane %v1604, 7
  %v1607 = vshll.u32 %v412, 16
  %v1609 = vor.u32 %v1606, %v1607
  %v1610 = vsel %vm552, %v1602, %v1609
  %v1611 = vrot.slane %v1606, 4
  %v1613 = vshrl.u32 %v413, 16
  %v1615 = vrot.slane %v1613, 7
  %v1616 = vshll.u32 %v413, 16
  %v1618 = vor.u32 %v1615, %v1616
  %v1619 = vsel %vm552, %v1611, %v1618
  %v1620 = vrot.slane %v1615, 4
  %v1622 = vshrl.u32 %v414, 16
  %v1624 = vrot.slane %v1622, 7
  %v1625 = vshll.u32 %v414, 16
  %v1627 = vor.u32 %v1624, %v1625
  %v1628 = vsel %vm552, %v1620, %v1627
  %v1629 = vrot.slane %v1624, 4
  %v1631 = vshrl.u32 %v415, 16
  %v1633 = vrot.slane %v1631, 7
  %v1634 = vshll.u32 %v415, 16
  %v1636 = vor.u32 %v1633, %v1634
  %v1637 = vsel %vm552, %v1629, %v1636
  %v1638 = vrot.slane %v1633, 4
  %v1640 = vshrl.u32 %v416, 16
  %v1642 = vrot.slane %v1640, 7
  %v1643 = vshll.u32 %v416, 16
  %v1645 = vor.u32 %v1642, %v1643
  %v1646 = vsel %vm552, %v1638, %v1645
  %v1647 = vrot.slane %v1642, 4
  %v1649 = vshrl.u32 %v417, 16
  %v1651 = vrot.slane %v1649, 7
  %v1652 = vshll.u32 %v417, 16
  %v1654 = vor.u32 %v1651, %v1652
  %v1655 = vsel %vm552, %v1647, %v1654
  %v1656 = vrot.slane %v1651, 4
  %v1658 = vshrl.u32 %v418, 16
  %v1660 = vrot.slane %v1658, 7
  %v1661 = vshll.u32 %v418, 16
  %v1663 = vor.u32 %v1660, %v1661
  %v1664 = vsel %vm552, %v1656, %v1663
  %v1665 = vrot.slane %v1660, 4
  %v1667 = vshrl.u32 %v419, 16
  %v1669 = vrot.slane %v1667, 7
  %v1670 = vshll.u32 %v419, 16
  %v1672 = vor.u32 %v1669, %v1670
  %v1673 = vsel %vm552, %v1665, %v1672
  %v1674 = vrot.slane %v1669, 4
  %v1676 = vshrl.u32 %v420, 16
  %v1678 = vrot.slane %v1676, 7
  %v1679 = vshll.u32 %v420, 16
  %v1681 = vor.u32 %v1678, %v1679
  %v1682 = vsel %vm552, %v1674, %v1681
  %v1683 = vrot.slane %v1678, 4
  %v1685 = vshrl.u32 %v421, 16
  %v1687 = vrot.slane %v1685, 7
  %v1688 = vshll.u32 %v421, 16
  %v1690 = vor.u32 %v1687, %v1688
  %v1691 = vsel %vm552, %v1683, %v1690
  %v1692 = vrot.slane %v1687, 4
  %v1694 = vshrl.u32 %v422, 16
  %v1696 = vrot.slane %v1694, 7
  %v1697 = vshll.u32 %v422, 16
  %v1699 = vor.u32 %v1696, %v1697
  %v1700 = vsel %vm552, %v1692, %v1699
  %v1702 = vshrl.u32 %v423, 16
  %v1704 = vrot.slane %v1702, 7
  %v1705 = vshll.u32 %v423, 16
  %v1707 = vor.u32 %v1704, %v1705
  %v1708 = vrot.slane %v1704, 4
  %v1710 = vshrl.u32 %v424, 16
  %v1712 = vrot.slane %v1710, 7
  %v1713 = vshll.u32 %v424, 16
  %v1715 = vor.u32 %v1712, %v1713
  %v1716 = vsel %vm552, %v1708, %v1715
  %v1717 = vrot.slane %v1712, 4
  %v1719 = vshrl.u32 %v425, 16
  %v1721 = vrot.slane %v1719, 7
  %v1722 = vshll.u32 %v425, 16
  %v1724 = vor.u32 %v1721, %v1722
  %v1725 = vsel %vm552, %v1717, %v1724
  %v1726 = vrot.slane %v1721, 4
  %v1728 = vshrl.u32 %v426, 16
  %v1730 = vrot.slane %v1728, 7
  %v1731 = vshll.u32 %v426, 16
  %v1733 = vor.u32 %v1730, %v1731
  %v1734 = vsel %vm552, %v1726, %v1733
  %v1735 = vrot.slane %v1730, 4
  %v1737 = vshrl.u32 %v427, 16
  %v1739 = vrot.slane %v1737, 7
  %v1740 = vshll.u32 %v427, 16
  %v1742 = vor.u32 %v1739, %v1740
  %v1743 = vsel %vm552, %v1735, %v1742
  %v1744 = vrot.slane %v1739, 4
  %v1746 = vshrl.u32 %v428, 16
  %v1748 = vrot.slane %v1746, 7
  %v1749 = vshll.u32 %v428, 16
  %v1751 = vor.u32 %v1748, %v1749
  %v1752 = vsel %vm552, %v1744, %v1751
  %v1753 = vrot.slane %v1748, 4
  %v1755 = vshrl.u32 %v429, 16
  %v1757 = vrot.slane %v1755, 7
  %v1758 = vshll.u32 %v429, 16
  %v1760 = vor.u32 %v1757, %v1758
  %v1761 = vsel %vm552, %v1753, %v1760
  %v1762 = vrot.slane %v1757, 4
  %v1764 = vshrl.u32 %v430, 16
  %v1766 = vrot.slane %v1764, 7
  %v1767 = vshll.u32 %v430, 16
  %v1769 = vor.u32 %v1766, %v1767
  %v1770 = vsel %vm552, %v1762, %v1769
  %v1771 = vrot.slane %v1766, 4
  %v1773 = vshrl.u32 %v431, 16
  %v1775 = vrot.slane %v1773, 7
  %v1776 = vshll.u32 %v431, 16
  %v1778 = vor.u32 %v1775, %v1776
  %v1779 = vsel %vm552, %v1771, %v1778
  %v1780 = vrot.slane %v1775, 4
  %v1782 = vshrl.u32 %v432, 16
  %v1784 = vrot.slane %v1782, 7
  %v1785 = vshll.u32 %v432, 16
  %v1787 = vor.u32 %v1784, %v1785
  %v1788 = vsel %vm552, %v1780, %v1787
  %v1789 = vrot.slane %v1784, 4
  %v1791 = vshrl.u32 %v433, 16
  %v1793 = vrot.slane %v1791, 7
  %v1794 = vshll.u32 %v433, 16
  %v1796 = vor.u32 %v1793, %v1794
  %v1797 = vsel %vm552, %v1789, %v1796
  %v1798 = vrot.slane %v1793, 4
  %v1800 = vshrl.u32 %v434, 16
  %v1802 = vrot.slane %v1800, 7
  %v1803 = vshll.u32 %v434, 16
  %v1805 = vor.u32 %v1802, %v1803
  %v1806 = vsel %vm552, %v1798, %v1805
  %v1807 = vrot.slane %v1802, 4
  %v1809 = vshrl.u32 %v435, 16
  %v1811 = vrot.slane %v1809, 7
  %v1812 = vshll.u32 %v435, 16
  %v1814 = vor.u32 %v1811, %v1812
  %v1815 = vsel %vm552, %v1807, %v1814
  %v1816 = vrot.slane %v1811, 4
  %v1818 = vshrl.u32 %v436, 16
  %v1820 = vrot.slane %v1818, 7
  %v1821 = vshll.u32 %v436, 16
  %v1823 = vor.u32 %v1820, %v1821
  %v1824 = vsel %vm552, %v1816, %v1823
  %v1825 = vrot.slane %v1820, 4
  %v1827 = vshrl.u32 %v437, 16
  %v1829 = vrot.slane %v1827, 7
  %v1830 = vshll.u32 %v437, 16
  %v1832 = vor.u32 %v1829, %v1830
  %v1833 = vsel %vm552, %v1825, %v1832
  %v1834 = vrot.slane %v1829, 4
  %v1836 = vshrl.u32 %v438, 16
  %v1838 = vrot.slane %v1836, 7
  %v1839 = vshll.u32 %v438, 16
  %v1841 = vor.u32 %v1838, %v1839
  %v1842 = vsel %vm552, %v1834, %v1841
  %v1843 = vrot.slane %v1838, 4
  %v1845 = vshrl.u32 %v439, 16
  %v1847 = vrot.slane %v1845, 7
  %v1848 = vshll.u32 %v439, 16
  %v1850 = vor.u32 %v1847, %v1848
  %v1851 = vsel %vm552, %v1843, %v1850
  %v1852 = vrot.slane %v1847, 4
  %v1854 = vshrl.u32 %v440, 16
  %v1856 = vrot.slane %v1854, 7
  %v1857 = vshll.u32 %v440, 16
  %v1859 = vor.u32 %v1856, %v1857
  %v1860 = vsel %vm552, %v1852, %v1859
  %v1861 = vrot.slane %v1856, 4
  %v1863 = vshrl.u32 %v441, 16
  %v1865 = vrot.slane %v1863, 7
  %v1866 = vshll.u32 %v441, 16
  %v1868 = vor.u32 %v1865, %v1866
  %v1869 = vsel %vm552, %v1861, %v1868
  %v1870 = vrot.slane %v1865, 4
  %v1872 = vshrl.u32 %v442, 16
  %v1874 = vrot.slane %v1872, 7
  %v1875 = vshll.u32 %v442, 16
  %v1877 = vor.u32 %v1874, %v1875
  %v1878 = vsel %vm552, %v1870, %v1877
  %v1879 = vrot.slane %v1874, 4
  %v1881 = vshrl.u32 %v443, 16
  %v1883 = vrot.slane %v1881, 7
  %v1884 = vshll.u32 %v443, 16
  %v1886 = vor.u32 %v1883, %v1884
  %v1887 = vsel %vm552, %v1879, %v1886
  %v1888 = vrot.slane %v1883, 4
  %v1890 = vshrl.u32 %v444, 16
  %v1892 = vrot.slane %v1890, 7
  %v1893 = vshll.u32 %v444, 16
  %v1895 = vor.u32 %v1892, %v1893
  %v1896 = vsel %vm552, %v1888, %v1895
  %v1897 = vrot.slane %v1892, 4
  %v1899 = vshrl.u32 %v445, 16
  %v1901 = vrot.slane %v1899, 7
  %v1902 = vshll.u32 %v445, 16
  %v1904 = vor.u32 %v1901, %v1902
  %v1905 = vsel %vm552, %v1897, %v1904
  %v1906 = vrot.slane %v1901, 4
  %v1908 = vshrl.u32 %v446, 16
  %v1910 = vrot.slane %v1908, 7
  %v1911 = vshll.u32 %v446, 16
  %v1913 = vor.u32 %v1910, %v1911
  %v1914 = vsel %vm552, %v1906, %v1913
  %v1915 = vrot.slane %v1910, 4
  %v1917 = vshrl.u32 %v447, 16
  %v1919 = vrot.slane %v1917, 7
  %v1920 = vshll.u32 %v447, 16
  %v1922 = vor.u32 %v1919, %v1920
  %v1923 = vsel %vm552, %v1915, %v1922
  %v1924 = vrot.slane %v1919, 4
  %v1926 = vshrl.u32 %v448, 16
  %v1928 = vrot.slane %v1926, 7
  %v1929 = vshll.u32 %v448, 16
  %v1931 = vor.u32 %v1928, %v1929
  %v1932 = vsel %vm552, %v1924, %v1931
  %v1933 = vrot.slane %v1928, 4
  %v1935 = vshrl.u32 %v449, 16
  %v1937 = vrot.slane %v1935, 7
  %v1938 = vshll.u32 %v449, 16
  %v1940 = vor.u32 %v1937, %v1938
  %v1941 = vsel %vm552, %v1933, %v1940
  %v1942 = vrot.slane %v1937, 4
  %v1944 = vshrl.u32 %v450, 16
  %v1946 = vrot.slane %v1944, 7
  %v1947 = vshll.u32 %v450, 16
  %v1949 = vor.u32 %v1946, %v1947
  %v1950 = vsel %vm552, %v1942, %v1949
  %v1951 = vrot.slane %v1946, 4
  %v1953 = vshrl.u32 %v451, 16
  %v1955 = vrot.slane %v1953, 7
  %v1956 = vshll.u32 %v451, 16
  %v1958 = vor.u32 %v1955, %v1956
  %v1959 = vsel %vm552, %v1951, %v1958
  %v1960 = vrot.slane %v1955, 4
  %v1962 = vshrl.u32 %v452, 16
  %v1964 = vrot.slane %v1962, 7
  %v1965 = vshll.u32 %v452, 16
  %v1967 = vor.u32 %v1964, %v1965
  %v1968 = vsel %vm552, %v1960, %v1967
  %v1969 = vrot.slane %v1964, 4
  %v1971 = vshrl.u32 %v453, 16
  %v1973 = vrot.slane %v1971, 7
  %v1974 = vshll.u32 %v453, 16
  %v1976 = vor.u32 %v1973, %v1974
  %v1977 = vsel %vm552, %v1969, %v1976
  %v1978 = vrot.slane %v1973, 4
  %v1980 = vshrl.u32 %v454, 16
  %v1982 = vrot.slane %v1980, 7
  %v1983 = vshll.u32 %v454, 16
  %v1985 = vor.u32 %v1982, %v1983
  %v1986 = vsel %vm552, %v1978, %v1985
  %v1987 = vrot.slane %v1982, 4
  %v1989 = vshrl.u32 %v455, 16
  %v1991 = vrot.slane %v1989, 7
  %v1992 = vshll.u32 %v455, 16
  %v1994 = vor.u32 %v1991, %v1992
  %v1995 = vsel %vm552, %v1987, %v1994
  %v1996 = vrot.slane %v1991, 4
  %v1998 = vshrl.u32 %v456, 16
  %v2000 = vrot.slane %v1998, 7
  %v2001 = vshll.u32 %v456, 16
  %v2003 = vor.u32 %v2000, %v2001
  %v2004 = vsel %vm552, %v1996, %v2003
  %v2005 = vrot.slane %v2000, 4
  %v2007 = vshrl.u32 %v457, 16
  %v2009 = vrot.slane %v2007, 7
  %v2010 = vshll.u32 %v457, 16
  %v2012 = vor.u32 %v2009, %v2010
  %v2013 = vsel %vm552, %v2005, %v2012
  %v2014 = vrot.slane %v2009, 4
  %v2016 = vshrl.u32 %v458, 16
  %v2018 = vrot.slane %v2016, 7
  %v2019 = vshll.u32 %v458, 16
  %v2021 = vor.u32 %v2018, %v2019
  %v2022 = vsel %vm552, %v2014, %v2021
  %v2023 = vrot.slane %v2018, 4
  %v2025 = vshrl.u32 %v459, 16
  %v2027 = vrot.slane %v2025, 7
  %v2028 = vshll.u32 %v459, 16
  %v2030 = vor.u32 %v2027, %v2028
  %v2031 = vsel %vm552, %v2023, %v2030
  %v2032 = vrot.slane %v2027, 4
  %v2034 = vshrl.u32 %v460, 16
  %v2036 = vrot.slane %v2034, 7
  %v2037 = vshll.u32 %v460, 16
  %v2039 = vor.u32 %v2036, %v2037
  %v2040 = vsel %vm552, %v2032, %v2039
  %v2041 = vrot.slane %v2036, 4
  %v2043 = vshrl.u32 %v461, 16
  %v2045 = vrot.slane %v2043, 7
  %v2046 = vshll.u32 %v461, 16
  %v2048 = vor.u32 %v2045, %v2046
  %v2049 = vsel %vm552, %v2041, %v2048
  %v2050 = vrot.slane %v2045, 4
  %v2052 = vshrl.u32 %v462, 16
  %v2054 = vrot.slane %v2052, 7
  %v2055 = vshll.u32 %v462, 16
  %v2057 = vor.u32 %v2054, %v2055
  %v2058 = vsel %vm552, %v2050, %v2057
  %v2059 = vrot.slane %v2054, 4
  %v2061 = vshrl.u32 %v463, 16
  %v2063 = vrot.slane %v2061, 7
  %v2064 = vshll.u32 %v463, 16
  %v2066 = vor.u32 %v2063, %v2064
  %v2067 = vsel %vm552, %v2059, %v2066
  %v2068 = vrot.slane %v2063, 4
  %v2070 = vshrl.u32 %v464, 16
  %v2072 = vrot.slane %v2070, 7
  %v2073 = vshll.u32 %v464, 16
  %v2075 = vor.u32 %v2072, %v2073
  %v2076 = vsel %vm552, %v2068, %v2075
  %v2077 = vrot.slane %v2072, 4
  %v2079 = vshrl.u32 %v465, 16
  %v2081 = vrot.slane %v2079, 7
  %v2082 = vshll.u32 %v465, 16
  %v2084 = vor.u32 %v2081, %v2082
  %v2085 = vsel %vm552, %v2077, %v2084
  %v2086 = vrot.slane %v2081, 4
  %v2088 = vshrl.u32 %v466, 16
  %v2090 = vrot.slane %v2088, 7
  %v2091 = vshll.u32 %v466, 16
  %v2093 = vor.u32 %v2090, %v2091
  %v2094 = vsel %vm552, %v2086, %v2093
  %v2095 = vrot.slane %v2090, 4
  %v2097 = vshrl.u32 %v467, 16
  %v2099 = vrot.slane %v2097, 7
  %v2100 = vshll.u32 %v467, 16
  %v2102 = vor.u32 %v2099, %v2100
  %v2103 = vsel %vm552, %v2095, %v2102
  %v2104 = vrot.slane %v2099, 4
  %v2106 = vshrl.u32 %v468, 16
  %v2108 = vrot.slane %v2106, 7
  %v2109 = vshll.u32 %v468, 16
  %v2111 = vor.u32 %v2108, %v2109
  %v2112 = vsel %vm552, %v2104, %v2111
  %v2113 = vrot.slane %v2108, 4
  %v2115 = vshrl.u32 %v469, 16
  %v2117 = vrot.slane %v2115, 7
  %v2118 = vshll.u32 %v469, 16
  %v2120 = vor.u32 %v2117, %v2118
  %v2121 = vsel %vm552, %v2113, %v2120
  %v2122 = vrot.slane %v2117, 4
  %v2124 = vshrl.u32 %v470, 16
  %v2126 = vrot.slane %v2124, 7
  %v2127 = vshll.u32 %v470, 16
  %v2129 = vor.u32 %v2126, %v2127
  %v2130 = vsel %vm552, %v2122, %v2129
  %v2131 = vrot.slane %v2126, 4
  %v2133 = vshrl.u32 %v471, 16
  %v2135 = vrot.slane %v2133, 7
  %v2136 = vshll.u32 %v471, 16
  %v2138 = vor.u32 %v2135, %v2136
  %v2139 = vsel %vm552, %v2131, %v2138
  %v2140 = vrot.slane %v2135, 4
  %v2142 = vshrl.u32 %v472, 16
  %v2144 = vrot.slane %v2142, 7
  %v2145 = vshll.u32 %v472, 16
  %v2147 = vor.u32 %v2144, %v2145
  %v2148 = vsel %vm552, %v2140, %v2147
  %v2149 = vrot.slane %v2144, 4
  %v2151 = vshrl.u32 %v473, 16
  %v2153 = vrot.slane %v2151, 7
  %v2154 = vshll.u32 %v473, 16
  %v2156 = vor.u32 %v2153, %v2154
  %v2157 = vsel %vm552, %v2149, %v2156
  %v2158 = vrot.slane %v2153, 4
  %v2160 = vshrl.u32 %v474, 16
  %v2162 = vrot.slane %v2160, 7
  %v2163 = vshll.u32 %v474, 16
  %v2165 = vor.u32 %v2162, %v2163
  %v2166 = vsel %vm552, %v2158, %v2165
  %v2167 = vrot.slane %v2162, 4
  %v2169 = vshrl.u32 %v475, 16
  %v2171 = vrot.slane %v2169, 7
  %v2172 = vshll.u32 %v475, 16
  %v2174 = vor.u32 %v2171, %v2172
  %v2175 = vsel %vm552, %v2167, %v2174
  %v2176 = vrot.slane %v2171, 4
  %v2178 = vshrl.u32 %v476, 16
  %v2180 = vrot.slane %v2178, 7
  %v2181 = vshll.u32 %v476, 16
  %v2183 = vor.u32 %v2180, %v2181
  %v2184 = vsel %vm552, %v2176, %v2183
  %v2185 = vrot.slane %v2180, 4
  %v2187 = vshrl.u32 %v477, 16
  %v2189 = vrot.slane %v2187, 7
  %v2190 = vshll.u32 %v477, 16
  %v2192 = vor.u32 %v2189, %v2190
  %v2193 = vsel %vm552, %v2185, %v2192
  %v2194 = vrot.slane %v2189, 4
  %v2196 = vshrl.u32 %v478, 16
  %v2198 = vrot.slane %v2196, 7
  %v2199 = vshll.u32 %v478, 16
  %v2201 = vor.u32 %v2198, %v2199
  %v2202 = vsel %vm552, %v2194, %v2201
  %v2203 = vrot.slane %v2198, 4
  %v2205 = vshrl.u32 %v479, 16
  %v2207 = vrot.slane %v2205, 7
  %v2208 = vshll.u32 %v479, 16
  %v2210 = vor.u32 %v2207, %v2208
  %v2211 = vsel %vm552, %v2203, %v2210
  %v2212 = vrot.slane %v2207, 4
  %v2214 = vshrl.u32 %v480, 16
  %v2216 = vrot.slane %v2214, 7
  %v2217 = vshll.u32 %v480, 16
  %v2219 = vor.u32 %v2216, %v2217
  %v2220 = vsel %vm552, %v2212, %v2219
  %v2221 = vrot.slane %v2216, 4
  %v2223 = vshrl.u32 %v481, 16
  %v2225 = vrot.slane %v2223, 7
  %v2226 = vshll.u32 %v481, 16
  %v2228 = vor.u32 %v2225, %v2226
  %v2229 = vsel %vm552, %v2221, %v2228
  %v2230 = vrot.slane %v2225, 4
  %v2232 = vshrl.u32 %v482, 16
  %v2234 = vrot.slane %v2232, 7
  %v2235 = vshll.u32 %v482, 16
  %v2237 = vor.u32 %v2234, %v2235
  %v2238 = vsel %vm552, %v2230, %v2237
  %v2239 = vrot.slane %v2234, 4
  %v2241 = vshrl.u32 %v483, 16
  %v2243 = vrot.slane %v2241, 7
  %v2244 = vshll.u32 %v483, 16
  %v2246 = vor.u32 %v2243, %v2244
  %v2247 = vsel %vm552, %v2239, %v2246
  %v2248 = vrot.slane %v2243, 4
  %v2250 = vshrl.u32 %v484, 16
  %v2252 = vrot.slane %v2250, 7
  %v2253 = vshll.u32 %v484, 16
  %v2255 = vor.u32 %v2252, %v2253
  %v2256 = vsel %vm552, %v2248, %v2255
  %v2257 = vrot.slane %v2252, 4
  %v2259 = vshrl.u32 %v485, 16
  %v2261 = vrot.slane %v2259, 7
  %v2262 = vshll.u32 %v485, 16
  %v2264 = vor.u32 %v2261, %v2262
  %v2265 = vsel %vm552, %v2257, %v2264
  %v2266 = vrot.slane %v2261, 4
  %v2268 = vshrl.u32 %v486, 16
  %v2270 = vrot.slane %v2268, 7
  %v2271 = vshll.u32 %v486, 16
  %v2273 = vor.u32 %v2270, %v2271
  %v2274 = vsel %vm552, %v2266, %v2273
  %v2276 = vshrl.u32 %v487, 16
  %v2278 = vrot.slane %v2276, 7
  %v2279 = vshll.u32 %v487, 16
  %v2281 = vor.u32 %v2278, %v2279
  %v2282 = vrot.slane %v2278, 4
  %v2284 = vshrl.u32 %v488, 16
  %v2286 = vrot.slane %v2284, 7
  %v2287 = vshll.u32 %v488, 16
  %v2289 = vor.u32 %v2286, %v2287
  %v2290 = vsel %vm552, %v2282, %v2289
  %v2291 = vrot.slane %v2286, 4
  %v2293 = vshrl.u32 %v489, 16
  %v2295 = vrot.slane %v2293, 7
  %v2296 = vshll.u32 %v489, 16
  %v2298 = vor.u32 %v2295, %v2296
  %v2299 = vsel %vm552, %v2291, %v2298
  %v2300 = vrot.slane %v2295, 4
  %v2302 = vshrl.u32 %v490, 16
  %v2304 = vrot.slane %v2302, 7
  %v2305 = vshll.u32 %v490, 16
  %v2307 = vor.u32 %v2304, %v2305
  %v2308 = vsel %vm552, %v2300, %v2307
  %v2309 = vrot.slane %v2304, 4
  %v2311 = vshrl.u32 %v491, 16
  %v2313 = vrot.slane %v2311, 7
  %v2314 = vshll.u32 %v491, 16
  %v2316 = vor.u32 %v2313, %v2314
  %v2317 = vsel %vm552, %v2309, %v2316
  %v2318 = vrot.slane %v2313, 4
  %v2320 = vshrl.u32 %v492, 16
  %v2322 = vrot.slane %v2320, 7
  %v2323 = vshll.u32 %v492, 16
  %v2325 = vor.u32 %v2322, %v2323
  %v2326 = vsel %vm552, %v2318, %v2325
  %v2327 = vrot.slane %v2322, 4
  %v2329 = vshrl.u32 %v493, 16
  %v2331 = vrot.slane %v2329, 7
  %v2332 = vshll.u32 %v493, 16
  %v2334 = vor.u32 %v2331, %v2332
  %v2335 = vsel %vm552, %v2327, %v2334
  %v2336 = vrot.slane %v2331, 4
  %v2338 = vshrl.u32 %v494, 16
  %v2340 = vrot.slane %v2338, 7
  %v2341 = vshll.u32 %v494, 16
  %v2343 = vor.u32 %v2340, %v2341
  %v2344 = vsel %vm552, %v2336, %v2343
  %v2345 = vrot.slane %v2340, 4
  %v2347 = vshrl.u32 %v495, 16
  %v2349 = vrot.slane %v2347, 7
  %v2350 = vshll.u32 %v495, 16
  %v2352 = vor.u32 %v2349, %v2350
  %v2353 = vsel %vm552, %v2345, %v2352
  %v2354 = vrot.slane %v2349, 4
  %v2356 = vshrl.u32 %v496, 16
  %v2358 = vrot.slane %v2356, 7
  %v2359 = vshll.u32 %v496, 16
  %v2361 = vor.u32 %v2358, %v2359
  %v2362 = vsel %vm552, %v2354, %v2361
  %v2363 = vrot.slane %v2358, 4
  %v2365 = vshrl.u32 %v497, 16
  %v2367 = vrot.slane %v2365, 7
  %v2368 = vshll.u32 %v497, 16
  %v2370 = vor.u32 %v2367, %v2368
  %v2371 = vsel %vm552, %v2363, %v2370
  %v2372 = vrot.slane %v2367, 4
  %v2374 = vshrl.u32 %v498, 16
  %v2376 = vrot.slane %v2374, 7
  %v2377 = vshll.u32 %v498, 16
  %v2379 = vor.u32 %v2376, %v2377
  %v2380 = vsel %vm552, %v2372, %v2379
  %v2381 = vrot.slane %v2376, 4
  %v2383 = vshrl.u32 %v499, 16
  %v2385 = vrot.slane %v2383, 7
  %v2386 = vshll.u32 %v499, 16
  %v2388 = vor.u32 %v2385, %v2386
  %v2389 = vsel %vm552, %v2381, %v2388
  %v2390 = vrot.slane %v2385, 4
  %v2392 = vshrl.u32 %v500, 16
  %v2394 = vrot.slane %v2392, 7
  %v2395 = vshll.u32 %v500, 16
  %v2397 = vor.u32 %v2394, %v2395
  %v2398 = vsel %vm552, %v2390, %v2397
  %v2399 = vrot.slane %v2394, 4
  %v2401 = vshrl.u32 %v501, 16
  %v2403 = vrot.slane %v2401, 7
  %v2404 = vshll.u32 %v501, 16
  %v2406 = vor.u32 %v2403, %v2404
  %v2407 = vsel %vm552, %v2399, %v2406
  %v2408 = vrot.slane %v2403, 4
  %v2410 = vshrl.u32 %v502, 16
  %v2412 = vrot.slane %v2410, 7
  %v2413 = vshll.u32 %v502, 16
  %v2415 = vor.u32 %v2412, %v2413
  %v2416 = vsel %vm552, %v2408, %v2415
  %v2417 = vrot.slane %v2412, 4
  %v2419 = vshrl.u32 %v503, 16
  %v2421 = vrot.slane %v2419, 7
  %v2422 = vshll.u32 %v503, 16
  %v2424 = vor.u32 %v2421, %v2422
  %v2425 = vsel %vm552, %v2417, %v2424
  %v2426 = vrot.slane %v2421, 4
  %v2428 = vshrl.u32 %v504, 16
  %v2430 = vrot.slane %v2428, 7
  %v2431 = vshll.u32 %v504, 16
  %v2433 = vor.u32 %v2430, %v2431
  %v2434 = vsel %vm552, %v2426, %v2433
  %v2435 = vrot.slane %v2430, 4
  %v2437 = vshrl.u32 %v505, 16
  %v2439 = vrot.slane %v2437, 7
  %v2440 = vshll.u32 %v505, 16
  %v2442 = vor.u32 %v2439, %v2440
  %v2443 = vsel %vm552, %v2435, %v2442
  %v2444 = vrot.slane %v2439, 4
  %v2446 = vshrl.u32 %v506, 16
  %v2448 = vrot.slane %v2446, 7
  %v2449 = vshll.u32 %v506, 16
  %v2451 = vor.u32 %v2448, %v2449
  %v2452 = vsel %vm552, %v2444, %v2451
  %v2453 = vrot.slane %v2448, 4
  %v2455 = vshrl.u32 %v507, 16
  %v2457 = vrot.slane %v2455, 7
  %v2458 = vshll.u32 %v507, 16
  %v2460 = vor.u32 %v2457, %v2458
  %v2461 = vsel %vm552, %v2453, %v2460
  %v2462 = vrot.slane %v2457, 4
  %v2464 = vshrl.u32 %v508, 16
  %v2466 = vrot.slane %v2464, 7
  %v2467 = vshll.u32 %v508, 16
  %v2469 = vor.u32 %v2466, %v2467
  %v2470 = vsel %vm552, %v2462, %v2469
  %v2471 = vrot.slane %v2466, 4
  %v2473 = vshrl.u32 %v509, 16
  %v2475 = vrot.slane %v2473, 7
  %v2476 = vshll.u32 %v509, 16
  %v2478 = vor.u32 %v2475, %v2476
  %v2479 = vsel %vm552, %v2471, %v2478
  %v2480 = vrot.slane %v2475, 4
  %v2482 = vshrl.u32 %v510, 16
  %v2484 = vrot.slane %v2482, 7
  %v2485 = vshll.u32 %v510, 16
  %v2487 = vor.u32 %v2484, %v2485
  %v2488 = vsel %vm552, %v2480, %v2487
  %v2489 = vrot.slane %v2484, 4
  %v2491 = vshrl.u32 %v511, 16
  %v2493 = vrot.slane %v2491, 7
  %v2494 = vshll.u32 %v511, 16
  %v2496 = vor.u32 %v2493, %v2494
  %v2497 = vsel %vm552, %v2489, %v2496
  %v2498 = vrot.slane %v2493, 4
  %v2500 = vshrl.u32 %v512, 16
  %v2502 = vrot.slane %v2500, 7
  %v2503 = vshll.u32 %v512, 16
  %v2505 = vor.u32 %v2502, %v2503
  %v2506 = vsel %vm552, %v2498, %v2505
  %v2507 = vrot.slane %v2502, 4
  %v2509 = vshrl.u32 %v513, 16
  %v2511 = vrot.slane %v2509, 7
  %v2512 = vshll.u32 %v513, 16
  %v2514 = vor.u32 %v2511, %v2512
  %v2515 = vsel %vm552, %v2507, %v2514
  %v2516 = vrot.slane %v2511, 4
  %v2518 = vshrl.u32 %v514, 16
  %v2520 = vrot.slane %v2518, 7
  %v2521 = vshll.u32 %v514, 16
  %v2523 = vor.u32 %v2520, %v2521
  %v2524 = vsel %vm552, %v2516, %v2523
  %v2525 = vrot.slane %v2520, 4
  %v2527 = vshrl.u32 %v515, 16
  %v2529 = vrot.slane %v2527, 7
  %v2530 = vshll.u32 %v515, 16
  %v2532 = vor.u32 %v2529, %v2530
  %v2533 = vsel %vm552, %v2525, %v2532
  %v2534 = vrot.slane %v2529, 4
  %v2536 = vshrl.u32 %v516, 16
  %v2538 = vrot.slane %v2536, 7
  %v2539 = vshll.u32 %v516, 16
  %v2541 = vor.u32 %v2538, %v2539
  %v2542 = vsel %vm552, %v2534, %v2541
  %v2543 = vrot.slane %v2538, 4
  %v2545 = vshrl.u32 %v517, 16
  %v2547 = vrot.slane %v2545, 7
  %v2548 = vshll.u32 %v517, 16
  %v2550 = vor.u32 %v2547, %v2548
  %v2551 = vsel %vm552, %v2543, %v2550
  %v2552 = vrot.slane %v2547, 4
  %v2554 = vshrl.u32 %v518, 16
  %v2556 = vrot.slane %v2554, 7
  %v2557 = vshll.u32 %v518, 16
  %v2559 = vor.u32 %v2556, %v2557
  %v2560 = vsel %vm552, %v2552, %v2559
  %v2561 = vrot.slane %v2556, 4
  %v2563 = vshrl.u32 %v519, 16
  %v2565 = vrot.slane %v2563, 7
  %v2566 = vshll.u32 %v519, 16
  %v2568 = vor.u32 %v2565, %v2566
  %v2569 = vsel %vm552, %v2561, %v2568
  %v2570 = vrot.slane %v2565, 4
  %v2572 = vshrl.u32 %v520, 16
  %v2574 = vrot.slane %v2572, 7
  %v2575 = vshll.u32 %v520, 16
  %v2577 = vor.u32 %v2574, %v2575
  %v2578 = vsel %vm552, %v2570, %v2577
  %v2579 = vrot.slane %v2574, 4
  %v2581 = vshrl.u32 %v521, 16
  %v2583 = vrot.slane %v2581, 7
  %v2584 = vshll.u32 %v521, 16
  %v2586 = vor.u32 %v2583, %v2584
  %v2587 = vsel %vm552, %v2579, %v2586
  %v2588 = vrot.slane %v2583, 4
  %v2590 = vshrl.u32 %v522, 16
  %v2592 = vrot.slane %v2590, 7
  %v2593 = vshll.u32 %v522, 16
  %v2595 = vor.u32 %v2592, %v2593
  %v2596 = vsel %vm552, %v2588, %v2595
  %v2597 = vrot.slane %v2592, 4
  %v2599 = vshrl.u32 %v523, 16
  %v2601 = vrot.slane %v2599, 7
  %v2602 = vshll.u32 %v523, 16
  %v2604 = vor.u32 %v2601, %v2602
  %v2605 = vsel %vm552, %v2597, %v2604
  %v2606 = vrot.slane %v2601, 4
  %v2608 = vshrl.u32 %v524, 16
  %v2610 = vrot.slane %v2608, 7
  %v2611 = vshll.u32 %v524, 16
  %v2613 = vor.u32 %v2610, %v2611
  %v2614 = vsel %vm552, %v2606, %v2613
  %v2615 = vrot.slane %v2610, 4
  %v2617 = vshrl.u32 %v525, 16
  %v2619 = vrot.slane %v2617, 7
  %v2620 = vshll.u32 %v525, 16
  %v2622 = vor.u32 %v2619, %v2620
  %v2623 = vsel %vm552, %v2615, %v2622
  %v2624 = vrot.slane %v2619, 4
  %v2626 = vshrl.u32 %v526, 16
  %v2628 = vrot.slane %v2626, 7
  %v2629 = vshll.u32 %v526, 16
  %v2631 = vor.u32 %v2628, %v2629
  %v2632 = vsel %vm552, %v2624, %v2631
  %v2633 = vrot.slane %v2628, 4
  %v2635 = vshrl.u32 %v527, 16
  %v2637 = vrot.slane %v2635, 7
  %v2638 = vshll.u32 %v527, 16
  %v2640 = vor.u32 %v2637, %v2638
  %v2641 = vsel %vm552, %v2633, %v2640
  %v2642 = vrot.slane %v2637, 4
  %v2644 = vshrl.u32 %v528, 16
  %v2646 = vrot.slane %v2644, 7
  %v2647 = vshll.u32 %v528, 16
  %v2649 = vor.u32 %v2646, %v2647
  %v2650 = vsel %vm552, %v2642, %v2649
  %v2651 = vrot.slane %v2646, 4
  %v2653 = vshrl.u32 %v529, 16
  %v2655 = vrot.slane %v2653, 7
  %v2656 = vshll.u32 %v529, 16
  %v2658 = vor.u32 %v2655, %v2656
  %v2659 = vsel %vm552, %v2651, %v2658
  %v2660 = vrot.slane %v2655, 4
  %v2662 = vshrl.u32 %v530, 16
  %v2664 = vrot.slane %v2662, 7
  %v2665 = vshll.u32 %v530, 16
  %v2667 = vor.u32 %v2664, %v2665
  %v2668 = vsel %vm552, %v2660, %v2667
  %v2669 = vrot.slane %v2664, 4
  %v2671 = vshrl.u32 %v531, 16
  %v2673 = vrot.slane %v2671, 7
  %v2674 = vshll.u32 %v531, 16
  %v2676 = vor.u32 %v2673, %v2674
  %v2677 = vsel %vm552, %v2669, %v2676
  %v2678 = vrot.slane %v2673, 4
  %v2680 = vshrl.u32 %v532, 16
  %v2682 = vrot.slane %v2680, 7
  %v2683 = vshll.u32 %v532, 16
  %v2685 = vor.u32 %v2682, %v2683
  %v2686 = vsel %vm552, %v2678, %v2685
  %v2687 = vrot.slane %v2682, 4
  %v2689 = vshrl.u32 %v533, 16
  %v2691 = vrot.slane %v2689, 7
  %v2692 = vshll.u32 %v533, 16
  %v2694 = vor.u32 %v2691, %v2692
  %v2695 = vsel %vm552, %v2687, %v2694
  %v2696 = vrot.slane %v2691, 4
  %v2698 = vshrl.u32 %v534, 16
  %v2700 = vrot.slane %v2698, 7
  %v2701 = vshll.u32 %v534, 16
  %v2703 = vor.u32 %v2700, %v2701
  %v2704 = vsel %vm552, %v2696, %v2703
  %v2705 = vrot.slane %v2700, 4
  %v2707 = vshrl.u32 %v535, 16
  %v2709 = vrot.slane %v2707, 7
  %v2710 = vshll.u32 %v535, 16
  %v2712 = vor.u32 %v2709, %v2710
  %v2713 = vsel %vm552, %v2705, %v2712
  %v2714 = vrot.slane %v2709, 4
  %v2716 = vshrl.u32 %v536, 16
  %v2718 = vrot.slane %v2716, 7
  %v2719 = vshll.u32 %v536, 16
  %v2721 = vor.u32 %v2718, %v2719
  %v2722 = vsel %vm552, %v2714, %v2721
  %v2723 = vrot.slane %v2718, 4
  %v2725 = vshrl.u32 %v537, 16
  %v2727 = vrot.slane %v2725, 7
  %v2728 = vshll.u32 %v537, 16
  %v2730 = vor.u32 %v2727, %v2728
  %v2731 = vsel %vm552, %v2723, %v2730
  %v2732 = vrot.slane %v2727, 4
  %v2734 = vshrl.u32 %v538, 16
  %v2736 = vrot.slane %v2734, 7
  %v2737 = vshll.u32 %v538, 16
  %v2739 = vor.u32 %v2736, %v2737
  %v2740 = vsel %vm552, %v2732, %v2739
  %v2741 = vrot.slane %v2736, 4
  %v2743 = vshrl.u32 %v539, 16
  %v2745 = vrot.slane %v2743, 7
  %v2746 = vshll.u32 %v539, 16
  %v2748 = vor.u32 %v2745, %v2746
  %v2749 = vsel %vm552, %v2741, %v2748
  %v2750 = vrot.slane %v2745, 4
  %v2752 = vshrl.u32 %v540, 16
  %v2754 = vrot.slane %v2752, 7
  %v2755 = vshll.u32 %v540, 16
  %v2757 = vor.u32 %v2754, %v2755
  %v2758 = vsel %vm552, %v2750, %v2757
  %v2759 = vrot.slane %v2754, 4
  %v2761 = vshrl.u32 %v541, 16
  %v2763 = vrot.slane %v2761, 7
  %v2764 = vshll.u32 %v541, 16
  %v2766 = vor.u32 %v2763, %v2764
  %v2767 = vsel %vm552, %v2759, %v2766
  %v2768 = vrot.slane %v2763, 4
  %v2770 = vshrl.u32 %v542, 16
  %v2772 = vrot.slane %v2770, 7
  %v2773 = vshll.u32 %v542, 16
  %v2775 = vor.u32 %v2772, %v2773
  %v2776 = vsel %vm552, %v2768, %v2775
  %v2777 = vrot.slane %v2772, 4
  %v2779 = vshrl.u32 %v543, 16
  %v2781 = vrot.slane %v2779, 7
  %v2782 = vshll.u32 %v543, 16
  %v2784 = vor.u32 %v2781, %v2782
  %v2785 = vsel %vm552, %v2777, %v2784
  %v2786 = vrot.slane %v2781, 4
  %v2788 = vshrl.u32 %v544, 16
  %v2790 = vrot.slane %v2788, 7
  %v2791 = vshll.u32 %v544, 16
  %v2793 = vor.u32 %v2790, %v2791
  %v2794 = vsel %vm552, %v2786, %v2793
  %v2795 = vrot.slane %v2790, 4
  %v2797 = vshrl.u32 %v545, 16
  %v2799 = vrot.slane %v2797, 7
  %v2800 = vshll.u32 %v545, 16
  %v2802 = vor.u32 %v2799, %v2800
  %v2803 = vsel %vm552, %v2795, %v2802
  %v2804 = vrot.slane %v2799, 4
  %v2806 = vshrl.u32 %v546, 16
  %v2808 = vrot.slane %v2806, 7
  %v2809 = vshll.u32 %v546, 16
  %v2811 = vor.u32 %v2808, %v2809
  %v2812 = vsel %vm552, %v2804, %v2811
  %v2813 = vrot.slane %v2808, 4
  %v2815 = vshrl.u32 %v547, 16
  %v2817 = vrot.slane %v2815, 7
  %v2818 = vshll.u32 %v547, 16
  %v2820 = vor.u32 %v2817, %v2818
  %v2821 = vsel %vm552, %v2813, %v2820
  %v2822 = vrot.slane %v2817, 4
  %v2824 = vshrl.u32 %v548, 16
  %v2826 = vrot.slane %v2824, 7
  %v2827 = vshll.u32 %v548, 16
  %v2829 = vor.u32 %v2826, %v2827
  %v2830 = vsel %vm552, %v2822, %v2829
  %v2831 = vrot.slane %v2826, 4
  %v2833 = vshrl.u32 %v549, 16
  %v2835 = vrot.slane %v2833, 7
  %v2836 = vshll.u32 %v549, 16
  %v2838 = vor.u32 %v2835, %v2836
  %v2839 = vsel %vm552, %v2831, %v2838
  %v2840 = vrot.slane %v2835, 4
  %v2842 = vshrl.u32 %v550, 16
  %v2844 = vrot.slane %v2842, 7
  %v2845 = vshll.u32 %v550, 16
  %v2847 = vor.u32 %v2844, %v2845
  %v2848 = vsel %vm552, %v2840, %v2847
  %vm3105 = vcmask 257024
  %vm3106 = vsmask.f32 7938
  %vm3107 = vmand %vm3105, %vm3106
  %v3108 = vld [vmem:[#allocation2] sm:$0xf]
  %v3109 = vsel %vm3107, %v559, %v3108
  %3110 = vst [vmem:[#allocation2] sm:$0xf] %v3109
  %vm3111 = vcmask 257024
  %3112 = vst.msk [vmem:[#allocation2 + $0x4] sm:$0xf] %vm3111, %v568
  %3113 = vst.msk [vmem:[#allocation2 + $0x8] sm:$0xf] %vm3111, %v577
  %3114 = vst.msk [vmem:[#allocation2 + $0xc] sm:$0xf] %vm3111, %v586
  %3115 = vst.msk [vmem:[#allocation2 + $0x10] sm:$0xf] %vm3111, %v595
  %3116 = vst.msk [vmem:[#allocation2 + $0x14] sm:$0xf] %vm3111, %v604
  %3117 = vst.msk [vmem:[#allocation2 + $0x18] sm:$0xf] %vm3111, %v613
  %3118 = vst.msk [vmem:[#allocation2 + $0x1c] sm:$0xf] %vm3111, %v622
  %3119 = vst.msk [vmem:[#allocation2 + $0x20] sm:$0xf] %vm3111, %v631
  %3120 = vst.msk [vmem:[#allocation2 + $0x24] sm:$0xf] %vm3111, %v640
  %3121 = vst.msk [vmem:[#allocation2 + $0x28] sm:$0xf] %vm3111, %v649
  %3122 = vst.msk [vmem:[#allocation2 + $0x2c] sm:$0xf] %vm3111, %v658
  %3123 = vst.msk [vmem:[#allocation2 + $0x30] sm:$0xf] %vm3111, %v667
  %3124 = vst.msk [vmem:[#allocation2 + $0x34] sm:$0xf] %vm3111, %v676
  %3125 = vst.msk [vmem:[#allocation2 + $0x38] sm:$0xf] %vm3111, %v685
  %3126 = vst.msk [vmem:[#allocation2 + $0x3c] sm:$0xf] %vm3111, %v694
  %3127 = vst.msk [vmem:[#allocation2 + $0x40] sm:$0xf] %vm3111, %v703
  %3128 = vst.msk [vmem:[#allocation2 + $0x44] sm:$0xf] %vm3111, %v712
  %3129 = vst.msk [vmem:[#allocation2 + $0x48] sm:$0xf] %vm3111, %v721
  %3130 = vst.msk [vmem:[#allocation2 + $0x4c] sm:$0xf] %vm3111, %v730
  %3131 = vst.msk [vmem:[#allocation2 + $0x50] sm:$0xf] %vm3111, %v739
  %3132 = vst.msk [vmem:[#allocation2 + $0x54] sm:$0xf] %vm3111, %v748
  %3133 = vst.msk [vmem:[#allocation2 + $0x58] sm:$0xf] %vm3111, %v757
  %3134 = vst.msk [vmem:[#allocation2 + $0x5c] sm:$0xf] %vm3111, %v766
  %3135 = vst.msk [vmem:[#allocation2 + $0x60] sm:$0xf] %vm3111, %v775
  %3136 = vst.msk [vmem:[#allocation2 + $0x64] sm:$0xf] %vm3111, %v784
  %3137 = vst.msk [vmem:[#allocation2 + $0x68] sm:$0xf] %vm3111, %v793
  %3138 = vst.msk [vmem:[#allocation2 + $0x6c] sm:$0xf] %vm3111, %v802
  %3139 = vst.msk [vmem:[#allocation2 + $0x70] sm:$0xf] %vm3111, %v811
  %3140 = vst.msk [vmem:[#allocation2 + $0x74] sm:$0xf] %vm3111, %v820
  %3141 = vst.msk [vmem:[#allocation2 + $0x78] sm:$0xf] %vm3111, %v829
  %3142 = vst.msk [vmem:[#allocation2 + $0x7c] sm:$0xf] %vm3111, %v838
  %3143 = vst.msk [vmem:[#allocation2 + $0x80] sm:$0xf] %vm3111, %v847
  %3144 = vst.msk [vmem:[#allocation2 + $0x84] sm:$0xf] %vm3111, %v856
  %3145 = vst.msk [vmem:[#allocation2 + $0x88] sm:$0xf] %vm3111, %v865
  %3146 = vst.msk [vmem:[#allocation2 + $0x8c] sm:$0xf] %vm3111, %v874
  %3147 = vst.msk [vmem:[#allocation2 + $0x90] sm:$0xf] %vm3111, %v883
  %3148 = vst.msk [vmem:[#allocation2 + $0x94] sm:$0xf] %vm3111, %v892
  %3149 = vst.msk [vmem:[#allocation2 + $0x98] sm:$0xf] %vm3111, %v901
  %3150 = vst.msk [vmem:[#allocation2 + $0x9c] sm:$0xf] %vm3111, %v910
  %3151 = vst.msk [vmem:[#allocation2 + $0xa0] sm:$0xf] %vm3111, %v919
  %3152 = vst.msk [vmem:[#allocation2 + $0xa4] sm:$0xf] %vm3111, %v928
  %3153 = vst.msk [vmem:[#allocation2 + $0xa8] sm:$0xf] %vm3111, %v937
  %3154 = vst.msk [vmem:[#allocation2 + $0xac] sm:$0xf] %vm3111, %v946
  %3155 = vst.msk [vmem:[#allocation2 + $0xb0] sm:$0xf] %vm3111, %v955
  %3156 = vst.msk [vmem:[#allocation2 + $0xb4] sm:$0xf] %vm3111, %v964
  %3157 = vst.msk [vmem:[#allocation2 + $0xb8] sm:$0xf] %vm3111, %v973
  %3158 = vst.msk [vmem:[#allocation2 + $0xbc] sm:$0xf] %vm3111, %v982
  %3159 = vst.msk [vmem:[#allocation2 + $0xc0] sm:$0xf] %vm3111, %v991
  %3160 = vst.msk [vmem:[#allocation2 + $0xc4] sm:$0xf] %vm3111, %v1000
  %3161 = vst.msk [vmem:[#allocation2 + $0xc8] sm:$0xf] %vm3111, %v1009
  %3162 = vst.msk [vmem:[#allocation2 + $0xcc] sm:$0xf] %vm3111, %v1018
  %3163 = vst.msk [vmem:[#allocation2 + $0xd0] sm:$0xf] %vm3111, %v1027
  %3164 = vst.msk [vmem:[#allocation2 + $0xd4] sm:$0xf] %vm3111, %v1036
  %3165 = vst.msk [vmem:[#allocation2 + $0xd8] sm:$0xf] %vm3111, %v1045
  %3166 = vst.msk [vmem:[#allocation2 + $0xdc] sm:$0xf] %vm3111, %v1054
  %3167 = vst.msk [vmem:[#allocation2 + $0xe0] sm:$0xf] %vm3111, %v1063
  %3168 = vst.msk [vmem:[#allocation2 + $0xe4] sm:$0xf] %vm3111, %v1072
  %3169 = vst.msk [vmem:[#allocation2 + $0xe8] sm:$0xf] %vm3111, %v1081
  %3170 = vst.msk [vmem:[#allocation2 + $0xec] sm:$0xf] %vm3111, %v1090
  %3171 = vst.msk [vmem:[#allocation2 + $0xf0] sm:$0xf] %vm3111, %v1099
  %3172 = vst.msk [vmem:[#allocation2 + $0xf4] sm:$0xf] %vm3111, %v1108
  %3173 = vst.msk [vmem:[#allocation2 + $0xf8] sm:$0xf] %vm3111, %v1117
  %3174 = vst.msk [vmem:[#allocation2 + $0xfc] sm:$0xf] %vm3111, %v1126
  %v3175 = vld [vmem:[#allocation2 + $0x100] sm:$0xf]
  %v3176 = vsel %vm3107, %v1133, %v3175
  %3177 = vst [vmem:[#allocation2 + $0x100] sm:$0xf] %v3176
  %3178 = vst.msk [vmem:[#allocation2 + $0x104] sm:$0xf] %vm3111, %v1142
  %3179 = vst.msk [vmem:[#allocation2 + $0x108] sm:$0xf] %vm3111, %v1151
  %3180 = vst.msk [vmem:[#allocation2 + $0x10c] sm:$0xf] %vm3111, %v1160
  %3181 = vst.msk [vmem:[#allocation2 + $0x110] sm:$0xf] %vm3111, %v1169
  %3182 = vst.msk [vmem:[#allocation2 + $0x114] sm:$0xf] %vm3111, %v1178
  %3183 = vst.msk [vmem:[#allocation2 + $0x118] sm:$0xf] %vm3111, %v1187
  %3184 = vst.msk [vmem:[#allocation2 + $0x11c] sm:$0xf] %vm3111, %v1196
  %3185 = vst.msk [vmem:[#allocation2 + $0x120] sm:$0xf] %vm3111, %v1205
  %3186 = vst.msk [vmem:[#allocation2 + $0x124] sm:$0xf] %vm3111, %v1214
  %3187 = vst.msk [vmem:[#allocation2 + $0x128] sm:$0xf] %vm3111, %v1223
  %3188 = vst.msk [vmem:[#allocation2 + $0x12c] sm:$0xf] %vm3111, %v1232
  %3189 = vst.msk [vmem:[#allocation2 + $0x130] sm:$0xf] %vm3111, %v1241
  %3190 = vst.msk [vmem:[#allocation2 + $0x134] sm:$0xf] %vm3111, %v1250
  %3191 = vst.msk [vmem:[#allocation2 + $0x138] sm:$0xf] %vm3111, %v1259
  %3192 = vst.msk [vmem:[#allocation2 + $0x13c] sm:$0xf] %vm3111, %v1268
  %3193 = vst.msk [vmem:[#allocation2 + $0x140] sm:$0xf] %vm3111, %v1277
  %3194 = vst.msk [vmem:[#allocation2 + $0x144] sm:$0xf] %vm3111, %v1286
  %3195 = vst.msk [vmem:[#allocation2 + $0x148] sm:$0xf] %vm3111, %v1295
  %3196 = vst.msk [vmem:[#allocation2 + $0x14c] sm:$0xf] %vm3111, %v1304
  %3197 = vst.msk [vmem:[#allocation2 + $0x150] sm:$0xf] %vm3111, %v1313
  %3198 = vst.msk [vmem:[#allocation2 + $0x154] sm:$0xf] %vm3111, %v1322
  %3199 = vst.msk [vmem:[#allocation2 + $0x158] sm:$0xf] %vm3111, %v1331
  %3200 = vst.msk [vmem:[#allocation2 + $0x15c] sm:$0xf] %vm3111, %v1340
  %3201 = vst.msk [vmem:[#allocation2 + $0x160] sm:$0xf] %vm3111, %v1349
  %3202 = vst.msk [vmem:[#allocation2 + $0x164] sm:$0xf] %vm3111, %v1358
  %3203 = vst.msk [vmem:[#allocation2 + $0x168] sm:$0xf] %vm3111, %v1367
  %3204 = vst.msk [vmem:[#allocation2 + $0x16c] sm:$0xf] %vm3111, %v1376
  %3205 = vst.msk [vmem:[#allocation2 + $0x170] sm:$0xf] %vm3111, %v1385
  %3206 = vst.msk [vmem:[#allocation2 + $0x174] sm:$0xf] %vm3111, %v1394
  %3207 = vst.msk [vmem:[#allocation2 + $0x178] sm:$0xf] %vm3111, %v1403
  %3208 = vst.msk [vmem:[#allocation2 + $0x17c] sm:$0xf] %vm3111, %v1412
  %3209 = vst.msk [vmem:[#allocation2 + $0x180] sm:$0xf] %vm3111, %v1421
  %3210 = vst.msk [vmem:[#allocation2 + $0x184] sm:$0xf] %vm3111, %v1430
  %3211 = vst.msk [vmem:[#allocation2 + $0x188] sm:$0xf] %vm3111, %v1439
  %3212 = vst.msk [vmem:[#allocation2 + $0x18c] sm:$0xf] %vm3111, %v1448
  %3213 = vst.msk [vmem:[#allocation2 + $0x190] sm:$0xf] %vm3111, %v1457
  %3214 = vst.msk [vmem:[#allocation2 + $0x194] sm:$0xf] %vm3111, %v1466
  %3215 = vst.msk [vmem:[#allocation2 + $0x198] sm:$0xf] %vm3111, %v1475
  %3216 = vst.msk [vmem:[#allocation2 + $0x19c] sm:$0xf] %vm3111, %v1484
  %3217 = vst.msk [vmem:[#allocation2 + $0x1a0] sm:$0xf] %vm3111, %v1493
  %3218 = vst.msk [vmem:[#allocation2 + $0x1a4] sm:$0xf] %vm3111, %v1502
  %3219 = vst.msk [vmem:[#allocation2 + $0x1a8] sm:$0xf] %vm3111, %v1511
  %3220 = vst.msk [vmem:[#allocation2 + $0x1ac] sm:$0xf] %vm3111, %v1520
  %3221 = vst.msk [vmem:[#allocation2 + $0x1b0] sm:$0xf] %vm3111, %v1529
  %3222 = vst.msk [vmem:[#allocation2 + $0x1b4] sm:$0xf] %vm3111, %v1538
  %3223 = vst.msk [vmem:[#allocation2 + $0x1b8] sm:$0xf] %vm3111, %v1547
  %3224 = vst.msk [vmem:[#allocation2 + $0x1bc] sm:$0xf] %vm3111, %v1556
  %3225 = vst.msk [vmem:[#allocation2 + $0x1c0] sm:$0xf] %vm3111, %v1565
  %3226 = vst.msk [vmem:[#allocation2 + $0x1c4] sm:$0xf] %vm3111, %v1574
  %3227 = vst.msk [vmem:[#allocation2 + $0x1c8] sm:$0xf] %vm3111, %v1583
  %3228 = vst.msk [vmem:[#allocation2 + $0x1cc] sm:$0xf] %vm3111, %v1592
  %3229 = vst.msk [vmem:[#allocation2 + $0x1d0] sm:$0xf] %vm3111, %v1601
  %3230 = vst.msk [vmem:[#allocation2 + $0x1d4] sm:$0xf] %vm3111, %v1610
  %3231 = vst.msk [vmem:[#allocation2 + $0x1d8] sm:$0xf] %vm3111, %v1619
  %3232 = vst.msk [vmem:[#allocation2 + $0x1dc] sm:$0xf] %vm3111, %v1628
  %3233 = vst.msk [vmem:[#allocation2 + $0x1e0] sm:$0xf] %vm3111, %v1637
  %3234 = vst.msk [vmem:[#allocation2 + $0x1e4] sm:$0xf] %vm3111, %v1646
  %3235 = vst.msk [vmem:[#allocation2 + $0x1e8] sm:$0xf] %vm3111, %v1655
  %3236 = vst.msk [vmem:[#allocation2 + $0x1ec] sm:$0xf] %vm3111, %v1664
  %3237 = vst.msk [vmem:[#allocation2 + $0x1f0] sm:$0xf] %vm3111, %v1673
  %3238 = vst.msk [vmem:[#allocation2 + $0x1f4] sm:$0xf] %vm3111, %v1682
  %3239 = vst.msk [vmem:[#allocation2 + $0x1f8] sm:$0xf] %vm3111, %v1691
  %3240 = vst.msk [vmem:[#allocation2 + $0x1fc] sm:$0xf] %vm3111, %v1700
  %v3241 = vld [vmem:[#allocation2 + $0x200] sm:$0xf]
  %v3242 = vsel %vm3107, %v1707, %v3241
  %3243 = vst [vmem:[#allocation2 + $0x200] sm:$0xf] %v3242
  %3244 = vst.msk [vmem:[#allocation2 + $0x204] sm:$0xf] %vm3111, %v1716
  %3245 = vst.msk [vmem:[#allocation2 + $0x208] sm:$0xf] %vm3111, %v1725
  %3246 = vst.msk [vmem:[#allocation2 + $0x20c] sm:$0xf] %vm3111, %v1734
  %3247 = vst.msk [vmem:[#allocation2 + $0x210] sm:$0xf] %vm3111, %v1743
  %3248 = vst.msk [vmem:[#allocation2 + $0x214] sm:$0xf] %vm3111, %v1752
  %3249 = vst.msk [vmem:[#allocation2 + $0x218] sm:$0xf] %vm3111, %v1761
  %3250 = vst.msk [vmem:[#allocation2 + $0x21c] sm:$0xf] %vm3111, %v1770
  %3251 = vst.msk [vmem:[#allocation2 + $0x220] sm:$0xf] %vm3111, %v1779
  %3252 = vst.msk [vmem:[#allocation2 + $0x224] sm:$0xf] %vm3111, %v1788
  %3253 = vst.msk [vmem:[#allocation2 + $0x228] sm:$0xf] %vm3111, %v1797
  %3254 = vst.msk [vmem:[#allocation2 + $0x22c] sm:$0xf] %vm3111, %v1806
  %3255 = vst.msk [vmem:[#allocation2 + $0x230] sm:$0xf] %vm3111, %v1815
  %3256 = vst.msk [vmem:[#allocation2 + $0x234] sm:$0xf] %vm3111, %v1824
  %3257 = vst.msk [vmem:[#allocation2 + $0x238] sm:$0xf] %vm3111, %v1833
  %3258 = vst.msk [vmem:[#allocation2 + $0x23c] sm:$0xf] %vm3111, %v1842
  %3259 = vst.msk [vmem:[#allocation2 + $0x240] sm:$0xf] %vm3111, %v1851
  %3260 = vst.msk [vmem:[#allocation2 + $0x244] sm:$0xf] %vm3111, %v1860
  %3261 = vst.msk [vmem:[#allocation2 + $0x248] sm:$0xf] %vm3111, %v1869
  %3262 = vst.msk [vmem:[#allocation2 + $0x24c] sm:$0xf] %vm3111, %v1878
  %3263 = vst.msk [vmem:[#allocation2 + $0x250] sm:$0xf] %vm3111, %v1887
  %3264 = vst.msk [vmem:[#allocation2 + $0x254] sm:$0xf] %vm3111, %v1896
  %3265 = vst.msk [vmem:[#allocation2 + $0x258] sm:$0xf] %vm3111, %v1905
  %3266 = vst.msk [vmem:[#allocation2 + $0x25c] sm:$0xf] %vm3111, %v1914
  %3267 = vst.msk [vmem:[#allocation2 + $0x260] sm:$0xf] %vm3111, %v1923
  %3268 = vst.msk [vmem:[#allocation2 + $0x264] sm:$0xf] %vm3111, %v1932
  %3269 = vst.msk [vmem:[#allocation2 + $0x268] sm:$0xf] %vm3111, %v1941
  %3270 = vst.msk [vmem:[#allocation2 + $0x26c] sm:$0xf] %vm3111, %v1950
  %3271 = vst.msk [vmem:[#allocation2 + $0x270] sm:$0xf] %vm3111, %v1959
  %3272 = vst.msk [vmem:[#allocation2 + $0x274] sm:$0xf] %vm3111, %v1968
  %3273 = vst.msk [vmem:[#allocation2 + $0x278] sm:$0xf] %vm3111, %v1977
  %3274 = vst.msk [vmem:[#allocation2 + $0x27c] sm:$0xf] %vm3111, %v1986
  %3275 = vst.msk [vmem:[#allocation2 + $0x280] sm:$0xf] %vm3111, %v1995
  %3276 = vst.msk [vmem:[#allocation2 + $0x284] sm:$0xf] %vm3111, %v2004
  %3277 = vst.msk [vmem:[#allocation2 + $0x288] sm:$0xf] %vm3111, %v2013
  %3278 = vst.msk [vmem:[#allocation2 + $0x28c] sm:$0xf] %vm3111, %v2022
  %3279 = vst.msk [vmem:[#allocation2 + $0x290] sm:$0xf] %vm3111, %v2031
  %3280 = vst.msk [vmem:[#allocation2 + $0x294] sm:$0xf] %vm3111, %v2040
  %3281 = vst.msk [vmem:[#allocation2 + $0x298] sm:$0xf] %vm3111, %v2049
  %3282 = vst.msk [vmem:[#allocation2 + $0x29c] sm:$0xf] %vm3111, %v2058
  %3283 = vst.msk [vmem:[#allocation2 + $0x2a0] sm:$0xf] %vm3111, %v2067
  %3284 = vst.msk [vmem:[#allocation2 + $0x2a4] sm:$0xf] %vm3111, %v2076
  %3285 = vst.msk [vmem:[#allocation2 + $0x2a8] sm:$0xf] %vm3111, %v2085
  %3286 = vst.msk [vmem:[#allocation2 + $0x2ac] sm:$0xf] %vm3111, %v2094
  %3287 = vst.msk [vmem:[#allocation2 + $0x2b0] sm:$0xf] %vm3111, %v2103
  %3288 = vst.msk [vmem:[#allocation2 + $0x2b4] sm:$0xf] %vm3111, %v2112
  %3289 = vst.msk [vmem:[#allocation2 + $0x2b8] sm:$0xf] %vm3111, %v2121
  %3290 = vst.msk [vmem:[#allocation2 + $0x2bc] sm:$0xf] %vm3111, %v2130
  %3291 = vst.msk [vmem:[#allocation2 + $0x2c0] sm:$0xf] %vm3111, %v2139
  %3292 = vst.msk [vmem:[#allocation2 + $0x2c4] sm:$0xf] %vm3111, %v2148
  %3293 = vst.msk [vmem:[#allocation2 + $0x2c8] sm:$0xf] %vm3111, %v2157
  %3294 = vst.msk [vmem:[#allocation2 + $0x2cc] sm:$0xf] %vm3111, %v2166
  %3295 = vst.msk [vmem:[#allocation2 + $0x2d0] sm:$0xf] %vm3111, %v2175
  %3296 = vst.msk [vmem:[#allocation2 + $0x2d4] sm:$0xf] %vm3111, %v2184
  %3297 = vst.msk [vmem:[#allocation2 + $0x2d8] sm:$0xf] %vm3111, %v2193
  %3298 = vst.msk [vmem:[#allocation2 + $0x2dc] sm:$0xf] %vm3111, %v2202
  %3299 = vst.msk [vmem:[#allocation2 + $0x2e0] sm:$0xf] %vm3111, %v2211
  %3300 = vst.msk [vmem:[#allocation2 + $0x2e4] sm:$0xf] %vm3111, %v2220
  %3301 = vst.msk [vmem:[#allocation2 + $0x2e8] sm:$0xf] %vm3111, %v2229
  %3302 = vst.msk [vmem:[#allocation2 + $0x2ec] sm:$0xf] %vm3111, %v2238
  %3303 = vst.msk [vmem:[#allocation2 + $0x2f0] sm:$0xf] %vm3111, %v2247
  %3304 = vst.msk [vmem:[#allocation2 + $0x2f4] sm:$0xf] %vm3111, %v2256
  %3305 = vst.msk [vmem:[#allocation2 + $0x2f8] sm:$0xf] %vm3111, %v2265
  %3306 = vst.msk [vmem:[#allocation2 + $0x2fc] sm:$0xf] %vm3111, %v2274
  %v3307 = vld [vmem:[#allocation2 + $0x300] sm:$0xf]
  %v3308 = vsel %vm3107, %v2281, %v3307
  %3309 = vst [vmem:[#allocation2 + $0x300] sm:$0xf] %v3308
  %3310 = vst.msk [vmem:[#allocation2 + $0x304] sm:$0xf] %vm3111, %v2290
  %3311 = vst.msk [vmem:[#allocation2 + $0x308] sm:$0xf] %vm3111, %v2299
  %3312 = vst.msk [vmem:[#allocation2 + $0x30c] sm:$0xf] %vm3111, %v2308
  %3313 = vst.msk [vmem:[#allocation2 + $0x310] sm:$0xf] %vm3111, %v2317
  %3314 = vst.msk [vmem:[#allocation2 + $0x314] sm:$0xf] %vm3111, %v2326
  %3315 = vst.msk [vmem:[#allocation2 + $0x318] sm:$0xf] %vm3111, %v2335
  %3316 = vst.msk [vmem:[#allocation2 + $0x31c] sm:$0xf] %vm3111, %v2344
  %3317 = vst.msk [vmem:[#allocation2 + $0x320] sm:$0xf] %vm3111, %v2353
  %3318 = vst.msk [vmem:[#allocation2 + $0x324] sm:$0xf] %vm3111, %v2362
  %3319 = vst.msk [vmem:[#allocation2 + $0x328] sm:$0xf] %vm3111, %v2371
  %3320 = vst.msk [vmem:[#allocation2 + $0x32c] sm:$0xf] %vm3111, %v2380
  %3321 = vst.msk [vmem:[#allocation2 + $0x330] sm:$0xf] %vm3111, %v2389
  %3322 = vst.msk [vmem:[#allocation2 + $0x334] sm:$0xf] %vm3111, %v2398
  %3323 = vst.msk [vmem:[#allocation2 + $0x338] sm:$0xf] %vm3111, %v2407
  %3324 = vst.msk [vmem:[#allocation2 + $0x33c] sm:$0xf] %vm3111, %v2416
  %3325 = vst.msk [vmem:[#allocation2 + $0x340] sm:$0xf] %vm3111, %v2425
  %3326 = vst.msk [vmem:[#allocation2 + $0x344] sm:$0xf] %vm3111, %v2434
  %3327 = vst.msk [vmem:[#allocation2 + $0x348] sm:$0xf] %vm3111, %v2443
  %3328 = vst.msk [vmem:[#allocation2 + $0x34c] sm:$0xf] %vm3111, %v2452
  %3329 = vst.msk [vmem:[#allocation2 + $0x350] sm:$0xf] %vm3111, %v2461
  %3330 = vst.msk [vmem:[#allocation2 + $0x354] sm:$0xf] %vm3111, %v2470
  %3331 = vst.msk [vmem:[#allocation2 + $0x358] sm:$0xf] %vm3111, %v2479
  %3332 = vst.msk [vmem:[#allocation2 + $0x35c] sm:$0xf] %vm3111, %v2488
  %3333 = vst.msk [vmem:[#allocation2 + $0x360] sm:$0xf] %vm3111, %v2497
  %3334 = vst.msk [vmem:[#allocation2 + $0x364] sm:$0xf] %vm3111, %v2506
  %3335 = vst.msk [vmem:[#allocation2 + $0x368] sm:$0xf] %vm3111, %v2515
  %3336 = vst.msk [vmem:[#allocation2 + $0x36c] sm:$0xf] %vm3111, %v2524
  %3337 = vst.msk [vmem:[#allocation2 + $0x370] sm:$0xf] %vm3111, %v2533
  %3338 = vst.msk [vmem:[#allocation2 + $0x374] sm:$0xf] %vm3111, %v2542
  %3339 = vst.msk [vmem:[#allocation2 + $0x378] sm:$0xf] %vm3111, %v2551
  %3340 = vst.msk [vmem:[#allocation2 + $0x37c] sm:$0xf] %vm3111, %v2560
  %3341 = vst.msk [vmem:[#allocation2 + $0x380] sm:$0xf] %vm3111, %v2569
  %3342 = vst.msk [vmem:[#allocation2 + $0x384] sm:$0xf] %vm3111, %v2578
  %3343 = vst.msk [vmem:[#allocation2 + $0x388] sm:$0xf] %vm3111, %v2587
  %3344 = vst.msk [vmem:[#allocation2 + $0x38c] sm:$0xf] %vm3111, %v2596
  %3345 = vst.msk [vmem:[#allocation2 + $0x390] sm:$0xf] %vm3111, %v2605
  %3346 = vst.msk [vmem:[#allocation2 + $0x394] sm:$0xf] %vm3111, %v2614
  %3347 = vst.msk [vmem:[#allocation2 + $0x398] sm:$0xf] %vm3111, %v2623
  %3348 = vst.msk [vmem:[#allocation2 + $0x39c] sm:$0xf] %vm3111, %v2632
  %3349 = vst.msk [vmem:[#allocation2 + $0x3a0] sm:$0xf] %vm3111, %v2641
  %3350 = vst.msk [vmem:[#allocation2 + $0x3a4] sm:$0xf] %vm3111, %v2650
  %3351 = vst.msk [vmem:[#allocation2 + $0x3a8] sm:$0xf] %vm3111, %v2659
  %3352 = vst.msk [vmem:[#allocation2 + $0x3ac] sm:$0xf] %vm3111, %v2668
  %3353 = vst.msk [vmem:[#allocation2 + $0x3b0] sm:$0xf] %vm3111, %v2677
  %3354 = vst.msk [vmem:[#allocation2 + $0x3b4] sm:$0xf] %vm3111, %v2686
  %3355 = vst.msk [vmem:[#allocation2 + $0x3b8] sm:$0xf] %vm3111, %v2695
  %3356 = vst.msk [vmem:[#allocation2 + $0x3bc] sm:$0xf] %vm3111, %v2704
  %3357 = vst.msk [vmem:[#allocation2 + $0x3c0] sm:$0xf] %vm3111, %v2713
  %3358 = vst.msk [vmem:[#allocation2 + $0x3c4] sm:$0xf] %vm3111, %v2722
  %3359 = vst.msk [vmem:[#allocation2 + $0x3c8] sm:$0xf] %vm3111, %v2731
  %3360 = vst.msk [vmem:[#allocation2 + $0x3cc] sm:$0xf] %vm3111, %v2740
  %3361 = vst.msk [vmem:[#allocation2 + $0x3d0] sm:$0xf] %vm3111, %v2749
  %3362 = vst.msk [vmem:[#allocation2 + $0x3d4] sm:$0xf] %vm3111, %v2758
  %3363 = vst.msk [vmem:[#allocation2 + $0x3d8] sm:$0xf] %vm3111, %v2767
  %3364 = vst.msk [vmem:[#allocation2 + $0x3dc] sm:$0xf] %vm3111, %v2776
  %3365 = vst.msk [vmem:[#allocation2 + $0x3e0] sm:$0xf] %vm3111, %v2785
  %3366 = vst.msk [vmem:[#allocation2 + $0x3e4] sm:$0xf] %vm3111, %v2794
  %3367 = vst.msk [vmem:[#allocation2 + $0x3e8] sm:$0xf] %vm3111, %v2803
  %3368 = vst.msk [vmem:[#allocation2 + $0x3ec] sm:$0xf] %vm3111, %v2812
  %3369 = vst.msk [vmem:[#allocation2 + $0x3f0] sm:$0xf] %vm3111, %v2821
  %3370 = vst.msk [vmem:[#allocation2 + $0x3f4] sm:$0xf] %vm3111, %v2830
  %3371 = vst.msk [vmem:[#allocation2 + $0x3f8] sm:$0xf] %vm3111, %v2839
  %3372 = vst.msk [vmem:[#allocation2 + $0x3fc] sm:$0xf] %vm3111, %v2848
  %v3373 = vld [vmem:[%s0] sm:$0xf]
  %v3374 = vld [vmem:[%s0 + $0x4] sm:$0xf]
  %v3375 = vld [vmem:[%s0 + $0x8] sm:$0xf]
  %v3376 = vld [vmem:[%s0 + $0xc] sm:$0xf]
  %v3377 = vld [vmem:[%s0 + $0x10] sm:$0xf]
  %v3378 = vld [vmem:[%s0 + $0x14] sm:$0xf]
  %v3379 = vld [vmem:[%s0 + $0x18] sm:$0xf]
  %v3380 = vld [vmem:[%s0 + $0x1c] sm:$0xf]
  %v3381 = vld [vmem:[%s0 + $0x20] sm:$0xf]
  %v3382 = vld [vmem:[%s0 + $0x24] sm:$0xf]
  %v3383 = vld [vmem:[%s0 + $0x28] sm:$0xf]
  %v3384 = vld [vmem:[%s0 + $0x2c] sm:$0xf]
  %v3385 = vld [vmem:[%s0 + $0x30] sm:$0xf]
  %v3386 = vld [vmem:[%s0 + $0x34] sm:$0xf]
  %v3387 = vld [vmem:[%s0 + $0x38] sm:$0xf]
  %v3388 = vld [vmem:[%s0 + $0x3c] sm:$0xf]
  %v3389 = vld [vmem:[%s0 + $0x40] sm:$0xf]
  %v3390 = vld [vmem:[%s0 + $0x44] sm:$0xf]
  %v3391 = vld [vmem:[%s0 + $0x48] sm:$0xf]
  %v3392 = vld [vmem:[%s0 + $0x4c] sm:$0xf]
  %v3393 = vld [vmem:[%s0 + $0x50] sm:$0xf]
  %v3394 = vld [vmem:[%s0 + $0x54] sm:$0xf]
  %v3395 = vld [vmem:[%s0 + $0x58] sm:$0xf]
  %v3396 = vld [vmem:[%s0 + $0x5c] sm:$0xf]
  %v3397 = vld [vmem:[%s0 + $0x60] sm:$0xf]
  %v3398 = vld [vmem:[%s0 + $0x64] sm:$0xf]
  %v3399 = vld [vmem:[%s0 + $0x68] sm:$0xf]
  %v3400 = vld [vmem:[%s0 + $0x6c] sm:$0xf]
  %v3401 = vld [vmem:[%s0 + $0x70] sm:$0xf]
  %v3402 = vld [vmem:[%s0 + $0x74] sm:$0xf]
  %v3403 = vld [vmem:[%s0 + $0x78] sm:$0xf]
  %v3404 = vld [vmem:[%s0 + $0x7c] sm:$0xf]
  %v3405 = vld [vmem:[%s0 + $0x80] sm:$0xf]
  %v3406 = vld [vmem:[%s0 + $0x84] sm:$0xf]
  %v3407 = vld [vmem:[%s0 + $0x88] sm:$0xf]
  %v3408 = vld [vmem:[%s0 + $0x8c] sm:$0xf]
  %v3409 = vld [vmem:[%s0 + $0x90] sm:$0xf]
  %v3410 = vld [vmem:[%s0 + $0x94] sm:$0xf]
  %v3411 = vld [vmem:[%s0 + $0x98] sm:$0xf]
  %v3412 = vld [vmem:[%s0 + $0x9c] sm:$0xf]
  %v3413 = vld [vmem:[%s0 + $0xa0] sm:$0xf]
  %v3414 = vld [vmem:[%s0 + $0xa4] sm:$0xf]
  %v3415 = vld [vmem:[%s0 + $0xa8] sm:$0xf]
  %v3416 = vld [vmem:[%s0 + $0xac] sm:$0xf]
  %v3417 = vld [vmem:[%s0 + $0xb0] sm:$0xf]
  %v3418 = vld [vmem:[%s0 + $0xb4] sm:$0xf]
  %v3419 = vld [vmem:[%s0 + $0xb8] sm:$0xf]
  %v3420 = vld [vmem:[%s0 + $0xbc] sm:$0xf]
  %v3421 = vld [vmem:[%s0 + $0xc0] sm:$0xf]
  %v3422 = vld [vmem:[%s0 + $0xc4] sm:$0xf]
  %v3423 = vld [vmem:[%s0 + $0xc8] sm:$0xf]
  %v3424 = vld [vmem:[%s0 + $0xcc] sm:$0xf]
  %v3425 = vld [vmem:[%s0 + $0xd0] sm:$0xf]
  %v3426 = vld [vmem:[%s0 + $0xd4] sm:$0xf]
  %v3427 = vld [vmem:[%s0 + $0xd8] sm:$0xf]
  %v3428 = vld [vmem:[%s0 + $0xdc] sm:$0xf]
  %v3429 = vld [vmem:[%s0 + $0xe0] sm:$0xf]
  %v3430 = vld [vmem:[%s0 + $0xe4] sm:$0xf]
  %v3431 = vld [vmem:[%s0 + $0xe8] sm:$0xf]
  %v3432 = vld [vmem:[%s0 + $0xec] sm:$0xf]
  %v3433 = vld [vmem:[%s0 + $0xf0] sm:$0xf]
  %v3434 = vld [vmem:[%s0 + $0xf4] sm:$0xf]
  %v3435 = vld [vmem:[%s0 + $0xf8] sm:$0xf]
  %v3436 = vld [vmem:[%s0 + $0xfc] sm:$0xf]
  %v3437 = vld [vmem:[%s0 + $0x100] sm:$0xf]
  %v3438 = vld [vmem:[%s0 + $0x104] sm:$0xf]
  %v3439 = vld [vmem:[%s0 + $0x108] sm:$0xf]
  %v3440 = vld [vmem:[%s0 + $0x10c] sm:$0xf]
  %v3441 = vld [vmem:[%s0 + $0x110] sm:$0xf]
  %v3442 = vld [vmem:[%s0 + $0x114] sm:$0xf]
  %v3443 = vld [vmem:[%s0 + $0x118] sm:$0xf]
  %v3444 = vld [vmem:[%s0 + $0x11c] sm:$0xf]
  %v3445 = vld [vmem:[%s0 + $0x120] sm:$0xf]
  %v3446 = vld [vmem:[%s0 + $0x124] sm:$0xf]
  %v3447 = vld [vmem:[%s0 + $0x128] sm:$0xf]
  %v3448 = vld [vmem:[%s0 + $0x12c] sm:$0xf]
  %v3449 = vld [vmem:[%s0 + $0x130] sm:$0xf]
  %v3450 = vld [vmem:[%s0 + $0x134] sm:$0xf]
  %v3451 = vld [vmem:[%s0 + $0x138] sm:$0xf]
  %v3452 = vld [vmem:[%s0 + $0x13c] sm:$0xf]
  %v3453 = vld [vmem:[%s0 + $0x140] sm:$0xf]
  %v3454 = vld [vmem:[%s0 + $0x144] sm:$0xf]
  %v3455 = vld [vmem:[%s0 + $0x148] sm:$0xf]
  %v3456 = vld [vmem:[%s0 + $0x14c] sm:$0xf]
  %v3457 = vld [vmem:[%s0 + $0x150] sm:$0xf]
  %v3458 = vld [vmem:[%s0 + $0x154] sm:$0xf]
  %v3459 = vld [vmem:[%s0 + $0x158] sm:$0xf]
  %v3460 = vld [vmem:[%s0 + $0x15c] sm:$0xf]
  %v3461 = vld [vmem:[%s0 + $0x160] sm:$0xf]
  %v3462 = vld [vmem:[%s0 + $0x164] sm:$0xf]
  %v3463 = vld [vmem:[%s0 + $0x168] sm:$0xf]
  %v3464 = vld [vmem:[%s0 + $0x16c] sm:$0xf]
  %v3465 = vld [vmem:[%s0 + $0x170] sm:$0xf]
  %v3466 = vld [vmem:[%s0 + $0x174] sm:$0xf]
  %v3467 = vld [vmem:[%s0 + $0x178] sm:$0xf]
  %v3468 = vld [vmem:[%s0 + $0x17c] sm:$0xf]
  %v3469 = vld [vmem:[%s0 + $0x180] sm:$0xf]
  %v3470 = vld [vmem:[%s0 + $0x184] sm:$0xf]
  %v3471 = vld [vmem:[%s0 + $0x188] sm:$0xf]
  %v3472 = vld [vmem:[%s0 + $0x18c] sm:$0xf]
  %v3473 = vld [vmem:[%s0 + $0x190] sm:$0xf]
  %v3474 = vld [vmem:[%s0 + $0x194] sm:$0xf]
  %v3475 = vld [vmem:[%s0 + $0x198] sm:$0xf]
  %v3476 = vld [vmem:[%s0 + $0x19c] sm:$0xf]
  %v3477 = vld [vmem:[%s0 + $0x1a0] sm:$0xf]
  %v3478 = vld [vmem:[%s0 + $0x1a4] sm:$0xf]
  %v3479 = vld [vmem:[%s0 + $0x1a8] sm:$0xf]
  %v3480 = vld [vmem:[%s0 + $0x1ac] sm:$0xf]
  %v3481 = vld [vmem:[%s0 + $0x1b0] sm:$0xf]
  %v3482 = vld [vmem:[%s0 + $0x1b4] sm:$0xf]
  %v3483 = vld [vmem:[%s0 + $0x1b8] sm:$0xf]
  %v3484 = vld [vmem:[%s0 + $0x1bc] sm:$0xf]
  %v3485 = vld [vmem:[%s0 + $0x1c0] sm:$0xf]
  %v3486 = vld [vmem:[%s0 + $0x1c4] sm:$0xf]
  %v3487 = vld [vmem:[%s0 + $0x1c8] sm:$0xf]
  %v3488 = vld [vmem:[%s0 + $0x1cc] sm:$0xf]
  %v3489 = vld [vmem:[%s0 + $0x1d0] sm:$0xf]
  %v3490 = vld [vmem:[%s0 + $0x1d4] sm:$0xf]
  %v3491 = vld [vmem:[%s0 + $0x1d8] sm:$0xf]
  %v3492 = vld [vmem:[%s0 + $0x1dc] sm:$0xf]
  %v3493 = vld [vmem:[%s0 + $0x1e0] sm:$0xf]
  %v3494 = vld [vmem:[%s0 + $0x1e4] sm:$0xf]
  %v3495 = vld [vmem:[%s0 + $0x1e8] sm:$0xf]
  %v3496 = vld [vmem:[%s0 + $0x1ec] sm:$0xf]
  %v3497 = vld [vmem:[%s0 + $0x1f0] sm:$0xf]
  %v3498 = vld [vmem:[%s0 + $0x1f4] sm:$0xf]
  %v3499 = vld [vmem:[%s0 + $0x1f8] sm:$0xf]
  %v3500 = vld [vmem:[%s0 + $0x1fc] sm:$0xf]
  %v3501 = vld [vmem:[%s0 + $0x200] sm:$0xf]
  %v3502 = vld [vmem:[%s0 + $0x204] sm:$0xf]
  %v3503 = vld [vmem:[%s0 + $0x208] sm:$0xf]
  %v3504 = vld [vmem:[%s0 + $0x20c] sm:$0xf]
  %v3505 = vld [vmem:[%s0 + $0x210] sm:$0xf]
  %v3506 = vld [vmem:[%s0 + $0x214] sm:$0xf]
  %v3507 = vld [vmem:[%s0 + $0x218] sm:$0xf]
  %v3508 = vld [vmem:[%s0 + $0x21c] sm:$0xf]
  %v3509 = vld [vmem:[%s0 + $0x220] sm:$0xf]
  %v3510 = vld [vmem:[%s0 + $0x224] sm:$0xf]
  %v3511 = vld [vmem:[%s0 + $0x228] sm:$0xf]
  %v3512 = vld [vmem:[%s0 + $0x22c] sm:$0xf]
  %v3513 = vld [vmem:[%s0 + $0x230] sm:$0xf]
  %v3514 = vld [vmem:[%s0 + $0x234] sm:$0xf]
  %v3515 = vld [vmem:[%s0 + $0x238] sm:$0xf]
  %v3516 = vld [vmem:[%s0 + $0x23c] sm:$0xf]
  %v3517 = vld [vmem:[%s0 + $0x240] sm:$0xf]
  %v3518 = vld [vmem:[%s0 + $0x244] sm:$0xf]
  %v3519 = vld [vmem:[%s0 + $0x248] sm:$0xf]
  %v3520 = vld [vmem:[%s0 + $0x24c] sm:$0xf]
  %v3521 = vld [vmem:[%s0 + $0x250] sm:$0xf]
  %v3522 = vld [vmem:[%s0 + $0x254] sm:$0xf]
  %v3523 = vld [vmem:[%s0 + $0x258] sm:$0xf]
  %v3524 = vld [vmem:[%s0 + $0x25c] sm:$0xf]
  %v3525 = vld [vmem:[%s0 + $0x260] sm:$0xf]
  %v3526 = vld [vmem:[%s0 + $0x264] sm:$0xf]
  %v3527 = vld [vmem:[%s0 + $0x268] sm:$0xf]
  %v3528 = vld [vmem:[%s0 + $0x26c] sm:$0xf]
  %v3529 = vld [vmem:[%s0 + $0x270] sm:$0xf]
  %v3530 = vld [vmem:[%s0 + $0x274] sm:$0xf]
  %v3531 = vld [vmem:[%s0 + $0x278] sm:$0xf]
  %v3532 = vld [vmem:[%s0 + $0x27c] sm:$0xf]
  %v3533 = vld [vmem:[%s0 + $0x280] sm:$0xf]
  %v3534 = vld [vmem:[%s0 + $0x284] sm:$0xf]
  %v3535 = vld [vmem:[%s0 + $0x288] sm:$0xf]
  %v3536 = vld [vmem:[%s0 + $0x28c] sm:$0xf]
  %v3537 = vld [vmem:[%s0 + $0x290] sm:$0xf]
  %v3538 = vld [vmem:[%s0 + $0x294] sm:$0xf]
  %v3539 = vld [vmem:[%s0 + $0x298] sm:$0xf]
  %v3540 = vld [vmem:[%s0 + $0x29c] sm:$0xf]
  %v3541 = vld [vmem:[%s0 + $0x2a0] sm:$0xf]
  %v3542 = vld [vmem:[%s0 + $0x2a4] sm:$0xf]
  %v3543 = vld [vmem:[%s0 + $0x2a8] sm:$0xf]
  %v3544 = vld [vmem:[%s0 + $0x2ac] sm:$0xf]
  %v3545 = vld [vmem:[%s0 + $0x2b0] sm:$0xf]
  %v3546 = vld [vmem:[%s0 + $0x2b4] sm:$0xf]
  %v3547 = vld [vmem:[%s0 + $0x2b8] sm:$0xf]
  %v3548 = vld [vmem:[%s0 + $0x2bc] sm:$0xf]
  %v3549 = vld [vmem:[%s0 + $0x2c0] sm:$0xf]
  %v3550 = vld [vmem:[%s0 + $0x2c4] sm:$0xf]
  %v3551 = vld [vmem:[%s0 + $0x2c8] sm:$0xf]
  %v3552 = vld [vmem:[%s0 + $0x2cc] sm:$0xf]
  %v3553 = vld [vmem:[%s0 + $0x2d0] sm:$0xf]
  %v3554 = vld [vmem:[%s0 + $0x2d4] sm:$0xf]
  %v3555 = vld [vmem:[%s0 + $0x2d8] sm:$0xf]
  %v3556 = vld [vmem:[%s0 + $0x2dc] sm:$0xf]
  %v3557 = vld [vmem:[%s0 + $0x2e0] sm:$0xf]
  %v3558 = vld [vmem:[%s0 + $0x2e4] sm:$0xf]
  %v3559 = vld [vmem:[%s0 + $0x2e8] sm:$0xf]
  %v3560 = vld [vmem:[%s0 + $0x2ec] sm:$0xf]
  %v3561 = vld [vmem:[%s0 + $0x2f0] sm:$0xf]
  %v3562 = vld [vmem:[%s0 + $0x2f4] sm:$0xf]
  %v3563 = vld [vmem:[%s0 + $0x2f8] sm:$0xf]
  %v3564 = vld [vmem:[%s0 + $0x2fc] sm:$0xf]
  %v3565 = vld [vmem:[%s0 + $0x300] sm:$0xf]
  %v3566 = vld [vmem:[%s0 + $0x304] sm:$0xf]
  %v3567 = vld [vmem:[%s0 + $0x308] sm:$0xf]
  %v3568 = vld [vmem:[%s0 + $0x30c] sm:$0xf]
  %v3569 = vld [vmem:[%s0 + $0x310] sm:$0xf]
  %v3570 = vld [vmem:[%s0 + $0x314] sm:$0xf]
  %v3571 = vld [vmem:[%s0 + $0x318] sm:$0xf]
  %v3572 = vld [vmem:[%s0 + $0x31c] sm:$0xf]
  %v3573 = vld [vmem:[%s0 + $0x320] sm:$0xf]
  %v3574 = vld [vmem:[%s0 + $0x324] sm:$0xf]
  %v3575 = vld [vmem:[%s0 + $0x328] sm:$0xf]
  %v3576 = vld [vmem:[%s0 + $0x32c] sm:$0xf]
  %v3577 = vld [vmem:[%s0 + $0x330] sm:$0xf]
  %v3578 = vld [vmem:[%s0 + $0x334] sm:$0xf]
  %v3579 = vld [vmem:[%s0 + $0x338] sm:$0xf]
  %v3580 = vld [vmem:[%s0 + $0x33c] sm:$0xf]
  %v3581 = vld [vmem:[%s0 + $0x340] sm:$0xf]
  %v3582 = vld [vmem:[%s0 + $0x344] sm:$0xf]
  %v3583 = vld [vmem:[%s0 + $0x348] sm:$0xf]
  %v3584 = vld [vmem:[%s0 + $0x34c] sm:$0xf]
  %v3585 = vld [vmem:[%s0 + $0x350] sm:$0xf]
  %v3586 = vld [vmem:[%s0 + $0x354] sm:$0xf]
  %v3587 = vld [vmem:[%s0 + $0x358] sm:$0xf]
  %v3588 = vld [vmem:[%s0 + $0x35c] sm:$0xf]
  %v3589 = vld [vmem:[%s0 + $0x360] sm:$0xf]
  %v3590 = vld [vmem:[%s0 + $0x364] sm:$0xf]
  %v3591 = vld [vmem:[%s0 + $0x368] sm:$0xf]
  %v3592 = vld [vmem:[%s0 + $0x36c] sm:$0xf]
  %v3593 = vld [vmem:[%s0 + $0x370] sm:$0xf]
  %v3594 = vld [vmem:[%s0 + $0x374] sm:$0xf]
  %v3595 = vld [vmem:[%s0 + $0x378] sm:$0xf]
  %v3596 = vld [vmem:[%s0 + $0x37c] sm:$0xf]
  %v3597 = vld [vmem:[%s0 + $0x380] sm:$0xf]
  %v3598 = vld [vmem:[%s0 + $0x384] sm:$0xf]
  %v3599 = vld [vmem:[%s0 + $0x388] sm:$0xf]
  %v3600 = vld [vmem:[%s0 + $0x38c] sm:$0xf]
  %v3601 = vld [vmem:[%s0 + $0x390] sm:$0xf]
  %v3602 = vld [vmem:[%s0 + $0x394] sm:$0xf]
  %v3603 = vld [vmem:[%s0 + $0x398] sm:$0xf]
  %v3604 = vld [vmem:[%s0 + $0x39c] sm:$0xf]
  %v3605 = vld [vmem:[%s0 + $0x3a0] sm:$0xf]
  %v3606 = vld [vmem:[%s0 + $0x3a4] sm:$0xf]
  %v3607 = vld [vmem:[%s0 + $0x3a8] sm:$0xf]
  %v3608 = vld [vmem:[%s0 + $0x3ac] sm:$0xf]
  %v3609 = vld [vmem:[%s0 + $0x3b0] sm:$0xf]
  %v3610 = vld [vmem:[%s0 + $0x3b4] sm:$0xf]
  %v3611 = vld [vmem:[%s0 + $0x3b8] sm:$0xf]
  %v3612 = vld [vmem:[%s0 + $0x3bc] sm:$0xf]
  %v3613 = vld [vmem:[%s0 + $0x3c0] sm:$0xf]
  %v3614 = vld [vmem:[%s0 + $0x3c4] sm:$0xf]
  %v3615 = vld [vmem:[%s0 + $0x3c8] sm:$0xf]
  %v3616 = vld [vmem:[%s0 + $0x3cc] sm:$0xf]
  %v3617 = vld [vmem:[%s0 + $0x3d0] sm:$0xf]
  %v3618 = vld [vmem:[%s0 + $0x3d4] sm:$0xf]
  %v3619 = vld [vmem:[%s0 + $0x3d8] sm:$0xf]
  %v3620 = vld [vmem:[%s0 + $0x3dc] sm:$0xf]
  %v3621 = vld [vmem:[%s0 + $0x3e0] sm:$0xf]
  %v3622 = vld [vmem:[%s0 + $0x3e4] sm:$0xf]
  %v3623 = vld [vmem:[%s0 + $0x3e8] sm:$0xf]
  %v3624 = vld [vmem:[%s0 + $0x3ec] sm:$0xf]
  %v3625 = vld [vmem:[%s0 + $0x3f0] sm:$0xf]
  %v3626 = vld [vmem:[%s0 + $0x3f4] sm:$0xf]
  %v3627 = vld [vmem:[%s0 + $0x3f8] sm:$0xf]
  %v3628 = vld [vmem:[%s0 + $0x3fc] sm:$0xf]
  %3885 = vrot.lane.b32.xlu0 %v3373, 32
  %v3886 = vpop.permute.xlu0 %3885
  %3887 = vrot.lane.b32.xlu0 %v3374, 32
  %v3888 = vpop.permute.xlu0 %3887
  %3889 = vrot.lane.b32.xlu0 %v3375, 32
  %v3890 = vpop.permute.xlu0 %3889
  %3891 = vrot.lane.b32.xlu0 %v3376, 32
  %v3892 = vpop.permute.xlu0 %3891
  %3893 = vrot.lane.b32.xlu0 %v3377, 32
  %v3894 = vpop.permute.xlu0 %3893
  %3895 = vrot.lane.b32.xlu0 %v3378, 32
  %v3896 = vpop.permute.xlu0 %3895
  %3897 = vrot.lane.b32.xlu0 %v3379, 32
  %v3898 = vpop.permute.xlu0 %3897
  %3899 = vrot.lane.b32.xlu0 %v3380, 32
  %v3900 = vpop.permute.xlu0 %3899
  %3901 = vrot.lane.b32.xlu0 %v3381, 32
  %v3902 = vpop.permute.xlu0 %3901
  %3903 = vrot.lane.b32.xlu0 %v3382, 32
  %v3904 = vpop.permute.xlu0 %3903
  %3905 = vrot.lane.b32.xlu0 %v3383, 32
  %v3906 = vpop.permute.xlu0 %3905
  %3907 = vrot.lane.b32.xlu0 %v3384, 32
  %v3908 = vpop.permute.xlu0 %3907
  %3909 = vrot.lane.b32.xlu0 %v3385, 32
  %v3910 = vpop.permute.xlu0 %3909
  %3911 = vrot.lane.b32.xlu0 %v3386, 32
  %v3912 = vpop.permute.xlu0 %3911
  %3913 = vrot.lane.b32.xlu0 %v3387, 32
  %v3914 = vpop.permute.xlu0 %3913
  %3915 = vrot.lane.b32.xlu0 %v3388, 32
  %v3916 = vpop.permute.xlu0 %3915
  %3917 = vrot.lane.b32.xlu0 %v3389, 32
  %v3918 = vpop.permute.xlu0 %3917
  %3919 = vrot.lane.b32.xlu0 %v3390, 32
  %v3920 = vpop.permute.xlu0 %3919
  %3921 = vrot.lane.b32.xlu0 %v3391, 32
  %v3922 = vpop.permute.xlu0 %3921
  %3923 = vrot.lane.b32.xlu0 %v3392, 32
  %v3924 = vpop.permute.xlu0 %3923
  %3925 = vrot.lane.b32.xlu0 %v3393, 32
  %v3926 = vpop.permute.xlu0 %3925
  %3927 = vrot.lane.b32.xlu0 %v3394, 32
  %v3928 = vpop.permute.xlu0 %3927
  %3929 = vrot.lane.b32.xlu0 %v3395, 32
  %v3930 = vpop.permute.xlu0 %3929
  %3931 = vrot.lane.b32.xlu0 %v3396, 32
  %v3932 = vpop.permute.xlu0 %3931
  %3933 = vrot.lane.b32.xlu0 %v3397, 32
  %v3934 = vpop.permute.xlu0 %3933
  %3935 = vrot.lane.b32.xlu0 %v3398, 32
  %v3936 = vpop.permute.xlu0 %3935
  %3937 = vrot.lane.b32.xlu0 %v3399, 32
  %v3938 = vpop.permute.xlu0 %3937
  %3939 = vrot.lane.b32.xlu0 %v3400, 32
  %v3940 = vpop.permute.xlu0 %3939
  %3941 = vrot.lane.b32.xlu0 %v3401, 32
  %v3942 = vpop.permute.xlu0 %3941
  %3943 = vrot.lane.b32.xlu0 %v3402, 32
  %v3944 = vpop.permute.xlu0 %3943
  %3945 = vrot.lane.b32.xlu0 %v3403, 32
  %v3946 = vpop.permute.xlu0 %3945
  %3947 = vrot.lane.b32.xlu0 %v3404, 32
  %v3948 = vpop.permute.xlu0 %3947
  %3949 = vrot.lane.b32.xlu0 %v3405, 32
  %v3950 = vpop.permute.xlu0 %3949
  %3951 = vrot.lane.b32.xlu0 %v3406, 32
  %v3952 = vpop.permute.xlu0 %3951
  %3953 = vrot.lane.b32.xlu0 %v3407, 32
  %v3954 = vpop.permute.xlu0 %3953
  %3955 = vrot.lane.b32.xlu0 %v3408, 32
  %v3956 = vpop.permute.xlu0 %3955
  %3957 = vrot.lane.b32.xlu0 %v3409, 32
  %v3958 = vpop.permute.xlu0 %3957
  %3959 = vrot.lane.b32.xlu0 %v3410, 32
  %v3960 = vpop.permute.xlu0 %3959
  %3961 = vrot.lane.b32.xlu0 %v3411, 32
  %v3962 = vpop.permute.xlu0 %3961
  %3963 = vrot.lane.b32.xlu0 %v3412, 32
  %v3964 = vpop.permute.xlu0 %3963
  %3965 = vrot.lane.b32.xlu0 %v3413, 32
  %v3966 = vpop.permute.xlu0 %3965
  %3967 = vrot.lane.b32.xlu0 %v3414, 32
  %v3968 = vpop.permute.xlu0 %3967
  %3969 = vrot.lane.b32.xlu0 %v3415, 32
  %v3970 = vpop.permute.xlu0 %3969
  %3971 = vrot.lane.b32.xlu0 %v3416, 32
  %v3972 = vpop.permute.xlu0 %3971
  %3973 = vrot.lane.b32.xlu0 %v3417, 32
  %v3974 = vpop.permute.xlu0 %3973
  %3975 = vrot.lane.b32.xlu0 %v3418, 32
  %v3976 = vpop.permute.xlu0 %3975
  %3977 = vrot.lane.b32.xlu0 %v3419, 32
  %v3978 = vpop.permute.xlu0 %3977
  %3979 = vrot.lane.b32.xlu0 %v3420, 32
  %v3980 = vpop.permute.xlu0 %3979
  %3981 = vrot.lane.b32.xlu0 %v3421, 32
  %v3982 = vpop.permute.xlu0 %3981
  %3983 = vrot.lane.b32.xlu0 %v3422, 32
  %v3984 = vpop.permute.xlu0 %3983
  %3985 = vrot.lane.b32.xlu0 %v3423, 32
  %v3986 = vpop.permute.xlu0 %3985
  %3987 = vrot.lane.b32.xlu0 %v3424, 32
  %v3988 = vpop.permute.xlu0 %3987
  %3989 = vrot.lane.b32.xlu0 %v3425, 32
  %v3990 = vpop.permute.xlu0 %3989
  %3991 = vrot.lane.b32.xlu0 %v3426, 32
  %v3992 = vpop.permute.xlu0 %3991
  %3993 = vrot.lane.b32.xlu0 %v3427, 32
  %v3994 = vpop.permute.xlu0 %3993
  %3995 = vrot.lane.b32.xlu0 %v3428, 32
  %v3996 = vpop.permute.xlu0 %3995
  %3997 = vrot.lane.b32.xlu0 %v3429, 32
  %v3998 = vpop.permute.xlu0 %3997
  %3999 = vrot.lane.b32.xlu0 %v3430, 32
  %v4000 = vpop.permute.xlu0 %3999
  %4001 = vrot.lane.b32.xlu0 %v3431, 32
  %v4002 = vpop.permute.xlu0 %4001
  %4003 = vrot.lane.b32.xlu0 %v3432, 32
  %v4004 = vpop.permute.xlu0 %4003
  %4005 = vrot.lane.b32.xlu0 %v3433, 32
  %v4006 = vpop.permute.xlu0 %4005
  %4007 = vrot.lane.b32.xlu0 %v3434, 32
  %v4008 = vpop.permute.xlu0 %4007
  %4009 = vrot.lane.b32.xlu0 %v3435, 32
  %v4010 = vpop.permute.xlu0 %4009
  %4011 = vrot.lane.b32.xlu0 %v3436, 32
  %v4012 = vpop.permute.xlu0 %4011
  %4013 = vrot.lane.b32.xlu0 %v3437, 32
  %v4014 = vpop.permute.xlu0 %4013
  %4015 = vrot.lane.b32.xlu0 %v3438, 32
  %v4016 = vpop.permute.xlu0 %4015
  %4017 = vrot.lane.b32.xlu0 %v3439, 32
  %v4018 = vpop.permute.xlu0 %4017
  %4019 = vrot.lane.b32.xlu0 %v3440, 32
  %v4020 = vpop.permute.xlu0 %4019
  %4021 = vrot.lane.b32.xlu0 %v3441, 32
  %v4022 = vpop.permute.xlu0 %4021
  %4023 = vrot.lane.b32.xlu0 %v3442, 32
  %v4024 = vpop.permute.xlu0 %4023
  %4025 = vrot.lane.b32.xlu0 %v3443, 32
  %v4026 = vpop.permute.xlu0 %4025
  %4027 = vrot.lane.b32.xlu0 %v3444, 32
  %v4028 = vpop.permute.xlu0 %4027
  %4029 = vrot.lane.b32.xlu0 %v3445, 32
  %v4030 = vpop.permute.xlu0 %4029
  %4031 = vrot.lane.b32.xlu0 %v3446, 32
  %v4032 = vpop.permute.xlu0 %4031
  %4033 = vrot.lane.b32.xlu0 %v3447, 32
  %v4034 = vpop.permute.xlu0 %4033
  %4035 = vrot.lane.b32.xlu0 %v3448, 32
  %v4036 = vpop.permute.xlu0 %4035
  %4037 = vrot.lane.b32.xlu0 %v3449, 32
  %v4038 = vpop.permute.xlu0 %4037
  %4039 = vrot.lane.b32.xlu0 %v3450, 32
  %v4040 = vpop.permute.xlu0 %4039
  %4041 = vrot.lane.b32.xlu0 %v3451, 32
  %v4042 = vpop.permute.xlu0 %4041
  %4043 = vrot.lane.b32.xlu0 %v3452, 32
  %v4044 = vpop.permute.xlu0 %4043
  %4045 = vrot.lane.b32.xlu0 %v3453, 32
  %v4046 = vpop.permute.xlu0 %4045
  %4047 = vrot.lane.b32.xlu0 %v3454, 32
  %v4048 = vpop.permute.xlu0 %4047
  %4049 = vrot.lane.b32.xlu0 %v3455, 32
  %v4050 = vpop.permute.xlu0 %4049
  %4051 = vrot.lane.b32.xlu0 %v3456, 32
  %v4052 = vpop.permute.xlu0 %4051
  %4053 = vrot.lane.b32.xlu0 %v3457, 32
  %v4054 = vpop.permute.xlu0 %4053
  %4055 = vrot.lane.b32.xlu0 %v3458, 32
  %v4056 = vpop.permute.xlu0 %4055
  %4057 = vrot.lane.b32.xlu0 %v3459, 32
  %v4058 = vpop.permute.xlu0 %4057
  %4059 = vrot.lane.b32.xlu0 %v3460, 32
  %v4060 = vpop.permute.xlu0 %4059
  %4061 = vrot.lane.b32.xlu0 %v3461, 32
  %v4062 = vpop.permute.xlu0 %4061
  %4063 = vrot.lane.b32.xlu0 %v3462, 32
  %v4064 = vpop.permute.xlu0 %4063
  %4065 = vrot.lane.b32.xlu0 %v3463, 32
  %v4066 = vpop.permute.xlu0 %4065
  %4067 = vrot.lane.b32.xlu0 %v3464, 32
  %v4068 = vpop.permute.xlu0 %4067
  %4069 = vrot.lane.b32.xlu0 %v3465, 32
  %v4070 = vpop.permute.xlu0 %4069
  %4071 = vrot.lane.b32.xlu0 %v3466, 32
  %v4072 = vpop.permute.xlu0 %4071
  %4073 = vrot.lane.b32.xlu0 %v3467, 32
  %v4074 = vpop.permute.xlu0 %4073
  %4075 = vrot.lane.b32.xlu0 %v3468, 32
  %v4076 = vpop.permute.xlu0 %4075
  %4077 = vrot.lane.b32.xlu0 %v3469, 32
  %v4078 = vpop.permute.xlu0 %4077
  %4079 = vrot.lane.b32.xlu0 %v3470, 32
  %v4080 = vpop.permute.xlu0 %4079
  %4081 = vrot.lane.b32.xlu0 %v3471, 32
  %v4082 = vpop.permute.xlu0 %4081
  %4083 = vrot.lane.b32.xlu0 %v3472, 32
  %v4084 = vpop.permute.xlu0 %4083
  %4085 = vrot.lane.b32.xlu0 %v3473, 32
  %v4086 = vpop.permute.xlu0 %4085
  %4087 = vrot.lane.b32.xlu0 %v3474, 32
  %v4088 = vpop.permute.xlu0 %4087
  %4089 = vrot.lane.b32.xlu0 %v3475, 32
  %v4090 = vpop.permute.xlu0 %4089
  %4091 = vrot.lane.b32.xlu0 %v3476, 32
  %v4092 = vpop.permute.xlu0 %4091
  %4093 = vrot.lane.b32.xlu0 %v3477, 32
  %v4094 = vpop.permute.xlu0 %4093
  %4095 = vrot.lane.b32.xlu0 %v3478, 32
  %v4096 = vpop.permute.xlu0 %4095
  %4097 = vrot.lane.b32.xlu0 %v3479, 32
  %v4098 = vpop.permute.xlu0 %4097
  %4099 = vrot.lane.b32.xlu0 %v3480, 32
  %v4100 = vpop.permute.xlu0 %4099
  %4101 = vrot.lane.b32.xlu0 %v3481, 32
  %v4102 = vpop.permute.xlu0 %4101
  %4103 = vrot.lane.b32.xlu0 %v3482, 32
  %v4104 = vpop.permute.xlu0 %4103
  %4105 = vrot.lane.b32.xlu0 %v3483, 32
  %v4106 = vpop.permute.xlu0 %4105
  %4107 = vrot.lane.b32.xlu0 %v3484, 32
  %v4108 = vpop.permute.xlu0 %4107
  %4109 = vrot.lane.b32.xlu0 %v3485, 32
  %v4110 = vpop.permute.xlu0 %4109
  %4111 = vrot.lane.b32.xlu0 %v3486, 32
  %v4112 = vpop.permute.xlu0 %4111
  %4113 = vrot.lane.b32.xlu0 %v3487, 32
  %v4114 = vpop.permute.xlu0 %4113
  %4115 = vrot.lane.b32.xlu0 %v3488, 32
  %v4116 = vpop.permute.xlu0 %4115
  %4117 = vrot.lane.b32.xlu0 %v3489, 32
  %v4118 = vpop.permute.xlu0 %4117
  %4119 = vrot.lane.b32.xlu0 %v3490, 32
  %v4120 = vpop.permute.xlu0 %4119
  %4121 = vrot.lane.b32.xlu0 %v3491, 32
  %v4122 = vpop.permute.xlu0 %4121
  %4123 = vrot.lane.b32.xlu0 %v3492, 32
  %v4124 = vpop.permute.xlu0 %4123
  %4125 = vrot.lane.b32.xlu0 %v3493, 32
  %v4126 = vpop.permute.xlu0 %4125
  %4127 = vrot.lane.b32.xlu0 %v3494, 32
  %v4128 = vpop.permute.xlu0 %4127
  %4129 = vrot.lane.b32.xlu0 %v3495, 32
  %v4130 = vpop.permute.xlu0 %4129
  %4131 = vrot.lane.b32.xlu0 %v3496, 32
  %v4132 = vpop.permute.xlu0 %4131
  %4133 = vrot.lane.b32.xlu0 %v3497, 32
  %v4134 = vpop.permute.xlu0 %4133
  %4135 = vrot.lane.b32.xlu0 %v3498, 32
  %v4136 = vpop.permute.xlu0 %4135
  %4137 = vrot.lane.b32.xlu0 %v3499, 32
  %v4138 = vpop.permute.xlu0 %4137
  %4139 = vrot.lane.b32.xlu0 %v3500, 32
  %v4140 = vpop.permute.xlu0 %4139
  %4141 = vrot.lane.b32.xlu0 %v3501, 32
  %v4142 = vpop.permute.xlu0 %4141
  %4143 = vrot.lane.b32.xlu0 %v3502, 32
  %v4144 = vpop.permute.xlu0 %4143
  %4145 = vrot.lane.b32.xlu0 %v3503, 32
  %v4146 = vpop.permute.xlu0 %4145
  %4147 = vrot.lane.b32.xlu0 %v3504, 32
  %v4148 = vpop.permute.xlu0 %4147
  %4149 = vrot.lane.b32.xlu0 %v3505, 32
  %v4150 = vpop.permute.xlu0 %4149
  %4151 = vrot.lane.b32.xlu0 %v3506, 32
  %v4152 = vpop.permute.xlu0 %4151
  %4153 = vrot.lane.b32.xlu0 %v3507, 32
  %v4154 = vpop.permute.xlu0 %4153
  %4155 = vrot.lane.b32.xlu0 %v3508, 32
  %v4156 = vpop.permute.xlu0 %4155
  %4157 = vrot.lane.b32.xlu0 %v3509, 32
  %v4158 = vpop.permute.xlu0 %4157
  %4159 = vrot.lane.b32.xlu0 %v3510, 32
  %v4160 = vpop.permute.xlu0 %4159
  %4161 = vrot.lane.b32.xlu0 %v3511, 32
  %v4162 = vpop.permute.xlu0 %4161
  %4163 = vrot.lane.b32.xlu0 %v3512, 32
  %v4164 = vpop.permute.xlu0 %4163
  %4165 = vrot.lane.b32.xlu0 %v3513, 32
  %v4166 = vpop.permute.xlu0 %4165
  %4167 = vrot.lane.b32.xlu0 %v3514, 32
  %v4168 = vpop.permute.xlu0 %4167
  %4169 = vrot.lane.b32.xlu0 %v3515, 32
  %v4170 = vpop.permute.xlu0 %4169
  %4171 = vrot.lane.b32.xlu0 %v3516, 32
  %v4172 = vpop.permute.xlu0 %4171
  %4173 = vrot.lane.b32.xlu0 %v3517, 32
  %v4174 = vpop.permute.xlu0 %4173
  %4175 = vrot.lane.b32.xlu0 %v3518, 32
  %v4176 = vpop.permute.xlu0 %4175
  %4177 = vrot.lane.b32.xlu0 %v3519, 32
  %v4178 = vpop.permute.xlu0 %4177
  %4179 = vrot.lane.b32.xlu0 %v3520, 32
  %v4180 = vpop.permute.xlu0 %4179
  %4181 = vrot.lane.b32.xlu0 %v3521, 32
  %v4182 = vpop.permute.xlu0 %4181
  %4183 = vrot.lane.b32.xlu0 %v3522, 32
  %v4184 = vpop.permute.xlu0 %4183
  %4185 = vrot.lane.b32.xlu0 %v3523, 32
  %v4186 = vpop.permute.xlu0 %4185
  %4187 = vrot.lane.b32.xlu0 %v3524, 32
  %v4188 = vpop.permute.xlu0 %4187
  %4189 = vrot.lane.b32.xlu0 %v3525, 32
  %v4190 = vpop.permute.xlu0 %4189
  %4191 = vrot.lane.b32.xlu0 %v3526, 32
  %v4192 = vpop.permute.xlu0 %4191
  %4193 = vrot.lane.b32.xlu0 %v3527, 32
  %v4194 = vpop.permute.xlu0 %4193
  %4195 = vrot.lane.b32.xlu0 %v3528, 32
  %v4196 = vpop.permute.xlu0 %4195
  %4197 = vrot.lane.b32.xlu0 %v3529, 32
  %v4198 = vpop.permute.xlu0 %4197
  %4199 = vrot.lane.b32.xlu0 %v3530, 32
  %v4200 = vpop.permute.xlu0 %4199
  %4201 = vrot.lane.b32.xlu0 %v3531, 32
  %v4202 = vpop.permute.xlu0 %4201
  %4203 = vrot.lane.b32.xlu0 %v3532, 32
  %v4204 = vpop.permute.xlu0 %4203
  %4205 = vrot.lane.b32.xlu0 %v3533, 32
  %v4206 = vpop.permute.xlu0 %4205
  %4207 = vrot.lane.b32.xlu0 %v3534, 32
  %v4208 = vpop.permute.xlu0 %4207
  %4209 = vrot.lane.b32.xlu0 %v3535, 32
  %v4210 = vpop.permute.xlu0 %4209
  %4211 = vrot.lane.b32.xlu0 %v3536, 32
  %v4212 = vpop.permute.xlu0 %4211
  %4213 = vrot.lane.b32.xlu0 %v3537, 32
  %v4214 = vpop.permute.xlu0 %4213
  %4215 = vrot.lane.b32.xlu0 %v3538, 32
  %v4216 = vpop.permute.xlu0 %4215
  %4217 = vrot.lane.b32.xlu0 %v3539, 32
  %v4218 = vpop.permute.xlu0 %4217
  %4219 = vrot.lane.b32.xlu0 %v3540, 32
  %v4220 = vpop.permute.xlu0 %4219
  %4221 = vrot.lane.b32.xlu0 %v3541, 32
  %v4222 = vpop.permute.xlu0 %4221
  %4223 = vrot.lane.b32.xlu0 %v3542, 32
  %v4224 = vpop.permute.xlu0 %4223
  %4225 = vrot.lane.b32.xlu0 %v3543, 32
  %v4226 = vpop.permute.xlu0 %4225
  %4227 = vrot.lane.b32.xlu0 %v3544, 32
  %v4228 = vpop.permute.xlu0 %4227
  %4229 = vrot.lane.b32.xlu0 %v3545, 32
  %v4230 = vpop.permute.xlu0 %4229
  %4231 = vrot.lane.b32.xlu0 %v3546, 32
  %v4232 = vpop.permute.xlu0 %4231
  %4233 = vrot.lane.b32.xlu0 %v3547, 32
  %v4234 = vpop.permute.xlu0 %4233
  %4235 = vrot.lane.b32.xlu0 %v3548, 32
  %v4236 = vpop.permute.xlu0 %4235
  %4237 = vrot.lane.b32.xlu0 %v3549, 32
  %v4238 = vpop.permute.xlu0 %4237
  %4239 = vrot.lane.b32.xlu0 %v3550, 32
  %v4240 = vpop.permute.xlu0 %4239
  %4241 = vrot.lane.b32.xlu0 %v3551, 32
  %v4242 = vpop.permute.xlu0 %4241
  %4243 = vrot.lane.b32.xlu0 %v3552, 32
  %v4244 = vpop.permute.xlu0 %4243
  %4245 = vrot.lane.b32.xlu0 %v3553, 32
  %v4246 = vpop.permute.xlu0 %4245
  %4247 = vrot.lane.b32.xlu0 %v3554, 32
  %v4248 = vpop.permute.xlu0 %4247
  %4249 = vrot.lane.b32.xlu0 %v3555, 32
  %v4250 = vpop.permute.xlu0 %4249
  %4251 = vrot.lane.b32.xlu0 %v3556, 32
  %v4252 = vpop.permute.xlu0 %4251
  %4253 = vrot.lane.b32.xlu0 %v3557, 32
  %v4254 = vpop.permute.xlu0 %4253
  %4255 = vrot.lane.b32.xlu0 %v3558, 32
  %v4256 = vpop.permute.xlu0 %4255
  %4257 = vrot.lane.b32.xlu0 %v3559, 32
  %v4258 = vpop.permute.xlu0 %4257
  %4259 = vrot.lane.b32.xlu0 %v3560, 32
  %v4260 = vpop.permute.xlu0 %4259
  %4261 = vrot.lane.b32.xlu0 %v3561, 32
  %v4262 = vpop.permute.xlu0 %4261
  %4263 = vrot.lane.b32.xlu0 %v3562, 32
  %v4264 = vpop.permute.xlu0 %4263
  %4265 = vrot.lane.b32.xlu0 %v3563, 32
  %v4266 = vpop.permute.xlu0 %4265
  %4267 = vrot.lane.b32.xlu0 %v3564, 32
  %v4268 = vpop.permute.xlu0 %4267
  %4269 = vrot.lane.b32.xlu0 %v3565, 32
  %v4270 = vpop.permute.xlu0 %4269
  %4271 = vrot.lane.b32.xlu0 %v3566, 32
  %v4272 = vpop.permute.xlu0 %4271
  %4273 = vrot.lane.b32.xlu0 %v3567, 32
  %v4274 = vpop.permute.xlu0 %4273
  %4275 = vrot.lane.b32.xlu0 %v3568, 32
  %v4276 = vpop.permute.xlu0 %4275
  %4277 = vrot.lane.b32.xlu0 %v3569, 32
  %v4278 = vpop.permute.xlu0 %4277
  %4279 = vrot.lane.b32.xlu0 %v3570, 32
  %v4280 = vpop.permute.xlu0 %4279
  %4281 = vrot.lane.b32.xlu0 %v3571, 32
  %v4282 = vpop.permute.xlu0 %4281
  %4283 = vrot.lane.b32.xlu0 %v3572, 32
  %v4284 = vpop.permute.xlu0 %4283
  %4285 = vrot.lane.b32.xlu0 %v3573, 32
  %v4286 = vpop.permute.xlu0 %4285
  %4287 = vrot.lane.b32.xlu0 %v3574, 32
  %v4288 = vpop.permute.xlu0 %4287
  %4289 = vrot.lane.b32.xlu0 %v3575, 32
  %v4290 = vpop.permute.xlu0 %4289
  %4291 = vrot.lane.b32.xlu0 %v3576, 32
  %v4292 = vpop.permute.xlu0 %4291
  %4293 = vrot.lane.b32.xlu0 %v3577, 32
  %v4294 = vpop.permute.xlu0 %4293
  %4295 = vrot.lane.b32.xlu0 %v3578, 32
  %v4296 = vpop.permute.xlu0 %4295
  %4297 = vrot.lane.b32.xlu0 %v3579, 32
  %v4298 = vpop.permute.xlu0 %4297
  %4299 = vrot.lane.b32.xlu0 %v3580, 32
  %v4300 = vpop.permute.xlu0 %4299
  %4301 = vrot.lane.b32.xlu0 %v3581, 32
  %v4302 = vpop.permute.xlu0 %4301
  %4303 = vrot.lane.b32.xlu0 %v3582, 32
  %v4304 = vpop.permute.xlu0 %4303
  %4305 = vrot.lane.b32.xlu0 %v3583, 32
  %v4306 = vpop.permute.xlu0 %4305
  %4307 = vrot.lane.b32.xlu0 %v3584, 32
  %v4308 = vpop.permute.xlu0 %4307
  %4309 = vrot.lane.b32.xlu0 %v3585, 32
  %v4310 = vpop.permute.xlu0 %4309
  %4311 = vrot.lane.b32.xlu0 %v3586, 32
  %v4312 = vpop.permute.xlu0 %4311
  %4313 = vrot.lane.b32.xlu0 %v3587, 32
  %v4314 = vpop.permute.xlu0 %4313
  %4315 = vrot.lane.b32.xlu0 %v3588, 32
  %v4316 = vpop.permute.xlu0 %4315
  %4317 = vrot.lane.b32.xlu0 %v3589, 32
  %v4318 = vpop.permute.xlu0 %4317
  %4319 = vrot.lane.b32.xlu0 %v3590, 32
  %v4320 = vpop.permute.xlu0 %4319
  %4321 = vrot.lane.b32.xlu0 %v3591, 32
  %v4322 = vpop.permute.xlu0 %4321
  %4323 = vrot.lane.b32.xlu0 %v3592, 32
  %v4324 = vpop.permute.xlu0 %4323
  %4325 = vrot.lane.b32.xlu0 %v3593, 32
  %v4326 = vpop.permute.xlu0 %4325
  %4327 = vrot.lane.b32.xlu0 %v3594, 32
  %v4328 = vpop.permute.xlu0 %4327
  %4329 = vrot.lane.b32.xlu0 %v3595, 32
  %v4330 = vpop.permute.xlu0 %4329
  %4331 = vrot.lane.b32.xlu0 %v3596, 32
  %v4332 = vpop.permute.xlu0 %4331
  %4333 = vrot.lane.b32.xlu0 %v3597, 32
  %v4334 = vpop.permute.xlu0 %4333
  %4335 = vrot.lane.b32.xlu0 %v3598, 32
  %v4336 = vpop.permute.xlu0 %4335
  %4337 = vrot.lane.b32.xlu0 %v3599, 32
  %v4338 = vpop.permute.xlu0 %4337
  %4339 = vrot.lane.b32.xlu0 %v3600, 32
  %v4340 = vpop.permute.xlu0 %4339
  %4341 = vrot.lane.b32.xlu0 %v3601, 32
  %v4342 = vpop.permute.xlu0 %4341
  %4343 = vrot.lane.b32.xlu0 %v3602, 32
  %v4344 = vpop.permute.xlu0 %4343
  %4345 = vrot.lane.b32.xlu0 %v3603, 32
  %v4346 = vpop.permute.xlu0 %4345
  %4347 = vrot.lane.b32.xlu0 %v3604, 32
  %v4348 = vpop.permute.xlu0 %4347
  %4349 = vrot.lane.b32.xlu0 %v3605, 32
  %v4350 = vpop.permute.xlu0 %4349
  %4351 = vrot.lane.b32.xlu0 %v3606, 32
  %v4352 = vpop.permute.xlu0 %4351
  %4353 = vrot.lane.b32.xlu0 %v3607, 32
  %v4354 = vpop.permute.xlu0 %4353
  %4355 = vrot.lane.b32.xlu0 %v3608, 32
  %v4356 = vpop.permute.xlu0 %4355
  %4357 = vrot.lane.b32.xlu0 %v3609, 32
  %v4358 = vpop.permute.xlu0 %4357
  %4359 = vrot.lane.b32.xlu0 %v3610, 32
  %v4360 = vpop.permute.xlu0 %4359
  %4361 = vrot.lane.b32.xlu0 %v3611, 32
  %v4362 = vpop.permute.xlu0 %4361
  %4363 = vrot.lane.b32.xlu0 %v3612, 32
  %v4364 = vpop.permute.xlu0 %4363
  %4365 = vrot.lane.b32.xlu0 %v3613, 32
  %v4366 = vpop.permute.xlu0 %4365
  %4367 = vrot.lane.b32.xlu0 %v3614, 32
  %v4368 = vpop.permute.xlu0 %4367
  %4369 = vrot.lane.b32.xlu0 %v3615, 32
  %v4370 = vpop.permute.xlu0 %4369
  %4371 = vrot.lane.b32.xlu0 %v3616, 32
  %v4372 = vpop.permute.xlu0 %4371
  %4373 = vrot.lane.b32.xlu0 %v3617, 32
  %v4374 = vpop.permute.xlu0 %4373
  %4375 = vrot.lane.b32.xlu0 %v3618, 32
  %v4376 = vpop.permute.xlu0 %4375
  %4377 = vrot.lane.b32.xlu0 %v3619, 32
  %v4378 = vpop.permute.xlu0 %4377
  %4379 = vrot.lane.b32.xlu0 %v3620, 32
  %v4380 = vpop.permute.xlu0 %4379
  %4381 = vrot.lane.b32.xlu0 %v3621, 32
  %v4382 = vpop.permute.xlu0 %4381
  %4383 = vrot.lane.b32.xlu0 %v3622, 32
  %v4384 = vpop.permute.xlu0 %4383
  %4385 = vrot.lane.b32.xlu0 %v3623, 32
  %v4386 = vpop.permute.xlu0 %4385
  %4387 = vrot.lane.b32.xlu0 %v3624, 32
  %v4388 = vpop.permute.xlu0 %4387
  %4389 = vrot.lane.b32.xlu0 %v3625, 32
  %v4390 = vpop.permute.xlu0 %4389
  %4391 = vrot.lane.b32.xlu0 %v3626, 32
  %v4392 = vpop.permute.xlu0 %4391
  %4393 = vrot.lane.b32.xlu0 %v3627, 32
  %v4394 = vpop.permute.xlu0 %4393
  %4395 = vrot.lane.b32.xlu0 %v3628, 32
  %v4396 = vpop.permute.xlu0 %4395
  %vm4653 = vcmask 519424
  %4654 = vst.msk [vmem:[#allocation2] sm:$0xf] %vm4653, %v3886
  %4655 = vst.msk [vmem:[#allocation2 + $0x4] sm:$0xf] %vm4653, %v3888
  %4656 = vst.msk [vmem:[#allocation2 + $0x8] sm:$0xf] %vm4653, %v3890
  %4657 = vst.msk [vmem:[#allocation2 + $0xc] sm:$0xf] %vm4653, %v3892
  %4658 = vst.msk [vmem:[#allocation2 + $0x10] sm:$0xf] %vm4653, %v3894
  %4659 = vst.msk [vmem:[#allocation2 + $0x14] sm:$0xf] %vm4653, %v3896
  %4660 = vst.msk [vmem:[#allocation2 + $0x18] sm:$0xf] %vm4653, %v3898
  %4661 = vst.msk [vmem:[#allocation2 + $0x1c] sm:$0xf] %vm4653, %v3900
  %4662 = vst.msk [vmem:[#allocation2 + $0x20] sm:$0xf] %vm4653, %v3902
  %4663 = vst.msk [vmem:[#allocation2 + $0x24] sm:$0xf] %vm4653, %v3904
  %4664 = vst.msk [vmem:[#allocation2 + $0x28] sm:$0xf] %vm4653, %v3906
  %4665 = vst.msk [vmem:[#allocation2 + $0x2c] sm:$0xf] %vm4653, %v3908
  %4666 = vst.msk [vmem:[#allocation2 + $0x30] sm:$0xf] %vm4653, %v3910
  %4667 = vst.msk [vmem:[#allocation2 + $0x34] sm:$0xf] %vm4653, %v3912
  %4668 = vst.msk [vmem:[#allocation2 + $0x38] sm:$0xf] %vm4653, %v3914
  %4669 = vst.msk [vmem:[#allocation2 + $0x3c] sm:$0xf] %vm4653, %v3916
  %4670 = vst.msk [vmem:[#allocation2 + $0x40] sm:$0xf] %vm4653, %v3918
  %4671 = vst.msk [vmem:[#allocation2 + $0x44] sm:$0xf] %vm4653, %v3920
  %4672 = vst.msk [vmem:[#allocation2 + $0x48] sm:$0xf] %vm4653, %v3922
  %4673 = vst.msk [vmem:[#allocation2 + $0x4c] sm:$0xf] %vm4653, %v3924
  %4674 = vst.msk [vmem:[#allocation2 + $0x50] sm:$0xf] %vm4653, %v3926
  %4675 = vst.msk [vmem:[#allocation2 + $0x54] sm:$0xf] %vm4653, %v3928
  %4676 = vst.msk [vmem:[#allocation2 + $0x58] sm:$0xf] %vm4653, %v3930
  %4677 = vst.msk [vmem:[#allocation2 + $0x5c] sm:$0xf] %vm4653, %v3932
  %4678 = vst.msk [vmem:[#allocation2 + $0x60] sm:$0xf] %vm4653, %v3934
  %4679 = vst.msk [vmem:[#allocation2 + $0x64] sm:$0xf] %vm4653, %v3936
  %4680 = vst.msk [vmem:[#allocation2 + $0x68] sm:$0xf] %vm4653, %v3938
  %4681 = vst.msk [vmem:[#allocation2 + $0x6c] sm:$0xf] %vm4653, %v3940
  %4682 = vst.msk [vmem:[#allocation2 + $0x70] sm:$0xf] %vm4653, %v3942
  %4683 = vst.msk [vmem:[#allocation2 + $0x74] sm:$0xf] %vm4653, %v3944
  %4684 = vst.msk [vmem:[#allocation2 + $0x78] sm:$0xf] %vm4653, %v3946
  %4685 = vst.msk [vmem:[#allocation2 + $0x7c] sm:$0xf] %vm4653, %v3948
  %4686 = vst.msk [vmem:[#allocation2 + $0x80] sm:$0xf] %vm4653, %v3950
  %4687 = vst.msk [vmem:[#allocation2 + $0x84] sm:$0xf] %vm4653, %v3952
  %4688 = vst.msk [vmem:[#allocation2 + $0x88] sm:$0xf] %vm4653, %v3954
  %4689 = vst.msk [vmem:[#allocation2 + $0x8c] sm:$0xf] %vm4653, %v3956
  %4690 = vst.msk [vmem:[#allocation2 + $0x90] sm:$0xf] %vm4653, %v3958
  %4691 = vst.msk [vmem:[#allocation2 + $0x94] sm:$0xf] %vm4653, %v3960
  %4692 = vst.msk [vmem:[#allocation2 + $0x98] sm:$0xf] %vm4653, %v3962
  %4693 = vst.msk [vmem:[#allocation2 + $0x9c] sm:$0xf] %vm4653, %v3964
  %4694 = vst.msk [vmem:[#allocation2 + $0xa0] sm:$0xf] %vm4653, %v3966
  %4695 = vst.msk [vmem:[#allocation2 + $0xa4] sm:$0xf] %vm4653, %v3968
  %4696 = vst.msk [vmem:[#allocation2 + $0xa8] sm:$0xf] %vm4653, %v3970
  %4697 = vst.msk [vmem:[#allocation2 + $0xac] sm:$0xf] %vm4653, %v3972
  %4698 = vst.msk [vmem:[#allocation2 + $0xb0] sm:$0xf] %vm4653, %v3974
  %4699 = vst.msk [vmem:[#allocation2 + $0xb4] sm:$0xf] %vm4653, %v3976
  %4700 = vst.msk [vmem:[#allocation2 + $0xb8] sm:$0xf] %vm4653, %v3978
  %4701 = vst.msk [vmem:[#allocation2 + $0xbc] sm:$0xf] %vm4653, %v3980
  %4702 = vst.msk [vmem:[#allocation2 + $0xc0] sm:$0xf] %vm4653, %v3982
  %4703 = vst.msk [vmem:[#allocation2 + $0xc4] sm:$0xf] %vm4653, %v3984
  %4704 = vst.msk [vmem:[#allocation2 + $0xc8] sm:$0xf] %vm4653, %v3986
  %4705 = vst.msk [vmem:[#allocation2 + $0xcc] sm:$0xf] %vm4653, %v3988
  %4706 = vst.msk [vmem:[#allocation2 + $0xd0] sm:$0xf] %vm4653, %v3990
  %4707 = vst.msk [vmem:[#allocation2 + $0xd4] sm:$0xf] %vm4653, %v3992
  %4708 = vst.msk [vmem:[#allocation2 + $0xd8] sm:$0xf] %vm4653, %v3994
  %4709 = vst.msk [vmem:[#allocation2 + $0xdc] sm:$0xf] %vm4653, %v3996
  %4710 = vst.msk [vmem:[#allocation2 + $0xe0] sm:$0xf] %vm4653, %v3998
  %4711 = vst.msk [vmem:[#allocation2 + $0xe4] sm:$0xf] %vm4653, %v4000
  %4712 = vst.msk [vmem:[#allocation2 + $0xe8] sm:$0xf] %vm4653, %v4002
  %4713 = vst.msk [vmem:[#allocation2 + $0xec] sm:$0xf] %vm4653, %v4004
  %4714 = vst.msk [vmem:[#allocation2 + $0xf0] sm:$0xf] %vm4653, %v4006
  %4715 = vst.msk [vmem:[#allocation2 + $0xf4] sm:$0xf] %vm4653, %v4008
  %4716 = vst.msk [vmem:[#allocation2 + $0xf8] sm:$0xf] %vm4653, %v4010
  %4717 = vst.msk [vmem:[#allocation2 + $0xfc] sm:$0xf] %vm4653, %v4012
  %4718 = vst.msk [vmem:[#allocation2 + $0x100] sm:$0xf] %vm4653, %v4014
  %4719 = vst.msk [vmem:[#allocation2 + $0x104] sm:$0xf] %vm4653, %v4016
  %4720 = vst.msk [vmem:[#allocation2 + $0x108] sm:$0xf] %vm4653, %v4018
  %4721 = vst.msk [vmem:[#allocation2 + $0x10c] sm:$0xf] %vm4653, %v4020
  %4722 = vst.msk [vmem:[#allocation2 + $0x110] sm:$0xf] %vm4653, %v4022
  %4723 = vst.msk [vmem:[#allocation2 + $0x114] sm:$0xf] %vm4653, %v4024
  %4724 = vst.msk [vmem:[#allocation2 + $0x118] sm:$0xf] %vm4653, %v4026
  %4725 = vst.msk [vmem:[#allocation2 + $0x11c] sm:$0xf] %vm4653, %v4028
  %4726 = vst.msk [vmem:[#allocation2 + $0x120] sm:$0xf] %vm4653, %v4030
  %4727 = vst.msk [vmem:[#allocation2 + $0x124] sm:$0xf] %vm4653, %v4032
  %4728 = vst.msk [vmem:[#allocation2 + $0x128] sm:$0xf] %vm4653, %v4034
  %4729 = vst.msk [vmem:[#allocation2 + $0x12c] sm:$0xf] %vm4653, %v4036
  %4730 = vst.msk [vmem:[#allocation2 + $0x130] sm:$0xf] %vm4653, %v4038
  %4731 = vst.msk [vmem:[#allocation2 + $0x134] sm:$0xf] %vm4653, %v4040
  %4732 = vst.msk [vmem:[#allocation2 + $0x138] sm:$0xf] %vm4653, %v4042
  %4733 = vst.msk [vmem:[#allocation2 + $0x13c] sm:$0xf] %vm4653, %v4044
  %4734 = vst.msk [vmem:[#allocation2 + $0x140] sm:$0xf] %vm4653, %v4046
  %4735 = vst.msk [vmem:[#allocation2 + $0x144] sm:$0xf] %vm4653, %v4048
  %4736 = vst.msk [vmem:[#allocation2 + $0x148] sm:$0xf] %vm4653, %v4050
  %4737 = vst.msk [vmem:[#allocation2 + $0x14c] sm:$0xf] %vm4653, %v4052
  %4738 = vst.msk [vmem:[#allocation2 + $0x150] sm:$0xf] %vm4653, %v4054
  %4739 = vst.msk [vmem:[#allocation2 + $0x154] sm:$0xf] %vm4653, %v4056
  %4740 = vst.msk [vmem:[#allocation2 + $0x158] sm:$0xf] %vm4653, %v4058
  %4741 = vst.msk [vmem:[#allocation2 + $0x15c] sm:$0xf] %vm4653, %v4060
  %4742 = vst.msk [vmem:[#allocation2 + $0x160] sm:$0xf] %vm4653, %v4062
  %4743 = vst.msk [vmem:[#allocation2 + $0x164] sm:$0xf] %vm4653, %v4064
  %4744 = vst.msk [vmem:[#allocation2 + $0x168] sm:$0xf] %vm4653, %v4066
  %4745 = vst.msk [vmem:[#allocation2 + $0x16c] sm:$0xf] %vm4653, %v4068
  %4746 = vst.msk [vmem:[#allocation2 + $0x170] sm:$0xf] %vm4653, %v4070
  %4747 = vst.msk [vmem:[#allocation2 + $0x174] sm:$0xf] %vm4653, %v4072
  %4748 = vst.msk [vmem:[#allocation2 + $0x178] sm:$0xf] %vm4653, %v4074
  %4749 = vst.msk [vmem:[#allocation2 + $0x17c] sm:$0xf] %vm4653, %v4076
  %4750 = vst.msk [vmem:[#allocation2 + $0x180] sm:$0xf] %vm4653, %v4078
  %4751 = vst.msk [vmem:[#allocation2 + $0x184] sm:$0xf] %vm4653, %v4080
  %4752 = vst.msk [vmem:[#allocation2 + $0x188] sm:$0xf] %vm4653, %v4082
  %4753 = vst.msk [vmem:[#allocation2 + $0x18c] sm:$0xf] %vm4653, %v4084
  %4754 = vst.msk [vmem:[#allocation2 + $0x190] sm:$0xf] %vm4653, %v4086
  %4755 = vst.msk [vmem:[#allocation2 + $0x194] sm:$0xf] %vm4653, %v4088
  %4756 = vst.msk [vmem:[#allocation2 + $0x198] sm:$0xf] %vm4653, %v4090
  %4757 = vst.msk [vmem:[#allocation2 + $0x19c] sm:$0xf] %vm4653, %v4092
  %4758 = vst.msk [vmem:[#allocation2 + $0x1a0] sm:$0xf] %vm4653, %v4094
  %4759 = vst.msk [vmem:[#allocation2 + $0x1a4] sm:$0xf] %vm4653, %v4096
  %4760 = vst.msk [vmem:[#allocation2 + $0x1a8] sm:$0xf] %vm4653, %v4098
  %4761 = vst.msk [vmem:[#allocation2 + $0x1ac] sm:$0xf] %vm4653, %v4100
  %4762 = vst.msk [vmem:[#allocation2 + $0x1b0] sm:$0xf] %vm4653, %v4102
  %4763 = vst.msk [vmem:[#allocation2 + $0x1b4] sm:$0xf] %vm4653, %v4104
  %4764 = vst.msk [vmem:[#allocation2 + $0x1b8] sm:$0xf] %vm4653, %v4106
  %4765 = vst.msk [vmem:[#allocation2 + $0x1bc] sm:$0xf] %vm4653, %v4108
  %4766 = vst.msk [vmem:[#allocation2 + $0x1c0] sm:$0xf] %vm4653, %v4110
  %4767 = vst.msk [vmem:[#allocation2 + $0x1c4] sm:$0xf] %vm4653, %v4112
  %4768 = vst.msk [vmem:[#allocation2 + $0x1c8] sm:$0xf] %vm4653, %v4114
  %4769 = vst.msk [vmem:[#allocation2 + $0x1cc] sm:$0xf] %vm4653, %v4116
  %4770 = vst.msk [vmem:[#allocation2 + $0x1d0] sm:$0xf] %vm4653, %v4118
  %4771 = vst.msk [vmem:[#allocation2 + $0x1d4] sm:$0xf] %vm4653, %v4120
  %4772 = vst.msk [vmem:[#allocation2 + $0x1d8] sm:$0xf] %vm4653, %v4122
  %4773 = vst.msk [vmem:[#allocation2 + $0x1dc] sm:$0xf] %vm4653, %v4124
  %4774 = vst.msk [vmem:[#allocation2 + $0x1e0] sm:$0xf] %vm4653, %v4126
  %4775 = vst.msk [vmem:[#allocation2 + $0x1e4] sm:$0xf] %vm4653, %v4128
  %4776 = vst.msk [vmem:[#allocation2 + $0x1e8] sm:$0xf] %vm4653, %v4130
  %4777 = vst.msk [vmem:[#allocation2 + $0x1ec] sm:$0xf] %vm4653, %v4132
  %4778 = vst.msk [vmem:[#allocation2 + $0x1f0] sm:$0xf] %vm4653, %v4134
  %4779 = vst.msk [vmem:[#allocation2 + $0x1f4] sm:$0xf] %vm4653, %v4136
  %4780 = vst.msk [vmem:[#allocation2 + $0x1f8] sm:$0xf] %vm4653, %v4138
  %4781 = vst.msk [vmem:[#allocation2 + $0x1fc] sm:$0xf] %vm4653, %v4140
  %4782 = vst.msk [vmem:[#allocation2 + $0x200] sm:$0xf] %vm4653, %v4142
  %4783 = vst.msk [vmem:[#allocation2 + $0x204] sm:$0xf] %vm4653, %v4144
  %4784 = vst.msk [vmem:[#allocation2 + $0x208] sm:$0xf] %vm4653, %v4146
  %4785 = vst.msk [vmem:[#allocation2 + $0x20c] sm:$0xf] %vm4653, %v4148
  %4786 = vst.msk [vmem:[#allocation2 + $0x210] sm:$0xf] %vm4653, %v4150
  %4787 = vst.msk [vmem:[#allocation2 + $0x214] sm:$0xf] %vm4653, %v4152
  %4788 = vst.msk [vmem:[#allocation2 + $0x218] sm:$0xf] %vm4653, %v4154
  %4789 = vst.msk [vmem:[#allocation2 + $0x21c] sm:$0xf] %vm4653, %v4156
  %4790 = vst.msk [vmem:[#allocation2 + $0x220] sm:$0xf] %vm4653, %v4158
  %4791 = vst.msk [vmem:[#allocation2 + $0x224] sm:$0xf] %vm4653, %v4160
  %4792 = vst.msk [vmem:[#allocation2 + $0x228] sm:$0xf] %vm4653, %v4162
  %4793 = vst.msk [vmem:[#allocation2 + $0x22c] sm:$0xf] %vm4653, %v4164
  %4794 = vst.msk [vmem:[#allocation2 + $0x230] sm:$0xf] %vm4653, %v4166
  %4795 = vst.msk [vmem:[#allocation2 + $0x234] sm:$0xf] %vm4653, %v4168
  %4796 = vst.msk [vmem:[#allocation2 + $0x238] sm:$0xf] %vm4653, %v4170
  %4797 = vst.msk [vmem:[#allocation2 + $0x23c] sm:$0xf] %vm4653, %v4172
  %4798 = vst.msk [vmem:[#allocation2 + $0x240] sm:$0xf] %vm4653, %v4174
  %4799 = vst.msk [vmem:[#allocation2 + $0x244] sm:$0xf] %vm4653, %v4176
  %4800 = vst.msk [vmem:[#allocation2 + $0x248] sm:$0xf] %vm4653, %v4178
  %4801 = vst.msk [vmem:[#allocation2 + $0x24c] sm:$0xf] %vm4653, %v4180
  %4802 = vst.msk [vmem:[#allocation2 + $0x250] sm:$0xf] %vm4653, %v4182
  %4803 = vst.msk [vmem:[#allocation2 + $0x254] sm:$0xf] %vm4653, %v4184
  %4804 = vst.msk [vmem:[#allocation2 + $0x258] sm:$0xf] %vm4653, %v4186
  %4805 = vst.msk [vmem:[#allocation2 + $0x25c] sm:$0xf] %vm4653, %v4188
  %4806 = vst.msk [vmem:[#allocation2 + $0x260] sm:$0xf] %vm4653, %v4190
  %4807 = vst.msk [vmem:[#allocation2 + $0x264] sm:$0xf] %vm4653, %v4192
  %4808 = vst.msk [vmem:[#allocation2 + $0x268] sm:$0xf] %vm4653, %v4194
  %4809 = vst.msk [vmem:[#allocation2 + $0x26c] sm:$0xf] %vm4653, %v4196
  %4810 = vst.msk [vmem:[#allocation2 + $0x270] sm:$0xf] %vm4653, %v4198
  %4811 = vst.msk [vmem:[#allocation2 + $0x274] sm:$0xf] %vm4653, %v4200
  %4812 = vst.msk [vmem:[#allocation2 + $0x278] sm:$0xf] %vm4653, %v4202
  %4813 = vst.msk [vmem:[#allocation2 + $0x27c] sm:$0xf] %vm4653, %v4204
  %4814 = vst.msk [vmem:[#allocation2 + $0x280] sm:$0xf] %vm4653, %v4206
  %4815 = vst.msk [vmem:[#allocation2 + $0x284] sm:$0xf] %vm4653, %v4208
  %4816 = vst.msk [vmem:[#allocation2 + $0x288] sm:$0xf] %vm4653, %v4210
  %4817 = vst.msk [vmem:[#allocation2 + $0x28c] sm:$0xf] %vm4653, %v4212
  %4818 = vst.msk [vmem:[#allocation2 + $0x290] sm:$0xf] %vm4653, %v4214
  %4819 = vst.msk [vmem:[#allocation2 + $0x294] sm:$0xf] %vm4653, %v4216
  %4820 = vst.msk [vmem:[#allocation2 + $0x298] sm:$0xf] %vm4653, %v4218
  %4821 = vst.msk [vmem:[#allocation2 + $0x29c] sm:$0xf] %vm4653, %v4220
  %4822 = vst.msk [vmem:[#allocation2 + $0x2a0] sm:$0xf] %vm4653, %v4222
  %4823 = vst.msk [vmem:[#allocation2 + $0x2a4] sm:$0xf] %vm4653, %v4224
  %4824 = vst.msk [vmem:[#allocation2 + $0x2a8] sm:$0xf] %vm4653, %v4226
  %4825 = vst.msk [vmem:[#allocation2 + $0x2ac] sm:$0xf] %vm4653, %v4228
  %4826 = vst.msk [vmem:[#allocation2 + $0x2b0] sm:$0xf] %vm4653, %v4230
  %4827 = vst.msk [vmem:[#allocation2 + $0x2b4] sm:$0xf] %vm4653, %v4232
  %4828 = vst.msk [vmem:[#allocation2 + $0x2b8] sm:$0xf] %vm4653, %v4234
  %4829 = vst.msk [vmem:[#allocation2 + $0x2bc] sm:$0xf] %vm4653, %v4236
  %4830 = vst.msk [vmem:[#allocation2 + $0x2c0] sm:$0xf] %vm4653, %v4238
  %4831 = vst.msk [vmem:[#allocation2 + $0x2c4] sm:$0xf] %vm4653, %v4240
  %4832 = vst.msk [vmem:[#allocation2 + $0x2c8] sm:$0xf] %vm4653, %v4242
  %4833 = vst.msk [vmem:[#allocation2 + $0x2cc] sm:$0xf] %vm4653, %v4244
  %4834 = vst.msk [vmem:[#allocation2 + $0x2d0] sm:$0xf] %vm4653, %v4246
  %4835 = vst.msk [vmem:[#allocation2 + $0x2d4] sm:$0xf] %vm4653, %v4248
  %4836 = vst.msk [vmem:[#allocation2 + $0x2d8] sm:$0xf] %vm4653, %v4250
  %4837 = vst.msk [vmem:[#allocation2 + $0x2dc] sm:$0xf] %vm4653, %v4252
  %4838 = vst.msk [vmem:[#allocation2 + $0x2e0] sm:$0xf] %vm4653, %v4254
  %4839 = vst.msk [vmem:[#allocation2 + $0x2e4] sm:$0xf] %vm4653, %v4256
  %4840 = vst.msk [vmem:[#allocation2 + $0x2e8] sm:$0xf] %vm4653, %v4258
  %4841 = vst.msk [vmem:[#allocation2 + $0x2ec] sm:$0xf] %vm4653, %v4260
  %4842 = vst.msk [vmem:[#allocation2 + $0x2f0] sm:$0xf] %vm4653, %v4262
  %4843 = vst.msk [vmem:[#allocation2 + $0x2f4] sm:$0xf] %vm4653, %v4264
  %4844 = vst.msk [vmem:[#allocation2 + $0x2f8] sm:$0xf] %vm4653, %v4266
  %4845 = vst.msk [vmem:[#allocation2 + $0x2fc] sm:$0xf] %vm4653, %v4268
  %4846 = vst.msk [vmem:[#allocation2 + $0x300] sm:$0xf] %vm4653, %v4270
  %4847 = vst.msk [vmem:[#allocation2 + $0x304] sm:$0xf] %vm4653, %v4272
  %4848 = vst.msk [vmem:[#allocation2 + $0x308] sm:$0xf] %vm4653, %v4274
  %4849 = vst.msk [vmem:[#allocation2 + $0x30c] sm:$0xf] %vm4653, %v4276
  %4850 = vst.msk [vmem:[#allocation2 + $0x310] sm:$0xf] %vm4653, %v4278
  %4851 = vst.msk [vmem:[#allocation2 + $0x314] sm:$0xf] %vm4653, %v4280
  %4852 = vst.msk [vmem:[#allocation2 + $0x318] sm:$0xf] %vm4653, %v4282
  %4853 = vst.msk [vmem:[#allocation2 + $0x31c] sm:$0xf] %vm4653, %v4284
  %4854 = vst.msk [vmem:[#allocation2 + $0x320] sm:$0xf] %vm4653, %v4286
  %4855 = vst.msk [vmem:[#allocation2 + $0x324] sm:$0xf] %vm4653, %v4288
  %4856 = vst.msk [vmem:[#allocation2 + $0x328] sm:$0xf] %vm4653, %v4290
  %4857 = vst.msk [vmem:[#allocation2 + $0x32c] sm:$0xf] %vm4653, %v4292
  %4858 = vst.msk [vmem:[#allocation2 + $0x330] sm:$0xf] %vm4653, %v4294
  %4859 = vst.msk [vmem:[#allocation2 + $0x334] sm:$0xf] %vm4653, %v4296
  %4860 = vst.msk [vmem:[#allocation2 + $0x338] sm:$0xf] %vm4653, %v4298
  %4861 = vst.msk [vmem:[#allocation2 + $0x33c] sm:$0xf] %vm4653, %v4300
  %4862 = vst.msk [vmem:[#allocation2 + $0x340] sm:$0xf] %vm4653, %v4302
  %4863 = vst.msk [vmem:[#allocation2 + $0x344] sm:$0xf] %vm4653, %v4304
  %4864 = vst.msk [vmem:[#allocation2 + $0x348] sm:$0xf] %vm4653, %v4306
  %4865 = vst.msk [vmem:[#allocation2 + $0x34c] sm:$0xf] %vm4653, %v4308
  %4866 = vst.msk [vmem:[#allocation2 + $0x350] sm:$0xf] %vm4653, %v4310
  %4867 = vst.msk [vmem:[#allocation2 + $0x354] sm:$0xf] %vm4653, %v4312
  %4868 = vst.msk [vmem:[#allocation2 + $0x358] sm:$0xf] %vm4653, %v4314
  %4869 = vst.msk [vmem:[#allocation2 + $0x35c] sm:$0xf] %vm4653, %v4316
  %4870 = vst.msk [vmem:[#allocation2 + $0x360] sm:$0xf] %vm4653, %v4318
  %4871 = vst.msk [vmem:[#allocation2 + $0x364] sm:$0xf] %vm4653, %v4320
  %4872 = vst.msk [vmem:[#allocation2 + $0x368] sm:$0xf] %vm4653, %v4322
  %4873 = vst.msk [vmem:[#allocation2 + $0x36c] sm:$0xf] %vm4653, %v4324
  %4874 = vst.msk [vmem:[#allocation2 + $0x370] sm:$0xf] %vm4653, %v4326
  %4875 = vst.msk [vmem:[#allocation2 + $0x374] sm:$0xf] %vm4653, %v4328
  %4876 = vst.msk [vmem:[#allocation2 + $0x378] sm:$0xf] %vm4653, %v4330
  %4877 = vst.msk [vmem:[#allocation2 + $0x37c] sm:$0xf] %vm4653, %v4332
  %4878 = vst.msk [vmem:[#allocation2 + $0x380] sm:$0xf] %vm4653, %v4334
  %4879 = vst.msk [vmem:[#allocation2 + $0x384] sm:$0xf] %vm4653, %v4336
  %4880 = vst.msk [vmem:[#allocation2 + $0x388] sm:$0xf] %vm4653, %v4338
  %4881 = vst.msk [vmem:[#allocation2 + $0x38c] sm:$0xf] %vm4653, %v4340
  %4882 = vst.msk [vmem:[#allocation2 + $0x390] sm:$0xf] %vm4653, %v4342
  %4883 = vst.msk [vmem:[#allocation2 + $0x394] sm:$0xf] %vm4653, %v4344
  %4884 = vst.msk [vmem:[#allocation2 + $0x398] sm:$0xf] %vm4653, %v4346
  %4885 = vst.msk [vmem:[#allocation2 + $0x39c] sm:$0xf] %vm4653, %v4348
  %4886 = vst.msk [vmem:[#allocation2 + $0x3a0] sm:$0xf] %vm4653, %v4350
  %4887 = vst.msk [vmem:[#allocation2 + $0x3a4] sm:$0xf] %vm4653, %v4352
  %4888 = vst.msk [vmem:[#allocation2 + $0x3a8] sm:$0xf] %vm4653, %v4354
  %4889 = vst.msk [vmem:[#allocation2 + $0x3ac] sm:$0xf] %vm4653, %v4356
  %4890 = vst.msk [vmem:[#allocation2 + $0x3b0] sm:$0xf] %vm4653, %v4358
  %4891 = vst.msk [vmem:[#allocation2 + $0x3b4] sm:$0xf] %vm4653, %v4360
  %4892 = vst.msk [vmem:[#allocation2 + $0x3b8] sm:$0xf] %vm4653, %v4362
  %4893 = vst.msk [vmem:[#allocation2 + $0x3bc] sm:$0xf] %vm4653, %v4364
  %4894 = vst.msk [vmem:[#allocation2 + $0x3c0] sm:$0xf] %vm4653, %v4366
  %4895 = vst.msk [vmem:[#allocation2 + $0x3c4] sm:$0xf] %vm4653, %v4368
  %4896 = vst.msk [vmem:[#allocation2 + $0x3c8] sm:$0xf] %vm4653, %v4370
  %4897 = vst.msk [vmem:[#allocation2 + $0x3cc] sm:$0xf] %vm4653, %v4372
  %4898 = vst.msk [vmem:[#allocation2 + $0x3d0] sm:$0xf] %vm4653, %v4374
  %4899 = vst.msk [vmem:[#allocation2 + $0x3d4] sm:$0xf] %vm4653, %v4376
  %4900 = vst.msk [vmem:[#allocation2 + $0x3d8] sm:$0xf] %vm4653, %v4378
  %4901 = vst.msk [vmem:[#allocation2 + $0x3dc] sm:$0xf] %vm4653, %v4380
  %4902 = vst.msk [vmem:[#allocation2 + $0x3e0] sm:$0xf] %vm4653, %v4382
  %4903 = vst.msk [vmem:[#allocation2 + $0x3e4] sm:$0xf] %vm4653, %v4384
  %4904 = vst.msk [vmem:[#allocation2 + $0x3e8] sm:$0xf] %vm4653, %v4386
  %4905 = vst.msk [vmem:[#allocation2 + $0x3ec] sm:$0xf] %vm4653, %v4388
  %4906 = vst.msk [vmem:[#allocation2 + $0x3f0] sm:$0xf] %vm4653, %v4390
  %4907 = vst.msk [vmem:[#allocation2 + $0x3f4] sm:$0xf] %vm4653, %v4392
  %4908 = vst.msk [vmem:[#allocation2 + $0x3f8] sm:$0xf] %vm4653, %v4394
  %4909 = vst.msk [vmem:[#allocation2 + $0x3fc] sm:$0xf] %vm4653, %v4396
  %v4910 = vld [vmem:[%s0] sm:$0xf]
  %v4911 = vld [vmem:[%s0 + $0x4] sm:$0xf]
  %v4912 = vld [vmem:[%s0 + $0x8] sm:$0xf]
  %v4913 = vld [vmem:[%s0 + $0xc] sm:$0xf]
  %v4914 = vld [vmem:[%s0 + $0x10] sm:$0xf]
  %v4915 = vld [vmem:[%s0 + $0x14] sm:$0xf]
  %v4916 = vld [vmem:[%s0 + $0x18] sm:$0xf]
  %v4917 = vld [vmem:[%s0 + $0x1c] sm:$0xf]
  %v4918 = vld [vmem:[%s0 + $0x20] sm:$0xf]
  %v4919 = vld [vmem:[%s0 + $0x24] sm:$0xf]
  %v4920 = vld [vmem:[%s0 + $0x28] sm:$0xf]
  %v4921 = vld [vmem:[%s0 + $0x2c] sm:$0xf]
  %v4922 = vld [vmem:[%s0 + $0x30] sm:$0xf]
  %v4923 = vld [vmem:[%s0 + $0x34] sm:$0xf]
  %v4924 = vld [vmem:[%s0 + $0x38] sm:$0xf]
  %v4925 = vld [vmem:[%s0 + $0x3c] sm:$0xf]
  %v4926 = vld [vmem:[%s0 + $0x40] sm:$0xf]
  %v4927 = vld [vmem:[%s0 + $0x44] sm:$0xf]
  %v4928 = vld [vmem:[%s0 + $0x48] sm:$0xf]
  %v4929 = vld [vmem:[%s0 + $0x4c] sm:$0xf]
  %v4930 = vld [vmem:[%s0 + $0x50] sm:$0xf]
  %v4931 = vld [vmem:[%s0 + $0x54] sm:$0xf]
  %v4932 = vld [vmem:[%s0 + $0x58] sm:$0xf]
  %v4933 = vld [vmem:[%s0 + $0x5c] sm:$0xf]
  %v4934 = vld [vmem:[%s0 + $0x60] sm:$0xf]
  %v4935 = vld [vmem:[%s0 + $0x64] sm:$0xf]
  %v4936 = vld [vmem:[%s0 + $0x68] sm:$0xf]
  %v4937 = vld [vmem:[%s0 + $0x6c] sm:$0xf]
  %v4938 = vld [vmem:[%s0 + $0x70] sm:$0xf]
  %v4939 = vld [vmem:[%s0 + $0x74] sm:$0xf]
  %v4940 = vld [vmem:[%s0 + $0x78] sm:$0xf]
  %v4941 = vld [vmem:[%s0 + $0x7c] sm:$0xf]
  %v4942 = vld [vmem:[%s0 + $0x80] sm:$0xf]
  %v4943 = vld [vmem:[%s0 + $0x84] sm:$0xf]
  %v4944 = vld [vmem:[%s0 + $0x88] sm:$0xf]
  %v4945 = vld [vmem:[%s0 + $0x8c] sm:$0xf]
  %v4946 = vld [vmem:[%s0 + $0x90] sm:$0xf]
  %v4947 = vld [vmem:[%s0 + $0x94] sm:$0xf]
  %v4948 = vld [vmem:[%s0 + $0x98] sm:$0xf]
  %v4949 = vld [vmem:[%s0 + $0x9c] sm:$0xf]
  %v4950 = vld [vmem:[%s0 + $0xa0] sm:$0xf]
  %v4951 = vld [vmem:[%s0 + $0xa4] sm:$0xf]
  %v4952 = vld [vmem:[%s0 + $0xa8] sm:$0xf]
  %v4953 = vld [vmem:[%s0 + $0xac] sm:$0xf]
  %v4954 = vld [vmem:[%s0 + $0xb0] sm:$0xf]
  %v4955 = vld [vmem:[%s0 + $0xb4] sm:$0xf]
  %v4956 = vld [vmem:[%s0 + $0xb8] sm:$0xf]
  %v4957 = vld [vmem:[%s0 + $0xbc] sm:$0xf]
  %v4958 = vld [vmem:[%s0 + $0xc0] sm:$0xf]
  %v4959 = vld [vmem:[%s0 + $0xc4] sm:$0xf]
  %v4960 = vld [vmem:[%s0 + $0xc8] sm:$0xf]
  %v4961 = vld [vmem:[%s0 + $0xcc] sm:$0xf]
  %v4962 = vld [vmem:[%s0 + $0xd0] sm:$0xf]
  %v4963 = vld [vmem:[%s0 + $0xd4] sm:$0xf]
  %v4964 = vld [vmem:[%s0 + $0xd8] sm:$0xf]
  %v4965 = vld [vmem:[%s0 + $0xdc] sm:$0xf]
  %v4966 = vld [vmem:[%s0 + $0xe0] sm:$0xf]
  %v4967 = vld [vmem:[%s0 + $0xe4] sm:$0xf]
  %v4968 = vld [vmem:[%s0 + $0xe8] sm:$0xf]
  %v4969 = vld [vmem:[%s0 + $0xec] sm:$0xf]
  %v4970 = vld [vmem:[%s0 + $0xf0] sm:$0xf]
  %v4971 = vld [vmem:[%s0 + $0xf4] sm:$0xf]
  %v4972 = vld [vmem:[%s0 + $0xf8] sm:$0xf]
  %v4973 = vld [vmem:[%s0 + $0xfc] sm:$0xf]
  %v4974 = vld [vmem:[%s0 + $0x100] sm:$0xf]
  %v4975 = vld [vmem:[%s0 + $0x104] sm:$0xf]
  %v4976 = vld [vmem:[%s0 + $0x108] sm:$0xf]
  %v4977 = vld [vmem:[%s0 + $0x10c] sm:$0xf]
  %v4978 = vld [vmem:[%s0 + $0x110] sm:$0xf]
  %v4979 = vld [vmem:[%s0 + $0x114] sm:$0xf]
  %v4980 = vld [vmem:[%s0 + $0x118] sm:$0xf]
  %v4981 = vld [vmem:[%s0 + $0x11c] sm:$0xf]
  %v4982 = vld [vmem:[%s0 + $0x120] sm:$0xf]
  %v4983 = vld [vmem:[%s0 + $0x124] sm:$0xf]
  %v4984 = vld [vmem:[%s0 + $0x128] sm:$0xf]
  %v4985 = vld [vmem:[%s0 + $0x12c] sm:$0xf]
  %v4986 = vld [vmem:[%s0 + $0x130] sm:$0xf]
  %v4987 = vld [vmem:[%s0 + $0x134] sm:$0xf]
  %v4988 = vld [vmem:[%s0 + $0x138] sm:$0xf]
  %v4989 = vld [vmem:[%s0 + $0x13c] sm:$0xf]
  %v4990 = vld [vmem:[%s0 + $0x140] sm:$0xf]
  %v4991 = vld [vmem:[%s0 + $0x144] sm:$0xf]
  %v4992 = vld [vmem:[%s0 + $0x148] sm:$0xf]
  %v4993 = vld [vmem:[%s0 + $0x14c] sm:$0xf]
  %v4994 = vld [vmem:[%s0 + $0x150] sm:$0xf]
  %v4995 = vld [vmem:[%s0 + $0x154] sm:$0xf]
  %v4996 = vld [vmem:[%s0 + $0x158] sm:$0xf]
  %v4997 = vld [vmem:[%s0 + $0x15c] sm:$0xf]
  %v4998 = vld [vmem:[%s0 + $0x160] sm:$0xf]
  %v4999 = vld [vmem:[%s0 + $0x164] sm:$0xf]
  %v5000 = vld [vmem:[%s0 + $0x168] sm:$0xf]
  %v5001 = vld [vmem:[%s0 + $0x16c] sm:$0xf]
  %v5002 = vld [vmem:[%s0 + $0x170] sm:$0xf]
  %v5003 = vld [vmem:[%s0 + $0x174] sm:$0xf]
  %v5004 = vld [vmem:[%s0 + $0x178] sm:$0xf]
  %v5005 = vld [vmem:[%s0 + $0x17c] sm:$0xf]
  %v5006 = vld [vmem:[%s0 + $0x180] sm:$0xf]
  %v5007 = vld [vmem:[%s0 + $0x184] sm:$0xf]
  %v5008 = vld [vmem:[%s0 + $0x188] sm:$0xf]
  %v5009 = vld [vmem:[%s0 + $0x18c] sm:$0xf]
  %v5010 = vld [vmem:[%s0 + $0x190] sm:$0xf]
  %v5011 = vld [vmem:[%s0 + $0x194] sm:$0xf]
  %v5012 = vld [vmem:[%s0 + $0x198] sm:$0xf]
  %v5013 = vld [vmem:[%s0 + $0x19c] sm:$0xf]
  %v5014 = vld [vmem:[%s0 + $0x1a0] sm:$0xf]
  %v5015 = vld [vmem:[%s0 + $0x1a4] sm:$0xf]
  %v5016 = vld [vmem:[%s0 + $0x1a8] sm:$0xf]
  %v5017 = vld [vmem:[%s0 + $0x1ac] sm:$0xf]
  %v5018 = vld [vmem:[%s0 + $0x1b0] sm:$0xf]
  %v5019 = vld [vmem:[%s0 + $0x1b4] sm:$0xf]
  %v5020 = vld [vmem:[%s0 + $0x1b8] sm:$0xf]
  %v5021 = vld [vmem:[%s0 + $0x1bc] sm:$0xf]
  %v5022 = vld [vmem:[%s0 + $0x1c0] sm:$0xf]
  %v5023 = vld [vmem:[%s0 + $0x1c4] sm:$0xf]
  %v5024 = vld [vmem:[%s0 + $0x1c8] sm:$0xf]
  %v5025 = vld [vmem:[%s0 + $0x1cc] sm:$0xf]
  %v5026 = vld [vmem:[%s0 + $0x1d0] sm:$0xf]
  %v5027 = vld [vmem:[%s0 + $0x1d4] sm:$0xf]
  %v5028 = vld [vmem:[%s0 + $0x1d8] sm:$0xf]
  %v5029 = vld [vmem:[%s0 + $0x1dc] sm:$0xf]
  %v5030 = vld [vmem:[%s0 + $0x1e0] sm:$0xf]
  %v5031 = vld [vmem:[%s0 + $0x1e4] sm:$0xf]
  %v5032 = vld [vmem:[%s0 + $0x1e8] sm:$0xf]
  %v5033 = vld [vmem:[%s0 + $0x1ec] sm:$0xf]
  %v5034 = vld [vmem:[%s0 + $0x1f0] sm:$0xf]
  %v5035 = vld [vmem:[%s0 + $0x1f4] sm:$0xf]
  %v5036 = vld [vmem:[%s0 + $0x1f8] sm:$0xf]
  %v5037 = vld [vmem:[%s0 + $0x1fc] sm:$0xf]
  %v5038 = vld [vmem:[%s0 + $0x200] sm:$0xf]
  %v5039 = vld [vmem:[%s0 + $0x204] sm:$0xf]
  %v5040 = vld [vmem:[%s0 + $0x208] sm:$0xf]
  %v5041 = vld [vmem:[%s0 + $0x20c] sm:$0xf]
  %v5042 = vld [vmem:[%s0 + $0x210] sm:$0xf]
  %v5043 = vld [vmem:[%s0 + $0x214] sm:$0xf]
  %v5044 = vld [vmem:[%s0 + $0x218] sm:$0xf]
  %v5045 = vld [vmem:[%s0 + $0x21c] sm:$0xf]
  %v5046 = vld [vmem:[%s0 + $0x220] sm:$0xf]
  %v5047 = vld [vmem:[%s0 + $0x224] sm:$0xf]
  %v5048 = vld [vmem:[%s0 + $0x228] sm:$0xf]
  %v5049 = vld [vmem:[%s0 + $0x22c] sm:$0xf]
  %v5050 = vld [vmem:[%s0 + $0x230] sm:$0xf]
  %v5051 = vld [vmem:[%s0 + $0x234] sm:$0xf]
  %v5052 = vld [vmem:[%s0 + $0x238] sm:$0xf]
  %v5053 = vld [vmem:[%s0 + $0x23c] sm:$0xf]
  %v5054 = vld [vmem:[%s0 + $0x240] sm:$0xf]
  %v5055 = vld [vmem:[%s0 + $0x244] sm:$0xf]
  %v5056 = vld [vmem:[%s0 + $0x248] sm:$0xf]
  %v5057 = vld [vmem:[%s0 + $0x24c] sm:$0xf]
  %v5058 = vld [vmem:[%s0 + $0x250] sm:$0xf]
  %v5059 = vld [vmem:[%s0 + $0x254] sm:$0xf]
  %v5060 = vld [vmem:[%s0 + $0x258] sm:$0xf]
  %v5061 = vld [vmem:[%s0 + $0x25c] sm:$0xf]
  %v5062 = vld [vmem:[%s0 + $0x260] sm:$0xf]
  %v5063 = vld [vmem:[%s0 + $0x264] sm:$0xf]
  %v5064 = vld [vmem:[%s0 + $0x268] sm:$0xf]
  %v5065 = vld [vmem:[%s0 + $0x26c] sm:$0xf]
  %v5066 = vld [vmem:[%s0 + $0x270] sm:$0xf]
  %v5067 = vld [vmem:[%s0 + $0x274] sm:$0xf]
  %v5068 = vld [vmem:[%s0 + $0x278] sm:$0xf]
  %v5069 = vld [vmem:[%s0 + $0x27c] sm:$0xf]
  %v5070 = vld [vmem:[%s0 + $0x280] sm:$0xf]
  %v5071 = vld [vmem:[%s0 + $0x284] sm:$0xf]
  %v5072 = vld [vmem:[%s0 + $0x288] sm:$0xf]
  %v5073 = vld [vmem:[%s0 + $0x28c] sm:$0xf]
  %v5074 = vld [vmem:[%s0 + $0x290] sm:$0xf]
  %v5075 = vld [vmem:[%s0 + $0x294] sm:$0xf]
  %v5076 = vld [vmem:[%s0 + $0x298] sm:$0xf]
  %v5077 = vld [vmem:[%s0 + $0x29c] sm:$0xf]
  %v5078 = vld [vmem:[%s0 + $0x2a0] sm:$0xf]
  %v5079 = vld [vmem:[%s0 + $0x2a4] sm:$0xf]
  %v5080 = vld [vmem:[%s0 + $0x2a8] sm:$0xf]
  %v5081 = vld [vmem:[%s0 + $0x2ac] sm:$0xf]
  %v5082 = vld [vmem:[%s0 + $0x2b0] sm:$0xf]
  %v5083 = vld [vmem:[%s0 + $0x2b4] sm:$0xf]
  %v5084 = vld [vmem:[%s0 + $0x2b8] sm:$0xf]
  %v5085 = vld [vmem:[%s0 + $0x2bc] sm:$0xf]
  %v5086 = vld [vmem:[%s0 + $0x2c0] sm:$0xf]
  %v5087 = vld [vmem:[%s0 + $0x2c4] sm:$0xf]
  %v5088 = vld [vmem:[%s0 + $0x2c8] sm:$0xf]
  %v5089 = vld [vmem:[%s0 + $0x2cc] sm:$0xf]
  %v5090 = vld [vmem:[%s0 + $0x2d0] sm:$0xf]
  %v5091 = vld [vmem:[%s0 + $0x2d4] sm:$0xf]
  %v5092 = vld [vmem:[%s0 + $0x2d8] sm:$0xf]
  %v5093 = vld [vmem:[%s0 + $0x2dc] sm:$0xf]
  %v5094 = vld [vmem:[%s0 + $0x2e0] sm:$0xf]
  %v5095 = vld [vmem:[%s0 + $0x2e4] sm:$0xf]
  %v5096 = vld [vmem:[%s0 + $0x2e8] sm:$0xf]
  %v5097 = vld [vmem:[%s0 + $0x2ec] sm:$0xf]
  %v5098 = vld [vmem:[%s0 + $0x2f0] sm:$0xf]
  %v5099 = vld [vmem:[%s0 + $0x2f4] sm:$0xf]
  %v5100 = vld [vmem:[%s0 + $0x2f8] sm:$0xf]
  %v5101 = vld [vmem:[%s0 + $0x2fc] sm:$0xf]
  %v5102 = vld [vmem:[%s0 + $0x300] sm:$0xf]
  %v5103 = vld [vmem:[%s0 + $0x304] sm:$0xf]
  %v5104 = vld [vmem:[%s0 + $0x308] sm:$0xf]
  %v5105 = vld [vmem:[%s0 + $0x30c] sm:$0xf]
  %v5106 = vld [vmem:[%s0 + $0x310] sm:$0xf]
  %v5107 = vld [vmem:[%s0 + $0x314] sm:$0xf]
  %v5108 = vld [vmem:[%s0 + $0x318] sm:$0xf]
  %v5109 = vld [vmem:[%s0 + $0x31c] sm:$0xf]
  %v5110 = vld [vmem:[%s0 + $0x320] sm:$0xf]
  %v5111 = vld [vmem:[%s0 + $0x324] sm:$0xf]
  %v5112 = vld [vmem:[%s0 + $0x328] sm:$0xf]
  %v5113 = vld [vmem:[%s0 + $0x32c] sm:$0xf]
  %v5114 = vld [vmem:[%s0 + $0x330] sm:$0xf]
  %v5115 = vld [vmem:[%s0 + $0x334] sm:$0xf]
  %v5116 = vld [vmem:[%s0 + $0x338] sm:$0xf]
  %v5117 = vld [vmem:[%s0 + $0x33c] sm:$0xf]
  %v5118 = vld [vmem:[%s0 + $0x340] sm:$0xf]
  %v5119 = vld [vmem:[%s0 + $0x344] sm:$0xf]
  %v5120 = vld [vmem:[%s0 + $0x348] sm:$0xf]
  %v5121 = vld [vmem:[%s0 + $0x34c] sm:$0xf]
  %v5122 = vld [vmem:[%s0 + $0x350] sm:$0xf]
  %v5123 = vld [vmem:[%s0 + $0x354] sm:$0xf]
  %v5124 = vld [vmem:[%s0 + $0x358] sm:$0xf]
  %v5125 = vld [vmem:[%s0 + $0x35c] sm:$0xf]
  %v5126 = vld [vmem:[%s0 + $0x360] sm:$0xf]
  %v5127 = vld [vmem:[%s0 + $0x364] sm:$0xf]
  %v5128 = vld [vmem:[%s0 + $0x368] sm:$0xf]
  %v5129 = vld [vmem:[%s0 + $0x36c] sm:$0xf]
  %v5130 = vld [vmem:[%s0 + $0x370] sm:$0xf]
  %v5131 = vld [vmem:[%s0 + $0x374] sm:$0xf]
  %v5132 = vld [vmem:[%s0 + $0x378] sm:$0xf]
  %v5133 = vld [vmem:[%s0 + $0x37c] sm:$0xf]
  %v5134 = vld [vmem:[%s0 + $0x380] sm:$0xf]
  %v5135 = vld [vmem:[%s0 + $0x384] sm:$0xf]
  %v5136 = vld [vmem:[%s0 + $0x388] sm:$0xf]
  %v5137 = vld [vmem:[%s0 + $0x38c] sm:$0xf]
  %v5138 = vld [vmem:[%s0 + $0x390] sm:$0xf]
  %v5139 = vld [vmem:[%s0 + $0x394] sm:$0xf]
  %v5140 = vld [vmem:[%s0 + $0x398] sm:$0xf]
  %v5141 = vld [vmem:[%s0 + $0x39c] sm:$0xf]
  %v5142 = vld [vmem:[%s0 + $0x3a0] sm:$0xf]
  %v5143 = vld [vmem:[%s0 + $0x3a4] sm:$0xf]
  %v5144 = vld [vmem:[%s0 + $0x3a8] sm:$0xf]
  %v5145 = vld [vmem:[%s0 + $0x3ac] sm:$0xf]
  %v5146 = vld [vmem:[%s0 + $0x3b0] sm:$0xf]
  %v5147 = vld [vmem:[%s0 + $0x3b4] sm:$0xf]
  %v5148 = vld [vmem:[%s0 + $0x3b8] sm:$0xf]
  %v5149 = vld [vmem:[%s0 + $0x3bc] sm:$0xf]
  %v5150 = vld [vmem:[%s0 + $0x3c0] sm:$0xf]
  %v5151 = vld [vmem:[%s0 + $0x3c4] sm:$0xf]
  %v5152 = vld [vmem:[%s0 + $0x3c8] sm:$0xf]
  %v5153 = vld [vmem:[%s0 + $0x3cc] sm:$0xf]
  %v5154 = vld [vmem:[%s0 + $0x3d0] sm:$0xf]
  %v5155 = vld [vmem:[%s0 + $0x3d4] sm:$0xf]
  %v5156 = vld [vmem:[%s0 + $0x3d8] sm:$0xf]
  %v5157 = vld [vmem:[%s0 + $0x3dc] sm:$0xf]
  %v5158 = vld [vmem:[%s0 + $0x3e0] sm:$0xf]
  %v5159 = vld [vmem:[%s0 + $0x3e4] sm:$0xf]
  %v5160 = vld [vmem:[%s0 + $0x3e8] sm:$0xf]
  %v5161 = vld [vmem:[%s0 + $0x3ec] sm:$0xf]
  %v5162 = vld [vmem:[%s0 + $0x3f0] sm:$0xf]
  %v5163 = vld [vmem:[%s0 + $0x3f4] sm:$0xf]
  %v5164 = vld [vmem:[%s0 + $0x3f8] sm:$0xf]
  %v5165 = vld [vmem:[%s0 + $0x3fc] sm:$0xf]
  %vm5166 = vsmask.f32 3328
  %vm5167 = vsmask.f32 7440
  %vm5168 = vmor %vm5166, %vm5167
  %v5170 = vshrl.u32 %v4910, 16
  %v5172 = vrot.slane %v5170, 4
  %v5173 = vshll.u32 %v4910, 16
  %v5175 = vrot.slane %v5173, 5
  %v5176 = vor.u32 %v5172, %v5175
  %v5177 = vrot.slane %v5176, 4
  %v5179 = vshll.u32 %v4911, 16
  %v5181 = vrot.slane %v5179, 5
  %v5182 = vsel %vm5168, %v5177, %v5181
  %v5183 = vshrl.u32 %v4911, 16
  %v5185 = vrot.slane %v5183, 4
  %v5186 = vor.u32 %v5185, %v5181
  %v5187 = vrot.slane %v5186, 4
  %v5189 = vshll.u32 %v4912, 16
  %v5191 = vrot.slane %v5189, 5
  %v5192 = vsel %vm5168, %v5187, %v5191
  %v5193 = vshrl.u32 %v4912, 16
  %v5195 = vrot.slane %v5193, 4
  %v5196 = vor.u32 %v5195, %v5191
  %v5197 = vrot.slane %v5196, 4
  %v5199 = vshll.u32 %v4913, 16
  %v5201 = vrot.slane %v5199, 5
  %v5202 = vsel %vm5168, %v5197, %v5201
  %v5203 = vshrl.u32 %v4913, 16
  %v5205 = vrot.slane %v5203, 4
  %v5206 = vor.u32 %v5205, %v5201
  %v5207 = vrot.slane %v5206, 4
  %v5209 = vshll.u32 %v4914, 16
  %v5211 = vrot.slane %v5209, 5
  %v5212 = vsel %vm5168, %v5207, %v5211
  %v5213 = vshrl.u32 %v4914, 16
  %v5215 = vrot.slane %v5213, 4
  %v5216 = vor.u32 %v5215, %v5211
  %v5217 = vrot.slane %v5216, 4
  %v5219 = vshll.u32 %v4915, 16
  %v5221 = vrot.slane %v5219, 5
  %v5222 = vsel %vm5168, %v5217, %v5221
  %v5223 = vshrl.u32 %v4915, 16
  %v5225 = vrot.slane %v5223, 4
  %v5226 = vor.u32 %v5225, %v5221
  %v5227 = vrot.slane %v5226, 4
  %v5229 = vshll.u32 %v4916, 16
  %v5231 = vrot.slane %v5229, 5
  %v5232 = vsel %vm5168, %v5227, %v5231
  %v5233 = vshrl.u32 %v4916, 16
  %v5235 = vrot.slane %v5233, 4
  %v5236 = vor.u32 %v5235, %v5231
  %v5237 = vrot.slane %v5236, 4
  %v5239 = vshll.u32 %v4917, 16
  %v5241 = vrot.slane %v5239, 5
  %v5242 = vsel %vm5168, %v5237, %v5241
  %v5243 = vshrl.u32 %v4917, 16
  %v5245 = vrot.slane %v5243, 4
  %v5246 = vor.u32 %v5245, %v5241
  %v5247 = vrot.slane %v5246, 4
  %v5249 = vshll.u32 %v4918, 16
  %v5251 = vrot.slane %v5249, 5
  %v5252 = vsel %vm5168, %v5247, %v5251
  %v5253 = vshrl.u32 %v4918, 16
  %v5255 = vrot.slane %v5253, 4
  %v5256 = vor.u32 %v5255, %v5251
  %v5257 = vrot.slane %v5256, 4
  %v5259 = vshll.u32 %v4919, 16
  %v5261 = vrot.slane %v5259, 5
  %v5262 = vsel %vm5168, %v5257, %v5261
  %v5263 = vshrl.u32 %v4919, 16
  %v5265 = vrot.slane %v5263, 4
  %v5266 = vor.u32 %v5265, %v5261
  %v5267 = vrot.slane %v5266, 4
  %v5269 = vshll.u32 %v4920, 16
  %v5271 = vrot.slane %v5269, 5
  %v5272 = vsel %vm5168, %v5267, %v5271
  %v5273 = vshrl.u32 %v4920, 16
  %v5275 = vrot.slane %v5273, 4
  %v5276 = vor.u32 %v5275, %v5271
  %v5277 = vrot.slane %v5276, 4
  %v5279 = vshll.u32 %v4921, 16
  %v5281 = vrot.slane %v5279, 5
  %v5282 = vsel %vm5168, %v5277, %v5281
  %v5283 = vshrl.u32 %v4921, 16
  %v5285 = vrot.slane %v5283, 4
  %v5286 = vor.u32 %v5285, %v5281
  %v5287 = vrot.slane %v5286, 4
  %v5289 = vshll.u32 %v4922, 16
  %v5291 = vrot.slane %v5289, 5
  %v5292 = vsel %vm5168, %v5287, %v5291
  %v5293 = vshrl.u32 %v4922, 16
  %v5295 = vrot.slane %v5293, 4
  %v5296 = vor.u32 %v5295, %v5291
  %v5297 = vrot.slane %v5296, 4
  %v5299 = vshll.u32 %v4923, 16
  %v5301 = vrot.slane %v5299, 5
  %v5302 = vsel %vm5168, %v5297, %v5301
  %v5303 = vshrl.u32 %v4923, 16
  %v5305 = vrot.slane %v5303, 4
  %v5306 = vor.u32 %v5305, %v5301
  %v5307 = vrot.slane %v5306, 4
  %v5309 = vshll.u32 %v4924, 16
  %v5311 = vrot.slane %v5309, 5
  %v5312 = vsel %vm5168, %v5307, %v5311
  %v5313 = vshrl.u32 %v4924, 16
  %v5315 = vrot.slane %v5313, 4
  %v5316 = vor.u32 %v5315, %v5311
  %v5317 = vrot.slane %v5316, 4
  %v5319 = vshll.u32 %v4925, 16
  %v5321 = vrot.slane %v5319, 5
  %v5322 = vsel %vm5168, %v5317, %v5321
  %v5323 = vshrl.u32 %v4925, 16
  %v5325 = vrot.slane %v5323, 4
  %v5326 = vor.u32 %v5325, %v5321
  %v5327 = vrot.slane %v5326, 4
  %v5329 = vshll.u32 %v4926, 16
  %v5331 = vrot.slane %v5329, 5
  %v5332 = vsel %vm5168, %v5327, %v5331
  %v5333 = vshrl.u32 %v4926, 16
  %v5335 = vrot.slane %v5333, 4
  %v5336 = vor.u32 %v5335, %v5331
  %v5337 = vrot.slane %v5336, 4
  %v5339 = vshll.u32 %v4927, 16
  %v5341 = vrot.slane %v5339, 5
  %v5342 = vsel %vm5168, %v5337, %v5341
  %v5343 = vshrl.u32 %v4927, 16
  %v5345 = vrot.slane %v5343, 4
  %v5346 = vor.u32 %v5345, %v5341
  %v5347 = vrot.slane %v5346, 4
  %v5349 = vshll.u32 %v4928, 16
  %v5351 = vrot.slane %v5349, 5
  %v5352 = vsel %vm5168, %v5347, %v5351
  %v5353 = vshrl.u32 %v4928, 16
  %v5355 = vrot.slane %v5353, 4
  %v5356 = vor.u32 %v5355, %v5351
  %v5357 = vrot.slane %v5356, 4
  %v5359 = vshll.u32 %v4929, 16
  %v5361 = vrot.slane %v5359, 5
  %v5362 = vsel %vm5168, %v5357, %v5361
  %v5363 = vshrl.u32 %v4929, 16
  %v5365 = vrot.slane %v5363, 4
  %v5366 = vor.u32 %v5365, %v5361
  %v5367 = vrot.slane %v5366, 4
  %v5369 = vshll.u32 %v4930, 16
  %v5371 = vrot.slane %v5369, 5
  %v5372 = vsel %vm5168, %v5367, %v5371
  %v5373 = vshrl.u32 %v4930, 16
  %v5375 = vrot.slane %v5373, 4
  %v5376 = vor.u32 %v5375, %v5371
  %v5377 = vrot.slane %v5376, 4
  %v5379 = vshll.u32 %v4931, 16
  %v5381 = vrot.slane %v5379, 5
  %v5382 = vsel %vm5168, %v5377, %v5381
  %v5383 = vshrl.u32 %v4931, 16
  %v5385 = vrot.slane %v5383, 4
  %v5386 = vor.u32 %v5385, %v5381
  %v5387 = vrot.slane %v5386, 4
  %v5389 = vshll.u32 %v4932, 16
  %v5391 = vrot.slane %v5389, 5
  %v5392 = vsel %vm5168, %v5387, %v5391
  %v5393 = vshrl.u32 %v4932, 16
  %v5395 = vrot.slane %v5393, 4
  %v5396 = vor.u32 %v5395, %v5391
  %v5397 = vrot.slane %v5396, 4
  %v5399 = vshll.u32 %v4933, 16
  %v5401 = vrot.slane %v5399, 5
  %v5402 = vsel %vm5168, %v5397, %v5401
  %v5403 = vshrl.u32 %v4933, 16
  %v5405 = vrot.slane %v5403, 4
  %v5406 = vor.u32 %v5405, %v5401
  %v5407 = vrot.slane %v5406, 4
  %v5409 = vshll.u32 %v4934, 16
  %v5411 = vrot.slane %v5409, 5
  %v5412 = vsel %vm5168, %v5407, %v5411
  %v5413 = vshrl.u32 %v4934, 16
  %v5415 = vrot.slane %v5413, 4
  %v5416 = vor.u32 %v5415, %v5411
  %v5417 = vrot.slane %v5416, 4
  %v5419 = vshll.u32 %v4935, 16
  %v5421 = vrot.slane %v5419, 5
  %v5422 = vsel %vm5168, %v5417, %v5421
  %v5423 = vshrl.u32 %v4935, 16
  %v5425 = vrot.slane %v5423, 4
  %v5426 = vor.u32 %v5425, %v5421
  %v5427 = vrot.slane %v5426, 4
  %v5429 = vshll.u32 %v4936, 16
  %v5431 = vrot.slane %v5429, 5
  %v5432 = vsel %vm5168, %v5427, %v5431
  %v5433 = vshrl.u32 %v4936, 16
  %v5435 = vrot.slane %v5433, 4
  %v5436 = vor.u32 %v5435, %v5431
  %v5437 = vrot.slane %v5436, 4
  %v5439 = vshll.u32 %v4937, 16
  %v5441 = vrot.slane %v5439, 5
  %v5442 = vsel %vm5168, %v5437, %v5441
  %v5443 = vshrl.u32 %v4937, 16
  %v5445 = vrot.slane %v5443, 4
  %v5446 = vor.u32 %v5445, %v5441
  %v5447 = vrot.slane %v5446, 4
  %v5449 = vshll.u32 %v4938, 16
  %v5451 = vrot.slane %v5449, 5
  %v5452 = vsel %vm5168, %v5447, %v5451
  %v5453 = vshrl.u32 %v4938, 16
  %v5455 = vrot.slane %v5453, 4
  %v5456 = vor.u32 %v5455, %v5451
  %v5457 = vrot.slane %v5456, 4
  %v5459 = vshll.u32 %v4939, 16
  %v5461 = vrot.slane %v5459, 5
  %v5462 = vsel %vm5168, %v5457, %v5461
  %v5463 = vshrl.u32 %v4939, 16
  %v5465 = vrot.slane %v5463, 4
  %v5466 = vor.u32 %v5465, %v5461
  %v5467 = vrot.slane %v5466, 4
  %v5469 = vshll.u32 %v4940, 16
  %v5471 = vrot.slane %v5469, 5
  %v5472 = vsel %vm5168, %v5467, %v5471
  %v5473 = vshrl.u32 %v4940, 16
  %v5475 = vrot.slane %v5473, 4
  %v5476 = vor.u32 %v5475, %v5471
  %v5477 = vrot.slane %v5476, 4
  %v5479 = vshll.u32 %v4941, 16
  %v5481 = vrot.slane %v5479, 5
  %v5482 = vsel %vm5168, %v5477, %v5481
  %v5483 = vshrl.u32 %v4941, 16
  %v5485 = vrot.slane %v5483, 4
  %v5486 = vor.u32 %v5485, %v5481
  %v5487 = vrot.slane %v5486, 4
  %v5489 = vshll.u32 %v4942, 16
  %v5491 = vrot.slane %v5489, 5
  %v5492 = vsel %vm5168, %v5487, %v5491
  %v5493 = vshrl.u32 %v4942, 16
  %v5495 = vrot.slane %v5493, 4
  %v5496 = vor.u32 %v5495, %v5491
  %v5497 = vrot.slane %v5496, 4
  %v5499 = vshll.u32 %v4943, 16
  %v5501 = vrot.slane %v5499, 5
  %v5502 = vsel %vm5168, %v5497, %v5501
  %v5503 = vshrl.u32 %v4943, 16
  %v5505 = vrot.slane %v5503, 4
  %v5506 = vor.u32 %v5505, %v5501
  %v5507 = vrot.slane %v5506, 4
  %v5509 = vshll.u32 %v4944, 16
  %v5511 = vrot.slane %v5509, 5
  %v5512 = vsel %vm5168, %v5507, %v5511
  %v5513 = vshrl.u32 %v4944, 16
  %v5515 = vrot.slane %v5513, 4
  %v5516 = vor.u32 %v5515, %v5511
  %v5517 = vrot.slane %v5516, 4
  %v5519 = vshll.u32 %v4945, 16
  %v5521 = vrot.slane %v5519, 5
  %v5522 = vsel %vm5168, %v5517, %v5521
  %v5523 = vshrl.u32 %v4945, 16
  %v5525 = vrot.slane %v5523, 4
  %v5526 = vor.u32 %v5525, %v5521
  %v5527 = vrot.slane %v5526, 4
  %v5529 = vshll.u32 %v4946, 16
  %v5531 = vrot.slane %v5529, 5
  %v5532 = vsel %vm5168, %v5527, %v5531
  %v5533 = vshrl.u32 %v4946, 16
  %v5535 = vrot.slane %v5533, 4
  %v5536 = vor.u32 %v5535, %v5531
  %v5537 = vrot.slane %v5536, 4
  %v5539 = vshll.u32 %v4947, 16
  %v5541 = vrot.slane %v5539, 5
  %v5542 = vsel %vm5168, %v5537, %v5541
  %v5543 = vshrl.u32 %v4947, 16
  %v5545 = vrot.slane %v5543, 4
  %v5546 = vor.u32 %v5545, %v5541
  %v5547 = vrot.slane %v5546, 4
  %v5549 = vshll.u32 %v4948, 16
  %v5551 = vrot.slane %v5549, 5
  %v5552 = vsel %vm5168, %v5547, %v5551
  %v5553 = vshrl.u32 %v4948, 16
  %v5555 = vrot.slane %v5553, 4
  %v5556 = vor.u32 %v5555, %v5551
  %v5557 = vrot.slane %v5556, 4
  %v5559 = vshll.u32 %v4949, 16
  %v5561 = vrot.slane %v5559, 5
  %v5562 = vsel %vm5168, %v5557, %v5561
  %v5563 = vshrl.u32 %v4949, 16
  %v5565 = vrot.slane %v5563, 4
  %v5566 = vor.u32 %v5565, %v5561
  %v5567 = vrot.slane %v5566, 4
  %v5569 = vshll.u32 %v4950, 16
  %v5571 = vrot.slane %v5569, 5
  %v5572 = vsel %vm5168, %v5567, %v5571
  %v5573 = vshrl.u32 %v4950, 16
  %v5575 = vrot.slane %v5573, 4
  %v5576 = vor.u32 %v5575, %v5571
  %v5577 = vrot.slane %v5576, 4
  %v5579 = vshll.u32 %v4951, 16
  %v5581 = vrot.slane %v5579, 5
  %v5582 = vsel %vm5168, %v5577, %v5581
  %v5583 = vshrl.u32 %v4951, 16
  %v5585 = vrot.slane %v5583, 4
  %v5586 = vor.u32 %v5585, %v5581
  %v5587 = vrot.slane %v5586, 4
  %v5589 = vshll.u32 %v4952, 16
  %v5591 = vrot.slane %v5589, 5
  %v5592 = vsel %vm5168, %v5587, %v5591
  %v5593 = vshrl.u32 %v4952, 16
  %v5595 = vrot.slane %v5593, 4
  %v5596 = vor.u32 %v5595, %v5591
  %v5597 = vrot.slane %v5596, 4
  %v5599 = vshll.u32 %v4953, 16
  %v5601 = vrot.slane %v5599, 5
  %v5602 = vsel %vm5168, %v5597, %v5601
  %v5603 = vshrl.u32 %v4953, 16
  %v5605 = vrot.slane %v5603, 4
  %v5606 = vor.u32 %v5605, %v5601
  %v5607 = vrot.slane %v5606, 4
  %v5609 = vshll.u32 %v4954, 16
  %v5611 = vrot.slane %v5609, 5
  %v5612 = vsel %vm5168, %v5607, %v5611
  %v5613 = vshrl.u32 %v4954, 16
  %v5615 = vrot.slane %v5613, 4
  %v5616 = vor.u32 %v5615, %v5611
  %v5617 = vrot.slane %v5616, 4
  %v5619 = vshll.u32 %v4955, 16
  %v5621 = vrot.slane %v5619, 5
  %v5622 = vsel %vm5168, %v5617, %v5621
  %v5623 = vshrl.u32 %v4955, 16
  %v5625 = vrot.slane %v5623, 4
  %v5626 = vor.u32 %v5625, %v5621
  %v5627 = vrot.slane %v5626, 4
  %v5629 = vshll.u32 %v4956, 16
  %v5631 = vrot.slane %v5629, 5
  %v5632 = vsel %vm5168, %v5627, %v5631
  %v5633 = vshrl.u32 %v4956, 16
  %v5635 = vrot.slane %v5633, 4
  %v5636 = vor.u32 %v5635, %v5631
  %v5637 = vrot.slane %v5636, 4
  %v5639 = vshll.u32 %v4957, 16
  %v5641 = vrot.slane %v5639, 5
  %v5642 = vsel %vm5168, %v5637, %v5641
  %v5643 = vshrl.u32 %v4957, 16
  %v5645 = vrot.slane %v5643, 4
  %v5646 = vor.u32 %v5645, %v5641
  %v5647 = vrot.slane %v5646, 4
  %v5649 = vshll.u32 %v4958, 16
  %v5651 = vrot.slane %v5649, 5
  %v5652 = vsel %vm5168, %v5647, %v5651
  %v5653 = vshrl.u32 %v4958, 16
  %v5655 = vrot.slane %v5653, 4
  %v5656 = vor.u32 %v5655, %v5651
  %v5657 = vrot.slane %v5656, 4
  %v5659 = vshll.u32 %v4959, 16
  %v5661 = vrot.slane %v5659, 5
  %v5662 = vsel %vm5168, %v5657, %v5661
  %v5663 = vshrl.u32 %v4959, 16
  %v5665 = vrot.slane %v5663, 4
  %v5666 = vor.u32 %v5665, %v5661
  %v5667 = vrot.slane %v5666, 4
  %v5669 = vshll.u32 %v4960, 16
  %v5671 = vrot.slane %v5669, 5
  %v5672 = vsel %vm5168, %v5667, %v5671
  %v5673 = vshrl.u32 %v4960, 16
  %v5675 = vrot.slane %v5673, 4
  %v5676 = vor.u32 %v5675, %v5671
  %v5677 = vrot.slane %v5676, 4
  %v5679 = vshll.u32 %v4961, 16
  %v5681 = vrot.slane %v5679, 5
  %v5682 = vsel %vm5168, %v5677, %v5681
  %v5683 = vshrl.u32 %v4961, 16
  %v5685 = vrot.slane %v5683, 4
  %v5686 = vor.u32 %v5685, %v5681
  %v5687 = vrot.slane %v5686, 4
  %v5689 = vshll.u32 %v4962, 16
  %v5691 = vrot.slane %v5689, 5
  %v5692 = vsel %vm5168, %v5687, %v5691
  %v5693 = vshrl.u32 %v4962, 16
  %v5695 = vrot.slane %v5693, 4
  %v5696 = vor.u32 %v5695, %v5691
  %v5697 = vrot.slane %v5696, 4
  %v5699 = vshll.u32 %v4963, 16
  %v5701 = vrot.slane %v5699, 5
  %v5702 = vsel %vm5168, %v5697, %v5701
  %v5703 = vshrl.u32 %v4963, 16
  %v5705 = vrot.slane %v5703, 4
  %v5706 = vor.u32 %v5705, %v5701
  %v5707 = vrot.slane %v5706, 4
  %v5709 = vshll.u32 %v4964, 16
  %v5711 = vrot.slane %v5709, 5
  %v5712 = vsel %vm5168, %v5707, %v5711
  %v5713 = vshrl.u32 %v4964, 16
  %v5715 = vrot.slane %v5713, 4
  %v5716 = vor.u32 %v5715, %v5711
  %v5717 = vrot.slane %v5716, 4
  %v5719 = vshll.u32 %v4965, 16
  %v5721 = vrot.slane %v5719, 5
  %v5722 = vsel %vm5168, %v5717, %v5721
  %v5723 = vshrl.u32 %v4965, 16
  %v5725 = vrot.slane %v5723, 4
  %v5726 = vor.u32 %v5725, %v5721
  %v5727 = vrot.slane %v5726, 4
  %v5729 = vshll.u32 %v4966, 16
  %v5731 = vrot.slane %v5729, 5
  %v5732 = vsel %vm5168, %v5727, %v5731
  %v5733 = vshrl.u32 %v4966, 16
  %v5735 = vrot.slane %v5733, 4
  %v5736 = vor.u32 %v5735, %v5731
  %v5737 = vrot.slane %v5736, 4
  %v5739 = vshll.u32 %v4967, 16
  %v5741 = vrot.slane %v5739, 5
  %v5742 = vsel %vm5168, %v5737, %v5741
  %v5743 = vshrl.u32 %v4967, 16
  %v5745 = vrot.slane %v5743, 4
  %v5746 = vor.u32 %v5745, %v5741
  %v5747 = vrot.slane %v5746, 4
  %v5749 = vshll.u32 %v4968, 16
  %v5751 = vrot.slane %v5749, 5
  %v5752 = vsel %vm5168, %v5747, %v5751
  %v5753 = vshrl.u32 %v4968, 16
  %v5755 = vrot.slane %v5753, 4
  %v5756 = vor.u32 %v5755, %v5751
  %v5757 = vrot.slane %v5756, 4
  %v5759 = vshll.u32 %v4969, 16
  %v5761 = vrot.slane %v5759, 5
  %v5762 = vsel %vm5168, %v5757, %v5761
  %v5763 = vshrl.u32 %v4969, 16
  %v5765 = vrot.slane %v5763, 4
  %v5766 = vor.u32 %v5765, %v5761
  %v5767 = vrot.slane %v5766, 4
  %v5769 = vshll.u32 %v4970, 16
  %v5771 = vrot.slane %v5769, 5
  %v5772 = vsel %vm5168, %v5767, %v5771
  %v5773 = vshrl.u32 %v4970, 16
  %v5775 = vrot.slane %v5773, 4
  %v5776 = vor.u32 %v5775, %v5771
  %v5777 = vrot.slane %v5776, 4
  %v5779 = vshll.u32 %v4971, 16
  %v5781 = vrot.slane %v5779, 5
  %v5782 = vsel %vm5168, %v5777, %v5781
  %v5783 = vshrl.u32 %v4971, 16
  %v5785 = vrot.slane %v5783, 4
  %v5786 = vor.u32 %v5785, %v5781
  %v5787 = vrot.slane %v5786, 4
  %v5789 = vshll.u32 %v4972, 16
  %v5791 = vrot.slane %v5789, 5
  %v5792 = vsel %vm5168, %v5787, %v5791
  %v5793 = vshrl.u32 %v4972, 16
  %v5795 = vrot.slane %v5793, 4
  %v5796 = vor.u32 %v5795, %v5791
  %v5797 = vrot.slane %v5796, 4
  %v5799 = vshll.u32 %v4973, 16
  %v5801 = vrot.slane %v5799, 5
  %v5802 = vsel %vm5168, %v5797, %v5801
  %v5803 = vshrl.u32 %v4973, 16
  %v5805 = vrot.slane %v5803, 4
  %v5806 = vor.u32 %v5805, %v5801
  %v5807 = vrot.slane %v5806, 4
  %v5809 = vshrl.u32 %v4974, 16
  %v5811 = vrot.slane %v5809, 4
  %v5812 = vshll.u32 %v4974, 16
  %v5814 = vrot.slane %v5812, 5
  %v5815 = vor.u32 %v5811, %v5814
  %v5816 = vrot.slane %v5815, 4
  %v5818 = vshll.u32 %v4975, 16
  %v5820 = vrot.slane %v5818, 5
  %v5821 = vsel %vm5168, %v5816, %v5820
  %v5822 = vshrl.u32 %v4975, 16
  %v5824 = vrot.slane %v5822, 4
  %v5825 = vor.u32 %v5824, %v5820
  %v5826 = vrot.slane %v5825, 4
  %v5828 = vshll.u32 %v4976, 16
  %v5830 = vrot.slane %v5828, 5
  %v5831 = vsel %vm5168, %v5826, %v5830
  %v5832 = vshrl.u32 %v4976, 16
  %v5834 = vrot.slane %v5832, 4
  %v5835 = vor.u32 %v5834, %v5830
  %v5836 = vrot.slane %v5835, 4
  %v5838 = vshll.u32 %v4977, 16
  %v5840 = vrot.slane %v5838, 5
  %v5841 = vsel %vm5168, %v5836, %v5840
  %v5842 = vshrl.u32 %v4977, 16
  %v5844 = vrot.slane %v5842, 4
  %v5845 = vor.u32 %v5844, %v5840
  %v5846 = vrot.slane %v5845, 4
  %v5848 = vshll.u32 %v4978, 16
  %v5850 = vrot.slane %v5848, 5
  %v5851 = vsel %vm5168, %v5846, %v5850
  %v5852 = vshrl.u32 %v4978, 16
  %v5854 = vrot.slane %v5852, 4
  %v5855 = vor.u32 %v5854, %v5850
  %v5856 = vrot.slane %v5855, 4
  %v5858 = vshll.u32 %v4979, 16
  %v5860 = vrot.slane %v5858, 5
  %v5861 = vsel %vm5168, %v5856, %v5860
  %v5862 = vshrl.u32 %v4979, 16
  %v5864 = vrot.slane %v5862, 4
  %v5865 = vor.u32 %v5864, %v5860
  %v5866 = vrot.slane %v5865, 4
  %v5868 = vshll.u32 %v4980, 16
  %v5870 = vrot.slane %v5868, 5
  %v5871 = vsel %vm5168, %v5866, %v5870
  %v5872 = vshrl.u32 %v4980, 16
  %v5874 = vrot.slane %v5872, 4
  %v5875 = vor.u32 %v5874, %v5870
  %v5876 = vrot.slane %v5875, 4
  %v5878 = vshll.u32 %v4981, 16
  %v5880 = vrot.slane %v5878, 5
  %v5881 = vsel %vm5168, %v5876, %v5880
  %v5882 = vshrl.u32 %v4981, 16
  %v5884 = vrot.slane %v5882, 4
  %v5885 = vor.u32 %v5884, %v5880
  %v5886 = vrot.slane %v5885, 4
  %v5888 = vshll.u32 %v4982, 16
  %v5890 = vrot.slane %v5888, 5
  %v5891 = vsel %vm5168, %v5886, %v5890
  %v5892 = vshrl.u32 %v4982, 16
  %v5894 = vrot.slane %v5892, 4
  %v5895 = vor.u32 %v5894, %v5890
  %v5896 = vrot.slane %v5895, 4
  %v5898 = vshll.u32 %v4983, 16
  %v5900 = vrot.slane %v5898, 5
  %v5901 = vsel %vm5168, %v5896, %v5900
  %v5902 = vshrl.u32 %v4983, 16
  %v5904 = vrot.slane %v5902, 4
  %v5905 = vor.u32 %v5904, %v5900
  %v5906 = vrot.slane %v5905, 4
  %v5908 = vshll.u32 %v4984, 16
  %v5910 = vrot.slane %v5908, 5
  %v5911 = vsel %vm5168, %v5906, %v5910
  %v5912 = vshrl.u32 %v4984, 16
  %v5914 = vrot.slane %v5912, 4
  %v5915 = vor.u32 %v5914, %v5910
  %v5916 = vrot.slane %v5915, 4
  %v5918 = vshll.u32 %v4985, 16
  %v5920 = vrot.slane %v5918, 5
  %v5921 = vsel %vm5168, %v5916, %v5920
  %v5922 = vshrl.u32 %v4985, 16
  %v5924 = vrot.slane %v5922, 4
  %v5925 = vor.u32 %v5924, %v5920
  %v5926 = vrot.slane %v5925, 4
  %v5928 = vshll.u32 %v4986, 16
  %v5930 = vrot.slane %v5928, 5
  %v5931 = vsel %vm5168, %v5926, %v5930
  %v5932 = vshrl.u32 %v4986, 16
  %v5934 = vrot.slane %v5932, 4
  %v5935 = vor.u32 %v5934, %v5930
  %v5936 = vrot.slane %v5935, 4
  %v5938 = vshll.u32 %v4987, 16
  %v5940 = vrot.slane %v5938, 5
  %v5941 = vsel %vm5168, %v5936, %v5940
  %v5942 = vshrl.u32 %v4987, 16
  %v5944 = vrot.slane %v5942, 4
  %v5945 = vor.u32 %v5944, %v5940
  %v5946 = vrot.slane %v5945, 4
  %v5948 = vshll.u32 %v4988, 16
  %v5950 = vrot.slane %v5948, 5
  %v5951 = vsel %vm5168, %v5946, %v5950
  %v5952 = vshrl.u32 %v4988, 16
  %v5954 = vrot.slane %v5952, 4
  %v5955 = vor.u32 %v5954, %v5950
  %v5956 = vrot.slane %v5955, 4
  %v5958 = vshll.u32 %v4989, 16
  %v5960 = vrot.slane %v5958, 5
  %v5961 = vsel %vm5168, %v5956, %v5960
  %v5962 = vshrl.u32 %v4989, 16
  %v5964 = vrot.slane %v5962, 4
  %v5965 = vor.u32 %v5964, %v5960
  %v5966 = vrot.slane %v5965, 4
  %v5968 = vshll.u32 %v4990, 16
  %v5970 = vrot.slane %v5968, 5
  %v5971 = vsel %vm5168, %v5966, %v5970
  %v5972 = vshrl.u32 %v4990, 16
  %v5974 = vrot.slane %v5972, 4
  %v5975 = vor.u32 %v5974, %v5970
  %v5976 = vrot.slane %v5975, 4
  %v5978 = vshll.u32 %v4991, 16
  %v5980 = vrot.slane %v5978, 5
  %v5981 = vsel %vm5168, %v5976, %v5980
  %v5982 = vshrl.u32 %v4991, 16
  %v5984 = vrot.slane %v5982, 4
  %v5985 = vor.u32 %v5984, %v5980
  %v5986 = vrot.slane %v5985, 4
  %v5988 = vshll.u32 %v4992, 16
  %v5990 = vrot.slane %v5988, 5
  %v5991 = vsel %vm5168, %v5986, %v5990
  %v5992 = vshrl.u32 %v4992, 16
  %v5994 = vrot.slane %v5992, 4
  %v5995 = vor.u32 %v5994, %v5990
  %v5996 = vrot.slane %v5995, 4
  %v5998 = vshll.u32 %v4993, 16
  %v6000 = vrot.slane %v5998, 5
  %v6001 = vsel %vm5168, %v5996, %v6000
  %v6002 = vshrl.u32 %v4993, 16
  %v6004 = vrot.slane %v6002, 4
  %v6005 = vor.u32 %v6004, %v6000
  %v6006 = vrot.slane %v6005, 4
  %v6008 = vshll.u32 %v4994, 16
  %v6010 = vrot.slane %v6008, 5
  %v6011 = vsel %vm5168, %v6006, %v6010
  %v6012 = vshrl.u32 %v4994, 16
  %v6014 = vrot.slane %v6012, 4
  %v6015 = vor.u32 %v6014, %v6010
  %v6016 = vrot.slane %v6015, 4
  %v6018 = vshll.u32 %v4995, 16
  %v6020 = vrot.slane %v6018, 5
  %v6021 = vsel %vm5168, %v6016, %v6020
  %v6022 = vshrl.u32 %v4995, 16
  %v6024 = vrot.slane %v6022, 4
  %v6025 = vor.u32 %v6024, %v6020
  %v6026 = vrot.slane %v6025, 4
  %v6028 = vshll.u32 %v4996, 16
  %v6030 = vrot.slane %v6028, 5
  %v6031 = vsel %vm5168, %v6026, %v6030
  %v6032 = vshrl.u32 %v4996, 16
  %v6034 = vrot.slane %v6032, 4
  %v6035 = vor.u32 %v6034, %v6030
  %v6036 = vrot.slane %v6035, 4
  %v6038 = vshll.u32 %v4997, 16
  %v6040 = vrot.slane %v6038, 5
  %v6041 = vsel %vm5168, %v6036, %v6040
  %v6042 = vshrl.u32 %v4997, 16
  %v6044 = vrot.slane %v6042, 4
  %v6045 = vor.u32 %v6044, %v6040
  %v6046 = vrot.slane %v6045, 4
  %v6048 = vshll.u32 %v4998, 16
  %v6050 = vrot.slane %v6048, 5
  %v6051 = vsel %vm5168, %v6046, %v6050
  %v6052 = vshrl.u32 %v4998, 16
  %v6054 = vrot.slane %v6052, 4
  %v6055 = vor.u32 %v6054, %v6050
  %v6056 = vrot.slane %v6055, 4
  %v6058 = vshll.u32 %v4999, 16
  %v6060 = vrot.slane %v6058, 5
  %v6061 = vsel %vm5168, %v6056, %v6060
  %v6062 = vshrl.u32 %v4999, 16
  %v6064 = vrot.slane %v6062, 4
  %v6065 = vor.u32 %v6064, %v6060
  %v6066 = vrot.slane %v6065, 4
  %v6068 = vshll.u32 %v5000, 16
  %v6070 = vrot.slane %v6068, 5
  %v6071 = vsel %vm5168, %v6066, %v6070
  %v6072 = vshrl.u32 %v5000, 16
  %v6074 = vrot.slane %v6072, 4
  %v6075 = vor.u32 %v6074, %v6070
  %v6076 = vrot.slane %v6075, 4
  %v6078 = vshll.u32 %v5001, 16
  %v6080 = vrot.slane %v6078, 5
  %v6081 = vsel %vm5168, %v6076, %v6080
  %v6082 = vshrl.u32 %v5001, 16
  %v6084 = vrot.slane %v6082, 4
  %v6085 = vor.u32 %v6084, %v6080
  %v6086 = vrot.slane %v6085, 4
  %v6088 = vshll.u32 %v5002, 16
  %v6090 = vrot.slane %v6088, 5
  %v6091 = vsel %vm5168, %v6086, %v6090
  %v6092 = vshrl.u32 %v5002, 16
  %v6094 = vrot.slane %v6092, 4
  %v6095 = vor.u32 %v6094, %v6090
  %v6096 = vrot.slane %v6095, 4
  %v6098 = vshll.u32 %v5003, 16
  %v6100 = vrot.slane %v6098, 5
  %v6101 = vsel %vm5168, %v6096, %v6100
  %v6102 = vshrl.u32 %v5003, 16
  %v6104 = vrot.slane %v6102, 4
  %v6105 = vor.u32 %v6104, %v6100
  %v6106 = vrot.slane %v6105, 4
  %v6108 = vshll.u32 %v5004, 16
  %v6110 = vrot.slane %v6108, 5
  %v6111 = vsel %vm5168, %v6106, %v6110
  %v6112 = vshrl.u32 %v5004, 16
  %v6114 = vrot.slane %v6112, 4
  %v6115 = vor.u32 %v6114, %v6110
  %v6116 = vrot.slane %v6115, 4
  %v6118 = vshll.u32 %v5005, 16
  %v6120 = vrot.slane %v6118, 5
  %v6121 = vsel %vm5168, %v6116, %v6120
  %v6122 = vshrl.u32 %v5005, 16
  %v6124 = vrot.slane %v6122, 4
  %v6125 = vor.u32 %v6124, %v6120
  %v6126 = vrot.slane %v6125, 4
  %v6128 = vshll.u32 %v5006, 16
  %v6130 = vrot.slane %v6128, 5
  %v6131 = vsel %vm5168, %v6126, %v6130
  %v6132 = vshrl.u32 %v5006, 16
  %v6134 = vrot.slane %v6132, 4
  %v6135 = vor.u32 %v6134, %v6130
  %v6136 = vrot.slane %v6135, 4
  %v6138 = vshll.u32 %v5007, 16
  %v6140 = vrot.slane %v6138, 5
  %v6141 = vsel %vm5168, %v6136, %v6140
  %v6142 = vshrl.u32 %v5007, 16
  %v6144 = vrot.slane %v6142, 4
  %v6145 = vor.u32 %v6144, %v6140
  %v6146 = vrot.slane %v6145, 4
  %v6148 = vshll.u32 %v5008, 16
  %v6150 = vrot.slane %v6148, 5
  %v6151 = vsel %vm5168, %v6146, %v6150
  %v6152 = vshrl.u32 %v5008, 16
  %v6154 = vrot.slane %v6152, 4
  %v6155 = vor.u32 %v6154, %v6150
  %v6156 = vrot.slane %v6155, 4
  %v6158 = vshll.u32 %v5009, 16
  %v6160 = vrot.slane %v6158, 5
  %v6161 = vsel %vm5168, %v6156, %v6160
  %v6162 = vshrl.u32 %v5009, 16
  %v6164 = vrot.slane %v6162, 4
  %v6165 = vor.u32 %v6164, %v6160
  %v6166 = vrot.slane %v6165, 4
  %v6168 = vshll.u32 %v5010, 16
  %v6170 = vrot.slane %v6168, 5
  %v6171 = vsel %vm5168, %v6166, %v6170
  %v6172 = vshrl.u32 %v5010, 16
  %v6174 = vrot.slane %v6172, 4
  %v6175 = vor.u32 %v6174, %v6170
  %v6176 = vrot.slane %v6175, 4
  %v6178 = vshll.u32 %v5011, 16
  %v6180 = vrot.slane %v6178, 5
  %v6181 = vsel %vm5168, %v6176, %v6180
  %v6182 = vshrl.u32 %v5011, 16
  %v6184 = vrot.slane %v6182, 4
  %v6185 = vor.u32 %v6184, %v6180
  %v6186 = vrot.slane %v6185, 4
  %v6188 = vshll.u32 %v5012, 16
  %v6190 = vrot.slane %v6188, 5
  %v6191 = vsel %vm5168, %v6186, %v6190
  %v6192 = vshrl.u32 %v5012, 16
  %v6194 = vrot.slane %v6192, 4
  %v6195 = vor.u32 %v6194, %v6190
  %v6196 = vrot.slane %v6195, 4
  %v6198 = vshll.u32 %v5013, 16
  %v6200 = vrot.slane %v6198, 5
  %v6201 = vsel %vm5168, %v6196, %v6200
  %v6202 = vshrl.u32 %v5013, 16
  %v6204 = vrot.slane %v6202, 4
  %v6205 = vor.u32 %v6204, %v6200
  %v6206 = vrot.slane %v6205, 4
  %v6208 = vshll.u32 %v5014, 16
  %v6210 = vrot.slane %v6208, 5
  %v6211 = vsel %vm5168, %v6206, %v6210
  %v6212 = vshrl.u32 %v5014, 16
  %v6214 = vrot.slane %v6212, 4
  %v6215 = vor.u32 %v6214, %v6210
  %v6216 = vrot.slane %v6215, 4
  %v6218 = vshll.u32 %v5015, 16
  %v6220 = vrot.slane %v6218, 5
  %v6221 = vsel %vm5168, %v6216, %v6220
  %v6222 = vshrl.u32 %v5015, 16
  %v6224 = vrot.slane %v6222, 4
  %v6225 = vor.u32 %v6224, %v6220
  %v6226 = vrot.slane %v6225, 4
  %v6228 = vshll.u32 %v5016, 16
  %v6230 = vrot.slane %v6228, 5
  %v6231 = vsel %vm5168, %v6226, %v6230
  %v6232 = vshrl.u32 %v5016, 16
  %v6234 = vrot.slane %v6232, 4
  %v6235 = vor.u32 %v6234, %v6230
  %v6236 = vrot.slane %v6235, 4
  %v6238 = vshll.u32 %v5017, 16
  %v6240 = vrot.slane %v6238, 5
  %v6241 = vsel %vm5168, %v6236, %v6240
  %v6242 = vshrl.u32 %v5017, 16
  %v6244 = vrot.slane %v6242, 4
  %v6245 = vor.u32 %v6244, %v6240
  %v6246 = vrot.slane %v6245, 4
  %v6248 = vshll.u32 %v5018, 16
  %v6250 = vrot.slane %v6248, 5
  %v6251 = vsel %vm5168, %v6246, %v6250
  %v6252 = vshrl.u32 %v5018, 16
  %v6254 = vrot.slane %v6252, 4
  %v6255 = vor.u32 %v6254, %v6250
  %v6256 = vrot.slane %v6255, 4
  %v6258 = vshll.u32 %v5019, 16
  %v6260 = vrot.slane %v6258, 5
  %v6261 = vsel %vm5168, %v6256, %v6260
  %v6262 = vshrl.u32 %v5019, 16
  %v6264 = vrot.slane %v6262, 4
  %v6265 = vor.u32 %v6264, %v6260
  %v6266 = vrot.slane %v6265, 4
  %v6268 = vshll.u32 %v5020, 16
  %v6270 = vrot.slane %v6268, 5
  %v6271 = vsel %vm5168, %v6266, %v6270
  %v6272 = vshrl.u32 %v5020, 16
  %v6274 = vrot.slane %v6272, 4
  %v6275 = vor.u32 %v6274, %v6270
  %v6276 = vrot.slane %v6275, 4
  %v6278 = vshll.u32 %v5021, 16
  %v6280 = vrot.slane %v6278, 5
  %v6281 = vsel %vm5168, %v6276, %v6280
  %v6282 = vshrl.u32 %v5021, 16
  %v6284 = vrot.slane %v6282, 4
  %v6285 = vor.u32 %v6284, %v6280
  %v6286 = vrot.slane %v6285, 4
  %v6288 = vshll.u32 %v5022, 16
  %v6290 = vrot.slane %v6288, 5
  %v6291 = vsel %vm5168, %v6286, %v6290
  %v6292 = vshrl.u32 %v5022, 16
  %v6294 = vrot.slane %v6292, 4
  %v6295 = vor.u32 %v6294, %v6290
  %v6296 = vrot.slane %v6295, 4
  %v6298 = vshll.u32 %v5023, 16
  %v6300 = vrot.slane %v6298, 5
  %v6301 = vsel %vm5168, %v6296, %v6300
  %v6302 = vshrl.u32 %v5023, 16
  %v6304 = vrot.slane %v6302, 4
  %v6305 = vor.u32 %v6304, %v6300
  %v6306 = vrot.slane %v6305, 4
  %v6308 = vshll.u32 %v5024, 16
  %v6310 = vrot.slane %v6308, 5
  %v6311 = vsel %vm5168, %v6306, %v6310
  %v6312 = vshrl.u32 %v5024, 16
  %v6314 = vrot.slane %v6312, 4
  %v6315 = vor.u32 %v6314, %v6310
  %v6316 = vrot.slane %v6315, 4
  %v6318 = vshll.u32 %v5025, 16
  %v6320 = vrot.slane %v6318, 5
  %v6321 = vsel %vm5168, %v6316, %v6320
  %v6322 = vshrl.u32 %v5025, 16
  %v6324 = vrot.slane %v6322, 4
  %v6325 = vor.u32 %v6324, %v6320
  %v6326 = vrot.slane %v6325, 4
  %v6328 = vshll.u32 %v5026, 16
  %v6330 = vrot.slane %v6328, 5
  %v6331 = vsel %vm5168, %v6326, %v6330
  %v6332 = vshrl.u32 %v5026, 16
  %v6334 = vrot.slane %v6332, 4
  %v6335 = vor.u32 %v6334, %v6330
  %v6336 = vrot.slane %v6335, 4
  %v6338 = vshll.u32 %v5027, 16
  %v6340 = vrot.slane %v6338, 5
  %v6341 = vsel %vm5168, %v6336, %v6340
  %v6342 = vshrl.u32 %v5027, 16
  %v6344 = vrot.slane %v6342, 4
  %v6345 = vor.u32 %v6344, %v6340
  %v6346 = vrot.slane %v6345, 4
  %v6348 = vshll.u32 %v5028, 16
  %v6350 = vrot.slane %v6348, 5
  %v6351 = vsel %vm5168, %v6346, %v6350
  %v6352 = vshrl.u32 %v5028, 16
  %v6354 = vrot.slane %v6352, 4
  %v6355 = vor.u32 %v6354, %v6350
  %v6356 = vrot.slane %v6355, 4
  %v6358 = vshll.u32 %v5029, 16
  %v6360 = vrot.slane %v6358, 5
  %v6361 = vsel %vm5168, %v6356, %v6360
  %v6362 = vshrl.u32 %v5029, 16
  %v6364 = vrot.slane %v6362, 4
  %v6365 = vor.u32 %v6364, %v6360
  %v6366 = vrot.slane %v6365, 4
  %v6368 = vshll.u32 %v5030, 16
  %v6370 = vrot.slane %v6368, 5
  %v6371 = vsel %vm5168, %v6366, %v6370
  %v6372 = vshrl.u32 %v5030, 16
  %v6374 = vrot.slane %v6372, 4
  %v6375 = vor.u32 %v6374, %v6370
  %v6376 = vrot.slane %v6375, 4
  %v6378 = vshll.u32 %v5031, 16
  %v6380 = vrot.slane %v6378, 5
  %v6381 = vsel %vm5168, %v6376, %v6380
  %v6382 = vshrl.u32 %v5031, 16
  %v6384 = vrot.slane %v6382, 4
  %v6385 = vor.u32 %v6384, %v6380
  %v6386 = vrot.slane %v6385, 4
  %v6388 = vshll.u32 %v5032, 16
  %v6390 = vrot.slane %v6388, 5
  %v6391 = vsel %vm5168, %v6386, %v6390
  %v6392 = vshrl.u32 %v5032, 16
  %v6394 = vrot.slane %v6392, 4
  %v6395 = vor.u32 %v6394, %v6390
  %v6396 = vrot.slane %v6395, 4
  %v6398 = vshll.u32 %v5033, 16
  %v6400 = vrot.slane %v6398, 5
  %v6401 = vsel %vm5168, %v6396, %v6400
  %v6402 = vshrl.u32 %v5033, 16
  %v6404 = vrot.slane %v6402, 4
  %v6405 = vor.u32 %v6404, %v6400
  %v6406 = vrot.slane %v6405, 4
  %v6408 = vshll.u32 %v5034, 16
  %v6410 = vrot.slane %v6408, 5
  %v6411 = vsel %vm5168, %v6406, %v6410
  %v6412 = vshrl.u32 %v5034, 16
  %v6414 = vrot.slane %v6412, 4
  %v6415 = vor.u32 %v6414, %v6410
  %v6416 = vrot.slane %v6415, 4
  %v6418 = vshll.u32 %v5035, 16
  %v6420 = vrot.slane %v6418, 5
  %v6421 = vsel %vm5168, %v6416, %v6420
  %v6422 = vshrl.u32 %v5035, 16
  %v6424 = vrot.slane %v6422, 4
  %v6425 = vor.u32 %v6424, %v6420
  %v6426 = vrot.slane %v6425, 4
  %v6428 = vshll.u32 %v5036, 16
  %v6430 = vrot.slane %v6428, 5
  %v6431 = vsel %vm5168, %v6426, %v6430
  %v6432 = vshrl.u32 %v5036, 16
  %v6434 = vrot.slane %v6432, 4
  %v6435 = vor.u32 %v6434, %v6430
  %v6436 = vrot.slane %v6435, 4
  %v6438 = vshll.u32 %v5037, 16
  %v6440 = vrot.slane %v6438, 5
  %v6441 = vsel %vm5168, %v6436, %v6440
  %v6442 = vshrl.u32 %v5037, 16
  %v6444 = vrot.slane %v6442, 4
  %v6445 = vor.u32 %v6444, %v6440
  %v6446 = vrot.slane %v6445, 4
  %v6448 = vshrl.u32 %v5038, 16
  %v6450 = vrot.slane %v6448, 4
  %v6451 = vshll.u32 %v5038, 16
  %v6453 = vrot.slane %v6451, 5
  %v6454 = vor.u32 %v6450, %v6453
  %v6455 = vrot.slane %v6454, 4
  %v6457 = vshll.u32 %v5039, 16
  %v6459 = vrot.slane %v6457, 5
  %v6460 = vsel %vm5168, %v6455, %v6459
  %v6461 = vshrl.u32 %v5039, 16
  %v6463 = vrot.slane %v6461, 4
  %v6464 = vor.u32 %v6463, %v6459
  %v6465 = vrot.slane %v6464, 4
  %v6467 = vshll.u32 %v5040, 16
  %v6469 = vrot.slane %v6467, 5
  %v6470 = vsel %vm5168, %v6465, %v6469
  %v6471 = vshrl.u32 %v5040, 16
  %v6473 = vrot.slane %v6471, 4
  %v6474 = vor.u32 %v6473, %v6469
  %v6475 = vrot.slane %v6474, 4
  %v6477 = vshll.u32 %v5041, 16
  %v6479 = vrot.slane %v6477, 5
  %v6480 = vsel %vm5168, %v6475, %v6479
  %v6481 = vshrl.u32 %v5041, 16
  %v6483 = vrot.slane %v6481, 4
  %v6484 = vor.u32 %v6483, %v6479
  %v6485 = vrot.slane %v6484, 4
  %v6487 = vshll.u32 %v5042, 16
  %v6489 = vrot.slane %v6487, 5
  %v6490 = vsel %vm5168, %v6485, %v6489
  %v6491 = vshrl.u32 %v5042, 16
  %v6493 = vrot.slane %v6491, 4
  %v6494 = vor.u32 %v6493, %v6489
  %v6495 = vrot.slane %v6494, 4
  %v6497 = vshll.u32 %v5043, 16
  %v6499 = vrot.slane %v6497, 5
  %v6500 = vsel %vm5168, %v6495, %v6499
  %v6501 = vshrl.u32 %v5043, 16
  %v6503 = vrot.slane %v6501, 4
  %v6504 = vor.u32 %v6503, %v6499
  %v6505 = vrot.slane %v6504, 4
  %v6507 = vshll.u32 %v5044, 16
  %v6509 = vrot.slane %v6507, 5
  %v6510 = vsel %vm5168, %v6505, %v6509
  %v6511 = vshrl.u32 %v5044, 16
  %v6513 = vrot.slane %v6511, 4
  %v6514 = vor.u32 %v6513, %v6509
  %v6515 = vrot.slane %v6514, 4
  %v6517 = vshll.u32 %v5045, 16
  %v6519 = vrot.slane %v6517, 5
  %v6520 = vsel %vm5168, %v6515, %v6519
  %v6521 = vshrl.u32 %v5045, 16
  %v6523 = vrot.slane %v6521, 4
  %v6524 = vor.u32 %v6523, %v6519
  %v6525 = vrot.slane %v6524, 4
  %v6527 = vshll.u32 %v5046, 16
  %v6529 = vrot.slane %v6527, 5
  %v6530 = vsel %vm5168, %v6525, %v6529
  %v6531 = vshrl.u32 %v5046, 16
  %v6533 = vrot.slane %v6531, 4
  %v6534 = vor.u32 %v6533, %v6529
  %v6535 = vrot.slane %v6534, 4
  %v6537 = vshll.u32 %v5047, 16
  %v6539 = vrot.slane %v6537, 5
  %v6540 = vsel %vm5168, %v6535, %v6539
  %v6541 = vshrl.u32 %v5047, 16
  %v6543 = vrot.slane %v6541, 4
  %v6544 = vor.u32 %v6543, %v6539
  %v6545 = vrot.slane %v6544, 4
  %v6547 = vshll.u32 %v5048, 16
  %v6549 = vrot.slane %v6547, 5
  %v6550 = vsel %vm5168, %v6545, %v6549
  %v6551 = vshrl.u32 %v5048, 16
  %v6553 = vrot.slane %v6551, 4
  %v6554 = vor.u32 %v6553, %v6549
  %v6555 = vrot.slane %v6554, 4
  %v6557 = vshll.u32 %v5049, 16
  %v6559 = vrot.slane %v6557, 5
  %v6560 = vsel %vm5168, %v6555, %v6559
  %v6561 = vshrl.u32 %v5049, 16
  %v6563 = vrot.slane %v6561, 4
  %v6564 = vor.u32 %v6563, %v6559
  %v6565 = vrot.slane %v6564, 4
  %v6567 = vshll.u32 %v5050, 16
  %v6569 = vrot.slane %v6567, 5
  %v6570 = vsel %vm5168, %v6565, %v6569
  %v6571 = vshrl.u32 %v5050, 16
  %v6573 = vrot.slane %v6571, 4
  %v6574 = vor.u32 %v6573, %v6569
  %v6575 = vrot.slane %v6574, 4
  %v6577 = vshll.u32 %v5051, 16
  %v6579 = vrot.slane %v6577, 5
  %v6580 = vsel %vm5168, %v6575, %v6579
  %v6581 = vshrl.u32 %v5051, 16
  %v6583 = vrot.slane %v6581, 4
  %v6584 = vor.u32 %v6583, %v6579
  %v6585 = vrot.slane %v6584, 4
  %v6587 = vshll.u32 %v5052, 16
  %v6589 = vrot.slane %v6587, 5
  %v6590 = vsel %vm5168, %v6585, %v6589
  %v6591 = vshrl.u32 %v5052, 16
  %v6593 = vrot.slane %v6591, 4
  %v6594 = vor.u32 %v6593, %v6589
  %v6595 = vrot.slane %v6594, 4
  %v6597 = vshll.u32 %v5053, 16
  %v6599 = vrot.slane %v6597, 5
  %v6600 = vsel %vm5168, %v6595, %v6599
  %v6601 = vshrl.u32 %v5053, 16
  %v6603 = vrot.slane %v6601, 4
  %v6604 = vor.u32 %v6603, %v6599
  %v6605 = vrot.slane %v6604, 4
  %v6607 = vshll.u32 %v5054, 16
  %v6609 = vrot.slane %v6607, 5
  %v6610 = vsel %vm5168, %v6605, %v6609
  %v6611 = vshrl.u32 %v5054, 16
  %v6613 = vrot.slane %v6611, 4
  %v6614 = vor.u32 %v6613, %v6609
  %v6615 = vrot.slane %v6614, 4
  %v6617 = vshll.u32 %v5055, 16
  %v6619 = vrot.slane %v6617, 5
  %v6620 = vsel %vm5168, %v6615, %v6619
  %v6621 = vshrl.u32 %v5055, 16
  %v6623 = vrot.slane %v6621, 4
  %v6624 = vor.u32 %v6623, %v6619
  %v6625 = vrot.slane %v6624, 4
  %v6627 = vshll.u32 %v5056, 16
  %v6629 = vrot.slane %v6627, 5
  %v6630 = vsel %vm5168, %v6625, %v6629
  %v6631 = vshrl.u32 %v5056, 16
  %v6633 = vrot.slane %v6631, 4
  %v6634 = vor.u32 %v6633, %v6629
  %v6635 = vrot.slane %v6634, 4
  %v6637 = vshll.u32 %v5057, 16
  %v6639 = vrot.slane %v6637, 5
  %v6640 = vsel %vm5168, %v6635, %v6639
  %v6641 = vshrl.u32 %v5057, 16
  %v6643 = vrot.slane %v6641, 4
  %v6644 = vor.u32 %v6643, %v6639
  %v6645 = vrot.slane %v6644, 4
  %v6647 = vshll.u32 %v5058, 16
  %v6649 = vrot.slane %v6647, 5
  %v6650 = vsel %vm5168, %v6645, %v6649
  %v6651 = vshrl.u32 %v5058, 16
  %v6653 = vrot.slane %v6651, 4
  %v6654 = vor.u32 %v6653, %v6649
  %v6655 = vrot.slane %v6654, 4
  %v6657 = vshll.u32 %v5059, 16
  %v6659 = vrot.slane %v6657, 5
  %v6660 = vsel %vm5168, %v6655, %v6659
  %v6661 = vshrl.u32 %v5059, 16
  %v6663 = vrot.slane %v6661, 4
  %v6664 = vor.u32 %v6663, %v6659
  %v6665 = vrot.slane %v6664, 4
  %v6667 = vshll.u32 %v5060, 16
  %v6669 = vrot.slane %v6667, 5
  %v6670 = vsel %vm5168, %v6665, %v6669
  %v6671 = vshrl.u32 %v5060, 16
  %v6673 = vrot.slane %v6671, 4
  %v6674 = vor.u32 %v6673, %v6669
  %v6675 = vrot.slane %v6674, 4
  %v6677 = vshll.u32 %v5061, 16
  %v6679 = vrot.slane %v6677, 5
  %v6680 = vsel %vm5168, %v6675, %v6679
  %v6681 = vshrl.u32 %v5061, 16
  %v6683 = vrot.slane %v6681, 4
  %v6684 = vor.u32 %v6683, %v6679
  %v6685 = vrot.slane %v6684, 4
  %v6687 = vshll.u32 %v5062, 16
  %v6689 = vrot.slane %v6687, 5
  %v6690 = vsel %vm5168, %v6685, %v6689
  %v6691 = vshrl.u32 %v5062, 16
  %v6693 = vrot.slane %v6691, 4
  %v6694 = vor.u32 %v6693, %v6689
  %v6695 = vrot.slane %v6694, 4
  %v6697 = vshll.u32 %v5063, 16
  %v6699 = vrot.slane %v6697, 5
  %v6700 = vsel %vm5168, %v6695, %v6699
  %v6701 = vshrl.u32 %v5063, 16
  %v6703 = vrot.slane %v6701, 4
  %v6704 = vor.u32 %v6703, %v6699
  %v6705 = vrot.slane %v6704, 4
  %v6707 = vshll.u32 %v5064, 16
  %v6709 = vrot.slane %v6707, 5
  %v6710 = vsel %vm5168, %v6705, %v6709
  %v6711 = vshrl.u32 %v5064, 16
  %v6713 = vrot.slane %v6711, 4
  %v6714 = vor.u32 %v6713, %v6709
  %v6715 = vrot.slane %v6714, 4
  %v6717 = vshll.u32 %v5065, 16
  %v6719 = vrot.slane %v6717, 5
  %v6720 = vsel %vm5168, %v6715, %v6719
  %v6721 = vshrl.u32 %v5065, 16
  %v6723 = vrot.slane %v6721, 4
  %v6724 = vor.u32 %v6723, %v6719
  %v6725 = vrot.slane %v6724, 4
  %v6727 = vshll.u32 %v5066, 16
  %v6729 = vrot.slane %v6727, 5
  %v6730 = vsel %vm5168, %v6725, %v6729
  %v6731 = vshrl.u32 %v5066, 16
  %v6733 = vrot.slane %v6731, 4
  %v6734 = vor.u32 %v6733, %v6729
  %v6735 = vrot.slane %v6734, 4
  %v6737 = vshll.u32 %v5067, 16
  %v6739 = vrot.slane %v6737, 5
  %v6740 = vsel %vm5168, %v6735, %v6739
  %v6741 = vshrl.u32 %v5067, 16
  %v6743 = vrot.slane %v6741, 4
  %v6744 = vor.u32 %v6743, %v6739
  %v6745 = vrot.slane %v6744, 4
  %v6747 = vshll.u32 %v5068, 16
  %v6749 = vrot.slane %v6747, 5
  %v6750 = vsel %vm5168, %v6745, %v6749
  %v6751 = vshrl.u32 %v5068, 16
  %v6753 = vrot.slane %v6751, 4
  %v6754 = vor.u32 %v6753, %v6749
  %v6755 = vrot.slane %v6754, 4
  %v6757 = vshll.u32 %v5069, 16
  %v6759 = vrot.slane %v6757, 5
  %v6760 = vsel %vm5168, %v6755, %v6759
  %v6761 = vshrl.u32 %v5069, 16
  %v6763 = vrot.slane %v6761, 4
  %v6764 = vor.u32 %v6763, %v6759
  %v6765 = vrot.slane %v6764, 4
  %v6767 = vshll.u32 %v5070, 16
  %v6769 = vrot.slane %v6767, 5
  %v6770 = vsel %vm5168, %v6765, %v6769
  %v6771 = vshrl.u32 %v5070, 16
  %v6773 = vrot.slane %v6771, 4
  %v6774 = vor.u32 %v6773, %v6769
  %v6775 = vrot.slane %v6774, 4
  %v6777 = vshll.u32 %v5071, 16
  %v6779 = vrot.slane %v6777, 5
  %v6780 = vsel %vm5168, %v6775, %v6779
  %v6781 = vshrl.u32 %v5071, 16
  %v6783 = vrot.slane %v6781, 4
  %v6784 = vor.u32 %v6783, %v6779
  %v6785 = vrot.slane %v6784, 4
  %v6787 = vshll.u32 %v5072, 16
  %v6789 = vrot.slane %v6787, 5
  %v6790 = vsel %vm5168, %v6785, %v6789
  %v6791 = vshrl.u32 %v5072, 16
  %v6793 = vrot.slane %v6791, 4
  %v6794 = vor.u32 %v6793, %v6789
  %v6795 = vrot.slane %v6794, 4
  %v6797 = vshll.u32 %v5073, 16
  %v6799 = vrot.slane %v6797, 5
  %v6800 = vsel %vm5168, %v6795, %v6799
  %v6801 = vshrl.u32 %v5073, 16
  %v6803 = vrot.slane %v6801, 4
  %v6804 = vor.u32 %v6803, %v6799
  %v6805 = vrot.slane %v6804, 4
  %v6807 = vshll.u32 %v5074, 16
  %v6809 = vrot.slane %v6807, 5
  %v6810 = vsel %vm5168, %v6805, %v6809
  %v6811 = vshrl.u32 %v5074, 16
  %v6813 = vrot.slane %v6811, 4
  %v6814 = vor.u32 %v6813, %v6809
  %v6815 = vrot.slane %v6814, 4
  %v6817 = vshll.u32 %v5075, 16
  %v6819 = vrot.slane %v6817, 5
  %v6820 = vsel %vm5168, %v6815, %v6819
  %v6821 = vshrl.u32 %v5075, 16
  %v6823 = vrot.slane %v6821, 4
  %v6824 = vor.u32 %v6823, %v6819
  %v6825 = vrot.slane %v6824, 4
  %v6827 = vshll.u32 %v5076, 16
  %v6829 = vrot.slane %v6827, 5
  %v6830 = vsel %vm5168, %v6825, %v6829
  %v6831 = vshrl.u32 %v5076, 16
  %v6833 = vrot.slane %v6831, 4
  %v6834 = vor.u32 %v6833, %v6829
  %v6835 = vrot.slane %v6834, 4
  %v6837 = vshll.u32 %v5077, 16
  %v6839 = vrot.slane %v6837, 5
  %v6840 = vsel %vm5168, %v6835, %v6839
  %v6841 = vshrl.u32 %v5077, 16
  %v6843 = vrot.slane %v6841, 4
  %v6844 = vor.u32 %v6843, %v6839
  %v6845 = vrot.slane %v6844, 4
  %v6847 = vshll.u32 %v5078, 16
  %v6849 = vrot.slane %v6847, 5
  %v6850 = vsel %vm5168, %v6845, %v6849
  %v6851 = vshrl.u32 %v5078, 16
  %v6853 = vrot.slane %v6851, 4
  %v6854 = vor.u32 %v6853, %v6849
  %v6855 = vrot.slane %v6854, 4
  %v6857 = vshll.u32 %v5079, 16
  %v6859 = vrot.slane %v6857, 5
  %v6860 = vsel %vm5168, %v6855, %v6859
  %v6861 = vshrl.u32 %v5079, 16
  %v6863 = vrot.slane %v6861, 4
  %v6864 = vor.u32 %v6863, %v6859
  %v6865 = vrot.slane %v6864, 4
  %v6867 = vshll.u32 %v5080, 16
  %v6869 = vrot.slane %v6867, 5
  %v6870 = vsel %vm5168, %v6865, %v6869
  %v6871 = vshrl.u32 %v5080, 16
  %v6873 = vrot.slane %v6871, 4
  %v6874 = vor.u32 %v6873, %v6869
  %v6875 = vrot.slane %v6874, 4
  %v6877 = vshll.u32 %v5081, 16
  %v6879 = vrot.slane %v6877, 5
  %v6880 = vsel %vm5168, %v6875, %v6879
  %v6881 = vshrl.u32 %v5081, 16
  %v6883 = vrot.slane %v6881, 4
  %v6884 = vor.u32 %v6883, %v6879
  %v6885 = vrot.slane %v6884, 4
  %v6887 = vshll.u32 %v5082, 16
  %v6889 = vrot.slane %v6887, 5
  %v6890 = vsel %vm5168, %v6885, %v6889
  %v6891 = vshrl.u32 %v5082, 16
  %v6893 = vrot.slane %v6891, 4
  %v6894 = vor.u32 %v6893, %v6889
  %v6895 = vrot.slane %v6894, 4
  %v6897 = vshll.u32 %v5083, 16
  %v6899 = vrot.slane %v6897, 5
  %v6900 = vsel %vm5168, %v6895, %v6899
  %v6901 = vshrl.u32 %v5083, 16
  %v6903 = vrot.slane %v6901, 4
  %v6904 = vor.u32 %v6903, %v6899
  %v6905 = vrot.slane %v6904, 4
  %v6907 = vshll.u32 %v5084, 16
  %v6909 = vrot.slane %v6907, 5
  %v6910 = vsel %vm5168, %v6905, %v6909
  %v6911 = vshrl.u32 %v5084, 16
  %v6913 = vrot.slane %v6911, 4
  %v6914 = vor.u32 %v6913, %v6909
  %v6915 = vrot.slane %v6914, 4
  %v6917 = vshll.u32 %v5085, 16
  %v6919 = vrot.slane %v6917, 5
  %v6920 = vsel %vm5168, %v6915, %v6919
  %v6921 = vshrl.u32 %v5085, 16
  %v6923 = vrot.slane %v6921, 4
  %v6924 = vor.u32 %v6923, %v6919
  %v6925 = vrot.slane %v6924, 4
  %v6927 = vshll.u32 %v5086, 16
  %v6929 = vrot.slane %v6927, 5
  %v6930 = vsel %vm5168, %v6925, %v6929
  %v6931 = vshrl.u32 %v5086, 16
  %v6933 = vrot.slane %v6931, 4
  %v6934 = vor.u32 %v6933, %v6929
  %v6935 = vrot.slane %v6934, 4
  %v6937 = vshll.u32 %v5087, 16
  %v6939 = vrot.slane %v6937, 5
  %v6940 = vsel %vm5168, %v6935, %v6939
  %v6941 = vshrl.u32 %v5087, 16
  %v6943 = vrot.slane %v6941, 4
  %v6944 = vor.u32 %v6943, %v6939
  %v6945 = vrot.slane %v6944, 4
  %v6947 = vshll.u32 %v5088, 16
  %v6949 = vrot.slane %v6947, 5
  %v6950 = vsel %vm5168, %v6945, %v6949
  %v6951 = vshrl.u32 %v5088, 16
  %v6953 = vrot.slane %v6951, 4
  %v6954 = vor.u32 %v6953, %v6949
  %v6955 = vrot.slane %v6954, 4
  %v6957 = vshll.u32 %v5089, 16
  %v6959 = vrot.slane %v6957, 5
  %v6960 = vsel %vm5168, %v6955, %v6959
  %v6961 = vshrl.u32 %v5089, 16
  %v6963 = vrot.slane %v6961, 4
  %v6964 = vor.u32 %v6963, %v6959
  %v6965 = vrot.slane %v6964, 4
  %v6967 = vshll.u32 %v5090, 16
  %v6969 = vrot.slane %v6967, 5
  %v6970 = vsel %vm5168, %v6965, %v6969
  %v6971 = vshrl.u32 %v5090, 16
  %v6973 = vrot.slane %v6971, 4
  %v6974 = vor.u32 %v6973, %v6969
  %v6975 = vrot.slane %v6974, 4
  %v6977 = vshll.u32 %v5091, 16
  %v6979 = vrot.slane %v6977, 5
  %v6980 = vsel %vm5168, %v6975, %v6979
  %v6981 = vshrl.u32 %v5091, 16
  %v6983 = vrot.slane %v6981, 4
  %v6984 = vor.u32 %v6983, %v6979
  %v6985 = vrot.slane %v6984, 4
  %v6987 = vshll.u32 %v5092, 16
  %v6989 = vrot.slane %v6987, 5
  %v6990 = vsel %vm5168, %v6985, %v6989
  %v6991 = vshrl.u32 %v5092, 16
  %v6993 = vrot.slane %v6991, 4
  %v6994 = vor.u32 %v6993, %v6989
  %v6995 = vrot.slane %v6994, 4
  %v6997 = vshll.u32 %v5093, 16
  %v6999 = vrot.slane %v6997, 5
  %v7000 = vsel %vm5168, %v6995, %v6999
  %v7001 = vshrl.u32 %v5093, 16
  %v7003 = vrot.slane %v7001, 4
  %v7004 = vor.u32 %v7003, %v6999
  %v7005 = vrot.slane %v7004, 4
  %v7007 = vshll.u32 %v5094, 16
  %v7009 = vrot.slane %v7007, 5
  %v7010 = vsel %vm5168, %v7005, %v7009
  %v7011 = vshrl.u32 %v5094, 16
  %v7013 = vrot.slane %v7011, 4
  %v7014 = vor.u32 %v7013, %v7009
  %v7015 = vrot.slane %v7014, 4
  %v7017 = vshll.u32 %v5095, 16
  %v7019 = vrot.slane %v7017, 5
  %v7020 = vsel %vm5168, %v7015, %v7019
  %v7021 = vshrl.u32 %v5095, 16
  %v7023 = vrot.slane %v7021, 4
  %v7024 = vor.u32 %v7023, %v7019
  %v7025 = vrot.slane %v7024, 4
  %v7027 = vshll.u32 %v5096, 16
  %v7029 = vrot.slane %v7027, 5
  %v7030 = vsel %vm5168, %v7025, %v7029
  %v7031 = vshrl.u32 %v5096, 16
  %v7033 = vrot.slane %v7031, 4
  %v7034 = vor.u32 %v7033, %v7029
  %v7035 = vrot.slane %v7034, 4
  %v7037 = vshll.u32 %v5097, 16
  %v7039 = vrot.slane %v7037, 5
  %v7040 = vsel %vm5168, %v7035, %v7039
  %v7041 = vshrl.u32 %v5097, 16
  %v7043 = vrot.slane %v7041, 4
  %v7044 = vor.u32 %v7043, %v7039
  %v7045 = vrot.slane %v7044, 4
  %v7047 = vshll.u32 %v5098, 16
  %v7049 = vrot.slane %v7047, 5
  %v7050 = vsel %vm5168, %v7045, %v7049
  %v7051 = vshrl.u32 %v5098, 16
  %v7053 = vrot.slane %v7051, 4
  %v7054 = vor.u32 %v7053, %v7049
  %v7055 = vrot.slane %v7054, 4
  %v7057 = vshll.u32 %v5099, 16
  %v7059 = vrot.slane %v7057, 5
  %v7060 = vsel %vm5168, %v7055, %v7059
  %v7061 = vshrl.u32 %v5099, 16
  %v7063 = vrot.slane %v7061, 4
  %v7064 = vor.u32 %v7063, %v7059
  %v7065 = vrot.slane %v7064, 4
  %v7067 = vshll.u32 %v5100, 16
  %v7069 = vrot.slane %v7067, 5
  %v7070 = vsel %vm5168, %v7065, %v7069
  %v7071 = vshrl.u32 %v5100, 16
  %v7073 = vrot.slane %v7071, 4
  %v7074 = vor.u32 %v7073, %v7069
  %v7075 = vrot.slane %v7074, 4
  %v7077 = vshll.u32 %v5101, 16
  %v7079 = vrot.slane %v7077, 5
  %v7080 = vsel %vm5168, %v7075, %v7079
  %v7081 = vshrl.u32 %v5101, 16
  %v7083 = vrot.slane %v7081, 4
  %v7084 = vor.u32 %v7083, %v7079
  %v7085 = vrot.slane %v7084, 4
  %v7087 = vshrl.u32 %v5102, 16
  %v7089 = vrot.slane %v7087, 4
  %v7090 = vshll.u32 %v5102, 16
  %v7092 = vrot.slane %v7090, 5
  %v7093 = vor.u32 %v7089, %v7092
  %v7094 = vrot.slane %v7093, 4
  %v7096 = vshll.u32 %v5103, 16
  %v7098 = vrot.slane %v7096, 5
  %v7099 = vsel %vm5168, %v7094, %v7098
  %v7100 = vshrl.u32 %v5103, 16
  %v7102 = vrot.slane %v7100, 4
  %v7103 = vor.u32 %v7102, %v7098
  %v7104 = vrot.slane %v7103, 4
  %v7106 = vshll.u32 %v5104, 16
  %v7108 = vrot.slane %v7106, 5
  %v7109 = vsel %vm5168, %v7104, %v7108
  %v7110 = vshrl.u32 %v5104, 16
  %v7112 = vrot.slane %v7110, 4
  %v7113 = vor.u32 %v7112, %v7108
  %v7114 = vrot.slane %v7113, 4
  %v7116 = vshll.u32 %v5105, 16
  %v7118 = vrot.slane %v7116, 5
  %v7119 = vsel %vm5168, %v7114, %v7118
  %v7120 = vshrl.u32 %v5105, 16
  %v7122 = vrot.slane %v7120, 4
  %v7123 = vor.u32 %v7122, %v7118
  %v7124 = vrot.slane %v7123, 4
  %v7126 = vshll.u32 %v5106, 16
  %v7128 = vrot.slane %v7126, 5
  %v7129 = vsel %vm5168, %v7124, %v7128
  %v7130 = vshrl.u32 %v5106, 16
  %v7132 = vrot.slane %v7130, 4
  %v7133 = vor.u32 %v7132, %v7128
  %v7134 = vrot.slane %v7133, 4
  %v7136 = vshll.u32 %v5107, 16
  %v7138 = vrot.slane %v7136, 5
  %v7139 = vsel %vm5168, %v7134, %v7138
  %v7140 = vshrl.u32 %v5107, 16
  %v7142 = vrot.slane %v7140, 4
  %v7143 = vor.u32 %v7142, %v7138
  %v7144 = vrot.slane %v7143, 4
  %v7146 = vshll.u32 %v5108, 16
  %v7148 = vrot.slane %v7146, 5
  %v7149 = vsel %vm5168, %v7144, %v7148
  %v7150 = vshrl.u32 %v5108, 16
  %v7152 = vrot.slane %v7150, 4
  %v7153 = vor.u32 %v7152, %v7148
  %v7154 = vrot.slane %v7153, 4
  %v7156 = vshll.u32 %v5109, 16
  %v7158 = vrot.slane %v7156, 5
  %v7159 = vsel %vm5168, %v7154, %v7158
  %v7160 = vshrl.u32 %v5109, 16
  %v7162 = vrot.slane %v7160, 4
  %v7163 = vor.u32 %v7162, %v7158
  %v7164 = vrot.slane %v7163, 4
  %v7166 = vshll.u32 %v5110, 16
  %v7168 = vrot.slane %v7166, 5
  %v7169 = vsel %vm5168, %v7164, %v7168
  %v7170 = vshrl.u32 %v5110, 16
  %v7172 = vrot.slane %v7170, 4
  %v7173 = vor.u32 %v7172, %v7168
  %v7174 = vrot.slane %v7173, 4
  %v7176 = vshll.u32 %v5111, 16
  %v7178 = vrot.slane %v7176, 5
  %v7179 = vsel %vm5168, %v7174, %v7178
  %v7180 = vshrl.u32 %v5111, 16
  %v7182 = vrot.slane %v7180, 4
  %v7183 = vor.u32 %v7182, %v7178
  %v7184 = vrot.slane %v7183, 4
  %v7186 = vshll.u32 %v5112, 16
  %v7188 = vrot.slane %v7186, 5
  %v7189 = vsel %vm5168, %v7184, %v7188
  %v7190 = vshrl.u32 %v5112, 16
  %v7192 = vrot.slane %v7190, 4
  %v7193 = vor.u32 %v7192, %v7188
  %v7194 = vrot.slane %v7193, 4
  %v7196 = vshll.u32 %v5113, 16
  %v7198 = vrot.slane %v7196, 5
  %v7199 = vsel %vm5168, %v7194, %v7198
  %v7200 = vshrl.u32 %v5113, 16
  %v7202 = vrot.slane %v7200, 4
  %v7203 = vor.u32 %v7202, %v7198
  %v7204 = vrot.slane %v7203, 4
  %v7206 = vshll.u32 %v5114, 16
  %v7208 = vrot.slane %v7206, 5
  %v7209 = vsel %vm5168, %v7204, %v7208
  %v7210 = vshrl.u32 %v5114, 16
  %v7212 = vrot.slane %v7210, 4
  %v7213 = vor.u32 %v7212, %v7208
  %v7214 = vrot.slane %v7213, 4
  %v7216 = vshll.u32 %v5115, 16
  %v7218 = vrot.slane %v7216, 5
  %v7219 = vsel %vm5168, %v7214, %v7218
  %v7220 = vshrl.u32 %v5115, 16
  %v7222 = vrot.slane %v7220, 4
  %v7223 = vor.u32 %v7222, %v7218
  %v7224 = vrot.slane %v7223, 4
  %v7226 = vshll.u32 %v5116, 16
  %v7228 = vrot.slane %v7226, 5
  %v7229 = vsel %vm5168, %v7224, %v7228
  %v7230 = vshrl.u32 %v5116, 16
  %v7232 = vrot.slane %v7230, 4
  %v7233 = vor.u32 %v7232, %v7228
  %v7234 = vrot.slane %v7233, 4
  %v7236 = vshll.u32 %v5117, 16
  %v7238 = vrot.slane %v7236, 5
  %v7239 = vsel %vm5168, %v7234, %v7238
  %v7240 = vshrl.u32 %v5117, 16
  %v7242 = vrot.slane %v7240, 4
  %v7243 = vor.u32 %v7242, %v7238
  %v7244 = vrot.slane %v7243, 4
  %v7246 = vshll.u32 %v5118, 16
  %v7248 = vrot.slane %v7246, 5
  %v7249 = vsel %vm5168, %v7244, %v7248
  %v7250 = vshrl.u32 %v5118, 16
  %v7252 = vrot.slane %v7250, 4
  %v7253 = vor.u32 %v7252, %v7248
  %v7254 = vrot.slane %v7253, 4
  %v7256 = vshll.u32 %v5119, 16
  %v7258 = vrot.slane %v7256, 5
  %v7259 = vsel %vm5168, %v7254, %v7258
  %v7260 = vshrl.u32 %v5119, 16
  %v7262 = vrot.slane %v7260, 4
  %v7263 = vor.u32 %v7262, %v7258
  %v7264 = vrot.slane %v7263, 4
  %v7266 = vshll.u32 %v5120, 16
  %v7268 = vrot.slane %v7266, 5
  %v7269 = vsel %vm5168, %v7264, %v7268
  %v7270 = vshrl.u32 %v5120, 16
  %v7272 = vrot.slane %v7270, 4
  %v7273 = vor.u32 %v7272, %v7268
  %v7274 = vrot.slane %v7273, 4
  %v7276 = vshll.u32 %v5121, 16
  %v7278 = vrot.slane %v7276, 5
  %v7279 = vsel %vm5168, %v7274, %v7278
  %v7280 = vshrl.u32 %v5121, 16
  %v7282 = vrot.slane %v7280, 4
  %v7283 = vor.u32 %v7282, %v7278
  %v7284 = vrot.slane %v7283, 4
  %v7286 = vshll.u32 %v5122, 16
  %v7288 = vrot.slane %v7286, 5
  %v7289 = vsel %vm5168, %v7284, %v7288
  %v7290 = vshrl.u32 %v5122, 16
  %v7292 = vrot.slane %v7290, 4
  %v7293 = vor.u32 %v7292, %v7288
  %v7294 = vrot.slane %v7293, 4
  %v7296 = vshll.u32 %v5123, 16
  %v7298 = vrot.slane %v7296, 5
  %v7299 = vsel %vm5168, %v7294, %v7298
  %v7300 = vshrl.u32 %v5123, 16
  %v7302 = vrot.slane %v7300, 4
  %v7303 = vor.u32 %v7302, %v7298
  %v7304 = vrot.slane %v7303, 4
  %v7306 = vshll.u32 %v5124, 16
  %v7308 = vrot.slane %v7306, 5
  %v7309 = vsel %vm5168, %v7304, %v7308
  %v7310 = vshrl.u32 %v5124, 16
  %v7312 = vrot.slane %v7310, 4
  %v7313 = vor.u32 %v7312, %v7308
  %v7314 = vrot.slane %v7313, 4
  %v7316 = vshll.u32 %v5125, 16
  %v7318 = vrot.slane %v7316, 5
  %v7319 = vsel %vm5168, %v7314, %v7318
  %v7320 = vshrl.u32 %v5125, 16
  %v7322 = vrot.slane %v7320, 4
  %v7323 = vor.u32 %v7322, %v7318
  %v7324 = vrot.slane %v7323, 4
  %v7326 = vshll.u32 %v5126, 16
  %v7328 = vrot.slane %v7326, 5
  %v7329 = vsel %vm5168, %v7324, %v7328
  %v7330 = vshrl.u32 %v5126, 16
  %v7332 = vrot.slane %v7330, 4
  %v7333 = vor.u32 %v7332, %v7328
  %v7334 = vrot.slane %v7333, 4
  %v7336 = vshll.u32 %v5127, 16
  %v7338 = vrot.slane %v7336, 5
  %v7339 = vsel %vm5168, %v7334, %v7338
  %v7340 = vshrl.u32 %v5127, 16
  %v7342 = vrot.slane %v7340, 4
  %v7343 = vor.u32 %v7342, %v7338
  %v7344 = vrot.slane %v7343, 4
  %v7346 = vshll.u32 %v5128, 16
  %v7348 = vrot.slane %v7346, 5
  %v7349 = vsel %vm5168, %v7344, %v7348
  %v7350 = vshrl.u32 %v5128, 16
  %v7352 = vrot.slane %v7350, 4
  %v7353 = vor.u32 %v7352, %v7348
  %v7354 = vrot.slane %v7353, 4
  %v7356 = vshll.u32 %v5129, 16
  %v7358 = vrot.slane %v7356, 5
  %v7359 = vsel %vm5168, %v7354, %v7358
  %v7360 = vshrl.u32 %v5129, 16
  %v7362 = vrot.slane %v7360, 4
  %v7363 = vor.u32 %v7362, %v7358
  %v7364 = vrot.slane %v7363, 4
  %v7366 = vshll.u32 %v5130, 16
  %v7368 = vrot.slane %v7366, 5
  %v7369 = vsel %vm5168, %v7364, %v7368
  %v7370 = vshrl.u32 %v5130, 16
  %v7372 = vrot.slane %v7370, 4
  %v7373 = vor.u32 %v7372, %v7368
  %v7374 = vrot.slane %v7373, 4
  %v7376 = vshll.u32 %v5131, 16
  %v7378 = vrot.slane %v7376, 5
  %v7379 = vsel %vm5168, %v7374, %v7378
  %v7380 = vshrl.u32 %v5131, 16
  %v7382 = vrot.slane %v7380, 4
  %v7383 = vor.u32 %v7382, %v7378
  %v7384 = vrot.slane %v7383, 4
  %v7386 = vshll.u32 %v5132, 16
  %v7388 = vrot.slane %v7386, 5
  %v7389 = vsel %vm5168, %v7384, %v7388
  %v7390 = vshrl.u32 %v5132, 16
  %v7392 = vrot.slane %v7390, 4
  %v7393 = vor.u32 %v7392, %v7388
  %v7394 = vrot.slane %v7393, 4
  %v7396 = vshll.u32 %v5133, 16
  %v7398 = vrot.slane %v7396, 5
  %v7399 = vsel %vm5168, %v7394, %v7398
  %v7400 = vshrl.u32 %v5133, 16
  %v7402 = vrot.slane %v7400, 4
  %v7403 = vor.u32 %v7402, %v7398
  %v7404 = vrot.slane %v7403, 4
  %v7406 = vshll.u32 %v5134, 16
  %v7408 = vrot.slane %v7406, 5
  %v7409 = vsel %vm5168, %v7404, %v7408
  %v7410 = vshrl.u32 %v5134, 16
  %v7412 = vrot.slane %v7410, 4
  %v7413 = vor.u32 %v7412, %v7408
  %v7414 = vrot.slane %v7413, 4
  %v7416 = vshll.u32 %v5135, 16
  %v7418 = vrot.slane %v7416, 5
  %v7419 = vsel %vm5168, %v7414, %v7418
  %v7420 = vshrl.u32 %v5135, 16
  %v7422 = vrot.slane %v7420, 4
  %v7423 = vor.u32 %v7422, %v7418
  %v7424 = vrot.slane %v7423, 4
  %v7426 = vshll.u32 %v5136, 16
  %v7428 = vrot.slane %v7426, 5
  %v7429 = vsel %vm5168, %v7424, %v7428
  %v7430 = vshrl.u32 %v5136, 16
  %v7432 = vrot.slane %v7430, 4
  %v7433 = vor.u32 %v7432, %v7428
  %v7434 = vrot.slane %v7433, 4
  %v7436 = vshll.u32 %v5137, 16
  %v7438 = vrot.slane %v7436, 5
  %v7439 = vsel %vm5168, %v7434, %v7438
  %v7440 = vshrl.u32 %v5137, 16
  %v7442 = vrot.slane %v7440, 4
  %v7443 = vor.u32 %v7442, %v7438
  %v7444 = vrot.slane %v7443, 4
  %v7446 = vshll.u32 %v5138, 16
  %v7448 = vrot.slane %v7446, 5
  %v7449 = vsel %vm5168, %v7444, %v7448
  %v7450 = vshrl.u32 %v5138, 16
  %v7452 = vrot.slane %v7450, 4
  %v7453 = vor.u32 %v7452, %v7448
  %v7454 = vrot.slane %v7453, 4
  %v7456 = vshll.u32 %v5139, 16
  %v7458 = vrot.slane %v7456, 5
  %v7459 = vsel %vm5168, %v7454, %v7458
  %v7460 = vshrl.u32 %v5139, 16
  %v7462 = vrot.slane %v7460, 4
  %v7463 = vor.u32 %v7462, %v7458
  %v7464 = vrot.slane %v7463, 4
  %v7466 = vshll.u32 %v5140, 16
  %v7468 = vrot.slane %v7466, 5
  %v7469 = vsel %vm5168, %v7464, %v7468
  %v7470 = vshrl.u32 %v5140, 16
  %v7472 = vrot.slane %v7470, 4
  %v7473 = vor.u32 %v7472, %v7468
  %v7474 = vrot.slane %v7473, 4
  %v7476 = vshll.u32 %v5141, 16
  %v7478 = vrot.slane %v7476, 5
  %v7479 = vsel %vm5168, %v7474, %v7478
  %v7480 = vshrl.u32 %v5141, 16
  %v7482 = vrot.slane %v7480, 4
  %v7483 = vor.u32 %v7482, %v7478
  %v7484 = vrot.slane %v7483, 4
  %v7486 = vshll.u32 %v5142, 16
  %v7488 = vrot.slane %v7486, 5
  %v7489 = vsel %vm5168, %v7484, %v7488
  %v7490 = vshrl.u32 %v5142, 16
  %v7492 = vrot.slane %v7490, 4
  %v7493 = vor.u32 %v7492, %v7488
  %v7494 = vrot.slane %v7493, 4
  %v7496 = vshll.u32 %v5143, 16
  %v7498 = vrot.slane %v7496, 5
  %v7499 = vsel %vm5168, %v7494, %v7498
  %v7500 = vshrl.u32 %v5143, 16
  %v7502 = vrot.slane %v7500, 4
  %v7503 = vor.u32 %v7502, %v7498
  %v7504 = vrot.slane %v7503, 4
  %v7506 = vshll.u32 %v5144, 16
  %v7508 = vrot.slane %v7506, 5
  %v7509 = vsel %vm5168, %v7504, %v7508
  %v7510 = vshrl.u32 %v5144, 16
  %v7512 = vrot.slane %v7510, 4
  %v7513 = vor.u32 %v7512, %v7508
  %v7514 = vrot.slane %v7513, 4
  %v7516 = vshll.u32 %v5145, 16
  %v7518 = vrot.slane %v7516, 5
  %v7519 = vsel %vm5168, %v7514, %v7518
  %v7520 = vshrl.u32 %v5145, 16
  %v7522 = vrot.slane %v7520, 4
  %v7523 = vor.u32 %v7522, %v7518
  %v7524 = vrot.slane %v7523, 4
  %v7526 = vshll.u32 %v5146, 16
  %v7528 = vrot.slane %v7526, 5
  %v7529 = vsel %vm5168, %v7524, %v7528
  %v7530 = vshrl.u32 %v5146, 16
  %v7532 = vrot.slane %v7530, 4
  %v7533 = vor.u32 %v7532, %v7528
  %v7534 = vrot.slane %v7533, 4
  %v7536 = vshll.u32 %v5147, 16
  %v7538 = vrot.slane %v7536, 5
  %v7539 = vsel %vm5168, %v7534, %v7538
  %v7540 = vshrl.u32 %v5147, 16
  %v7542 = vrot.slane %v7540, 4
  %v7543 = vor.u32 %v7542, %v7538
  %v7544 = vrot.slane %v7543, 4
  %v7546 = vshll.u32 %v5148, 16
  %v7548 = vrot.slane %v7546, 5
  %v7549 = vsel %vm5168, %v7544, %v7548
  %v7550 = vshrl.u32 %v5148, 16
  %v7552 = vrot.slane %v7550, 4
  %v7553 = vor.u32 %v7552, %v7548
  %v7554 = vrot.slane %v7553, 4
  %v7556 = vshll.u32 %v5149, 16
  %v7558 = vrot.slane %v7556, 5
  %v7559 = vsel %vm5168, %v7554, %v7558
  %v7560 = vshrl.u32 %v5149, 16
  %v7562 = vrot.slane %v7560, 4
  %v7563 = vor.u32 %v7562, %v7558
  %v7564 = vrot.slane %v7563, 4
  %v7566 = vshll.u32 %v5150, 16
  %v7568 = vrot.slane %v7566, 5
  %v7569 = vsel %vm5168, %v7564, %v7568
  %v7570 = vshrl.u32 %v5150, 16
  %v7572 = vrot.slane %v7570, 4
  %v7573 = vor.u32 %v7572, %v7568
  %v7574 = vrot.slane %v7573, 4
  %v7576 = vshll.u32 %v5151, 16
  %v7578 = vrot.slane %v7576, 5
  %v7579 = vsel %vm5168, %v7574, %v7578
  %v7580 = vshrl.u32 %v5151, 16
  %v7582 = vrot.slane %v7580, 4
  %v7583 = vor.u32 %v7582, %v7578
  %v7584 = vrot.slane %v7583, 4
  %v7586 = vshll.u32 %v5152, 16
  %v7588 = vrot.slane %v7586, 5
  %v7589 = vsel %vm5168, %v7584, %v7588
  %v7590 = vshrl.u32 %v5152, 16
  %v7592 = vrot.slane %v7590, 4
  %v7593 = vor.u32 %v7592, %v7588
  %v7594 = vrot.slane %v7593, 4
  %v7596 = vshll.u32 %v5153, 16
  %v7598 = vrot.slane %v7596, 5
  %v7599 = vsel %vm5168, %v7594, %v7598
  %v7600 = vshrl.u32 %v5153, 16
  %v7602 = vrot.slane %v7600, 4
  %v7603 = vor.u32 %v7602, %v7598
  %v7604 = vrot.slane %v7603, 4
  %v7606 = vshll.u32 %v5154, 16
  %v7608 = vrot.slane %v7606, 5
  %v7609 = vsel %vm5168, %v7604, %v7608
  %v7610 = vshrl.u32 %v5154, 16
  %v7612 = vrot.slane %v7610, 4
  %v7613 = vor.u32 %v7612, %v7608
  %v7614 = vrot.slane %v7613, 4
  %v7616 = vshll.u32 %v5155, 16
  %v7618 = vrot.slane %v7616, 5
  %v7619 = vsel %vm5168, %v7614, %v7618
  %v7620 = vshrl.u32 %v5155, 16
  %v7622 = vrot.slane %v7620, 4
  %v7623 = vor.u32 %v7622, %v7618
  %v7624 = vrot.slane %v7623, 4
  %v7626 = vshll.u32 %v5156, 16
  %v7628 = vrot.slane %v7626, 5
  %v7629 = vsel %vm5168, %v7624, %v7628
  %v7630 = vshrl.u32 %v5156, 16
  %v7632 = vrot.slane %v7630, 4
  %v7633 = vor.u32 %v7632, %v7628
  %v7634 = vrot.slane %v7633, 4
  %v7636 = vshll.u32 %v5157, 16
  %v7638 = vrot.slane %v7636, 5
  %v7639 = vsel %vm5168, %v7634, %v7638
  %v7640 = vshrl.u32 %v5157, 16
  %v7642 = vrot.slane %v7640, 4
  %v7643 = vor.u32 %v7642, %v7638
  %v7644 = vrot.slane %v7643, 4
  %v7646 = vshll.u32 %v5158, 16
  %v7648 = vrot.slane %v7646, 5
  %v7649 = vsel %vm5168, %v7644, %v7648
  %v7650 = vshrl.u32 %v5158, 16
  %v7652 = vrot.slane %v7650, 4
  %v7653 = vor.u32 %v7652, %v7648
  %v7654 = vrot.slane %v7653, 4
  %v7656 = vshll.u32 %v5159, 16
  %v7658 = vrot.slane %v7656, 5
  %v7659 = vsel %vm5168, %v7654, %v7658
  %v7660 = vshrl.u32 %v5159, 16
  %v7662 = vrot.slane %v7660, 4
  %v7663 = vor.u32 %v7662, %v7658
  %v7664 = vrot.slane %v7663, 4
  %v7666 = vshll.u32 %v5160, 16
  %v7668 = vrot.slane %v7666, 5
  %v7669 = vsel %vm5168, %v7664, %v7668
  %v7670 = vshrl.u32 %v5160, 16
  %v7672 = vrot.slane %v7670, 4
  %v7673 = vor.u32 %v7672, %v7668
  %v7674 = vrot.slane %v7673, 4
  %v7676 = vshll.u32 %v5161, 16
  %v7678 = vrot.slane %v7676, 5
  %v7679 = vsel %vm5168, %v7674, %v7678
  %v7680 = vshrl.u32 %v5161, 16
  %v7682 = vrot.slane %v7680, 4
  %v7683 = vor.u32 %v7682, %v7678
  %v7684 = vrot.slane %v7683, 4
  %v7686 = vshll.u32 %v5162, 16
  %v7688 = vrot.slane %v7686, 5
  %v7689 = vsel %vm5168, %v7684, %v7688
  %v7690 = vshrl.u32 %v5162, 16
  %v7692 = vrot.slane %v7690, 4
  %v7693 = vor.u32 %v7692, %v7688
  %v7694 = vrot.slane %v7693, 4
  %v7696 = vshll.u32 %v5163, 16
  %v7698 = vrot.slane %v7696, 5
  %v7699 = vsel %vm5168, %v7694, %v7698
  %v7700 = vshrl.u32 %v5163, 16
  %v7702 = vrot.slane %v7700, 4
  %v7703 = vor.u32 %v7702, %v7698
  %v7704 = vrot.slane %v7703, 4
  %v7706 = vshll.u32 %v5164, 16
  %v7708 = vrot.slane %v7706, 5
  %v7709 = vsel %vm5168, %v7704, %v7708
  %v7710 = vshrl.u32 %v5164, 16
  %v7712 = vrot.slane %v7710, 4
  %v7713 = vor.u32 %v7712, %v7708
  %v7714 = vrot.slane %v7713, 4
  %v7716 = vshll.u32 %v5165, 16
  %v7718 = vrot.slane %v7716, 5
  %v7719 = vsel %vm5168, %v7714, %v7718
  %v7720 = vshrl.u32 %v5165, 16
  %v7722 = vrot.slane %v7720, 4
  %v7723 = vor.u32 %v7722, %v7718
  %v7724 = vrot.slane %v7723, 4
  %7725 = vrot.lane.b32.xlu0 %v5182, 64
  %v7726 = vpop.permute.xlu0 %7725
  %7727 = vrot.lane.b32.xlu0 %v5192, 64
  %v7728 = vpop.permute.xlu0 %7727
  %7729 = vrot.lane.b32.xlu0 %v5202, 64
  %v7730 = vpop.permute.xlu0 %7729
  %7731 = vrot.lane.b32.xlu0 %v5212, 64
  %v7732 = vpop.permute.xlu0 %7731
  %7733 = vrot.lane.b32.xlu0 %v5222, 64
  %v7734 = vpop.permute.xlu0 %7733
  %7735 = vrot.lane.b32.xlu0 %v5232, 64
  %v7736 = vpop.permute.xlu0 %7735
  %7737 = vrot.lane.b32.xlu0 %v5242, 64
  %v7738 = vpop.permute.xlu0 %7737
  %7739 = vrot.lane.b32.xlu0 %v5252, 64
  %v7740 = vpop.permute.xlu0 %7739
  %7741 = vrot.lane.b32.xlu0 %v5262, 64
  %v7742 = vpop.permute.xlu0 %7741
  %7743 = vrot.lane.b32.xlu0 %v5272, 64
  %v7744 = vpop.permute.xlu0 %7743
  %7745 = vrot.lane.b32.xlu0 %v5282, 64
  %v7746 = vpop.permute.xlu0 %7745
  %7747 = vrot.lane.b32.xlu0 %v5292, 64
  %v7748 = vpop.permute.xlu0 %7747
  %7749 = vrot.lane.b32.xlu0 %v5302, 64
  %v7750 = vpop.permute.xlu0 %7749
  %7751 = vrot.lane.b32.xlu0 %v5312, 64
  %v7752 = vpop.permute.xlu0 %7751
  %7753 = vrot.lane.b32.xlu0 %v5322, 64
  %v7754 = vpop.permute.xlu0 %7753
  %7755 = vrot.lane.b32.xlu0 %v5332, 64
  %v7756 = vpop.permute.xlu0 %7755
  %7757 = vrot.lane.b32.xlu0 %v5342, 64
  %v7758 = vpop.permute.xlu0 %7757
  %7759 = vrot.lane.b32.xlu0 %v5352, 64
  %v7760 = vpop.permute.xlu0 %7759
  %7761 = vrot.lane.b32.xlu0 %v5362, 64
  %v7762 = vpop.permute.xlu0 %7761
  %7763 = vrot.lane.b32.xlu0 %v5372, 64
  %v7764 = vpop.permute.xlu0 %7763
  %7765 = vrot.lane.b32.xlu0 %v5382, 64
  %v7766 = vpop.permute.xlu0 %7765
  %7767 = vrot.lane.b32.xlu0 %v5392, 64
  %v7768 = vpop.permute.xlu0 %7767
  %7769 = vrot.lane.b32.xlu0 %v5402, 64
  %v7770 = vpop.permute.xlu0 %7769
  %7771 = vrot.lane.b32.xlu0 %v5412, 64
  %v7772 = vpop.permute.xlu0 %7771
  %7773 = vrot.lane.b32.xlu0 %v5422, 64
  %v7774 = vpop.permute.xlu0 %7773
  %7775 = vrot.lane.b32.xlu0 %v5432, 64
  %v7776 = vpop.permute.xlu0 %7775
  %7777 = vrot.lane.b32.xlu0 %v5442, 64
  %v7778 = vpop.permute.xlu0 %7777
  %7779 = vrot.lane.b32.xlu0 %v5452, 64
  %v7780 = vpop.permute.xlu0 %7779
  %7781 = vrot.lane.b32.xlu0 %v5462, 64
  %v7782 = vpop.permute.xlu0 %7781
  %7783 = vrot.lane.b32.xlu0 %v5472, 64
  %v7784 = vpop.permute.xlu0 %7783
  %7785 = vrot.lane.b32.xlu0 %v5482, 64
  %v7786 = vpop.permute.xlu0 %7785
  %7787 = vrot.lane.b32.xlu0 %v5492, 64
  %v7788 = vpop.permute.xlu0 %7787
  %7789 = vrot.lane.b32.xlu0 %v5502, 64
  %v7790 = vpop.permute.xlu0 %7789
  %7791 = vrot.lane.b32.xlu0 %v5512, 64
  %v7792 = vpop.permute.xlu0 %7791
  %7793 = vrot.lane.b32.xlu0 %v5522, 64
  %v7794 = vpop.permute.xlu0 %7793
  %7795 = vrot.lane.b32.xlu0 %v5532, 64
  %v7796 = vpop.permute.xlu0 %7795
  %7797 = vrot.lane.b32.xlu0 %v5542, 64
  %v7798 = vpop.permute.xlu0 %7797
  %7799 = vrot.lane.b32.xlu0 %v5552, 64
  %v7800 = vpop.permute.xlu0 %7799
  %7801 = vrot.lane.b32.xlu0 %v5562, 64
  %v7802 = vpop.permute.xlu0 %7801
  %7803 = vrot.lane.b32.xlu0 %v5572, 64
  %v7804 = vpop.permute.xlu0 %7803
  %7805 = vrot.lane.b32.xlu0 %v5582, 64
  %v7806 = vpop.permute.xlu0 %7805
  %7807 = vrot.lane.b32.xlu0 %v5592, 64
  %v7808 = vpop.permute.xlu0 %7807
  %7809 = vrot.lane.b32.xlu0 %v5602, 64
  %v7810 = vpop.permute.xlu0 %7809
  %7811 = vrot.lane.b32.xlu0 %v5612, 64
  %v7812 = vpop.permute.xlu0 %7811
  %7813 = vrot.lane.b32.xlu0 %v5622, 64
  %v7814 = vpop.permute.xlu0 %7813
  %7815 = vrot.lane.b32.xlu0 %v5632, 64
  %v7816 = vpop.permute.xlu0 %7815
  %7817 = vrot.lane.b32.xlu0 %v5642, 64
  %v7818 = vpop.permute.xlu0 %7817
  %7819 = vrot.lane.b32.xlu0 %v5652, 64
  %v7820 = vpop.permute.xlu0 %7819
  %7821 = vrot.lane.b32.xlu0 %v5662, 64
  %v7822 = vpop.permute.xlu0 %7821
  %7823 = vrot.lane.b32.xlu0 %v5672, 64
  %v7824 = vpop.permute.xlu0 %7823
  %7825 = vrot.lane.b32.xlu0 %v5682, 64
  %v7826 = vpop.permute.xlu0 %7825
  %7827 = vrot.lane.b32.xlu0 %v5692, 64
  %v7828 = vpop.permute.xlu0 %7827
  %7829 = vrot.lane.b32.xlu0 %v5702, 64
  %v7830 = vpop.permute.xlu0 %7829
  %7831 = vrot.lane.b32.xlu0 %v5712, 64
  %v7832 = vpop.permute.xlu0 %7831
  %7833 = vrot.lane.b32.xlu0 %v5722, 64
  %v7834 = vpop.permute.xlu0 %7833
  %7835 = vrot.lane.b32.xlu0 %v5732, 64
  %v7836 = vpop.permute.xlu0 %7835
  %7837 = vrot.lane.b32.xlu0 %v5742, 64
  %v7838 = vpop.permute.xlu0 %7837
  %7839 = vrot.lane.b32.xlu0 %v5752, 64
  %v7840 = vpop.permute.xlu0 %7839
  %7841 = vrot.lane.b32.xlu0 %v5762, 64
  %v7842 = vpop.permute.xlu0 %7841
  %7843 = vrot.lane.b32.xlu0 %v5772, 64
  %v7844 = vpop.permute.xlu0 %7843
  %7845 = vrot.lane.b32.xlu0 %v5782, 64
  %v7846 = vpop.permute.xlu0 %7845
  %7847 = vrot.lane.b32.xlu0 %v5792, 64
  %v7848 = vpop.permute.xlu0 %7847
  %7849 = vrot.lane.b32.xlu0 %v5802, 64
  %v7850 = vpop.permute.xlu0 %7849
  %7851 = vrot.lane.b32.xlu0 %v5807, 64
  %v7852 = vpop.permute.xlu0 %7851
  %7853 = vrot.lane.b32.xlu0 %v5821, 64
  %v7854 = vpop.permute.xlu0 %7853
  %7855 = vrot.lane.b32.xlu0 %v5831, 64
  %v7856 = vpop.permute.xlu0 %7855
  %7857 = vrot.lane.b32.xlu0 %v5841, 64
  %v7858 = vpop.permute.xlu0 %7857
  %7859 = vrot.lane.b32.xlu0 %v5851, 64
  %v7860 = vpop.permute.xlu0 %7859
  %7861 = vrot.lane.b32.xlu0 %v5861, 64
  %v7862 = vpop.permute.xlu0 %7861
  %7863 = vrot.lane.b32.xlu0 %v5871, 64
  %v7864 = vpop.permute.xlu0 %7863
  %7865 = vrot.lane.b32.xlu0 %v5881, 64
  %v7866 = vpop.permute.xlu0 %7865
  %7867 = vrot.lane.b32.xlu0 %v5891, 64
  %v7868 = vpop.permute.xlu0 %7867
  %7869 = vrot.lane.b32.xlu0 %v5901, 64
  %v7870 = vpop.permute.xlu0 %7869
  %7871 = vrot.lane.b32.xlu0 %v5911, 64
  %v7872 = vpop.permute.xlu0 %7871
  %7873 = vrot.lane.b32.xlu0 %v5921, 64
  %v7874 = vpop.permute.xlu0 %7873
  %7875 = vrot.lane.b32.xlu0 %v5931, 64
  %v7876 = vpop.permute.xlu0 %7875
  %7877 = vrot.lane.b32.xlu0 %v5941, 64
  %v7878 = vpop.permute.xlu0 %7877
  %7879 = vrot.lane.b32.xlu0 %v5951, 64
  %v7880 = vpop.permute.xlu0 %7879
  %7881 = vrot.lane.b32.xlu0 %v5961, 64
  %v7882 = vpop.permute.xlu0 %7881
  %7883 = vrot.lane.b32.xlu0 %v5971, 64
  %v7884 = vpop.permute.xlu0 %7883
  %7885 = vrot.lane.b32.xlu0 %v5981, 64
  %v7886 = vpop.permute.xlu0 %7885
  %7887 = vrot.lane.b32.xlu0 %v5991, 64
  %v7888 = vpop.permute.xlu0 %7887
  %7889 = vrot.lane.b32.xlu0 %v6001, 64
  %v7890 = vpop.permute.xlu0 %7889
  %7891 = vrot.lane.b32.xlu0 %v6011, 64
  %v7892 = vpop.permute.xlu0 %7891
  %7893 = vrot.lane.b32.xlu0 %v6021, 64
  %v7894 = vpop.permute.xlu0 %7893
  %7895 = vrot.lane.b32.xlu0 %v6031, 64
  %v7896 = vpop.permute.xlu0 %7895
  %7897 = vrot.lane.b32.xlu0 %v6041, 64
  %v7898 = vpop.permute.xlu0 %7897
  %7899 = vrot.lane.b32.xlu0 %v6051, 64
  %v7900 = vpop.permute.xlu0 %7899
  %7901 = vrot.lane.b32.xlu0 %v6061, 64
  %v7902 = vpop.permute.xlu0 %7901
  %7903 = vrot.lane.b32.xlu0 %v6071, 64
  %v7904 = vpop.permute.xlu0 %7903
  %7905 = vrot.lane.b32.xlu0 %v6081, 64
  %v7906 = vpop.permute.xlu0 %7905
  %7907 = vrot.lane.b32.xlu0 %v6091, 64
  %v7908 = vpop.permute.xlu0 %7907
  %7909 = vrot.lane.b32.xlu0 %v6101, 64
  %v7910 = vpop.permute.xlu0 %7909
  %7911 = vrot.lane.b32.xlu0 %v6111, 64
  %v7912 = vpop.permute.xlu0 %7911
  %7913 = vrot.lane.b32.xlu0 %v6121, 64
  %v7914 = vpop.permute.xlu0 %7913
  %7915 = vrot.lane.b32.xlu0 %v6131, 64
  %v7916 = vpop.permute.xlu0 %7915
  %7917 = vrot.lane.b32.xlu0 %v6141, 64
  %v7918 = vpop.permute.xlu0 %7917
  %7919 = vrot.lane.b32.xlu0 %v6151, 64
  %v7920 = vpop.permute.xlu0 %7919
  %7921 = vrot.lane.b32.xlu0 %v6161, 64
  %v7922 = vpop.permute.xlu0 %7921
  %7923 = vrot.lane.b32.xlu0 %v6171, 64
  %v7924 = vpop.permute.xlu0 %7923
  %7925 = vrot.lane.b32.xlu0 %v6181, 64
  %v7926 = vpop.permute.xlu0 %7925
  %7927 = vrot.lane.b32.xlu0 %v6191, 64
  %v7928 = vpop.permute.xlu0 %7927
  %7929 = vrot.lane.b32.xlu0 %v6201, 64
  %v7930 = vpop.permute.xlu0 %7929
  %7931 = vrot.lane.b32.xlu0 %v6211, 64
  %v7932 = vpop.permute.xlu0 %7931
  %7933 = vrot.lane.b32.xlu0 %v6221, 64
  %v7934 = vpop.permute.xlu0 %7933
  %7935 = vrot.lane.b32.xlu0 %v6231, 64
  %v7936 = vpop.permute.xlu0 %7935
  %7937 = vrot.lane.b32.xlu0 %v6241, 64
  %v7938 = vpop.permute.xlu0 %7937
  %7939 = vrot.lane.b32.xlu0 %v6251, 64
  %v7940 = vpop.permute.xlu0 %7939
  %7941 = vrot.lane.b32.xlu0 %v6261, 64
  %v7942 = vpop.permute.xlu0 %7941
  %7943 = vrot.lane.b32.xlu0 %v6271, 64
  %v7944 = vpop.permute.xlu0 %7943
  %7945 = vrot.lane.b32.xlu0 %v6281, 64
  %v7946 = vpop.permute.xlu0 %7945
  %7947 = vrot.lane.b32.xlu0 %v6291, 64
  %v7948 = vpop.permute.xlu0 %7947
  %7949 = vrot.lane.b32.xlu0 %v6301, 64
  %v7950 = vpop.permute.xlu0 %7949
  %7951 = vrot.lane.b32.xlu0 %v6311, 64
  %v7952 = vpop.permute.xlu0 %7951
  %7953 = vrot.lane.b32.xlu0 %v6321, 64
  %v7954 = vpop.permute.xlu0 %7953
  %7955 = vrot.lane.b32.xlu0 %v6331, 64
  %v7956 = vpop.permute.xlu0 %7955
  %7957 = vrot.lane.b32.xlu0 %v6341, 64
  %v7958 = vpop.permute.xlu0 %7957
  %7959 = vrot.lane.b32.xlu0 %v6351, 64
  %v7960 = vpop.permute.xlu0 %7959
  %7961 = vrot.lane.b32.xlu0 %v6361, 64
  %v7962 = vpop.permute.xlu0 %7961
  %7963 = vrot.lane.b32.xlu0 %v6371, 64
  %v7964 = vpop.permute.xlu0 %7963
  %7965 = vrot.lane.b32.xlu0 %v6381, 64
  %v7966 = vpop.permute.xlu0 %7965
  %7967 = vrot.lane.b32.xlu0 %v6391, 64
  %v7968 = vpop.permute.xlu0 %7967
  %7969 = vrot.lane.b32.xlu0 %v6401, 64
  %v7970 = vpop.permute.xlu0 %7969
  %7971 = vrot.lane.b32.xlu0 %v6411, 64
  %v7972 = vpop.permute.xlu0 %7971
  %7973 = vrot.lane.b32.xlu0 %v6421, 64
  %v7974 = vpop.permute.xlu0 %7973
  %7975 = vrot.lane.b32.xlu0 %v6431, 64
  %v7976 = vpop.permute.xlu0 %7975
  %7977 = vrot.lane.b32.xlu0 %v6441, 64
  %v7978 = vpop.permute.xlu0 %7977
  %7979 = vrot.lane.b32.xlu0 %v6446, 64
  %v7980 = vpop.permute.xlu0 %7979
  %7981 = vrot.lane.b32.xlu0 %v6460, 64
  %v7982 = vpop.permute.xlu0 %7981
  %7983 = vrot.lane.b32.xlu0 %v6470, 64
  %v7984 = vpop.permute.xlu0 %7983
  %7985 = vrot.lane.b32.xlu0 %v6480, 64
  %v7986 = vpop.permute.xlu0 %7985
  %7987 = vrot.lane.b32.xlu0 %v6490, 64
  %v7988 = vpop.permute.xlu0 %7987
  %7989 = vrot.lane.b32.xlu0 %v6500, 64
  %v7990 = vpop.permute.xlu0 %7989
  %7991 = vrot.lane.b32.xlu0 %v6510, 64
  %v7992 = vpop.permute.xlu0 %7991
  %7993 = vrot.lane.b32.xlu0 %v6520, 64
  %v7994 = vpop.permute.xlu0 %7993
  %7995 = vrot.lane.b32.xlu0 %v6530, 64
  %v7996 = vpop.permute.xlu0 %7995
  %7997 = vrot.lane.b32.xlu0 %v6540, 64
  %v7998 = vpop.permute.xlu0 %7997
  %7999 = vrot.lane.b32.xlu0 %v6550, 64
  %v8000 = vpop.permute.xlu0 %7999
  %8001 = vrot.lane.b32.xlu0 %v6560, 64
  %v8002 = vpop.permute.xlu0 %8001
  %8003 = vrot.lane.b32.xlu0 %v6570, 64
  %v8004 = vpop.permute.xlu0 %8003
  %8005 = vrot.lane.b32.xlu0 %v6580, 64
  %v8006 = vpop.permute.xlu0 %8005
  %8007 = vrot.lane.b32.xlu0 %v6590, 64
  %v8008 = vpop.permute.xlu0 %8007
  %8009 = vrot.lane.b32.xlu0 %v6600, 64
  %v8010 = vpop.permute.xlu0 %8009
  %8011 = vrot.lane.b32.xlu0 %v6610, 64
  %v8012 = vpop.permute.xlu0 %8011
  %8013 = vrot.lane.b32.xlu0 %v6620, 64
  %v8014 = vpop.permute.xlu0 %8013
  %8015 = vrot.lane.b32.xlu0 %v6630, 64
  %v8016 = vpop.permute.xlu0 %8015
  %8017 = vrot.lane.b32.xlu0 %v6640, 64
  %v8018 = vpop.permute.xlu0 %8017
  %8019 = vrot.lane.b32.xlu0 %v6650, 64
  %v8020 = vpop.permute.xlu0 %8019
  %8021 = vrot.lane.b32.xlu0 %v6660, 64
  %v8022 = vpop.permute.xlu0 %8021
  %8023 = vrot.lane.b32.xlu0 %v6670, 64
  %v8024 = vpop.permute.xlu0 %8023
  %8025 = vrot.lane.b32.xlu0 %v6680, 64
  %v8026 = vpop.permute.xlu0 %8025
  %8027 = vrot.lane.b32.xlu0 %v6690, 64
  %v8028 = vpop.permute.xlu0 %8027
  %8029 = vrot.lane.b32.xlu0 %v6700, 64
  %v8030 = vpop.permute.xlu0 %8029
  %8031 = vrot.lane.b32.xlu0 %v6710, 64
  %v8032 = vpop.permute.xlu0 %8031
  %8033 = vrot.lane.b32.xlu0 %v6720, 64
  %v8034 = vpop.permute.xlu0 %8033
  %8035 = vrot.lane.b32.xlu0 %v6730, 64
  %v8036 = vpop.permute.xlu0 %8035
  %8037 = vrot.lane.b32.xlu0 %v6740, 64
  %v8038 = vpop.permute.xlu0 %8037
  %8039 = vrot.lane.b32.xlu0 %v6750, 64
  %v8040 = vpop.permute.xlu0 %8039
  %8041 = vrot.lane.b32.xlu0 %v6760, 64
  %v8042 = vpop.permute.xlu0 %8041
  %8043 = vrot.lane.b32.xlu0 %v6770, 64
  %v8044 = vpop.permute.xlu0 %8043
  %8045 = vrot.lane.b32.xlu0 %v6780, 64
  %v8046 = vpop.permute.xlu0 %8045
  %8047 = vrot.lane.b32.xlu0 %v6790, 64
  %v8048 = vpop.permute.xlu0 %8047
  %8049 = vrot.lane.b32.xlu0 %v6800, 64
  %v8050 = vpop.permute.xlu0 %8049
  %8051 = vrot.lane.b32.xlu0 %v6810, 64
  %v8052 = vpop.permute.xlu0 %8051
  %8053 = vrot.lane.b32.xlu0 %v6820, 64
  %v8054 = vpop.permute.xlu0 %8053
  %8055 = vrot.lane.b32.xlu0 %v6830, 64
  %v8056 = vpop.permute.xlu0 %8055
  %8057 = vrot.lane.b32.xlu0 %v6840, 64
  %v8058 = vpop.permute.xlu0 %8057
  %8059 = vrot.lane.b32.xlu0 %v6850, 64
  %v8060 = vpop.permute.xlu0 %8059
  %8061 = vrot.lane.b32.xlu0 %v6860, 64
  %v8062 = vpop.permute.xlu0 %8061
  %8063 = vrot.lane.b32.xlu0 %v6870, 64
  %v8064 = vpop.permute.xlu0 %8063
  %8065 = vrot.lane.b32.xlu0 %v6880, 64
  %v8066 = vpop.permute.xlu0 %8065
  %8067 = vrot.lane.b32.xlu0 %v6890, 64
  %v8068 = vpop.permute.xlu0 %8067
  %8069 = vrot.lane.b32.xlu0 %v6900, 64
  %v8070 = vpop.permute.xlu0 %8069
  %8071 = vrot.lane.b32.xlu0 %v6910, 64
  %v8072 = vpop.permute.xlu0 %8071
  %8073 = vrot.lane.b32.xlu0 %v6920, 64
  %v8074 = vpop.permute.xlu0 %8073
  %8075 = vrot.lane.b32.xlu0 %v6930, 64
  %v8076 = vpop.permute.xlu0 %8075
  %8077 = vrot.lane.b32.xlu0 %v6940, 64
  %v8078 = vpop.permute.xlu0 %8077
  %8079 = vrot.lane.b32.xlu0 %v6950, 64
  %v8080 = vpop.permute.xlu0 %8079
  %8081 = vrot.lane.b32.xlu0 %v6960, 64
  %v8082 = vpop.permute.xlu0 %8081
  %8083 = vrot.lane.b32.xlu0 %v6970, 64
  %v8084 = vpop.permute.xlu0 %8083
  %8085 = vrot.lane.b32.xlu0 %v6980, 64
  %v8086 = vpop.permute.xlu0 %8085
  %8087 = vrot.lane.b32.xlu0 %v6990, 64
  %v8088 = vpop.permute.xlu0 %8087
  %8089 = vrot.lane.b32.xlu0 %v7000, 64
  %v8090 = vpop.permute.xlu0 %8089
  %8091 = vrot.lane.b32.xlu0 %v7010, 64
  %v8092 = vpop.permute.xlu0 %8091
  %8093 = vrot.lane.b32.xlu0 %v7020, 64
  %v8094 = vpop.permute.xlu0 %8093
  %8095 = vrot.lane.b32.xlu0 %v7030, 64
  %v8096 = vpop.permute.xlu0 %8095
  %8097 = vrot.lane.b32.xlu0 %v7040, 64
  %v8098 = vpop.permute.xlu0 %8097
  %8099 = vrot.lane.b32.xlu0 %v7050, 64
  %v8100 = vpop.permute.xlu0 %8099
  %8101 = vrot.lane.b32.xlu0 %v7060, 64
  %v8102 = vpop.permute.xlu0 %8101
  %8103 = vrot.lane.b32.xlu0 %v7070, 64
  %v8104 = vpop.permute.xlu0 %8103
  %8105 = vrot.lane.b32.xlu0 %v7080, 64
  %v8106 = vpop.permute.xlu0 %8105
  %8107 = vrot.lane.b32.xlu0 %v7085, 64
  %v8108 = vpop.permute.xlu0 %8107
  %8109 = vrot.lane.b32.xlu0 %v7099, 64
  %v8110 = vpop.permute.xlu0 %8109
  %8111 = vrot.lane.b32.xlu0 %v7109, 64
  %v8112 = vpop.permute.xlu0 %8111
  %8113 = vrot.lane.b32.xlu0 %v7119, 64
  %v8114 = vpop.permute.xlu0 %8113
  %8115 = vrot.lane.b32.xlu0 %v7129, 64
  %v8116 = vpop.permute.xlu0 %8115
  %8117 = vrot.lane.b32.xlu0 %v7139, 64
  %v8118 = vpop.permute.xlu0 %8117
  %8119 = vrot.lane.b32.xlu0 %v7149, 64
  %v8120 = vpop.permute.xlu0 %8119
  %8121 = vrot.lane.b32.xlu0 %v7159, 64
  %v8122 = vpop.permute.xlu0 %8121
  %8123 = vrot.lane.b32.xlu0 %v7169, 64
  %v8124 = vpop.permute.xlu0 %8123
  %8125 = vrot.lane.b32.xlu0 %v7179, 64
  %v8126 = vpop.permute.xlu0 %8125
  %8127 = vrot.lane.b32.xlu0 %v7189, 64
  %v8128 = vpop.permute.xlu0 %8127
  %8129 = vrot.lane.b32.xlu0 %v7199, 64
  %v8130 = vpop.permute.xlu0 %8129
  %8131 = vrot.lane.b32.xlu0 %v7209, 64
  %v8132 = vpop.permute.xlu0 %8131
  %8133 = vrot.lane.b32.xlu0 %v7219, 64
  %v8134 = vpop.permute.xlu0 %8133
  %8135 = vrot.lane.b32.xlu0 %v7229, 64
  %v8136 = vpop.permute.xlu0 %8135
  %8137 = vrot.lane.b32.xlu0 %v7239, 64
  %v8138 = vpop.permute.xlu0 %8137
  %8139 = vrot.lane.b32.xlu0 %v7249, 64
  %v8140 = vpop.permute.xlu0 %8139
  %8141 = vrot.lane.b32.xlu0 %v7259, 64
  %v8142 = vpop.permute.xlu0 %8141
  %8143 = vrot.lane.b32.xlu0 %v7269, 64
  %v8144 = vpop.permute.xlu0 %8143
  %8145 = vrot.lane.b32.xlu0 %v7279, 64
  %v8146 = vpop.permute.xlu0 %8145
  %8147 = vrot.lane.b32.xlu0 %v7289, 64
  %v8148 = vpop.permute.xlu0 %8147
  %8149 = vrot.lane.b32.xlu0 %v7299, 64
  %v8150 = vpop.permute.xlu0 %8149
  %8151 = vrot.lane.b32.xlu0 %v7309, 64
  %v8152 = vpop.permute.xlu0 %8151
  %8153 = vrot.lane.b32.xlu0 %v7319, 64
  %v8154 = vpop.permute.xlu0 %8153
  %8155 = vrot.lane.b32.xlu0 %v7329, 64
  %v8156 = vpop.permute.xlu0 %8155
  %8157 = vrot.lane.b32.xlu0 %v7339, 64
  %v8158 = vpop.permute.xlu0 %8157
  %8159 = vrot.lane.b32.xlu0 %v7349, 64
  %v8160 = vpop.permute.xlu0 %8159
  %8161 = vrot.lane.b32.xlu0 %v7359, 64
  %v8162 = vpop.permute.xlu0 %8161
  %8163 = vrot.lane.b32.xlu0 %v7369, 64
  %v8164 = vpop.permute.xlu0 %8163
  %8165 = vrot.lane.b32.xlu0 %v7379, 64
  %v8166 = vpop.permute.xlu0 %8165
  %8167 = vrot.lane.b32.xlu0 %v7389, 64
  %v8168 = vpop.permute.xlu0 %8167
  %8169 = vrot.lane.b32.xlu0 %v7399, 64
  %v8170 = vpop.permute.xlu0 %8169
  %8171 = vrot.lane.b32.xlu0 %v7409, 64
  %v8172 = vpop.permute.xlu0 %8171
  %8173 = vrot.lane.b32.xlu0 %v7419, 64
  %v8174 = vpop.permute.xlu0 %8173
  %8175 = vrot.lane.b32.xlu0 %v7429, 64
  %v8176 = vpop.permute.xlu0 %8175
  %8177 = vrot.lane.b32.xlu0 %v7439, 64
  %v8178 = vpop.permute.xlu0 %8177
  %8179 = vrot.lane.b32.xlu0 %v7449, 64
  %v8180 = vpop.permute.xlu0 %8179
  %8181 = vrot.lane.b32.xlu0 %v7459, 64
  %v8182 = vpop.permute.xlu0 %8181
  %8183 = vrot.lane.b32.xlu0 %v7469, 64
  %v8184 = vpop.permute.xlu0 %8183
  %8185 = vrot.lane.b32.xlu0 %v7479, 64
  %v8186 = vpop.permute.xlu0 %8185
  %8187 = vrot.lane.b32.xlu0 %v7489, 64
  %v8188 = vpop.permute.xlu0 %8187
  %8189 = vrot.lane.b32.xlu0 %v7499, 64
  %v8190 = vpop.permute.xlu0 %8189
  %8191 = vrot.lane.b32.xlu0 %v7509, 64
  %v8192 = vpop.permute.xlu0 %8191
  %8193 = vrot.lane.b32.xlu0 %v7519, 64
  %v8194 = vpop.permute.xlu0 %8193
  %8195 = vrot.lane.b32.xlu0 %v7529, 64
  %v8196 = vpop.permute.xlu0 %8195
  %8197 = vrot.lane.b32.xlu0 %v7539, 64
  %v8198 = vpop.permute.xlu0 %8197
  %8199 = vrot.lane.b32.xlu0 %v7549, 64
  %v8200 = vpop.permute.xlu0 %8199
  %8201 = vrot.lane.b32.xlu0 %v7559, 64
  %v8202 = vpop.permute.xlu0 %8201
  %8203 = vrot.lane.b32.xlu0 %v7569, 64
  %v8204 = vpop.permute.xlu0 %8203
  %8205 = vrot.lane.b32.xlu0 %v7579, 64
  %v8206 = vpop.permute.xlu0 %8205
  %8207 = vrot.lane.b32.xlu0 %v7589, 64
  %v8208 = vpop.permute.xlu0 %8207
  %8209 = vrot.lane.b32.xlu0 %v7599, 64
  %v8210 = vpop.permute.xlu0 %8209
  %8211 = vrot.lane.b32.xlu0 %v7609, 64
  %v8212 = vpop.permute.xlu0 %8211
  %8213 = vrot.lane.b32.xlu0 %v7619, 64
  %v8214 = vpop.permute.xlu0 %8213
  %8215 = vrot.lane.b32.xlu0 %v7629, 64
  %v8216 = vpop.permute.xlu0 %8215
  %8217 = vrot.lane.b32.xlu0 %v7639, 64
  %v8218 = vpop.permute.xlu0 %8217
  %8219 = vrot.lane.b32.xlu0 %v7649, 64
  %v8220 = vpop.permute.xlu0 %8219
  %8221 = vrot.lane.b32.xlu0 %v7659, 64
  %v8222 = vpop.permute.xlu0 %8221
  %8223 = vrot.lane.b32.xlu0 %v7669, 64
  %v8224 = vpop.permute.xlu0 %8223
  %8225 = vrot.lane.b32.xlu0 %v7679, 64
  %v8226 = vpop.permute.xlu0 %8225
  %8227 = vrot.lane.b32.xlu0 %v7689, 64
  %v8228 = vpop.permute.xlu0 %8227
  %8229 = vrot.lane.b32.xlu0 %v7699, 64
  %v8230 = vpop.permute.xlu0 %8229
  %8231 = vrot.lane.b32.xlu0 %v7709, 64
  %v8232 = vpop.permute.xlu0 %8231
  %8233 = vrot.lane.b32.xlu0 %v7719, 64
  %v8234 = vpop.permute.xlu0 %8233
  %8235 = vrot.lane.b32.xlu0 %v7724, 64
  %v8236 = vpop.permute.xlu0 %8235
  %vm8493 = vcmask 781824
  %8494 = vst.msk [vmem:[#allocation2] sm:$0xf] %vm8493, %v7726
  %8495 = vst.msk [vmem:[#allocation2 + $0x4] sm:$0xf] %vm8493, %v7728
  %8496 = vst.msk [vmem:[#allocation2 + $0x8] sm:$0xf] %vm8493, %v7730
  %8497 = vst.msk [vmem:[#allocation2 + $0xc] sm:$0xf] %vm8493, %v7732
  %8498 = vst.msk [vmem:[#allocation2 + $0x10] sm:$0xf] %vm8493, %v7734
  %8499 = vst.msk [vmem:[#allocation2 + $0x14] sm:$0xf] %vm8493, %v7736
  %8500 = vst.msk [vmem:[#allocation2 + $0x18] sm:$0xf] %vm8493, %v7738
  %8501 = vst.msk [vmem:[#allocation2 + $0x1c] sm:$0xf] %vm8493, %v7740
  %8502 = vst.msk [vmem:[#allocation2 + $0x20] sm:$0xf] %vm8493, %v7742
  %8503 = vst.msk [vmem:[#allocation2 + $0x24] sm:$0xf] %vm8493, %v7744
  %8504 = vst.msk [vmem:[#allocation2 + $0x28] sm:$0xf] %vm8493, %v7746
  %8505 = vst.msk [vmem:[#allocation2 + $0x2c] sm:$0xf] %vm8493, %v7748
  %8506 = vst.msk [vmem:[#allocation2 + $0x30] sm:$0xf] %vm8493, %v7750
  %8507 = vst.msk [vmem:[#allocation2 + $0x34] sm:$0xf] %vm8493, %v7752
  %8508 = vst.msk [vmem:[#allocation2 + $0x38] sm:$0xf] %vm8493, %v7754
  %8509 = vst.msk [vmem:[#allocation2 + $0x3c] sm:$0xf] %vm8493, %v7756
  %8510 = vst.msk [vmem:[#allocation2 + $0x40] sm:$0xf] %vm8493, %v7758
  %8511 = vst.msk [vmem:[#allocation2 + $0x44] sm:$0xf] %vm8493, %v7760
  %8512 = vst.msk [vmem:[#allocation2 + $0x48] sm:$0xf] %vm8493, %v7762
  %8513 = vst.msk [vmem:[#allocation2 + $0x4c] sm:$0xf] %vm8493, %v7764
  %8514 = vst.msk [vmem:[#allocation2 + $0x50] sm:$0xf] %vm8493, %v7766
  %8515 = vst.msk [vmem:[#allocation2 + $0x54] sm:$0xf] %vm8493, %v7768
  %8516 = vst.msk [vmem:[#allocation2 + $0x58] sm:$0xf] %vm8493, %v7770
  %8517 = vst.msk [vmem:[#allocation2 + $0x5c] sm:$0xf] %vm8493, %v7772
  %8518 = vst.msk [vmem:[#allocation2 + $0x60] sm:$0xf] %vm8493, %v7774
  %8519 = vst.msk [vmem:[#allocation2 + $0x64] sm:$0xf] %vm8493, %v7776
  %8520 = vst.msk [vmem:[#allocation2 + $0x68] sm:$0xf] %vm8493, %v7778
  %8521 = vst.msk [vmem:[#allocation2 + $0x6c] sm:$0xf] %vm8493, %v7780
  %8522 = vst.msk [vmem:[#allocation2 + $0x70] sm:$0xf] %vm8493, %v7782
  %8523 = vst.msk [vmem:[#allocation2 + $0x74] sm:$0xf] %vm8493, %v7784
  %8524 = vst.msk [vmem:[#allocation2 + $0x78] sm:$0xf] %vm8493, %v7786
  %8525 = vst.msk [vmem:[#allocation2 + $0x7c] sm:$0xf] %vm8493, %v7788
  %8526 = vst.msk [vmem:[#allocation2 + $0x80] sm:$0xf] %vm8493, %v7790
  %8527 = vst.msk [vmem:[#allocation2 + $0x84] sm:$0xf] %vm8493, %v7792
  %8528 = vst.msk [vmem:[#allocation2 + $0x88] sm:$0xf] %vm8493, %v7794
  %8529 = vst.msk [vmem:[#allocation2 + $0x8c] sm:$0xf] %vm8493, %v7796
  %8530 = vst.msk [vmem:[#allocation2 + $0x90] sm:$0xf] %vm8493, %v7798
  %8531 = vst.msk [vmem:[#allocation2 + $0x94] sm:$0xf] %vm8493, %v7800
  %8532 = vst.msk [vmem:[#allocation2 + $0x98] sm:$0xf] %vm8493, %v7802
  %8533 = vst.msk [vmem:[#allocation2 + $0x9c] sm:$0xf] %vm8493, %v7804
  %8534 = vst.msk [vmem:[#allocation2 + $0xa0] sm:$0xf] %vm8493, %v7806
  %8535 = vst.msk [vmem:[#allocation2 + $0xa4] sm:$0xf] %vm8493, %v7808
  %8536 = vst.msk [vmem:[#allocation2 + $0xa8] sm:$0xf] %vm8493, %v7810
  %8537 = vst.msk [vmem:[#allocation2 + $0xac] sm:$0xf] %vm8493, %v7812
  %8538 = vst.msk [vmem:[#allocation2 + $0xb0] sm:$0xf] %vm8493, %v7814
  %8539 = vst.msk [vmem:[#allocation2 + $0xb4] sm:$0xf] %vm8493, %v7816
  %8540 = vst.msk [vmem:[#allocation2 + $0xb8] sm:$0xf] %vm8493, %v7818
  %8541 = vst.msk [vmem:[#allocation2 + $0xbc] sm:$0xf] %vm8493, %v7820
  %8542 = vst.msk [vmem:[#allocation2 + $0xc0] sm:$0xf] %vm8493, %v7822
  %8543 = vst.msk [vmem:[#allocation2 + $0xc4] sm:$0xf] %vm8493, %v7824
  %8544 = vst.msk [vmem:[#allocation2 + $0xc8] sm:$0xf] %vm8493, %v7826
  %8545 = vst.msk [vmem:[#allocation2 + $0xcc] sm:$0xf] %vm8493, %v7828
  %8546 = vst.msk [vmem:[#allocation2 + $0xd0] sm:$0xf] %vm8493, %v7830
  %8547 = vst.msk [vmem:[#allocation2 + $0xd4] sm:$0xf] %vm8493, %v7832
  %8548 = vst.msk [vmem:[#allocation2 + $0xd8] sm:$0xf] %vm8493, %v7834
  %8549 = vst.msk [vmem:[#allocation2 + $0xdc] sm:$0xf] %vm8493, %v7836
  %8550 = vst.msk [vmem:[#allocation2 + $0xe0] sm:$0xf] %vm8493, %v7838
  %8551 = vst.msk [vmem:[#allocation2 + $0xe4] sm:$0xf] %vm8493, %v7840
  %8552 = vst.msk [vmem:[#allocation2 + $0xe8] sm:$0xf] %vm8493, %v7842
  %8553 = vst.msk [vmem:[#allocation2 + $0xec] sm:$0xf] %vm8493, %v7844
  %8554 = vst.msk [vmem:[#allocation2 + $0xf0] sm:$0xf] %vm8493, %v7846
  %8555 = vst.msk [vmem:[#allocation2 + $0xf4] sm:$0xf] %vm8493, %v7848
  %8556 = vst.msk [vmem:[#allocation2 + $0xf8] sm:$0xf] %vm8493, %v7850
  %vm8557 = vcmask 781824
  %vm8558 = vmand %vm8557, %vm5166
  %v8559 = vld [vmem:[#allocation2 + $0xfc] sm:$0xf]
  %v8560 = vsel %vm8558, %v7852, %v8559
  %8561 = vst [vmem:[#allocation2 + $0xfc] sm:$0xf] %v8560
  %8562 = vst.msk [vmem:[#allocation2 + $0x100] sm:$0xf] %vm8493, %v7854
  %8563 = vst.msk [vmem:[#allocation2 + $0x104] sm:$0xf] %vm8493, %v7856
  %8564 = vst.msk [vmem:[#allocation2 + $0x108] sm:$0xf] %vm8493, %v7858
  %8565 = vst.msk [vmem:[#allocation2 + $0x10c] sm:$0xf] %vm8493, %v7860
  %8566 = vst.msk [vmem:[#allocation2 + $0x110] sm:$0xf] %vm8493, %v7862
  %8567 = vst.msk [vmem:[#allocation2 + $0x114] sm:$0xf] %vm8493, %v7864
  %8568 = vst.msk [vmem:[#allocation2 + $0x118] sm:$0xf] %vm8493, %v7866
  %8569 = vst.msk [vmem:[#allocation2 + $0x11c] sm:$0xf] %vm8493, %v7868
  %8570 = vst.msk [vmem:[#allocation2 + $0x120] sm:$0xf] %vm8493, %v7870
  %8571 = vst.msk [vmem:[#allocation2 + $0x124] sm:$0xf] %vm8493, %v7872
  %8572 = vst.msk [vmem:[#allocation2 + $0x128] sm:$0xf] %vm8493, %v7874
  %8573 = vst.msk [vmem:[#allocation2 + $0x12c] sm:$0xf] %vm8493, %v7876
  %8574 = vst.msk [vmem:[#allocation2 + $0x130] sm:$0xf] %vm8493, %v7878
  %8575 = vst.msk [vmem:[#allocation2 + $0x134] sm:$0xf] %vm8493, %v7880
  %8576 = vst.msk [vmem:[#allocation2 + $0x138] sm:$0xf] %vm8493, %v7882
  %8577 = vst.msk [vmem:[#allocation2 + $0x13c] sm:$0xf] %vm8493, %v7884
  %8578 = vst.msk [vmem:[#allocation2 + $0x140] sm:$0xf] %vm8493, %v7886
  %8579 = vst.msk [vmem:[#allocation2 + $0x144] sm:$0xf] %vm8493, %v7888
  %8580 = vst.msk [vmem:[#allocation2 + $0x148] sm:$0xf] %vm8493, %v7890
  %8581 = vst.msk [vmem:[#allocation2 + $0x14c] sm:$0xf] %vm8493, %v7892
  %8582 = vst.msk [vmem:[#allocation2 + $0x150] sm:$0xf] %vm8493, %v7894
  %8583 = vst.msk [vmem:[#allocation2 + $0x154] sm:$0xf] %vm8493, %v7896
  %8584 = vst.msk [vmem:[#allocation2 + $0x158] sm:$0xf] %vm8493, %v7898
  %8585 = vst.msk [vmem:[#allocation2 + $0x15c] sm:$0xf] %vm8493, %v7900
  %8586 = vst.msk [vmem:[#allocation2 + $0x160] sm:$0xf] %vm8493, %v7902
  %8587 = vst.msk [vmem:[#allocation2 + $0x164] sm:$0xf] %vm8493, %v7904
  %8588 = vst.msk [vmem:[#allocation2 + $0x168] sm:$0xf] %vm8493, %v7906
  %8589 = vst.msk [vmem:[#allocation2 + $0x16c] sm:$0xf] %vm8493, %v7908
  %8590 = vst.msk [vmem:[#allocation2 + $0x170] sm:$0xf] %vm8493, %v7910
  %8591 = vst.msk [vmem:[#allocation2 + $0x174] sm:$0xf] %vm8493, %v7912
  %8592 = vst.msk [vmem:[#allocation2 + $0x178] sm:$0xf] %vm8493, %v7914
  %8593 = vst.msk [vmem:[#allocation2 + $0x17c] sm:$0xf] %vm8493, %v7916
  %8594 = vst.msk [vmem:[#allocation2 + $0x180] sm:$0xf] %vm8493, %v7918
  %8595 = vst.msk [vmem:[#allocation2 + $0x184] sm:$0xf] %vm8493, %v7920
  %8596 = vst.msk [vmem:[#allocation2 + $0x188] sm:$0xf] %vm8493, %v7922
  %8597 = vst.msk [vmem:[#allocation2 + $0x18c] sm:$0xf] %vm8493, %v7924
  %8598 = vst.msk [vmem:[#allocation2 + $0x190] sm:$0xf] %vm8493, %v7926
  %8599 = vst.msk [vmem:[#allocation2 + $0x194] sm:$0xf] %vm8493, %v7928
  %8600 = vst.msk [vmem:[#allocation2 + $0x198] sm:$0xf] %vm8493, %v7930
  %8601 = vst.msk [vmem:[#allocation2 + $0x19c] sm:$0xf] %vm8493, %v7932
  %8602 = vst.msk [vmem:[#allocation2 + $0x1a0] sm:$0xf] %vm8493, %v7934
  %8603 = vst.msk [vmem:[#allocation2 + $0x1a4] sm:$0xf] %vm8493, %v7936
  %8604 = vst.msk [vmem:[#allocation2 + $0x1a8] sm:$0xf] %vm8493, %v7938
  %8605 = vst.msk [vmem:[#allocation2 + $0x1ac] sm:$0xf] %vm8493, %v7940
  %8606 = vst.msk [vmem:[#allocation2 + $0x1b0] sm:$0xf] %vm8493, %v7942
  %8607 = vst.msk [vmem:[#allocation2 + $0x1b4] sm:$0xf] %vm8493, %v7944
  %8608 = vst.msk [vmem:[#allocation2 + $0x1b8] sm:$0xf] %vm8493, %v7946
  %8609 = vst.msk [vmem:[#allocation2 + $0x1bc] sm:$0xf] %vm8493, %v7948
  %8610 = vst.msk [vmem:[#allocation2 + $0x1c0] sm:$0xf] %vm8493, %v7950
  %8611 = vst.msk [vmem:[#allocation2 + $0x1c4] sm:$0xf] %vm8493, %v7952
  %8612 = vst.msk [vmem:[#allocation2 + $0x1c8] sm:$0xf] %vm8493, %v7954
  %8613 = vst.msk [vmem:[#allocation2 + $0x1cc] sm:$0xf] %vm8493, %v7956
  %8614 = vst.msk [vmem:[#allocation2 + $0x1d0] sm:$0xf] %vm8493, %v7958
  %8615 = vst.msk [vmem:[#allocation2 + $0x1d4] sm:$0xf] %vm8493, %v7960
  %8616 = vst.msk [vmem:[#allocation2 + $0x1d8] sm:$0xf] %vm8493, %v7962
  %8617 = vst.msk [vmem:[#allocation2 + $0x1dc] sm:$0xf] %vm8493, %v7964
  %8618 = vst.msk [vmem:[#allocation2 + $0x1e0] sm:$0xf] %vm8493, %v7966
  %8619 = vst.msk [vmem:[#allocation2 + $0x1e4] sm:$0xf] %vm8493, %v7968
  %8620 = vst.msk [vmem:[#allocation2 + $0x1e8] sm:$0xf] %vm8493, %v7970
  %8621 = vst.msk [vmem:[#allocation2 + $0x1ec] sm:$0xf] %vm8493, %v7972
  %8622 = vst.msk [vmem:[#allocation2 + $0x1f0] sm:$0xf] %vm8493, %v7974
  %8623 = vst.msk [vmem:[#allocation2 + $0x1f4] sm:$0xf] %vm8493, %v7976
  %8624 = vst.msk [vmem:[#allocation2 + $0x1f8] sm:$0xf] %vm8493, %v7978
  %v8625 = vld [vmem:[#allocation2 + $0x1fc] sm:$0xf]
  %v8626 = vsel %vm8558, %v7980, %v8625
  %8627 = vst [vmem:[#allocation2 + $0x1fc] sm:$0xf] %v8626
  %8628 = vst.msk [vmem:[#allocation2 + $0x200] sm:$0xf] %vm8493, %v7982
  %8629 = vst.msk [vmem:[#allocation2 + $0x204] sm:$0xf] %vm8493, %v7984
  %8630 = vst.msk [vmem:[#allocation2 + $0x208] sm:$0xf] %vm8493, %v7986
  %8631 = vst.msk [vmem:[#allocation2 + $0x20c] sm:$0xf] %vm8493, %v7988
  %8632 = vst.msk [vmem:[#allocation2 + $0x210] sm:$0xf] %vm8493, %v7990
  %8633 = vst.msk [vmem:[#allocation2 + $0x214] sm:$0xf] %vm8493, %v7992
  %8634 = vst.msk [vmem:[#allocation2 + $0x218] sm:$0xf] %vm8493, %v7994
  %8635 = vst.msk [vmem:[#allocation2 + $0x21c] sm:$0xf] %vm8493, %v7996
  %8636 = vst.msk [vmem:[#allocation2 + $0x220] sm:$0xf] %vm8493, %v7998
  %8637 = vst.msk [vmem:[#allocation2 + $0x224] sm:$0xf] %vm8493, %v8000
  %8638 = vst.msk [vmem:[#allocation2 + $0x228] sm:$0xf] %vm8493, %v8002
  %8639 = vst.msk [vmem:[#allocation2 + $0x22c] sm:$0xf] %vm8493, %v8004
  %8640 = vst.msk [vmem:[#allocation2 + $0x230] sm:$0xf] %vm8493, %v8006
  %8641 = vst.msk [vmem:[#allocation2 + $0x234] sm:$0xf] %vm8493, %v8008
  %8642 = vst.msk [vmem:[#allocation2 + $0x238] sm:$0xf] %vm8493, %v8010
  %8643 = vst.msk [vmem:[#allocation2 + $0x23c] sm:$0xf] %vm8493, %v8012
  %8644 = vst.msk [vmem:[#allocation2 + $0x240] sm:$0xf] %vm8493, %v8014
  %8645 = vst.msk [vmem:[#allocation2 + $0x244] sm:$0xf] %vm8493, %v8016
  %8646 = vst.msk [vmem:[#allocation2 + $0x248] sm:$0xf] %vm8493, %v8018
  %8647 = vst.msk [vmem:[#allocation2 + $0x24c] sm:$0xf] %vm8493, %v8020
  %8648 = vst.msk [vmem:[#allocation2 + $0x250] sm:$0xf] %vm8493, %v8022
  %8649 = vst.msk [vmem:[#allocation2 + $0x254] sm:$0xf] %vm8493, %v8024
  %8650 = vst.msk [vmem:[#allocation2 + $0x258] sm:$0xf] %vm8493, %v8026
  %8651 = vst.msk [vmem:[#allocation2 + $0x25c] sm:$0xf] %vm8493, %v8028
  %8652 = vst.msk [vmem:[#allocation2 + $0x260] sm:$0xf] %vm8493, %v8030
  %8653 = vst.msk [vmem:[#allocation2 + $0x264] sm:$0xf] %vm8493, %v8032
  %8654 = vst.msk [vmem:[#allocation2 + $0x268] sm:$0xf] %vm8493, %v8034
  %8655 = vst.msk [vmem:[#allocation2 + $0x26c] sm:$0xf] %vm8493, %v8036
  %8656 = vst.msk [vmem:[#allocation2 + $0x270] sm:$0xf] %vm8493, %v8038
  %8657 = vst.msk [vmem:[#allocation2 + $0x274] sm:$0xf] %vm8493, %v8040
  %8658 = vst.msk [vmem:[#allocation2 + $0x278] sm:$0xf] %vm8493, %v8042
  %8659 = vst.msk [vmem:[#allocation2 + $0x27c] sm:$0xf] %vm8493, %v8044
  %8660 = vst.msk [vmem:[#allocation2 + $0x280] sm:$0xf] %vm8493, %v8046
  %8661 = vst.msk [vmem:[#allocation2 + $0x284] sm:$0xf] %vm8493, %v8048
  %8662 = vst.msk [vmem:[#allocation2 + $0x288] sm:$0xf] %vm8493, %v8050
  %8663 = vst.msk [vmem:[#allocation2 + $0x28c] sm:$0xf] %vm8493, %v8052
  %8664 = vst.msk [vmem:[#allocation2 + $0x290] sm:$0xf] %vm8493, %v8054
  %8665 = vst.msk [vmem:[#allocation2 + $0x294] sm:$0xf] %vm8493, %v8056
  %8666 = vst.msk [vmem:[#allocation2 + $0x298] sm:$0xf] %vm8493, %v8058
  %8667 = vst.msk [vmem:[#allocation2 + $0x29c] sm:$0xf] %vm8493, %v8060
  %8668 = vst.msk [vmem:[#allocation2 + $0x2a0] sm:$0xf] %vm8493, %v8062
  %8669 = vst.msk [vmem:[#allocation2 + $0x2a4] sm:$0xf] %vm8493, %v8064
  %8670 = vst.msk [vmem:[#allocation2 + $0x2a8] sm:$0xf] %vm8493, %v8066
  %8671 = vst.msk [vmem:[#allocation2 + $0x2ac] sm:$0xf] %vm8493, %v8068
  %8672 = vst.msk [vmem:[#allocation2 + $0x2b0] sm:$0xf] %vm8493, %v8070
  %8673 = vst.msk [vmem:[#allocation2 + $0x2b4] sm:$0xf] %vm8493, %v8072
  %8674 = vst.msk [vmem:[#allocation2 + $0x2b8] sm:$0xf] %vm8493, %v8074
  %8675 = vst.msk [vmem:[#allocation2 + $0x2bc] sm:$0xf] %vm8493, %v8076
  %8676 = vst.msk [vmem:[#allocation2 + $0x2c0] sm:$0xf] %vm8493, %v8078
  %8677 = vst.msk [vmem:[#allocation2 + $0x2c4] sm:$0xf] %vm8493, %v8080
  %8678 = vst.msk [vmem:[#allocation2 + $0x2c8] sm:$0xf] %vm8493, %v8082
  %8679 = vst.msk [vmem:[#allocation2 + $0x2cc] sm:$0xf] %vm8493, %v8084
  %8680 = vst.msk [vmem:[#allocation2 + $0x2d0] sm:$0xf] %vm8493, %v8086
  %8681 = vst.msk [vmem:[#allocation2 + $0x2d4] sm:$0xf] %vm8493, %v8088
  %8682 = vst.msk [vmem:[#allocation2 + $0x2d8] sm:$0xf] %vm8493, %v8090
  %8683 = vst.msk [vmem:[#allocation2 + $0x2dc] sm:$0xf] %vm8493, %v8092
  %8684 = vst.msk [vmem:[#allocation2 + $0x2e0] sm:$0xf] %vm8493, %v8094
  %8685 = vst.msk [vmem:[#allocation2 + $0x2e4] sm:$0xf] %vm8493, %v8096
  %8686 = vst.msk [vmem:[#allocation2 + $0x2e8] sm:$0xf] %vm8493, %v8098
  %8687 = vst.msk [vmem:[#allocation2 + $0x2ec] sm:$0xf] %vm8493, %v8100
  %8688 = vst.msk [vmem:[#allocation2 + $0x2f0] sm:$0xf] %vm8493, %v8102
  %8689 = vst.msk [vmem:[#allocation2 + $0x2f4] sm:$0xf] %vm8493, %v8104
  %8690 = vst.msk [vmem:[#allocation2 + $0x2f8] sm:$0xf] %vm8493, %v8106
  %v8691 = vld [vmem:[#allocation2 + $0x2fc] sm:$0xf]
  %v8692 = vsel %vm8558, %v8108, %v8691
  %8693 = vst [vmem:[#allocation2 + $0x2fc] sm:$0xf] %v8692
  %8694 = vst.msk [vmem:[#allocation2 + $0x300] sm:$0xf] %vm8493, %v8110
  %8695 = vst.msk [vmem:[#allocation2 + $0x304] sm:$0xf] %vm8493, %v8112
  %8696 = vst.msk [vmem:[#allocation2 + $0x308] sm:$0xf] %vm8493, %v8114
  %8697 = vst.msk [vmem:[#allocation2 + $0x30c] sm:$0xf] %vm8493, %v8116
  %8698 = vst.msk [vmem:[#allocation2 + $0x310] sm:$0xf] %vm8493, %v8118
  %8699 = vst.msk [vmem:[#allocation2 + $0x314] sm:$0xf] %vm8493, %v8120
  %8700 = vst.msk [vmem:[#allocation2 + $0x318] sm:$0xf] %vm8493, %v8122
  %8701 = vst.msk [vmem:[#allocation2 + $0x31c] sm:$0xf] %vm8493, %v8124
  %8702 = vst.msk [vmem:[#allocation2 + $0x320] sm:$0xf] %vm8493, %v8126
  %8703 = vst.msk [vmem:[#allocation2 + $0x324] sm:$0xf] %vm8493, %v8128
  %8704 = vst.msk [vmem:[#allocation2 + $0x328] sm:$0xf] %vm8493, %v8130
  %8705 = vst.msk [vmem:[#allocation2 + $0x32c] sm:$0xf] %vm8493, %v8132
  %8706 = vst.msk [vmem:[#allocation2 + $0x330] sm:$0xf] %vm8493, %v8134
  %8707 = vst.msk [vmem:[#allocation2 + $0x334] sm:$0xf] %vm8493, %v8136
  %8708 = vst.msk [vmem:[#allocation2 + $0x338] sm:$0xf] %vm8493, %v8138
  %8709 = vst.msk [vmem:[#allocation2 + $0x33c] sm:$0xf] %vm8493, %v8140
  %8710 = vst.msk [vmem:[#allocation2 + $0x340] sm:$0xf] %vm8493, %v8142
  %8711 = vst.msk [vmem:[#allocation2 + $0x344] sm:$0xf] %vm8493, %v8144
  %8712 = vst.msk [vmem:[#allocation2 + $0x348] sm:$0xf] %vm8493, %v8146
  %8713 = vst.msk [vmem:[#allocation2 + $0x34c] sm:$0xf] %vm8493, %v8148
  %8714 = vst.msk [vmem:[#allocation2 + $0x350] sm:$0xf] %vm8493, %v8150
  %8715 = vst.msk [vmem:[#allocation2 + $0x354] sm:$0xf] %vm8493, %v8152
  %8716 = vst.msk [vmem:[#allocation2 + $0x358] sm:$0xf] %vm8493, %v8154
  %8717 = vst.msk [vmem:[#allocation2 + $0x35c] sm:$0xf] %vm8493, %v8156
  %8718 = vst.msk [vmem:[#allocation2 + $0x360] sm:$0xf] %vm8493, %v8158
  %8719 = vst.msk [vmem:[#allocation2 + $0x364] sm:$0xf] %vm8493, %v8160
  %8720 = vst.msk [vmem:[#allocation2 + $0x368] sm:$0xf] %vm8493, %v8162
  %8721 = vst.msk [vmem:[#allocation2 + $0x36c] sm:$0xf] %vm8493, %v8164
  %8722 = vst.msk [vmem:[#allocation2 + $0x370] sm:$0xf] %vm8493, %v8166
  %8723 = vst.msk [vmem:[#allocation2 + $0x374] sm:$0xf] %vm8493, %v8168
  %8724 = vst.msk [vmem:[#allocation2 + $0x378] sm:$0xf] %vm8493, %v8170
  %8725 = vst.msk [vmem:[#allocation2 + $0x37c] sm:$0xf] %vm8493, %v8172
  %8726 = vst.msk [vmem:[#allocation2 + $0x380] sm:$0xf] %vm8493, %v8174
  %8727 = vst.msk [vmem:[#allocation2 + $0x384] sm:$0xf] %vm8493, %v8176
  %8728 = vst.msk [vmem:[#allocation2 + $0x388] sm:$0xf] %vm8493, %v8178
  %8729 = vst.msk [vmem:[#allocation2 + $0x38c] sm:$0xf] %vm8493, %v8180
  %8730 = vst.msk [vmem:[#allocation2 + $0x390] sm:$0xf] %vm8493, %v8182
  %8731 = vst.msk [vmem:[#allocation2 + $0x394] sm:$0xf] %vm8493, %v8184
  %8732 = vst.msk [vmem:[#allocation2 + $0x398] sm:$0xf] %vm8493, %v8186
  %8733 = vst.msk [vmem:[#allocation2 + $0x39c] sm:$0xf] %vm8493, %v8188
  %8734 = vst.msk [vmem:[#allocation2 + $0x3a0] sm:$0xf] %vm8493, %v8190
  %8735 = vst.msk [vmem:[#allocation2 + $0x3a4] sm:$0xf] %vm8493, %v8192
  %8736 = vst.msk [vmem:[#allocation2 + $0x3a8] sm:$0xf] %vm8493, %v8194
  %8737 = vst.msk [vmem:[#allocation2 + $0x3ac] sm:$0xf] %vm8493, %v8196
  %8738 = vst.msk [vmem:[#allocation2 + $0x3b0] sm:$0xf] %vm8493, %v8198
  %8739 = vst.msk [vmem:[#allocation2 + $0x3b4] sm:$0xf] %vm8493, %v8200
  %8740 = vst.msk [vmem:[#allocation2 + $0x3b8] sm:$0xf] %vm8493, %v8202
  %8741 = vst.msk [vmem:[#allocation2 + $0x3bc] sm:$0xf] %vm8493, %v8204
  %8742 = vst.msk [vmem:[#allocation2 + $0x3c0] sm:$0xf] %vm8493, %v8206
  %8743 = vst.msk [vmem:[#allocation2 + $0x3c4] sm:$0xf] %vm8493, %v8208
  %8744 = vst.msk [vmem:[#allocation2 + $0x3c8] sm:$0xf] %vm8493, %v8210
  %8745 = vst.msk [vmem:[#allocation2 + $0x3cc] sm:$0xf] %vm8493, %v8212
  %8746 = vst.msk [vmem:[#allocation2 + $0x3d0] sm:$0xf] %vm8493, %v8214
  %8747 = vst.msk [vmem:[#allocation2 + $0x3d4] sm:$0xf] %vm8493, %v8216
  %8748 = vst.msk [vmem:[#allocation2 + $0x3d8] sm:$0xf] %vm8493, %v8218
  %8749 = vst.msk [vmem:[#allocation2 + $0x3dc] sm:$0xf] %vm8493, %v8220
  %8750 = vst.msk [vmem:[#allocation2 + $0x3e0] sm:$0xf] %vm8493, %v8222
  %8751 = vst.msk [vmem:[#allocation2 + $0x3e4] sm:$0xf] %vm8493, %v8224
  %8752 = vst.msk [vmem:[#allocation2 + $0x3e8] sm:$0xf] %vm8493, %v8226
  %8753 = vst.msk [vmem:[#allocation2 + $0x3ec] sm:$0xf] %vm8493, %v8228
  %8754 = vst.msk [vmem:[#allocation2 + $0x3f0] sm:$0xf] %vm8493, %v8230
  %8755 = vst.msk [vmem:[#allocation2 + $0x3f4] sm:$0xf] %vm8493, %v8232
  %8756 = vst.msk [vmem:[#allocation2 + $0x3f8] sm:$0xf] %vm8493, %v8234
  %v8757 = vld [vmem:[#allocation2 + $0x3fc] sm:$0xf]
  %v8758 = vsel %vm8558, %v8236, %v8757
  %8759 = vst [vmem:[#allocation2 + $0x3fc] sm:$0xf] %v8758
  %vm8760 = vcmask 781827
  %vm8761 = vsmask.f32 7950
  %vm8762 = vmand %vm8760, %vm8761
  %v8763 = vld [vmem:[#allocation2 + $0xfc] sm:$0x8]
  %v8764 = vsel %vm8762, 0, %v8763
  %8765 = vst [vmem:[#allocation2 + $0xfc] sm:$0x8] %v8764
  %v8766 = vld [vmem:[#allocation2 + $0x1fc] sm:$0x8]
  %v8767 = vsel %vm8762, 0, %v8766
  %8768 = vst [vmem:[#allocation2 + $0x1fc] sm:$0x8] %v8767
  %v8769 = vld [vmem:[#allocation2 + $0x2fc] sm:$0x8]
  %v8770 = vsel %vm8762, 0, %v8769
  %8771 = vst [vmem:[#allocation2 + $0x2fc] sm:$0x8] %v8770
  %v8772 = vld [vmem:[#allocation2 + $0x3fc] sm:$0x8]
  %v8773 = vsel %vm8762, 0, %v8772
  %8774 = vst [vmem:[#allocation2 + $0x3fc] sm:$0x8] %v8773
  %v8775 = vld [vmem:[#allocation2] sm:$0xf]
  %v8776 = vld [vmem:[#allocation2 + $0x4] sm:$0xf]
  %v8777 = vld [vmem:[#allocation2 + $0x8] sm:$0xf]
  %v8778 = vld [vmem:[#allocation2 + $0xc] sm:$0xf]
  %v8779 = vld [vmem:[#allocation2 + $0x10] sm:$0xf]
  %v8780 = vld [vmem:[#allocation2 + $0x14] sm:$0xf]
  %v8781 = vld [vmem:[#allocation2 + $0x18] sm:$0xf]
  %v8782 = vld [vmem:[#allocation2 + $0x1c] sm:$0xf]
  %v8783 = vld [vmem:[#allocation2 + $0x20] sm:$0xf]
  %v8784 = vld [vmem:[#allocation2 + $0x24] sm:$0xf]
  %v8785 = vld [vmem:[#allocation2 + $0x28] sm:$0xf]
  %v8786 = vld [vmem:[#allocation2 + $0x2c] sm:$0xf]
  %v8787 = vld [vmem:[#allocation2 + $0x30] sm:$0xf]
  %v8788 = vld [vmem:[#allocation2 + $0x34] sm:$0xf]
  %v8789 = vld [vmem:[#allocation2 + $0x38] sm:$0xf]
  %v8790 = vld [vmem:[#allocation2 + $0x3c] sm:$0xf]
  %v8791 = vld [vmem:[#allocation2 + $0x40] sm:$0xf]
  %v8792 = vld [vmem:[#allocation2 + $0x44] sm:$0xf]
  %v8793 = vld [vmem:[#allocation2 + $0x48] sm:$0xf]
  %v8794 = vld [vmem:[#allocation2 + $0x4c] sm:$0xf]
  %v8795 = vld [vmem:[#allocation2 + $0x50] sm:$0xf]
  %v8796 = vld [vmem:[#allocation2 + $0x54] sm:$0xf]
  %v8797 = vld [vmem:[#allocation2 + $0x58] sm:$0xf]
  %v8798 = vld [vmem:[#allocation2 + $0x5c] sm:$0xf]
  %v8799 = vld [vmem:[#allocation2 + $0x60] sm:$0xf]
  %v8800 = vld [vmem:[#allocation2 + $0x64] sm:$0xf]
  %v8801 = vld [vmem:[#allocation2 + $0x68] sm:$0xf]
  %v8802 = vld [vmem:[#allocation2 + $0x6c] sm:$0xf]
  %v8803 = vld [vmem:[#allocation2 + $0x70] sm:$0xf]
  %v8804 = vld [vmem:[#allocation2 + $0x74] sm:$0xf]
  %v8805 = vld [vmem:[#allocation2 + $0x78] sm:$0xf]
  %v8806 = vld [vmem:[#allocation2 + $0x7c] sm:$0xf]
  %v8807 = vld [vmem:[#allocation2 + $0x80] sm:$0xf]
  %v8808 = vld [vmem:[#allocation2 + $0x84] sm:$0xf]
  %v8809 = vld [vmem:[#allocation2 + $0x88] sm:$0xf]
  %v8810 = vld [vmem:[#allocation2 + $0x8c] sm:$0xf]
  %v8811 = vld [vmem:[#allocation2 + $0x90] sm:$0xf]
  %v8812 = vld [vmem:[#allocation2 + $0x94] sm:$0xf]
  %v8813 = vld [vmem:[#allocation2 + $0x98] sm:$0xf]
  %v8814 = vld [vmem:[#allocation2 + $0x9c] sm:$0xf]
  %v8815 = vld [vmem:[#allocation2 + $0xa0] sm:$0xf]
  %v8816 = vld [vmem:[#allocation2 + $0xa4] sm:$0xf]
  %v8817 = vld [vmem:[#allocation2 + $0xa8] sm:$0xf]
  %v8818 = vld [vmem:[#allocation2 + $0xac] sm:$0xf]
  %v8819 = vld [vmem:[#allocation2 + $0xb0] sm:$0xf]
  %v8820 = vld [vmem:[#allocation2 + $0xb4] sm:$0xf]
  %v8821 = vld [vmem:[#allocation2 + $0xb8] sm:$0xf]
  %v8822 = vld [vmem:[#allocation2 + $0xbc] sm:$0xf]
  %v8823 = vld [vmem:[#allocation2 + $0xc0] sm:$0xf]
  %v8824 = vld [vmem:[#allocation2 + $0xc4] sm:$0xf]
  %v8825 = vld [vmem:[#allocation2 + $0xc8] sm:$0xf]
  %v8826 = vld [vmem:[#allocation2 + $0xcc] sm:$0xf]
  %v8827 = vld [vmem:[#allocation2 + $0xd0] sm:$0xf]
  %v8828 = vld [vmem:[#allocation2 + $0xd4] sm:$0xf]
  %v8829 = vld [vmem:[#allocation2 + $0xd8] sm:$0xf]
  %v8830 = vld [vmem:[#allocation2 + $0xdc] sm:$0xf]
  %v8831 = vld [vmem:[#allocation2 + $0xe0] sm:$0xf]
  %v8832 = vld [vmem:[#allocation2 + $0xe4] sm:$0xf]
  %v8833 = vld [vmem:[#allocation2 + $0xe8] sm:$0xf]
  %v8834 = vld [vmem:[#allocation2 + $0xec] sm:$0xf]
  %v8835 = vld [vmem:[#allocation2 + $0xf0] sm:$0xf]
  %v8836 = vld [vmem:[#allocation2 + $0xf4] sm:$0xf]
  %v8837 = vld [vmem:[#allocation2 + $0xf8] sm:$0xf]
  %v8838 = vld [vmem:[#allocation2 + $0xfc] sm:$0xf]
  %v8839 = vld [vmem:[#allocation2 + $0x100] sm:$0xf]
  %v8840 = vld [vmem:[#allocation2 + $0x104] sm:$0xf]
  %v8841 = vld [vmem:[#allocation2 + $0x108] sm:$0xf]
  %v8842 = vld [vmem:[#allocation2 + $0x10c] sm:$0xf]
  %v8843 = vld [vmem:[#allocation2 + $0x110] sm:$0xf]
  %v8844 = vld [vmem:[#allocation2 + $0x114] sm:$0xf]
  %v8845 = vld [vmem:[#allocation2 + $0x118] sm:$0xf]
  %v8846 = vld [vmem:[#allocation2 + $0x11c] sm:$0xf]
  %v8847 = vld [vmem:[#allocation2 + $0x120] sm:$0xf]
  %v8848 = vld [vmem:[#allocation2 + $0x124] sm:$0xf]
  %v8849 = vld [vmem:[#allocation2 + $0x128] sm:$0xf]
  %v8850 = vld [vmem:[#allocation2 + $0x12c] sm:$0xf]
  %v8851 = vld [vmem:[#allocation2 + $0x130] sm:$0xf]
  %v8852 = vld [vmem:[#allocation2 + $0x134] sm:$0xf]
  %v8853 = vld [vmem:[#allocation2 + $0x138] sm:$0xf]
  %v8854 = vld [vmem:[#allocation2 + $0x13c] sm:$0xf]
  %v8855 = vld [vmem:[#allocation2 + $0x140] sm:$0xf]
  %v8856 = vld [vmem:[#allocation2 + $0x144] sm:$0xf]
  %v8857 = vld [vmem:[#allocation2 + $0x148] sm:$0xf]
  %v8858 = vld [vmem:[#allocation2 + $0x14c] sm:$0xf]
  %v8859 = vld [vmem:[#allocation2 + $0x150] sm:$0xf]
  %v8860 = vld [vmem:[#allocation2 + $0x154] sm:$0xf]
  %v8861 = vld [vmem:[#allocation2 + $0x158] sm:$0xf]
  %v8862 = vld [vmem:[#allocation2 + $0x15c] sm:$0xf]
  %v8863 = vld [vmem:[#allocation2 + $0x160] sm:$0xf]
  %v8864 = vld [vmem:[#allocation2 + $0x164] sm:$0xf]
  %v8865 = vld [vmem:[#allocation2 + $0x168] sm:$0xf]
  %v8866 = vld [vmem:[#allocation2 + $0x16c] sm:$0xf]
  %v8867 = vld [vmem:[#allocation2 + $0x170] sm:$0xf]
  %v8868 = vld [vmem:[#allocation2 + $0x174] sm:$0xf]
  %v8869 = vld [vmem:[#allocation2 + $0x178] sm:$0xf]
  %v8870 = vld [vmem:[#allocation2 + $0x17c] sm:$0xf]
  %v8871 = vld [vmem:[#allocation2 + $0x180] sm:$0xf]
  %v8872 = vld [vmem:[#allocation2 + $0x184] sm:$0xf]
  %v8873 = vld [vmem:[#allocation2 + $0x188] sm:$0xf]
  %v8874 = vld [vmem:[#allocation2 + $0x18c] sm:$0xf]
  %v8875 = vld [vmem:[#allocation2 + $0x190] sm:$0xf]
  %v8876 = vld [vmem:[#allocation2 + $0x194] sm:$0xf]
  %v8877 = vld [vmem:[#allocation2 + $0x198] sm:$0xf]
  %v8878 = vld [vmem:[#allocation2 + $0x19c] sm:$0xf]
  %v8879 = vld [vmem:[#allocation2 + $0x1a0] sm:$0xf]
  %v8880 = vld [vmem:[#allocation2 + $0x1a4] sm:$0xf]
  %v8881 = vld [vmem:[#allocation2 + $0x1a8] sm:$0xf]
  %v8882 = vld [vmem:[#allocation2 + $0x1ac] sm:$0xf]
  %v8883 = vld [vmem:[#allocation2 + $0x1b0] sm:$0xf]
  %v8884 = vld [vmem:[#allocation2 + $0x1b4] sm:$0xf]
  %v8885 = vld [vmem:[#allocation2 + $0x1b8] sm:$0xf]
  %v8886 = vld [vmem:[#allocation2 + $0x1bc] sm:$0xf]
  %v8887 = vld [vmem:[#allocation2 + $0x1c0] sm:$0xf]
  %v8888 = vld [vmem:[#allocation2 + $0x1c4] sm:$0xf]
  %v8889 = vld [vmem:[#allocation2 + $0x1c8] sm:$0xf]
  %v8890 = vld [vmem:[#allocation2 + $0x1cc] sm:$0xf]
  %v8891 = vld [vmem:[#allocation2 + $0x1d0] sm:$0xf]
  %v8892 = vld [vmem:[#allocation2 + $0x1d4] sm:$0xf]
  %v8893 = vld [vmem:[#allocation2 + $0x1d8] sm:$0xf]
  %v8894 = vld [vmem:[#allocation2 + $0x1dc] sm:$0xf]
  %v8895 = vld [vmem:[#allocation2 + $0x1e0] sm:$0xf]
  %v8896 = vld [vmem:[#allocation2 + $0x1e4] sm:$0xf]
  %v8897 = vld [vmem:[#allocation2 + $0x1e8] sm:$0xf]
  %v8898 = vld [vmem:[#allocation2 + $0x1ec] sm:$0xf]
  %v8899 = vld [vmem:[#allocation2 + $0x1f0] sm:$0xf]
  %v8900 = vld [vmem:[#allocation2 + $0x1f4] sm:$0xf]
  %v8901 = vld [vmem:[#allocation2 + $0x1f8] sm:$0xf]
  %v8902 = vld [vmem:[#allocation2 + $0x1fc] sm:$0xf]
  %v8903 = vld [vmem:[#allocation2 + $0x200] sm:$0xf]
  %v8904 = vld [vmem:[#allocation2 + $0x204] sm:$0xf]
  %v8905 = vld [vmem:[#allocation2 + $0x208] sm:$0xf]
  %v8906 = vld [vmem:[#allocation2 + $0x20c] sm:$0xf]
  %v8907 = vld [vmem:[#allocation2 + $0x210] sm:$0xf]
  %v8908 = vld [vmem:[#allocation2 + $0x214] sm:$0xf]
  %v8909 = vld [vmem:[#allocation2 + $0x218] sm:$0xf]
  %v8910 = vld [vmem:[#allocation2 + $0x21c] sm:$0xf]
  %v8911 = vld [vmem:[#allocation2 + $0x220] sm:$0xf]
  %v8912 = vld [vmem:[#allocation2 + $0x224] sm:$0xf]
  %v8913 = vld [vmem:[#allocation2 + $0x228] sm:$0xf]
  %v8914 = vld [vmem:[#allocation2 + $0x22c] sm:$0xf]
  %v8915 = vld [vmem:[#allocation2 + $0x230] sm:$0xf]
  %v8916 = vld [vmem:[#allocation2 + $0x234] sm:$0xf]
  %v8917 = vld [vmem:[#allocation2 + $0x238] sm:$0xf]
  %v8918 = vld [vmem:[#allocation2 + $0x23c] sm:$0xf]
  %v8919 = vld [vmem:[#allocation2 + $0x240] sm:$0xf]
  %v8920 = vld [vmem:[#allocation2 + $0x244] sm:$0xf]
  %v8921 = vld [vmem:[#allocation2 + $0x248] sm:$0xf]
  %v8922 = vld [vmem:[#allocation2 + $0x24c] sm:$0xf]
  %v8923 = vld [vmem:[#allocation2 + $0x250] sm:$0xf]
  %v8924 = vld [vmem:[#allocation2 + $0x254] sm:$0xf]
  %v8925 = vld [vmem:[#allocation2 + $0x258] sm:$0xf]
  %v8926 = vld [vmem:[#allocation2 + $0x25c] sm:$0xf]
  %v8927 = vld [vmem:[#allocation2 + $0x260] sm:$0xf]
  %v8928 = vld [vmem:[#allocation2 + $0x264] sm:$0xf]
  %v8929 = vld [vmem:[#allocation2 + $0x268] sm:$0xf]
  %v8930 = vld [vmem:[#allocation2 + $0x26c] sm:$0xf]
  %v8931 = vld [vmem:[#allocation2 + $0x270] sm:$0xf]
  %v8932 = vld [vmem:[#allocation2 + $0x274] sm:$0xf]
  %v8933 = vld [vmem:[#allocation2 + $0x278] sm:$0xf]
  %v8934 = vld [vmem:[#allocation2 + $0x27c] sm:$0xf]
  %v8935 = vld [vmem:[#allocation2 + $0x280] sm:$0xf]
  %v8936 = vld [vmem:[#allocation2 + $0x284] sm:$0xf]
  %v8937 = vld [vmem:[#allocation2 + $0x288] sm:$0xf]
  %v8938 = vld [vmem:[#allocation2 + $0x28c] sm:$0xf]
  %v8939 = vld [vmem:[#allocation2 + $0x290] sm:$0xf]
  %v8940 = vld [vmem:[#allocation2 + $0x294] sm:$0xf]
  %v8941 = vld [vmem:[#allocation2 + $0x298] sm:$0xf]
  %v8942 = vld [vmem:[#allocation2 + $0x29c] sm:$0xf]
  %v8943 = vld [vmem:[#allocation2 + $0x2a0] sm:$0xf]
  %v8944 = vld [vmem:[#allocation2 + $0x2a4] sm:$0xf]
  %v8945 = vld [vmem:[#allocation2 + $0x2a8] sm:$0xf]
  %v8946 = vld [vmem:[#allocation2 + $0x2ac] sm:$0xf]
  %v8947 = vld [vmem:[#allocation2 + $0x2b0] sm:$0xf]
  %v8948 = vld [vmem:[#allocation2 + $0x2b4] sm:$0xf]
  %v8949 = vld [vmem:[#allocation2 + $0x2b8] sm:$0xf]
  %v8950 = vld [vmem:[#allocation2 + $0x2bc] sm:$0xf]
  %v8951 = vld [vmem:[#allocation2 + $0x2c0] sm:$0xf]
  %v8952 = vld [vmem:[#allocation2 + $0x2c4] sm:$0xf]
  %v8953 = vld [vmem:[#allocation2 + $0x2c8] sm:$0xf]
  %v8954 = vld [vmem:[#allocation2 + $0x2cc] sm:$0xf]
  %v8955 = vld [vmem:[#allocation2 + $0x2d0] sm:$0xf]
  %v8956 = vld [vmem:[#allocation2 + $0x2d4] sm:$0xf]
  %v8957 = vld [vmem:[#allocation2 + $0x2d8] sm:$0xf]
  %v8958 = vld [vmem:[#allocation2 + $0x2dc] sm:$0xf]
  %v8959 = vld [vmem:[#allocation2 + $0x2e0] sm:$0xf]
  %v8960 = vld [vmem:[#allocation2 + $0x2e4] sm:$0xf]
  %v8961 = vld [vmem:[#allocation2 + $0x2e8] sm:$0xf]
  %v8962 = vld [vmem:[#allocation2 + $0x2ec] sm:$0xf]
  %v8963 = vld [vmem:[#allocation2 + $0x2f0] sm:$0xf]
  %v8964 = vld [vmem:[#allocation2 + $0x2f4] sm:$0xf]
  %v8965 = vld [vmem:[#allocation2 + $0x2f8] sm:$0xf]
  %v8966 = vld [vmem:[#allocation2 + $0x2fc] sm:$0xf]
  %v8967 = vld [vmem:[#allocation2 + $0x300] sm:$0xf]
  %v8968 = vld [vmem:[#allocation2 + $0x304] sm:$0xf]
  %v8969 = vld [vmem:[#allocation2 + $0x308] sm:$0xf]
  %v8970 = vld [vmem:[#allocation2 + $0x30c] sm:$0xf]
  %v8971 = vld [vmem:[#allocation2 + $0x310] sm:$0xf]
  %v8972 = vld [vmem:[#allocation2 + $0x314] sm:$0xf]
  %v8973 = vld [vmem:[#allocation2 + $0x318] sm:$0xf]
  %v8974 = vld [vmem:[#allocation2 + $0x31c] sm:$0xf]
  %v8975 = vld [vmem:[#allocation2 + $0x320] sm:$0xf]
  %v8976 = vld [vmem:[#allocation2 + $0x324] sm:$0xf]
  %v8977 = vld [vmem:[#allocation2 + $0x328] sm:$0xf]
  %v8978 = vld [vmem:[#allocation2 + $0x32c] sm:$0xf]
  %v8979 = vld [vmem:[#allocation2 + $0x330] sm:$0xf]
  %v8980 = vld [vmem:[#allocation2 + $0x334] sm:$0xf]
  %v8981 = vld [vmem:[#allocation2 + $0x338] sm:$0xf]
  %v8982 = vld [vmem:[#allocation2 + $0x33c] sm:$0xf]
  %v8983 = vld [vmem:[#allocation2 + $0x340] sm:$0xf]
  %v8984 = vld [vmem:[#allocation2 + $0x344] sm:$0xf]
  %v8985 = vld [vmem:[#allocation2 + $0x348] sm:$0xf]
  %v8986 = vld [vmem:[#allocation2 + $0x34c] sm:$0xf]
  %v8987 = vld [vmem:[#allocation2 + $0x350] sm:$0xf]
  %v8988 = vld [vmem:[#allocation2 + $0x354] sm:$0xf]
  %v8989 = vld [vmem:[#allocation2 + $0x358] sm:$0xf]
  %v8990 = vld [vmem:[#allocation2 + $0x35c] sm:$0xf]
  %v8991 = vld [vmem:[#allocation2 + $0x360] sm:$0xf]
  %v8992 = vld [vmem:[#allocation2 + $0x364] sm:$0xf]
  %v8993 = vld [vmem:[#allocation2 + $0x368] sm:$0xf]
  %v8994 = vld [vmem:[#allocation2 + $0x36c] sm:$0xf]
  %v8995 = vld [vmem:[#allocation2 + $0x370] sm:$0xf]
  %v8996 = vld [vmem:[#allocation2 + $0x374] sm:$0xf]
  %v8997 = vld [vmem:[#allocation2 + $0x378] sm:$0xf]
  %v8998 = vld [vmem:[#allocation2 + $0x37c] sm:$0xf]
  %v8999 = vld [vmem:[#allocation2 + $0x380] sm:$0xf]
  %v9000 = vld [vmem:[#allocation2 + $0x384] sm:$0xf]
  %v9001 = vld [vmem:[#allocation2 + $0x388] sm:$0xf]
  %v9002 = vld [vmem:[#allocation2 + $0x38c] sm:$0xf]
  %v9003 = vld [vmem:[#allocation2 + $0x390] sm:$0xf]
  %v9004 = vld [vmem:[#allocation2 + $0x394] sm:$0xf]
  %v9005 = vld [vmem:[#allocation2 + $0x398] sm:$0xf]
  %v9006 = vld [vmem:[#allocation2 + $0x39c] sm:$0xf]
  %v9007 = vld [vmem:[#allocation2 + $0x3a0] sm:$0xf]
  %v9008 = vld [vmem:[#allocation2 + $0x3a4] sm:$0xf]
  %v9009 = vld [vmem:[#allocation2 + $0x3a8] sm:$0xf]
  %v9010 = vld [vmem:[#allocation2 + $0x3ac] sm:$0xf]
  %v9011 = vld [vmem:[#allocation2 + $0x3b0] sm:$0xf]
  %v9012 = vld [vmem:[#allocation2 + $0x3b4] sm:$0xf]
  %v9013 = vld [vmem:[#allocation2 + $0x3b8] sm:$0xf]
  %v9014 = vld [vmem:[#allocation2 + $0x3bc] sm:$0xf]
  %v9015 = vld [vmem:[#allocation2 + $0x3c0] sm:$0xf]
  %v9016 = vld [vmem:[#allocation2 + $0x3c4] sm:$0xf]
  %v9017 = vld [vmem:[#allocation2 + $0x3c8] sm:$0xf]
  %v9018 = vld [vmem:[#allocation2 + $0x3cc] sm:$0xf]
  %v9019 = vld [vmem:[#allocation2 + $0x3d0] sm:$0xf]
  %v9020 = vld [vmem:[#allocation2 + $0x3d4] sm:$0xf]
  %v9021 = vld [vmem:[#allocation2 + $0x3d8] sm:$0xf]
  %v9022 = vld [vmem:[#allocation2 + $0x3dc] sm:$0xf]
  %v9023 = vld [vmem:[#allocation2 + $0x3e0] sm:$0xf]
  %v9024 = vld [vmem:[#allocation2 + $0x3e4] sm:$0xf]
  %v9025 = vld [vmem:[#allocation2 + $0x3e8] sm:$0xf]
  %v9026 = vld [vmem:[#allocation2 + $0x3ec] sm:$0xf]
  %v9027 = vld [vmem:[#allocation2 + $0x3f0] sm:$0xf]
  %v9028 = vld [vmem:[#allocation2 + $0x3f4] sm:$0xf]
  %v9029 = vld [vmem:[#allocation2 + $0x3f8] sm:$0xf]
  %v9030 = vld [vmem:[#allocation2 + $0x3fc] sm:$0xf]
  %v9031 = vld [vmem:[%s1] sm:$0xf]
  %v9032 = vld [vmem:[%s1 + $0x4] sm:$0xf]
  %v9033 = vld [vmem:[%s1 + $0x8] sm:$0xf]
  %v9034 = vld [vmem:[%s1 + $0xc] sm:$0xf]
  %v9035 = vld [vmem:[%s1 + $0x10] sm:$0xf]
  %v9036 = vld [vmem:[%s1 + $0x14] sm:$0xf]
  %v9037 = vld [vmem:[%s1 + $0x18] sm:$0xf]
  %v9038 = vld [vmem:[%s1 + $0x1c] sm:$0xf]
  %v9039 = vld [vmem:[%s1 + $0x20] sm:$0xf]
  %v9040 = vld [vmem:[%s1 + $0x24] sm:$0xf]
  %v9041 = vld [vmem:[%s1 + $0x28] sm:$0xf]
  %v9042 = vld [vmem:[%s1 + $0x2c] sm:$0xf]
  %v9043 = vld [vmem:[%s1 + $0x30] sm:$0xf]
  %v9044 = vld [vmem:[%s1 + $0x34] sm:$0xf]
  %v9045 = vld [vmem:[%s1 + $0x38] sm:$0xf]
  %v9046 = vld [vmem:[%s1 + $0x3c] sm:$0xf]
  %v9047 = vld [vmem:[%s2] sm:$0x1]
  %v9049 = vlaneseq
  %v9050 = vshrl.u32 %v9049, 7
  %v9051 = vsub.s32 0, %v9050
  %v9052 = vrot.slane %v9047, %v9051
  %v9310 = vunpack.c.l.b16 %v8775
  %v9311 = vunpack.c.l.b16 %v8776
  %v9312 = vunpack.c.l.b16 %v8777
  %v9313 = vunpack.c.l.b16 %v8778
  %v9314 = vunpack.c.l.b16 %v8779
  %v9315 = vunpack.c.l.b16 %v8780
  %v9316 = vunpack.c.l.b16 %v8781
  %v9317 = vunpack.c.l.b16 %v8782
  %v9318 = vunpack.c.l.b16 %v8783
  %v9319 = vunpack.c.l.b16 %v8784
  %v9320 = vunpack.c.l.b16 %v8785
  %v9321 = vunpack.c.l.b16 %v8786
  %v9322 = vunpack.c.l.b16 %v8787
  %v9323 = vunpack.c.l.b16 %v8788
  %v9324 = vunpack.c.l.b16 %v8789
  %v9325 = vunpack.c.l.b16 %v8790
  %v9326 = vunpack.c.l.b16 %v8791
  %v9327 = vunpack.c.l.b16 %v8792
  %v9328 = vunpack.c.l.b16 %v8793
  %v9329 = vunpack.c.l.b16 %v8794
  %v9330 = vunpack.c.l.b16 %v8795
  %v9331 = vunpack.c.l.b16 %v8796
  %v9332 = vunpack.c.l.b16 %v8797
  %v9333 = vunpack.c.l.b16 %v8798
  %v9334 = vunpack.c.l.b16 %v8799
  %v9335 = vunpack.c.l.b16 %v8800
  %v9336 = vunpack.c.l.b16 %v8801
  %v9337 = vunpack.c.l.b16 %v8802
  %v9338 = vunpack.c.l.b16 %v8803
  %v9339 = vunpack.c.l.b16 %v8804
  %v9340 = vunpack.c.l.b16 %v8805
  %v9341 = vunpack.c.l.b16 %v8806
  %v9342 = vunpack.c.l.b16 %v8807
  %v9343 = vunpack.c.l.b16 %v8808
  %v9344 = vunpack.c.l.b16 %v8809
  %v9345 = vunpack.c.l.b16 %v8810
  %v9346 = vunpack.c.l.b16 %v8811
  %v9347 = vunpack.c.l.b16 %v8812
  %v9348 = vunpack.c.l.b16 %v8813
  %v9349 = vunpack.c.l.b16 %v8814
  %v9350 = vunpack.c.l.b16 %v8815
  %v9351 = vunpack.c.l.b16 %v8816
  %v9352 = vunpack.c.l.b16 %v8817
  %v9353 = vunpack.c.l.b16 %v8818
  %v9354 = vunpack.c.l.b16 %v8819
  %v9355 = vunpack.c.l.b16 %v8820
  %v9356 = vunpack.c.l.b16 %v8821
  %v9357 = vunpack.c.l.b16 %v8822
  %v9358 = vunpack.c.l.b16 %v8823
  %v9359 = vunpack.c.l.b16 %v8824
  %v9360 = vunpack.c.l.b16 %v8825
  %v9361 = vunpack.c.l.b16 %v8826
  %v9362 = vunpack.c.l.b16 %v8827
  %v9363 = vunpack.c.l.b16 %v8828
  %v9364 = vunpack.c.l.b16 %v8829
  %v9365 = vunpack.c.l.b16 %v8830
  %v9366 = vunpack.c.l.b16 %v8831
  %v9367 = vunpack.c.l.b16 %v8832
  %v9368 = vunpack.c.l.b16 %v8833
  %v9369 = vunpack.c.l.b16 %v8834
  %v9370 = vunpack.c.l.b16 %v8835
  %v9371 = vunpack.c.l.b16 %v8836
  %v9372 = vunpack.c.l.b16 %v8837
  %v9373 = vunpack.c.l.b16 %v8838
  %v9374 = vunpack.c.l.b16 %v8839
  %v9375 = vunpack.c.l.b16 %v8840
  %v9376 = vunpack.c.l.b16 %v8841
  %v9377 = vunpack.c.l.b16 %v8842
  %v9378 = vunpack.c.l.b16 %v8843
  %v9379 = vunpack.c.l.b16 %v8844
  %v9380 = vunpack.c.l.b16 %v8845
  %v9381 = vunpack.c.l.b16 %v8846
  %v9382 = vunpack.c.l.b16 %v8847
  %v9383 = vunpack.c.l.b16 %v8848
  %v9384 = vunpack.c.l.b16 %v8849
  %v9385 = vunpack.c.l.b16 %v8850
  %v9386 = vunpack.c.l.b16 %v8851
  %v9387 = vunpack.c.l.b16 %v8852
  %v9388 = vunpack.c.l.b16 %v8853
  %v9389 = vunpack.c.l.b16 %v8854
  %v9390 = vunpack.c.l.b16 %v8855
  %v9391 = vunpack.c.l.b16 %v8856
  %v9392 = vunpack.c.l.b16 %v8857
  %v9393 = vunpack.c.l.b16 %v8858
  %v9394 = vunpack.c.l.b16 %v8859
  %v9395 = vunpack.c.l.b16 %v8860
  %v9396 = vunpack.c.l.b16 %v8861
  %v9397 = vunpack.c.l.b16 %v8862
  %v9398 = vunpack.c.l.b16 %v8863
  %v9399 = vunpack.c.l.b16 %v8864
  %v9400 = vunpack.c.l.b16 %v8865
  %v9401 = vunpack.c.l.b16 %v8866
  %v9402 = vunpack.c.l.b16 %v8867
  %v9403 = vunpack.c.l.b16 %v8868
  %v9404 = vunpack.c.l.b16 %v8869
  %v9405 = vunpack.c.l.b16 %v8870
  %v9406 = vunpack.c.l.b16 %v8871
  %v9407 = vunpack.c.l.b16 %v8872
  %v9408 = vunpack.c.l.b16 %v8873
  %v9409 = vunpack.c.l.b16 %v8874
  %v9410 = vunpack.c.l.b16 %v8875
  %v9411 = vunpack.c.l.b16 %v8876
  %v9412 = vunpack.c.l.b16 %v8877
  %v9413 = vunpack.c.l.b16 %v8878
  %v9414 = vunpack.c.l.b16 %v8879
  %v9415 = vunpack.c.l.b16 %v8880
  %v9416 = vunpack.c.l.b16 %v8881
  %v9417 = vunpack.c.l.b16 %v8882
  %v9418 = vunpack.c.l.b16 %v8883
  %v9419 = vunpack.c.l.b16 %v8884
  %v9420 = vunpack.c.l.b16 %v8885
  %v9421 = vunpack.c.l.b16 %v8886
  %v9422 = vunpack.c.l.b16 %v8887
  %v9423 = vunpack.c.l.b16 %v8888
  %v9424 = vunpack.c.l.b16 %v8889
  %v9425 = vunpack.c.l.b16 %v8890
  %v9426 = vunpack.c.l.b16 %v8891
  %v9427 = vunpack.c.l.b16 %v8892
  %v9428 = vunpack.c.l.b16 %v8893
  %v9429 = vunpack.c.l.b16 %v8894
  %v9430 = vunpack.c.l.b16 %v8895
  %v9431 = vunpack.c.l.b16 %v8896
  %v9432 = vunpack.c.l.b16 %v8897
  %v9433 = vunpack.c.l.b16 %v8898
  %v9434 = vunpack.c.l.b16 %v8899
  %v9435 = vunpack.c.l.b16 %v8900
  %v9436 = vunpack.c.l.b16 %v8901
  %v9437 = vunpack.c.l.b16 %v8902
  %v9438 = vunpack.c.l.b16 %v8903
  %v9439 = vunpack.c.l.b16 %v8904
  %v9440 = vunpack.c.l.b16 %v8905
  %v9441 = vunpack.c.l.b16 %v8906
  %v9442 = vunpack.c.l.b16 %v8907
  %v9443 = vunpack.c.l.b16 %v8908
  %v9444 = vunpack.c.l.b16 %v8909
  %v9445 = vunpack.c.l.b16 %v8910
  %v9446 = vunpack.c.l.b16 %v8911
  %v9447 = vunpack.c.l.b16 %v8912
  %v9448 = vunpack.c.l.b16 %v8913
  %v9449 = vunpack.c.l.b16 %v8914
  %v9450 = vunpack.c.l.b16 %v8915
  %v9451 = vunpack.c.l.b16 %v8916
  %v9452 = vunpack.c.l.b16 %v8917
  %v9453 = vunpack.c.l.b16 %v8918
  %v9454 = vunpack.c.l.b16 %v8919
  %v9455 = vunpack.c.l.b16 %v8920
  %v9456 = vunpack.c.l.b16 %v8921
  %v9457 = vunpack.c.l.b16 %v8922
  %v9458 = vunpack.c.l.b16 %v8923
  %v9459 = vunpack.c.l.b16 %v8924
  %v9460 = vunpack.c.l.b16 %v8925
  %v9461 = vunpack.c.l.b16 %v8926
  %v9462 = vunpack.c.l.b16 %v8927
  %v9463 = vunpack.c.l.b16 %v8928
  %v9464 = vunpack.c.l.b16 %v8929
  %v9465 = vunpack.c.l.b16 %v8930
  %v9466 = vunpack.c.l.b16 %v8931
  %v9467 = vunpack.c.l.b16 %v8932
  %v9468 = vunpack.c.l.b16 %v8933
  %v9469 = vunpack.c.l.b16 %v8934
  %v9470 = vunpack.c.l.b16 %v8935
  %v9471 = vunpack.c.l.b16 %v8936
  %v9472 = vunpack.c.l.b16 %v8937
  %v9473 = vunpack.c.l.b16 %v8938
  %v9474 = vunpack.c.l.b16 %v8939
  %v9475 = vunpack.c.l.b16 %v8940
  %v9476 = vunpack.c.l.b16 %v8941
  %v9477 = vunpack.c.l.b16 %v8942
  %v9478 = vunpack.c.l.b16 %v8943
  %v9479 = vunpack.c.l.b16 %v8944
  %v9480 = vunpack.c.l.b16 %v8945
  %v9481 = vunpack.c.l.b16 %v8946
  %v9482 = vunpack.c.l.b16 %v8947
  %v9483 = vunpack.c.l.b16 %v8948
  %v9484 = vunpack.c.l.b16 %v8949
  %v9485 = vunpack.c.l.b16 %v8950
  %v9486 = vunpack.c.l.b16 %v8951
  %v9487 = vunpack.c.l.b16 %v8952
  %v9488 = vunpack.c.l.b16 %v8953
  %v9489 = vunpack.c.l.b16 %v8954
  %v9490 = vunpack.c.l.b16 %v8955
  %v9491 = vunpack.c.l.b16 %v8956
  %v9492 = vunpack.c.l.b16 %v8957
  %v9493 = vunpack.c.l.b16 %v8958
  %v9494 = vunpack.c.l.b16 %v8959
  %v9495 = vunpack.c.l.b16 %v8960
  %v9496 = vunpack.c.l.b16 %v8961
  %v9497 = vunpack.c.l.b16 %v8962
  %v9498 = vunpack.c.l.b16 %v8963
  %v9499 = vunpack.c.l.b16 %v8964
  %v9500 = vunpack.c.l.b16 %v8965
  %v9501 = vunpack.c.l.b16 %v8966
  %v9502 = vunpack.c.l.b16 %v8967
  %v9503 = vunpack.c.l.b16 %v8968
  %v9504 = vunpack.c.l.b16 %v8969
  %v9505 = vunpack.c.l.b16 %v8970
  %v9506 = vunpack.c.l.b16 %v8971
  %v9507 = vunpack.c.l.b16 %v8972
  %v9508 = vunpack.c.l.b16 %v8973
  %v9509 = vunpack.c.l.b16 %v8974
  %v9510 = vunpack.c.l.b16 %v8975
  %v9511 = vunpack.c.l.b16 %v8976
  %v9512 = vunpack.c.l.b16 %v8977
  %v9513 = vunpack.c.l.b16 %v8978
  %v9514 = vunpack.c.l.b16 %v8979
  %v9515 = vunpack.c.l.b16 %v8980
  %v9516 = vunpack.c.l.b16 %v8981
  %v9517 = vunpack.c.l.b16 %v8982
  %v9518 = vunpack.c.l.b16 %v8983
  %v9519 = vunpack.c.l.b16 %v8984
  %v9520 = vunpack.c.l.b16 %v8985
  %v9521 = vunpack.c.l.b16 %v8986
  %v9522 = vunpack.c.l.b16 %v8987
  %v9523 = vunpack.c.l.b16 %v8988
  %v9524 = vunpack.c.l.b16 %v8989
  %v9525 = vunpack.c.l.b16 %v8990
  %v9526 = vunpack.c.l.b16 %v8991
  %v9527 = vunpack.c.l.b16 %v8992
  %v9528 = vunpack.c.l.b16 %v8993
  %v9529 = vunpack.c.l.b16 %v8994
  %v9530 = vunpack.c.l.b16 %v8995
  %v9531 = vunpack.c.l.b16 %v8996
  %v9532 = vunpack.c.l.b16 %v8997
  %v9533 = vunpack.c.l.b16 %v8998
  %v9534 = vunpack.c.l.b16 %v8999
  %v9535 = vunpack.c.l.b16 %v9000
  %v9536 = vunpack.c.l.b16 %v9001
  %v9537 = vunpack.c.l.b16 %v9002
  %v9538 = vunpack.c.l.b16 %v9003
  %v9539 = vunpack.c.l.b16 %v9004
  %v9540 = vunpack.c.l.b16 %v9005
  %v9541 = vunpack.c.l.b16 %v9006
  %v9542 = vunpack.c.l.b16 %v9007
  %v9543 = vunpack.c.l.b16 %v9008
  %v9544 = vunpack.c.l.b16 %v9009
  %v9545 = vunpack.c.l.b16 %v9010
  %v9546 = vunpack.c.l.b16 %v9011
  %v9547 = vunpack.c.l.b16 %v9012
  %v9548 = vunpack.c.l.b16 %v9013
  %v9549 = vunpack.c.l.b16 %v9014
  %v9550 = vunpack.c.l.b16 %v9015
  %v9551 = vunpack.c.l.b16 %v9016
  %v9552 = vunpack.c.l.b16 %v9017
  %v9553 = vunpack.c.l.b16 %v9018
  %v9554 = vunpack.c.l.b16 %v9019
  %v9555 = vunpack.c.l.b16 %v9020
  %v9556 = vunpack.c.l.b16 %v9021
  %v9557 = vunpack.c.l.b16 %v9022
  %v9558 = vunpack.c.l.b16 %v9023
  %v9559 = vunpack.c.l.b16 %v9024
  %v9560 = vunpack.c.l.b16 %v9025
  %v9561 = vunpack.c.l.b16 %v9026
  %v9562 = vunpack.c.l.b16 %v9027
  %v9563 = vunpack.c.l.b16 %v9028
  %v9564 = vunpack.c.l.b16 %v9029
  %v9565 = vunpack.c.l.b16 %v9030
  %v9566 = vpack.c.b16 %v9311, %v9310
  %v9567 = vpack.c.b16 %v9313, %v9312
  %v9568 = vpack.c.b16 %v9315, %v9314
  %v9569 = vpack.c.b16 %v9317, %v9316
  %v9570 = vpack.c.b16 %v9319, %v9318
  %v9571 = vpack.c.b16 %v9321, %v9320
  %v9572 = vpack.c.b16 %v9323, %v9322
  %v9573 = vpack.c.b16 %v9325, %v9324
  %v9574 = vpack.c.b16 %v9327, %v9326
  %v9575 = vpack.c.b16 %v9329, %v9328
  %v9576 = vpack.c.b16 %v9331, %v9330
  %v9577 = vpack.c.b16 %v9333, %v9332
  %v9578 = vpack.c.b16 %v9335, %v9334
  %v9579 = vpack.c.b16 %v9337, %v9336
  %v9580 = vpack.c.b16 %v9339, %v9338
  %v9581 = vpack.c.b16 %v9341, %v9340
  %v9582 = vpack.c.b16 %v9343, %v9342
  %v9583 = vpack.c.b16 %v9345, %v9344
  %v9584 = vpack.c.b16 %v9347, %v9346
  %v9585 = vpack.c.b16 %v9349, %v9348
  %v9586 = vpack.c.b16 %v9351, %v9350
  %v9587 = vpack.c.b16 %v9353, %v9352
  %v9588 = vpack.c.b16 %v9355, %v9354
  %v9589 = vpack.c.b16 %v9357, %v9356
  %v9590 = vpack.c.b16 %v9359, %v9358
  %v9591 = vpack.c.b16 %v9361, %v9360
  %v9592 = vpack.c.b16 %v9363, %v9362
  %v9593 = vpack.c.b16 %v9365, %v9364
  %v9594 = vpack.c.b16 %v9367, %v9366
  %v9595 = vpack.c.b16 %v9369, %v9368
  %v9596 = vpack.c.b16 %v9371, %v9370
  %v9597 = vpack.c.b16 %v9373, %v9372
  %v9598 = vpack.c.b16 %v9375, %v9374
  %v9599 = vpack.c.b16 %v9377, %v9376
  %v9600 = vpack.c.b16 %v9379, %v9378
  %v9601 = vpack.c.b16 %v9381, %v9380
  %v9602 = vpack.c.b16 %v9383, %v9382
  %v9603 = vpack.c.b16 %v9385, %v9384
  %v9604 = vpack.c.b16 %v9387, %v9386
  %v9605 = vpack.c.b16 %v9389, %v9388
  %v9606 = vpack.c.b16 %v9391, %v9390
  %v9607 = vpack.c.b16 %v9393, %v9392
  %v9608 = vpack.c.b16 %v9395, %v9394
  %v9609 = vpack.c.b16 %v9397, %v9396
  %v9610 = vpack.c.b16 %v9399, %v9398
  %v9611 = vpack.c.b16 %v9401, %v9400
  %v9612 = vpack.c.b16 %v9403, %v9402
  %v9613 = vpack.c.b16 %v9405, %v9404
  %v9614 = vpack.c.b16 %v9407, %v9406
  %v9615 = vpack.c.b16 %v9409, %v9408
  %v9616 = vpack.c.b16 %v9411, %v9410
  %v9617 = vpack.c.b16 %v9413, %v9412
  %v9618 = vpack.c.b16 %v9415, %v9414
  %v9619 = vpack.c.b16 %v9417, %v9416
  %v9620 = vpack.c.b16 %v9419, %v9418
  %v9621 = vpack.c.b16 %v9421, %v9420
  %v9622 = vpack.c.b16 %v9423, %v9422
  %v9623 = vpack.c.b16 %v9425, %v9424
  %v9624 = vpack.c.b16 %v9427, %v9426
  %v9625 = vpack.c.b16 %v9429, %v9428
  %v9626 = vpack.c.b16 %v9431, %v9430
  %v9627 = vpack.c.b16 %v9433, %v9432
  %v9628 = vpack.c.b16 %v9435, %v9434
  %v9629 = vpack.c.b16 %v9437, %v9436
  %v9630 = vpack.c.b16 %v9439, %v9438
  %v9631 = vpack.c.b16 %v9441, %v9440
  %v9632 = vpack.c.b16 %v9443, %v9442
  %v9633 = vpack.c.b16 %v9445, %v9444
  %v9634 = vpack.c.b16 %v9447, %v9446
  %v9635 = vpack.c.b16 %v9449, %v9448
  %v9636 = vpack.c.b16 %v9451, %v9450
  %v9637 = vpack.c.b16 %v9453, %v9452
  %v9638 = vpack.c.b16 %v9455, %v9454
  %v9639 = vpack.c.b16 %v9457, %v9456
  %v9640 = vpack.c.b16 %v9459, %v9458
  %v9641 = vpack.c.b16 %v9461, %v9460
  %v9642 = vpack.c.b16 %v9463, %v9462
  %v9643 = vpack.c.b16 %v9465, %v9464
  %v9644 = vpack.c.b16 %v9467, %v9466
  %v9645 = vpack.c.b16 %v9469, %v9468
  %v9646 = vpack.c.b16 %v9471, %v9470
  %v9647 = vpack.c.b16 %v9473, %v9472
  %v9648 = vpack.c.b16 %v9475, %v9474
  %v9649 = vpack.c.b16 %v9477, %v9476
  %v9650 = vpack.c.b16 %v9479, %v9478
  %v9651 = vpack.c.b16 %v9481, %v9480
  %v9652 = vpack.c.b16 %v9483, %v9482
  %v9653 = vpack.c.b16 %v9485, %v9484
  %v9654 = vpack.c.b16 %v9487, %v9486
  %v9655 = vpack.c.b16 %v9489, %v9488
  %v9656 = vpack.c.b16 %v9491, %v9490
  %v9657 = vpack.c.b16 %v9493, %v9492
  %v9658 = vpack.c.b16 %v9495, %v9494
  %v9659 = vpack.c.b16 %v9497, %v9496
  %v9660 = vpack.c.b16 %v9499, %v9498
  %v9661 = vpack.c.b16 %v9501, %v9500
  %v9662 = vpack.c.b16 %v9503, %v9502
  %v9663 = vpack.c.b16 %v9505, %v9504
  %v9664 = vpack.c.b16 %v9507, %v9506
  %v9665 = vpack.c.b16 %v9509, %v9508
  %v9666 = vpack.c.b16 %v9511, %v9510
  %v9667 = vpack.c.b16 %v9513, %v9512
  %v9668 = vpack.c.b16 %v9515, %v9514
  %v9669 = vpack.c.b16 %v9517, %v9516
  %v9670 = vpack.c.b16 %v9519, %v9518
  %v9671 = vpack.c.b16 %v9521, %v9520
  %v9672 = vpack.c.b16 %v9523, %v9522
  %v9673 = vpack.c.b16 %v9525, %v9524
  %v9674 = vpack.c.b16 %v9527, %v9526
  %v9675 = vpack.c.b16 %v9529, %v9528
  %v9676 = vpack.c.b16 %v9531, %v9530
  %v9677 = vpack.c.b16 %v9533, %v9532
  %v9678 = vpack.c.b16 %v9535, %v9534
  %v9679 = vpack.c.b16 %v9537, %v9536
  %v9680 = vpack.c.b16 %v9539, %v9538
  %v9681 = vpack.c.b16 %v9541, %v9540
  %v9682 = vpack.c.b16 %v9543, %v9542
  %v9683 = vpack.c.b16 %v9545, %v9544
  %v9684 = vpack.c.b16 %v9547, %v9546
  %v9685 = vpack.c.b16 %v9549, %v9548
  %v9686 = vpack.c.b16 %v9551, %v9550
  %v9687 = vpack.c.b16 %v9553, %v9552
  %v9688 = vpack.c.b16 %v9555, %v9554
  %v9689 = vpack.c.b16 %v9557, %v9556
  %v9690 = vpack.c.b16 %v9559, %v9558
  %v9691 = vpack.c.b16 %v9561, %v9560
  %v9692 = vpack.c.b16 %v9563, %v9562
  %v9693 = vpack.c.b16 %v9565, %v9564
  %v9838 = vunpack.c.l.b16 %v9031
  %v9839 = vunpack.c.l.b16 %v9032
  %v9840 = vunpack.c.l.b16 %v9033
  %v9841 = vunpack.c.l.b16 %v9034
  %v9842 = vunpack.c.l.b16 %v9035
  %v9843 = vunpack.c.l.b16 %v9036
  %v9844 = vunpack.c.l.b16 %v9037
  %v9845 = vunpack.c.l.b16 %v9038
  %v9846 = vunpack.c.l.b16 %v9039
  %v9847 = vunpack.c.l.b16 %v9040
  %v9848 = vunpack.c.l.b16 %v9041
  %v9849 = vunpack.c.l.b16 %v9042
  %v9850 = vunpack.c.l.b16 %v9043
  %v9851 = vunpack.c.l.b16 %v9044
  %v9852 = vunpack.c.l.b16 %v9045
  %v9853 = vunpack.c.l.b16 %v9046
  %v9854 = vpack.c.b16 %v9839, %v9838
  %v9855 = vpack.c.b16 %v9841, %v9840
  %v9856 = vpack.c.b16 %v9843, %v9842
  %v9857 = vpack.c.b16 %v9845, %v9844
  %v9858 = vpack.c.b16 %v9847, %v9846
  %v9859 = vpack.c.b16 %v9849, %v9848
  %v9860 = vpack.c.b16 %v9851, %v9850
  %v9861 = vpack.c.b16 %v9853, %v9852
  %9870 = vmatprep.subr.bf16.mxu0 0
  %9871 = vmatpush1.bf16.msra.mxu0 %v9861
  %9872 = vmatprep.subr.bf16.mxu0 0
  %9873 = vmatpush1.bf16.msra.mxu0 %v9860
  %9874 = vmatprep.subr.bf16.mxu0 0
  %9875 = vmatpush1.bf16.msra.mxu0 %v9859
  %9876 = vmatprep.subr.bf16.mxu0 0
  %9877 = vmatpush1.bf16.msra.mxu0 %v9858
  %9878 = vmatprep.subr.bf16.mxu0 0
  %9879 = vmatpush1.bf16.msra.mxu0 %v9857
  %9880 = vmatprep.subr.bf16.mxu0 0
  %9881 = vmatpush1.bf16.msra.mxu0 %v9856
  %9882 = vmatprep.subr.bf16.mxu0 0
  %9883 = vmatpush1.bf16.msra.mxu0 %v9855
  %9884 = vmatprep.subr.bf16.mxu0 0
  %9885 = vmatpush1.bf16.msra.mxu0 %v9854
  %9886 = vmatprep.subr.bf16.mxu0 0
  %9887 = vmatpush2.bf16.msra.mxu0 0
  %9888 = vmatprep.subr.bf16.mxu0 0
  %9889 = vmatpush2.bf16.msra.mxu0 0
  %9890 = vmatprep.subr.bf16.mxu0 0
  %9891 = vmatpush2.bf16.msra.mxu0 0
  %9892 = vmatprep.subr.bf16.mxu0 0
  %9893 = vmatpush2.bf16.msra.mxu0 0
  %9894 = vmatprep.subr.bf16.mxu0 0
  %9895 = vmatpush2.bf16.msra.mxu0 0
  %9896 = vmatprep.subr.bf16.mxu0 0
  %9897 = vmatpush2.bf16.msra.mxu0 0
  %9898 = vmatprep.subr.bf16.mxu0 0
  %9899 = vmatpush2.bf16.msra.mxu0 0
  %9900 = vmatprep.subr.bf16.mxu0 0
  %9901 = vmatpush2.bf16.msra.mxu0 0
  %9902 = vmatprep.mubr.bf16.mxu0 0
  %9903 = vmatmul.mubr.bf16.gmra.mxu0 %v9566
  %v9904 = vpop.f32.mrf.mxu0
  %v9905 = vadd.f32 %v9052, %v9904
  %v9906 = vpop.f32.mrf.mxu0
  %v9907 = vpop.f32.mrf.mxu0
  %v9908 = vadd.f32 %v9052, %v9907
  %v9909 = vpop.f32.mrf.mxu0
  %9910 = vmatprep.mubr.bf16.mxu0 0
  %9911 = vmatmul.mubr.bf16.gmra.mxu0 %v9567
  %v9912 = vpop.f32.mrf.mxu0
  %v9913 = vadd.f32 %v9052, %v9912
  %v9914 = vpop.f32.mrf.mxu0
  %v9915 = vpop.f32.mrf.mxu0
  %v9916 = vadd.f32 %v9052, %v9915
  %v9917 = vpop.f32.mrf.mxu0
  %9918 = vmatprep.mubr.bf16.mxu0 0
  %9919 = vmatmul.mubr.bf16.gmra.mxu0 %v9568
  %v9920 = vpop.f32.mrf.mxu0
  %v9921 = vadd.f32 %v9052, %v9920
  %v9922 = vpop.f32.mrf.mxu0
  %v9923 = vpop.f32.mrf.mxu0
  %v9924 = vadd.f32 %v9052, %v9923
  %v9925 = vpop.f32.mrf.mxu0
  %9926 = vmatprep.mubr.bf16.mxu0 0
  %9927 = vmatmul.mubr.bf16.gmra.mxu0 %v9569
  %v9928 = vpop.f32.mrf.mxu0
  %v9929 = vadd.f32 %v9052, %v9928
  %v9930 = vpop.f32.mrf.mxu0
  %v9931 = vpop.f32.mrf.mxu0
  %v9932 = vadd.f32 %v9052, %v9931
  %v9933 = vpop.f32.mrf.mxu0
  %9934 = vmatprep.mubr.bf16.mxu0 0
  %9935 = vmatmul.mubr.bf16.gmra.mxu0 %v9570
  %v9936 = vpop.f32.mrf.mxu0
  %v9937 = vadd.f32 %v9052, %v9936
  %v9938 = vpop.f32.mrf.mxu0
  %v9939 = vpop.f32.mrf.mxu0
  %v9940 = vadd.f32 %v9052, %v9939
  %v9941 = vpop.f32.mrf.mxu0
  %9942 = vmatprep.mubr.bf16.mxu0 0
  %9943 = vmatmul.mubr.bf16.gmra.mxu0 %v9571
  %v9944 = vpop.f32.mrf.mxu0
  %v9945 = vadd.f32 %v9052, %v9944
  %v9946 = vpop.f32.mrf.mxu0
  %v9947 = vpop.f32.mrf.mxu0
  %v9948 = vadd.f32 %v9052, %v9947
  %v9949 = vpop.f32.mrf.mxu0
  %9950 = vmatprep.mubr.bf16.mxu0 0
  %9951 = vmatmul.mubr.bf16.gmra.mxu0 %v9572
  %v9952 = vpop.f32.mrf.mxu0
  %v9953 = vadd.f32 %v9052, %v9952
  %v9954 = vpop.f32.mrf.mxu0
  %v9955 = vpop.f32.mrf.mxu0
  %v9956 = vadd.f32 %v9052, %v9955
  %v9957 = vpop.f32.mrf.mxu0
  %9958 = vmatprep.mubr.bf16.mxu0 0
  %9959 = vmatmul.mubr.bf16.gmra.mxu0 %v9573
  %v9960 = vpop.f32.mrf.mxu0
  %v9961 = vadd.f32 %v9052, %v9960
  %v9962 = vpop.f32.mrf.mxu0
  %v9963 = vpop.f32.mrf.mxu0
  %v9964 = vadd.f32 %v9052, %v9963
  %v9965 = vpop.f32.mrf.mxu0
  %9966 = vmatprep.mubr.bf16.mxu0 0
  %9967 = vmatmul.mubr.bf16.gmra.mxu0 %v9574
  %v9968 = vpop.f32.mrf.mxu0
  %v9969 = vadd.f32 %v9052, %v9968
  %v9970 = vpop.f32.mrf.mxu0
  %v9971 = vpop.f32.mrf.mxu0
  %v9972 = vadd.f32 %v9052, %v9971
  %v9973 = vpop.f32.mrf.mxu0
  %9974 = vmatprep.mubr.bf16.mxu0 0
  %9975 = vmatmul.mubr.bf16.gmra.mxu0 %v9575
  %v9976 = vpop.f32.mrf.mxu0
  %v9977 = vadd.f32 %v9052, %v9976
  %v9978 = vpop.f32.mrf.mxu0
  %v9979 = vpop.f32.mrf.mxu0
  %v9980 = vadd.f32 %v9052, %v9979
  %v9981 = vpop.f32.mrf.mxu0
  %9982 = vmatprep.mubr.bf16.mxu0 0
  %9983 = vmatmul.mubr.bf16.gmra.mxu0 %v9576
  %v9984 = vpop.f32.mrf.mxu0
  %v9985 = vadd.f32 %v9052, %v9984
  %v9986 = vpop.f32.mrf.mxu0
  %v9987 = vpop.f32.mrf.mxu0
  %v9988 = vadd.f32 %v9052, %v9987
  %v9989 = vpop.f32.mrf.mxu0
  %9990 = vmatprep.mubr.bf16.mxu0 0
  %9991 = vmatmul.mubr.bf16.gmra.mxu0 %v9577
  %v9992 = vpop.f32.mrf.mxu0
  %v9993 = vadd.f32 %v9052, %v9992
  %v9994 = vpop.f32.mrf.mxu0
  %v9995 = vpop.f32.mrf.mxu0
  %v9996 = vadd.f32 %v9052, %v9995
  %v9997 = vpop.f32.mrf.mxu0
  %9998 = vmatprep.mubr.bf16.mxu0 0
  %9999 = vmatmul.mubr.bf16.gmra.mxu0 %v9578
  %v10000 = vpop.f32.mrf.mxu0
  %v10001 = vadd.f32 %v9052, %v10000
  %v10002 = vpop.f32.mrf.mxu0
  %v10003 = vpop.f32.mrf.mxu0
  %v10004 = vadd.f32 %v9052, %v10003
  %v10005 = vpop.f32.mrf.mxu0
  %10006 = vmatprep.mubr.bf16.mxu0 0
  %10007 = vmatmul.mubr.bf16.gmra.mxu0 %v9579
  %v10008 = vpop.f32.mrf.mxu0
  %v10009 = vadd.f32 %v9052, %v10008
  %v10010 = vpop.f32.mrf.mxu0
  %v10011 = vpop.f32.mrf.mxu0
  %v10012 = vadd.f32 %v9052, %v10011
  %v10013 = vpop.f32.mrf.mxu0
  %10014 = vmatprep.mubr.bf16.mxu0 0
  %10015 = vmatmul.mubr.bf16.gmra.mxu0 %v9580
  %v10016 = vpop.f32.mrf.mxu0
  %v10017 = vadd.f32 %v9052, %v10016
  %v10018 = vpop.f32.mrf.mxu0
  %v10019 = vpop.f32.mrf.mxu0
  %v10020 = vadd.f32 %v9052, %v10019
  %v10021 = vpop.f32.mrf.mxu0
  %10022 = vmatprep.mubr.bf16.mxu0 0
  %10023 = vmatmul.mubr.bf16.gmra.mxu0 %v9581
  %v10024 = vpop.f32.mrf.mxu0
  %v10025 = vadd.f32 %v9052, %v10024
  %v10026 = vpop.f32.mrf.mxu0
  %v10027 = vpop.f32.mrf.mxu0
  %v10028 = vadd.f32 %v9052, %v10027
  %v10029 = vpop.f32.mrf.mxu0
  %10030 = vmatprep.mubr.bf16.mxu0 0
  %10031 = vmatmul.mubr.bf16.gmra.mxu0 %v9582
  %v10032 = vpop.f32.mrf.mxu0
  %v10033 = vadd.f32 %v9052, %v10032
  %v10034 = vpop.f32.mrf.mxu0
  %v10035 = vpop.f32.mrf.mxu0
  %v10036 = vadd.f32 %v9052, %v10035
  %v10037 = vpop.f32.mrf.mxu0
  %10038 = vmatprep.mubr.bf16.mxu0 0
  %10039 = vmatmul.mubr.bf16.gmra.mxu0 %v9583
  %v10040 = vpop.f32.mrf.mxu0
  %v10041 = vadd.f32 %v9052, %v10040
  %v10042 = vpop.f32.mrf.mxu0
  %v10043 = vpop.f32.mrf.mxu0
  %v10044 = vadd.f32 %v9052, %v10043
  %v10045 = vpop.f32.mrf.mxu0
  %10046 = vmatprep.mubr.bf16.mxu0 0
  %10047 = vmatmul.mubr.bf16.gmra.mxu0 %v9584
  %v10048 = vpop.f32.mrf.mxu0
  %v10049 = vadd.f32 %v9052, %v10048
  %v10050 = vpop.f32.mrf.mxu0
  %v10051 = vpop.f32.mrf.mxu0
  %v10052 = vadd.f32 %v9052, %v10051
  %v10053 = vpop.f32.mrf.mxu0
  %10054 = vmatprep.mubr.bf16.mxu0 0
  %10055 = vmatmul.mubr.bf16.gmra.mxu0 %v9585
  %v10056 = vpop.f32.mrf.mxu0
  %v10057 = vadd.f32 %v9052, %v10056
  %v10058 = vpop.f32.mrf.mxu0
  %v10059 = vpop.f32.mrf.mxu0
  %v10060 = vadd.f32 %v9052, %v10059
  %v10061 = vpop.f32.mrf.mxu0
  %10062 = vmatprep.mubr.bf16.mxu0 0
  %10063 = vmatmul.mubr.bf16.gmra.mxu0 %v9586
  %v10064 = vpop.f32.mrf.mxu0
  %v10065 = vadd.f32 %v9052, %v10064
  %v10066 = vpop.f32.mrf.mxu0
  %v10067 = vpop.f32.mrf.mxu0
  %v10068 = vadd.f32 %v9052, %v10067
  %v10069 = vpop.f32.mrf.mxu0
  %10070 = vmatprep.mubr.bf16.mxu0 0
  %10071 = vmatmul.mubr.bf16.gmra.mxu0 %v9587
  %v10072 = vpop.f32.mrf.mxu0
  %v10073 = vadd.f32 %v9052, %v10072
  %v10074 = vpop.f32.mrf.mxu0
  %v10075 = vpop.f32.mrf.mxu0
  %v10076 = vadd.f32 %v9052, %v10075
  %v10077 = vpop.f32.mrf.mxu0
  %10078 = vmatprep.mubr.bf16.mxu0 0
  %10079 = vmatmul.mubr.bf16.gmra.mxu0 %v9588
  %v10080 = vpop.f32.mrf.mxu0
  %v10081 = vadd.f32 %v9052, %v10080
  %v10082 = vpop.f32.mrf.mxu0
  %v10083 = vpop.f32.mrf.mxu0
  %v10084 = vadd.f32 %v9052, %v10083
  %v10085 = vpop.f32.mrf.mxu0
  %10086 = vmatprep.mubr.bf16.mxu0 0
  %10087 = vmatmul.mubr.bf16.gmra.mxu0 %v9589
  %v10088 = vpop.f32.mrf.mxu0
  %v10089 = vadd.f32 %v9052, %v10088
  %v10090 = vpop.f32.mrf.mxu0
  %v10091 = vpop.f32.mrf.mxu0
  %v10092 = vadd.f32 %v9052, %v10091
  %v10093 = vpop.f32.mrf.mxu0
  %10094 = vmatprep.mubr.bf16.mxu0 0
  %10095 = vmatmul.mubr.bf16.gmra.mxu0 %v9590
  %v10096 = vpop.f32.mrf.mxu0
  %v10097 = vadd.f32 %v9052, %v10096
  %v10098 = vpop.f32.mrf.mxu0
  %v10099 = vpop.f32.mrf.mxu0
  %v10100 = vadd.f32 %v9052, %v10099
  %v10101 = vpop.f32.mrf.mxu0
  %10102 = vmatprep.mubr.bf16.mxu0 0
  %10103 = vmatmul.mubr.bf16.gmra.mxu0 %v9591
  %v10104 = vpop.f32.mrf.mxu0
  %v10105 = vadd.f32 %v9052, %v10104
  %v10106 = vpop.f32.mrf.mxu0
  %v10107 = vpop.f32.mrf.mxu0
  %v10108 = vadd.f32 %v9052, %v10107
  %v10109 = vpop.f32.mrf.mxu0
  %10110 = vmatprep.mubr.bf16.mxu0 0
  %10111 = vmatmul.mubr.bf16.gmra.mxu0 %v9592
  %v10112 = vpop.f32.mrf.mxu0
  %v10113 = vadd.f32 %v9052, %v10112
  %v10114 = vpop.f32.mrf.mxu0
  %v10115 = vpop.f32.mrf.mxu0
  %v10116 = vadd.f32 %v9052, %v10115
  %v10117 = vpop.f32.mrf.mxu0
  %10118 = vmatprep.mubr.bf16.mxu0 0
  %10119 = vmatmul.mubr.bf16.gmra.mxu0 %v9593
  %v10120 = vpop.f32.mrf.mxu0
  %v10121 = vadd.f32 %v9052, %v10120
  %v10122 = vpop.f32.mrf.mxu0
  %v10123 = vpop.f32.mrf.mxu0
  %v10124 = vadd.f32 %v9052, %v10123
  %v10125 = vpop.f32.mrf.mxu0
  %10126 = vmatprep.mubr.bf16.mxu0 0
  %10127 = vmatmul.mubr.bf16.gmra.mxu0 %v9594
  %v10128 = vpop.f32.mrf.mxu0
  %v10129 = vadd.f32 %v9052, %v10128
  %v10130 = vpop.f32.mrf.mxu0
  %v10131 = vpop.f32.mrf.mxu0
  %v10132 = vadd.f32 %v9052, %v10131
  %v10133 = vpop.f32.mrf.mxu0
  %10134 = vmatprep.mubr.bf16.mxu0 0
  %10135 = vmatmul.mubr.bf16.gmra.mxu0 %v9595
  %v10136 = vpop.f32.mrf.mxu0
  %v10137 = vadd.f32 %v9052, %v10136
  %v10138 = vpop.f32.mrf.mxu0
  %v10139 = vpop.f32.mrf.mxu0
  %v10140 = vadd.f32 %v9052, %v10139
  %v10141 = vpop.f32.mrf.mxu0
  %10142 = vmatprep.mubr.bf16.mxu0 0
  %10143 = vmatmul.mubr.bf16.gmra.mxu0 %v9596
  %v10144 = vpop.f32.mrf.mxu0
  %v10145 = vadd.f32 %v9052, %v10144
  %v10146 = vpop.f32.mrf.mxu0
  %v10147 = vpop.f32.mrf.mxu0
  %v10148 = vadd.f32 %v9052, %v10147
  %v10149 = vpop.f32.mrf.mxu0
  %10150 = vmatprep.mubr.bf16.mxu0 0
  %10151 = vmatmul.mubr.bf16.gmra.mxu0 %v9597
  %v10152 = vpop.f32.mrf.mxu0
  %v10153 = vadd.f32 %v9052, %v10152
  %v10154 = vpop.f32.mrf.mxu0
  %v10155 = vpop.f32.mrf.mxu0
  %v10156 = vadd.f32 %v9052, %v10155
  %v10157 = vpop.f32.mrf.mxu0
  %10158 = vmatprep.mubr.bf16.mxu0 0
  %10159 = vmatmul.mubr.bf16.gmra.mxu0 %v9598
  %v10160 = vpop.f32.mrf.mxu0
  %v10161 = vadd.f32 %v9052, %v10160
  %v10162 = vpop.f32.mrf.mxu0
  %v10163 = vpop.f32.mrf.mxu0
  %v10164 = vadd.f32 %v9052, %v10163
  %v10165 = vpop.f32.mrf.mxu0
  %10166 = vmatprep.mubr.bf16.mxu0 0
  %10167 = vmatmul.mubr.bf16.gmra.mxu0 %v9599
  %v10168 = vpop.f32.mrf.mxu0
  %v10169 = vadd.f32 %v9052, %v10168
  %v10170 = vpop.f32.mrf.mxu0
  %v10171 = vpop.f32.mrf.mxu0
  %v10172 = vadd.f32 %v9052, %v10171
  %v10173 = vpop.f32.mrf.mxu0
  %10174 = vmatprep.mubr.bf16.mxu0 0
  %10175 = vmatmul.mubr.bf16.gmra.mxu0 %v9600
  %v10176 = vpop.f32.mrf.mxu0
  %v10177 = vadd.f32 %v9052, %v10176
  %v10178 = vpop.f32.mrf.mxu0
  %v10179 = vpop.f32.mrf.mxu0
  %v10180 = vadd.f32 %v9052, %v10179
  %v10181 = vpop.f32.mrf.mxu0
  %10182 = vmatprep.mubr.bf16.mxu0 0
  %10183 = vmatmul.mubr.bf16.gmra.mxu0 %v9601
  %v10184 = vpop.f32.mrf.mxu0
  %v10185 = vadd.f32 %v9052, %v10184
  %v10186 = vpop.f32.mrf.mxu0
  %v10187 = vpop.f32.mrf.mxu0
  %v10188 = vadd.f32 %v9052, %v10187
  %v10189 = vpop.f32.mrf.mxu0
  %10190 = vmatprep.mubr.bf16.mxu0 0
  %10191 = vmatmul.mubr.bf16.gmra.mxu0 %v9602
  %v10192 = vpop.f32.mrf.mxu0
  %v10193 = vadd.f32 %v9052, %v10192
  %v10194 = vpop.f32.mrf.mxu0
  %v10195 = vpop.f32.mrf.mxu0
  %v10196 = vadd.f32 %v9052, %v10195
  %v10197 = vpop.f32.mrf.mxu0
  %10198 = vmatprep.mubr.bf16.mxu0 0
  %10199 = vmatmul.mubr.bf16.gmra.mxu0 %v9603
  %v10200 = vpop.f32.mrf.mxu0
  %v10201 = vadd.f32 %v9052, %v10200
  %v10202 = vpop.f32.mrf.mxu0
  %v10203 = vpop.f32.mrf.mxu0
  %v10204 = vadd.f32 %v9052, %v10203
  %v10205 = vpop.f32.mrf.mxu0
  %10206 = vmatprep.mubr.bf16.mxu0 0
  %10207 = vmatmul.mubr.bf16.gmra.mxu0 %v9604
  %v10208 = vpop.f32.mrf.mxu0
  %v10209 = vadd.f32 %v9052, %v10208
  %v10210 = vpop.f32.mrf.mxu0
  %v10211 = vpop.f32.mrf.mxu0
  %v10212 = vadd.f32 %v9052, %v10211
  %v10213 = vpop.f32.mrf.mxu0
  %10214 = vmatprep.mubr.bf16.mxu0 0
  %10215 = vmatmul.mubr.bf16.gmra.mxu0 %v9605
  %v10216 = vpop.f32.mrf.mxu0
  %v10217 = vadd.f32 %v9052, %v10216
  %v10218 = vpop.f32.mrf.mxu0
  %v10219 = vpop.f32.mrf.mxu0
  %v10220 = vadd.f32 %v9052, %v10219
  %v10221 = vpop.f32.mrf.mxu0
  %10222 = vmatprep.mubr.bf16.mxu0 0
  %10223 = vmatmul.mubr.bf16.gmra.mxu0 %v9606
  %v10224 = vpop.f32.mrf.mxu0
  %v10225 = vadd.f32 %v9052, %v10224
  %v10226 = vpop.f32.mrf.mxu0
  %v10227 = vpop.f32.mrf.mxu0
  %v10228 = vadd.f32 %v9052, %v10227
  %v10229 = vpop.f32.mrf.mxu0
  %10230 = vmatprep.mubr.bf16.mxu0 0
  %10231 = vmatmul.mubr.bf16.gmra.mxu0 %v9607
  %v10232 = vpop.f32.mrf.mxu0
  %v10233 = vadd.f32 %v9052, %v10232
  %v10234 = vpop.f32.mrf.mxu0
  %v10235 = vpop.f32.mrf.mxu0
  %v10236 = vadd.f32 %v9052, %v10235
  %v10237 = vpop.f32.mrf.mxu0
  %10238 = vmatprep.mubr.bf16.mxu0 0
  %10239 = vmatmul.mubr.bf16.gmra.mxu0 %v9608
  %v10240 = vpop.f32.mrf.mxu0
  %v10241 = vadd.f32 %v9052, %v10240
  %v10242 = vpop.f32.mrf.mxu0
  %v10243 = vpop.f32.mrf.mxu0
  %v10244 = vadd.f32 %v9052, %v10243
  %v10245 = vpop.f32.mrf.mxu0
  %10246 = vmatprep.mubr.bf16.mxu0 0
  %10247 = vmatmul.mubr.bf16.gmra.mxu0 %v9609
  %v10248 = vpop.f32.mrf.mxu0
  %v10249 = vadd.f32 %v9052, %v10248
  %v10250 = vpop.f32.mrf.mxu0
  %v10251 = vpop.f32.mrf.mxu0
  %v10252 = vadd.f32 %v9052, %v10251
  %v10253 = vpop.f32.mrf.mxu0
  %10254 = vmatprep.mubr.bf16.mxu0 0
  %10255 = vmatmul.mubr.bf16.gmra.mxu0 %v9610
  %v10256 = vpop.f32.mrf.mxu0
  %v10257 = vadd.f32 %v9052, %v10256
  %v10258 = vpop.f32.mrf.mxu0
  %v10259 = vpop.f32.mrf.mxu0
  %v10260 = vadd.f32 %v9052, %v10259
  %v10261 = vpop.f32.mrf.mxu0
  %10262 = vmatprep.mubr.bf16.mxu0 0
  %10263 = vmatmul.mubr.bf16.gmra.mxu0 %v9611
  %v10264 = vpop.f32.mrf.mxu0
  %v10265 = vadd.f32 %v9052, %v10264
  %v10266 = vpop.f32.mrf.mxu0
  %v10267 = vpop.f32.mrf.mxu0
  %v10268 = vadd.f32 %v9052, %v10267
  %v10269 = vpop.f32.mrf.mxu0
  %10270 = vmatprep.mubr.bf16.mxu0 0
  %10271 = vmatmul.mubr.bf16.gmra.mxu0 %v9612
  %v10272 = vpop.f32.mrf.mxu0
  %v10273 = vadd.f32 %v9052, %v10272
  %v10274 = vpop.f32.mrf.mxu0
  %v10275 = vpop.f32.mrf.mxu0
  %v10276 = vadd.f32 %v9052, %v10275
  %v10277 = vpop.f32.mrf.mxu0
  %10278 = vmatprep.mubr.bf16.mxu0 0
  %10279 = vmatmul.mubr.bf16.gmra.mxu0 %v9613
  %v10280 = vpop.f32.mrf.mxu0
  %v10281 = vadd.f32 %v9052, %v10280
  %v10282 = vpop.f32.mrf.mxu0
  %v10283 = vpop.f32.mrf.mxu0
  %v10284 = vadd.f32 %v9052, %v10283
  %v10285 = vpop.f32.mrf.mxu0
  %10286 = vmatprep.mubr.bf16.mxu0 0
  %10287 = vmatmul.mubr.bf16.gmra.mxu0 %v9614
  %v10288 = vpop.f32.mrf.mxu0
  %v10289 = vadd.f32 %v9052, %v10288
  %v10290 = vpop.f32.mrf.mxu0
  %v10291 = vpop.f32.mrf.mxu0
  %v10292 = vadd.f32 %v9052, %v10291
  %v10293 = vpop.f32.mrf.mxu0
  %10294 = vmatprep.mubr.bf16.mxu0 0
  %10295 = vmatmul.mubr.bf16.gmra.mxu0 %v9615
  %v10296 = vpop.f32.mrf.mxu0
  %v10297 = vadd.f32 %v9052, %v10296
  %v10298 = vpop.f32.mrf.mxu0
  %v10299 = vpop.f32.mrf.mxu0
  %v10300 = vadd.f32 %v9052, %v10299
  %v10301 = vpop.f32.mrf.mxu0
  %10302 = vmatprep.mubr.bf16.mxu0 0
  %10303 = vmatmul.mubr.bf16.gmra.mxu0 %v9616
  %v10304 = vpop.f32.mrf.mxu0
  %v10305 = vadd.f32 %v9052, %v10304
  %v10306 = vpop.f32.mrf.mxu0
  %v10307 = vpop.f32.mrf.mxu0
  %v10308 = vadd.f32 %v9052, %v10307
  %v10309 = vpop.f32.mrf.mxu0
  %10310 = vmatprep.mubr.bf16.mxu0 0
  %10311 = vmatmul.mubr.bf16.gmra.mxu0 %v9617
  %v10312 = vpop.f32.mrf.mxu0
  %v10313 = vadd.f32 %v9052, %v10312
  %v10314 = vpop.f32.mrf.mxu0
  %v10315 = vpop.f32.mrf.mxu0
  %v10316 = vadd.f32 %v9052, %v10315
  %v10317 = vpop.f32.mrf.mxu0
  %10318 = vmatprep.mubr.bf16.mxu0 0
  %10319 = vmatmul.mubr.bf16.gmra.mxu0 %v9618
  %v10320 = vpop.f32.mrf.mxu0
  %v10321 = vadd.f32 %v9052, %v10320
  %v10322 = vpop.f32.mrf.mxu0
  %v10323 = vpop.f32.mrf.mxu0
  %v10324 = vadd.f32 %v9052, %v10323
  %v10325 = vpop.f32.mrf.mxu0
  %10326 = vmatprep.mubr.bf16.mxu0 0
  %10327 = vmatmul.mubr.bf16.gmra.mxu0 %v9619
  %v10328 = vpop.f32.mrf.mxu0
  %v10329 = vadd.f32 %v9052, %v10328
  %v10330 = vpop.f32.mrf.mxu0
  %v10331 = vpop.f32.mrf.mxu0
  %v10332 = vadd.f32 %v9052, %v10331
  %v10333 = vpop.f32.mrf.mxu0
  %10334 = vmatprep.mubr.bf16.mxu0 0
  %10335 = vmatmul.mubr.bf16.gmra.mxu0 %v9620
  %v10336 = vpop.f32.mrf.mxu0
  %v10337 = vadd.f32 %v9052, %v10336
  %v10338 = vpop.f32.mrf.mxu0
  %v10339 = vpop.f32.mrf.mxu0
  %v10340 = vadd.f32 %v9052, %v10339
  %v10341 = vpop.f32.mrf.mxu0
  %10342 = vmatprep.mubr.bf16.mxu0 0
  %10343 = vmatmul.mubr.bf16.gmra.mxu0 %v9621
  %v10344 = vpop.f32.mrf.mxu0
  %v10345 = vadd.f32 %v9052, %v10344
  %v10346 = vpop.f32.mrf.mxu0
  %v10347 = vpop.f32.mrf.mxu0
  %v10348 = vadd.f32 %v9052, %v10347
  %v10349 = vpop.f32.mrf.mxu0
  %10350 = vmatprep.mubr.bf16.mxu0 0
  %10351 = vmatmul.mubr.bf16.gmra.mxu0 %v9622
  %v10352 = vpop.f32.mrf.mxu0
  %v10353 = vadd.f32 %v9052, %v10352
  %v10354 = vpop.f32.mrf.mxu0
  %v10355 = vpop.f32.mrf.mxu0
  %v10356 = vadd.f32 %v9052, %v10355
  %v10357 = vpop.f32.mrf.mxu0
  %10358 = vmatprep.mubr.bf16.mxu0 0
  %10359 = vmatmul.mubr.bf16.gmra.mxu0 %v9623
  %v10360 = vpop.f32.mrf.mxu0
  %v10361 = vadd.f32 %v9052, %v10360
  %v10362 = vpop.f32.mrf.mxu0
  %v10363 = vpop.f32.mrf.mxu0
  %v10364 = vadd.f32 %v9052, %v10363
  %v10365 = vpop.f32.mrf.mxu0
  %10366 = vmatprep.mubr.bf16.mxu0 0
  %10367 = vmatmul.mubr.bf16.gmra.mxu0 %v9624
  %v10368 = vpop.f32.mrf.mxu0
  %v10369 = vadd.f32 %v9052, %v10368
  %v10370 = vpop.f32.mrf.mxu0
  %v10371 = vpop.f32.mrf.mxu0
  %v10372 = vadd.f32 %v9052, %v10371
  %v10373 = vpop.f32.mrf.mxu0
  %10374 = vmatprep.mubr.bf16.mxu0 0
  %10375 = vmatmul.mubr.bf16.gmra.mxu0 %v9625
  %v10376 = vpop.f32.mrf.mxu0
  %v10377 = vadd.f32 %v9052, %v10376
  %v10378 = vpop.f32.mrf.mxu0
  %v10379 = vpop.f32.mrf.mxu0
  %v10380 = vadd.f32 %v9052, %v10379
  %v10381 = vpop.f32.mrf.mxu0
  %10382 = vmatprep.mubr.bf16.mxu0 0
  %10383 = vmatmul.mubr.bf16.gmra.mxu0 %v9626
  %v10384 = vpop.f32.mrf.mxu0
  %v10385 = vadd.f32 %v9052, %v10384
  %v10386 = vpop.f32.mrf.mxu0
  %v10387 = vpop.f32.mrf.mxu0
  %v10388 = vadd.f32 %v9052, %v10387
  %v10389 = vpop.f32.mrf.mxu0
  %10390 = vmatprep.mubr.bf16.mxu0 0
  %10391 = vmatmul.mubr.bf16.gmra.mxu0 %v9627
  %v10392 = vpop.f32.mrf.mxu0
  %v10393 = vadd.f32 %v9052, %v10392
  %v10394 = vpop.f32.mrf.mxu0
  %v10395 = vpop.f32.mrf.mxu0
  %v10396 = vadd.f32 %v9052, %v10395
  %v10397 = vpop.f32.mrf.mxu0
  %10398 = vmatprep.mubr.bf16.mxu0 0
  %10399 = vmatmul.mubr.bf16.gmra.mxu0 %v9628
  %v10400 = vpop.f32.mrf.mxu0
  %v10401 = vadd.f32 %v9052, %v10400
  %v10402 = vpop.f32.mrf.mxu0
  %v10403 = vpop.f32.mrf.mxu0
  %v10404 = vadd.f32 %v9052, %v10403
  %v10405 = vpop.f32.mrf.mxu0
  %10406 = vmatprep.mubr.bf16.mxu0 0
  %10407 = vmatmul.mubr.bf16.gmra.mxu0 %v9629
  %v10408 = vpop.f32.mrf.mxu0
  %v10409 = vadd.f32 %v9052, %v10408
  %v10410 = vpop.f32.mrf.mxu0
  %v10411 = vpop.f32.mrf.mxu0
  %v10412 = vadd.f32 %v9052, %v10411
  %v10413 = vpop.f32.mrf.mxu0
  %10414 = vmatprep.mubr.bf16.mxu0 0
  %10415 = vmatmul.mubr.bf16.gmra.mxu0 %v9630
  %v10416 = vpop.f32.mrf.mxu0
  %v10417 = vadd.f32 %v9052, %v10416
  %v10418 = vpop.f32.mrf.mxu0
  %v10419 = vpop.f32.mrf.mxu0
  %v10420 = vadd.f32 %v9052, %v10419
  %v10421 = vpop.f32.mrf.mxu0
  %10422 = vmatprep.mubr.bf16.mxu0 0
  %10423 = vmatmul.mubr.bf16.gmra.mxu0 %v9631
  %v10424 = vpop.f32.mrf.mxu0
  %v10425 = vadd.f32 %v9052, %v10424
  %v10426 = vpop.f32.mrf.mxu0
  %v10427 = vpop.f32.mrf.mxu0
  %v10428 = vadd.f32 %v9052, %v10427
  %v10429 = vpop.f32.mrf.mxu0
  %10430 = vmatprep.mubr.bf16.mxu0 0
  %10431 = vmatmul.mubr.bf16.gmra.mxu0 %v9632
  %v10432 = vpop.f32.mrf.mxu0
  %v10433 = vadd.f32 %v9052, %v10432
  %v10434 = vpop.f32.mrf.mxu0
  %v10435 = vpop.f32.mrf.mxu0
  %v10436 = vadd.f32 %v9052, %v10435
  %v10437 = vpop.f32.mrf.mxu0
  %10438 = vmatprep.mubr.bf16.mxu0 0
  %10439 = vmatmul.mubr.bf16.gmra.mxu0 %v9633
  %v10440 = vpop.f32.mrf.mxu0
  %v10441 = vadd.f32 %v9052, %v10440
  %v10442 = vpop.f32.mrf.mxu0
  %v10443 = vpop.f32.mrf.mxu0
  %v10444 = vadd.f32 %v9052, %v10443
  %v10445 = vpop.f32.mrf.mxu0
  %10446 = vmatprep.mubr.bf16.mxu0 0
  %10447 = vmatmul.mubr.bf16.gmra.mxu0 %v9634
  %v10448 = vpop.f32.mrf.mxu0
  %v10449 = vadd.f32 %v9052, %v10448
  %v10450 = vpop.f32.mrf.mxu0
  %v10451 = vpop.f32.mrf.mxu0
  %v10452 = vadd.f32 %v9052, %v10451
  %v10453 = vpop.f32.mrf.mxu0
  %10454 = vmatprep.mubr.bf16.mxu0 0
  %10455 = vmatmul.mubr.bf16.gmra.mxu0 %v9635
  %v10456 = vpop.f32.mrf.mxu0
  %v10457 = vadd.f32 %v9052, %v10456
  %v10458 = vpop.f32.mrf.mxu0
  %v10459 = vpop.f32.mrf.mxu0
  %v10460 = vadd.f32 %v9052, %v10459
  %v10461 = vpop.f32.mrf.mxu0
  %10462 = vmatprep.mubr.bf16.mxu0 0
  %10463 = vmatmul.mubr.bf16.gmra.mxu0 %v9636
  %v10464 = vpop.f32.mrf.mxu0
  %v10465 = vadd.f32 %v9052, %v10464
  %v10466 = vpop.f32.mrf.mxu0
  %v10467 = vpop.f32.mrf.mxu0
  %v10468 = vadd.f32 %v9052, %v10467
  %v10469 = vpop.f32.mrf.mxu0
  %10470 = vmatprep.mubr.bf16.mxu0 0
  %10471 = vmatmul.mubr.bf16.gmra.mxu0 %v9637
  %v10472 = vpop.f32.mrf.mxu0
  %v10473 = vadd.f32 %v9052, %v10472
  %v10474 = vpop.f32.mrf.mxu0
  %v10475 = vpop.f32.mrf.mxu0
  %v10476 = vadd.f32 %v9052, %v10475
  %v10477 = vpop.f32.mrf.mxu0
  %10478 = vmatprep.mubr.bf16.mxu0 0
  %10479 = vmatmul.mubr.bf16.gmra.mxu0 %v9638
  %v10480 = vpop.f32.mrf.mxu0
  %v10481 = vadd.f32 %v9052, %v10480
  %v10482 = vpop.f32.mrf.mxu0
  %v10483 = vpop.f32.mrf.mxu0
  %v10484 = vadd.f32 %v9052, %v10483
  %v10485 = vpop.f32.mrf.mxu0
  %10486 = vmatprep.mubr.bf16.mxu0 0
  %10487 = vmatmul.mubr.bf16.gmra.mxu0 %v9639
  %v10488 = vpop.f32.mrf.mxu0
  %v10489 = vadd.f32 %v9052, %v10488
  %v10490 = vpop.f32.mrf.mxu0
  %v10491 = vpop.f32.mrf.mxu0
  %v10492 = vadd.f32 %v9052, %v10491
  %v10493 = vpop.f32.mrf.mxu0
  %10494 = vmatprep.mubr.bf16.mxu0 0
  %10495 = vmatmul.mubr.bf16.gmra.mxu0 %v9640
  %v10496 = vpop.f32.mrf.mxu0
  %v10497 = vadd.f32 %v9052, %v10496
  %v10498 = vpop.f32.mrf.mxu0
  %v10499 = vpop.f32.mrf.mxu0
  %v10500 = vadd.f32 %v9052, %v10499
  %v10501 = vpop.f32.mrf.mxu0
  %10502 = vmatprep.mubr.bf16.mxu0 0
  %10503 = vmatmul.mubr.bf16.gmra.mxu0 %v9641
  %v10504 = vpop.f32.mrf.mxu0
  %v10505 = vadd.f32 %v9052, %v10504
  %v10506 = vpop.f32.mrf.mxu0
  %v10507 = vpop.f32.mrf.mxu0
  %v10508 = vadd.f32 %v9052, %v10507
  %v10509 = vpop.f32.mrf.mxu0
  %10510 = vmatprep.mubr.bf16.mxu0 0
  %10511 = vmatmul.mubr.bf16.gmra.mxu0 %v9642
  %v10512 = vpop.f32.mrf.mxu0
  %v10513 = vadd.f32 %v9052, %v10512
  %v10514 = vpop.f32.mrf.mxu0
  %v10515 = vpop.f32.mrf.mxu0
  %v10516 = vadd.f32 %v9052, %v10515
  %v10517 = vpop.f32.mrf.mxu0
  %10518 = vmatprep.mubr.bf16.mxu0 0
  %10519 = vmatmul.mubr.bf16.gmra.mxu0 %v9643
  %v10520 = vpop.f32.mrf.mxu0
  %v10521 = vadd.f32 %v9052, %v10520
  %v10522 = vpop.f32.mrf.mxu0
  %v10523 = vpop.f32.mrf.mxu0
  %v10524 = vadd.f32 %v9052, %v10523
  %v10525 = vpop.f32.mrf.mxu0
  %10526 = vmatprep.mubr.bf16.mxu0 0
  %10527 = vmatmul.mubr.bf16.gmra.mxu0 %v9644
  %v10528 = vpop.f32.mrf.mxu0
  %v10529 = vadd.f32 %v9052, %v10528
  %v10530 = vpop.f32.mrf.mxu0
  %v10531 = vpop.f32.mrf.mxu0
  %v10532 = vadd.f32 %v9052, %v10531
  %v10533 = vpop.f32.mrf.mxu0
  %10534 = vmatprep.mubr.bf16.mxu0 0
  %10535 = vmatmul.mubr.bf16.gmra.mxu0 %v9645
  %v10536 = vpop.f32.mrf.mxu0
  %v10537 = vadd.f32 %v9052, %v10536
  %v10538 = vpop.f32.mrf.mxu0
  %v10539 = vpop.f32.mrf.mxu0
  %v10540 = vadd.f32 %v9052, %v10539
  %v10541 = vpop.f32.mrf.mxu0
  %10542 = vmatprep.mubr.bf16.mxu0 0
  %10543 = vmatmul.mubr.bf16.gmra.mxu0 %v9646
  %v10544 = vpop.f32.mrf.mxu0
  %v10545 = vadd.f32 %v9052, %v10544
  %v10546 = vpop.f32.mrf.mxu0
  %v10547 = vpop.f32.mrf.mxu0
  %v10548 = vadd.f32 %v9052, %v10547
  %v10549 = vpop.f32.mrf.mxu0
  %10550 = vmatprep.mubr.bf16.mxu0 0
  %10551 = vmatmul.mubr.bf16.gmra.mxu0 %v9647
  %v10552 = vpop.f32.mrf.mxu0
  %v10553 = vadd.f32 %v9052, %v10552
  %v10554 = vpop.f32.mrf.mxu0
  %v10555 = vpop.f32.mrf.mxu0
  %v10556 = vadd.f32 %v9052, %v10555
  %v10557 = vpop.f32.mrf.mxu0
  %10558 = vmatprep.mubr.bf16.mxu0 0
  %10559 = vmatmul.mubr.bf16.gmra.mxu0 %v9648
  %v10560 = vpop.f32.mrf.mxu0
  %v10561 = vadd.f32 %v9052, %v10560
  %v10562 = vpop.f32.mrf.mxu0
  %v10563 = vpop.f32.mrf.mxu0
  %v10564 = vadd.f32 %v9052, %v10563
  %v10565 = vpop.f32.mrf.mxu0
  %10566 = vmatprep.mubr.bf16.mxu0 0
  %10567 = vmatmul.mubr.bf16.gmra.mxu0 %v9649
  %v10568 = vpop.f32.mrf.mxu0
  %v10569 = vadd.f32 %v9052, %v10568
  %v10570 = vpop.f32.mrf.mxu0
  %v10571 = vpop.f32.mrf.mxu0
  %v10572 = vadd.f32 %v9052, %v10571
  %v10573 = vpop.f32.mrf.mxu0
  %10574 = vmatprep.mubr.bf16.mxu0 0
  %10575 = vmatmul.mubr.bf16.gmra.mxu0 %v9650
  %v10576 = vpop.f32.mrf.mxu0
  %v10577 = vadd.f32 %v9052, %v10576
  %v10578 = vpop.f32.mrf.mxu0
  %v10579 = vpop.f32.mrf.mxu0
  %v10580 = vadd.f32 %v9052, %v10579
  %v10581 = vpop.f32.mrf.mxu0
  %10582 = vmatprep.mubr.bf16.mxu0 0
  %10583 = vmatmul.mubr.bf16.gmra.mxu0 %v9651
  %v10584 = vpop.f32.mrf.mxu0
  %v10585 = vadd.f32 %v9052, %v10584
  %v10586 = vpop.f32.mrf.mxu0
  %v10587 = vpop.f32.mrf.mxu0
  %v10588 = vadd.f32 %v9052, %v10587
  %v10589 = vpop.f32.mrf.mxu0
  %10590 = vmatprep.mubr.bf16.mxu0 0
  %10591 = vmatmul.mubr.bf16.gmra.mxu0 %v9652
  %v10592 = vpop.f32.mrf.mxu0
  %v10593 = vadd.f32 %v9052, %v10592
  %v10594 = vpop.f32.mrf.mxu0
  %v10595 = vpop.f32.mrf.mxu0
  %v10596 = vadd.f32 %v9052, %v10595
  %v10597 = vpop.f32.mrf.mxu0
  %10598 = vmatprep.mubr.bf16.mxu0 0
  %10599 = vmatmul.mubr.bf16.gmra.mxu0 %v9653
  %v10600 = vpop.f32.mrf.mxu0
  %v10601 = vadd.f32 %v9052, %v10600
  %v10602 = vpop.f32.mrf.mxu0
  %v10603 = vpop.f32.mrf.mxu0
  %v10604 = vadd.f32 %v9052, %v10603
  %v10605 = vpop.f32.mrf.mxu0
  %10606 = vmatprep.mubr.bf16.mxu0 0
  %10607 = vmatmul.mubr.bf16.gmra.mxu0 %v9654
  %v10608 = vpop.f32.mrf.mxu0
  %v10609 = vadd.f32 %v9052, %v10608
  %v10610 = vpop.f32.mrf.mxu0
  %v10611 = vpop.f32.mrf.mxu0
  %v10612 = vadd.f32 %v9052, %v10611
  %v10613 = vpop.f32.mrf.mxu0
  %10614 = vmatprep.mubr.bf16.mxu0 0
  %10615 = vmatmul.mubr.bf16.gmra.mxu0 %v9655
  %v10616 = vpop.f32.mrf.mxu0
  %v10617 = vadd.f32 %v9052, %v10616
  %v10618 = vpop.f32.mrf.mxu0
  %v10619 = vpop.f32.mrf.mxu0
  %v10620 = vadd.f32 %v9052, %v10619
  %v10621 = vpop.f32.mrf.mxu0
  %10622 = vmatprep.mubr.bf16.mxu0 0
  %10623 = vmatmul.mubr.bf16.gmra.mxu0 %v9656
  %v10624 = vpop.f32.mrf.mxu0
  %v10625 = vadd.f32 %v9052, %v10624
  %v10626 = vpop.f32.mrf.mxu0
  %v10627 = vpop.f32.mrf.mxu0
  %v10628 = vadd.f32 %v9052, %v10627
  %v10629 = vpop.f32.mrf.mxu0
  %10630 = vmatprep.mubr.bf16.mxu0 0
  %10631 = vmatmul.mubr.bf16.gmra.mxu0 %v9657
  %v10632 = vpop.f32.mrf.mxu0
  %v10633 = vadd.f32 %v9052, %v10632
  %v10634 = vpop.f32.mrf.mxu0
  %v10635 = vpop.f32.mrf.mxu0
  %v10636 = vadd.f32 %v9052, %v10635
  %v10637 = vpop.f32.mrf.mxu0
  %10638 = vmatprep.mubr.bf16.mxu0 0
  %10639 = vmatmul.mubr.bf16.gmra.mxu0 %v9658
  %v10640 = vpop.f32.mrf.mxu0
  %v10641 = vadd.f32 %v9052, %v10640
  %v10642 = vpop.f32.mrf.mxu0
  %v10643 = vpop.f32.mrf.mxu0
  %v10644 = vadd.f32 %v9052, %v10643
  %v10645 = vpop.f32.mrf.mxu0
  %10646 = vmatprep.mubr.bf16.mxu0 0
  %10647 = vmatmul.mubr.bf16.gmra.mxu0 %v9659
  %v10648 = vpop.f32.mrf.mxu0
  %v10649 = vadd.f32 %v9052, %v10648
  %v10650 = vpop.f32.mrf.mxu0
  %v10651 = vpop.f32.mrf.mxu0
  %v10652 = vadd.f32 %v9052, %v10651
  %v10653 = vpop.f32.mrf.mxu0
  %10654 = vmatprep.mubr.bf16.mxu0 0
  %10655 = vmatmul.mubr.bf16.gmra.mxu0 %v9660
  %v10656 = vpop.f32.mrf.mxu0
  %v10657 = vadd.f32 %v9052, %v10656
  %v10658 = vpop.f32.mrf.mxu0
  %v10659 = vpop.f32.mrf.mxu0
  %v10660 = vadd.f32 %v9052, %v10659
  %v10661 = vpop.f32.mrf.mxu0
  %10662 = vmatprep.mubr.bf16.mxu0 0
  %10663 = vmatmul.mubr.bf16.gmra.mxu0 %v9661
  %v10664 = vpop.f32.mrf.mxu0
  %v10665 = vadd.f32 %v9052, %v10664
  %v10666 = vpop.f32.mrf.mxu0
  %v10667 = vpop.f32.mrf.mxu0
  %v10668 = vadd.f32 %v9052, %v10667
  %v10669 = vpop.f32.mrf.mxu0
  %10670 = vmatprep.mubr.bf16.mxu0 0
  %10671 = vmatmul.mubr.bf16.gmra.mxu0 %v9662
  %v10672 = vpop.f32.mrf.mxu0
  %v10673 = vadd.f32 %v9052, %v10672
  %v10674 = vpop.f32.mrf.mxu0
  %v10675 = vpop.f32.mrf.mxu0
  %v10676 = vadd.f32 %v9052, %v10675
  %v10677 = vpop.f32.mrf.mxu0
  %10678 = vmatprep.mubr.bf16.mxu0 0
  %10679 = vmatmul.mubr.bf16.gmra.mxu0 %v9663
  %v10680 = vpop.f32.mrf.mxu0
  %v10681 = vadd.f32 %v9052, %v10680
  %v10682 = vpop.f32.mrf.mxu0
  %v10683 = vpop.f32.mrf.mxu0
  %v10684 = vadd.f32 %v9052, %v10683
  %v10685 = vpop.f32.mrf.mxu0
  %10686 = vmatprep.mubr.bf16.mxu0 0
  %10687 = vmatmul.mubr.bf16.gmra.mxu0 %v9664
  %v10688 = vpop.f32.mrf.mxu0
  %v10689 = vadd.f32 %v9052, %v10688
  %v10690 = vpop.f32.mrf.mxu0
  %v10691 = vpop.f32.mrf.mxu0
  %v10692 = vadd.f32 %v9052, %v10691
  %v10693 = vpop.f32.mrf.mxu0
  %10694 = vmatprep.mubr.bf16.mxu0 0
  %10695 = vmatmul.mubr.bf16.gmra.mxu0 %v9665
  %v10696 = vpop.f32.mrf.mxu0
  %v10697 = vadd.f32 %v9052, %v10696
  %v10698 = vpop.f32.mrf.mxu0
  %v10699 = vpop.f32.mrf.mxu0
  %v10700 = vadd.f32 %v9052, %v10699
  %v10701 = vpop.f32.mrf.mxu0
  %10702 = vmatprep.mubr.bf16.mxu0 0
  %10703 = vmatmul.mubr.bf16.gmra.mxu0 %v9666
  %v10704 = vpop.f32.mrf.mxu0
  %v10705 = vadd.f32 %v9052, %v10704
  %v10706 = vpop.f32.mrf.mxu0
  %v10707 = vpop.f32.mrf.mxu0
  %v10708 = vadd.f32 %v9052, %v10707
  %v10709 = vpop.f32.mrf.mxu0
  %10710 = vmatprep.mubr.bf16.mxu0 0
  %10711 = vmatmul.mubr.bf16.gmra.mxu0 %v9667
  %v10712 = vpop.f32.mrf.mxu0
  %v10713 = vadd.f32 %v9052, %v10712
  %v10714 = vpop.f32.mrf.mxu0
  %v10715 = vpop.f32.mrf.mxu0
  %v10716 = vadd.f32 %v9052, %v10715
  %v10717 = vpop.f32.mrf.mxu0
  %10718 = vmatprep.mubr.bf16.mxu0 0
  %10719 = vmatmul.mubr.bf16.gmra.mxu0 %v9668
  %v10720 = vpop.f32.mrf.mxu0
  %v10721 = vadd.f32 %v9052, %v10720
  %v10722 = vpop.f32.mrf.mxu0
  %v10723 = vpop.f32.mrf.mxu0
  %v10724 = vadd.f32 %v9052, %v10723
  %v10725 = vpop.f32.mrf.mxu0
  %10726 = vmatprep.mubr.bf16.mxu0 0
  %10727 = vmatmul.mubr.bf16.gmra.mxu0 %v9669
  %v10728 = vpop.f32.mrf.mxu0
  %v10729 = vadd.f32 %v9052, %v10728
  %v10730 = vpop.f32.mrf.mxu0
  %v10731 = vpop.f32.mrf.mxu0
  %v10732 = vadd.f32 %v9052, %v10731
  %v10733 = vpop.f32.mrf.mxu0
  %10734 = vmatprep.mubr.bf16.mxu0 0
  %10735 = vmatmul.mubr.bf16.gmra.mxu0 %v9670
  %v10736 = vpop.f32.mrf.mxu0
  %v10737 = vadd.f32 %v9052, %v10736
  %v10738 = vpop.f32.mrf.mxu0
  %v10739 = vpop.f32.mrf.mxu0
  %v10740 = vadd.f32 %v9052, %v10739
  %v10741 = vpop.f32.mrf.mxu0
  %10742 = vmatprep.mubr.bf16.mxu0 0
  %10743 = vmatmul.mubr.bf16.gmra.mxu0 %v9671
  %v10744 = vpop.f32.mrf.mxu0
  %v10745 = vadd.f32 %v9052, %v10744
  %v10746 = vpop.f32.mrf.mxu0
  %v10747 = vpop.f32.mrf.mxu0
  %v10748 = vadd.f32 %v9052, %v10747
  %v10749 = vpop.f32.mrf.mxu0
  %10750 = vmatprep.mubr.bf16.mxu0 0
  %10751 = vmatmul.mubr.bf16.gmra.mxu0 %v9672
  %v10752 = vpop.f32.mrf.mxu0
  %v10753 = vadd.f32 %v9052, %v10752
  %v10754 = vpop.f32.mrf.mxu0
  %v10755 = vpop.f32.mrf.mxu0
  %v10756 = vadd.f32 %v9052, %v10755
  %v10757 = vpop.f32.mrf.mxu0
  %10758 = vmatprep.mubr.bf16.mxu0 0
  %10759 = vmatmul.mubr.bf16.gmra.mxu0 %v9673
  %v10760 = vpop.f32.mrf.mxu0
  %v10761 = vadd.f32 %v9052, %v10760
  %v10762 = vpop.f32.mrf.mxu0
  %v10763 = vpop.f32.mrf.mxu0
  %v10764 = vadd.f32 %v9052, %v10763
  %v10765 = vpop.f32.mrf.mxu0
  %10766 = vmatprep.mubr.bf16.mxu0 0
  %10767 = vmatmul.mubr.bf16.gmra.mxu0 %v9674
  %v10768 = vpop.f32.mrf.mxu0
  %v10769 = vadd.f32 %v9052, %v10768
  %v10770 = vpop.f32.mrf.mxu0
  %v10771 = vpop.f32.mrf.mxu0
  %v10772 = vadd.f32 %v9052, %v10771
  %v10773 = vpop.f32.mrf.mxu0
  %10774 = vmatprep.mubr.bf16.mxu0 0
  %10775 = vmatmul.mubr.bf16.gmra.mxu0 %v9675
  %v10776 = vpop.f32.mrf.mxu0
  %v10777 = vadd.f32 %v9052, %v10776
  %v10778 = vpop.f32.mrf.mxu0
  %v10779 = vpop.f32.mrf.mxu0
  %v10780 = vadd.f32 %v9052, %v10779
  %v10781 = vpop.f32.mrf.mxu0
  %10782 = vmatprep.mubr.bf16.mxu0 0
  %10783 = vmatmul.mubr.bf16.gmra.mxu0 %v9676
  %v10784 = vpop.f32.mrf.mxu0
  %v10785 = vadd.f32 %v9052, %v10784
  %v10786 = vpop.f32.mrf.mxu0
  %v10787 = vpop.f32.mrf.mxu0
  %v10788 = vadd.f32 %v9052, %v10787
  %v10789 = vpop.f32.mrf.mxu0
  %10790 = vmatprep.mubr.bf16.mxu0 0
  %10791 = vmatmul.mubr.bf16.gmra.mxu0 %v9677
  %v10792 = vpop.f32.mrf.mxu0
  %v10793 = vadd.f32 %v9052, %v10792
  %v10794 = vpop.f32.mrf.mxu0
  %v10795 = vpop.f32.mrf.mxu0
  %v10796 = vadd.f32 %v9052, %v10795
  %v10797 = vpop.f32.mrf.mxu0
  %10798 = vmatprep.mubr.bf16.mxu0 0
  %10799 = vmatmul.mubr.bf16.gmra.mxu0 %v9678
  %v10800 = vpop.f32.mrf.mxu0
  %v10801 = vadd.f32 %v9052, %v10800
  %v10802 = vpop.f32.mrf.mxu0
  %v10803 = vpop.f32.mrf.mxu0
  %v10804 = vadd.f32 %v9052, %v10803
  %v10805 = vpop.f32.mrf.mxu0
  %10806 = vmatprep.mubr.bf16.mxu0 0
  %10807 = vmatmul.mubr.bf16.gmra.mxu0 %v9679
  %v10808 = vpop.f32.mrf.mxu0
  %v10809 = vadd.f32 %v9052, %v10808
  %v10810 = vpop.f32.mrf.mxu0
  %v10811 = vpop.f32.mrf.mxu0
  %v10812 = vadd.f32 %v9052, %v10811
  %v10813 = vpop.f32.mrf.mxu0
  %10814 = vmatprep.mubr.bf16.mxu0 0
  %10815 = vmatmul.mubr.bf16.gmra.mxu0 %v9680
  %v10816 = vpop.f32.mrf.mxu0
  %v10817 = vadd.f32 %v9052, %v10816
  %v10818 = vpop.f32.mrf.mxu0
  %v10819 = vpop.f32.mrf.mxu0
  %v10820 = vadd.f32 %v9052, %v10819
  %v10821 = vpop.f32.mrf.mxu0
  %10822 = vmatprep.mubr.bf16.mxu0 0
  %10823 = vmatmul.mubr.bf16.gmra.mxu0 %v9681
  %v10824 = vpop.f32.mrf.mxu0
  %v10825 = vadd.f32 %v9052, %v10824
  %v10826 = vpop.f32.mrf.mxu0
  %v10827 = vpop.f32.mrf.mxu0
  %v10828 = vadd.f32 %v9052, %v10827
  %v10829 = vpop.f32.mrf.mxu0
  %10830 = vmatprep.mubr.bf16.mxu0 0
  %10831 = vmatmul.mubr.bf16.gmra.mxu0 %v9682
  %v10832 = vpop.f32.mrf.mxu0
  %v10833 = vadd.f32 %v9052, %v10832
  %v10834 = vpop.f32.mrf.mxu0
  %v10835 = vpop.f32.mrf.mxu0
  %v10836 = vadd.f32 %v9052, %v10835
  %v10837 = vpop.f32.mrf.mxu0
  %10838 = vmatprep.mubr.bf16.mxu0 0
  %10839 = vmatmul.mubr.bf16.gmra.mxu0 %v9683
  %v10840 = vpop.f32.mrf.mxu0
  %v10841 = vadd.f32 %v9052, %v10840
  %v10842 = vpop.f32.mrf.mxu0
  %v10843 = vpop.f32.mrf.mxu0
  %v10844 = vadd.f32 %v9052, %v10843
  %v10845 = vpop.f32.mrf.mxu0
  %10846 = vmatprep.mubr.bf16.mxu0 0
  %10847 = vmatmul.mubr.bf16.gmra.mxu0 %v9684
  %v10848 = vpop.f32.mrf.mxu0
  %v10849 = vadd.f32 %v9052, %v10848
  %v10850 = vpop.f32.mrf.mxu0
  %v10851 = vpop.f32.mrf.mxu0
  %v10852 = vadd.f32 %v9052, %v10851
  %v10853 = vpop.f32.mrf.mxu0
  %10854 = vmatprep.mubr.bf16.mxu0 0
  %10855 = vmatmul.mubr.bf16.gmra.mxu0 %v9685
  %v10856 = vpop.f32.mrf.mxu0
  %v10857 = vadd.f32 %v9052, %v10856
  %v10858 = vpop.f32.mrf.mxu0
  %v10859 = vpop.f32.mrf.mxu0
  %v10860 = vadd.f32 %v9052, %v10859
  %v10861 = vpop.f32.mrf.mxu0
  %10862 = vmatprep.mubr.bf16.mxu0 0
  %10863 = vmatmul.mubr.bf16.gmra.mxu0 %v9686
  %v10864 = vpop.f32.mrf.mxu0
  %v10865 = vadd.f32 %v9052, %v10864
  %v10866 = vpop.f32.mrf.mxu0
  %v10867 = vpop.f32.mrf.mxu0
  %v10868 = vadd.f32 %v9052, %v10867
  %v10869 = vpop.f32.mrf.mxu0
  %10870 = vmatprep.mubr.bf16.mxu0 0
  %10871 = vmatmul.mubr.bf16.gmra.mxu0 %v9687
  %v10872 = vpop.f32.mrf.mxu0
  %v10873 = vadd.f32 %v9052, %v10872
  %v10874 = vpop.f32.mrf.mxu0
  %v10875 = vpop.f32.mrf.mxu0
  %v10876 = vadd.f32 %v9052, %v10875
  %v10877 = vpop.f32.mrf.mxu0
  %10878 = vmatprep.mubr.bf16.mxu0 0
  %10879 = vmatmul.mubr.bf16.gmra.mxu0 %v9688
  %v10880 = vpop.f32.mrf.mxu0
  %v10881 = vadd.f32 %v9052, %v10880
  %v10882 = vpop.f32.mrf.mxu0
  %v10883 = vpop.f32.mrf.mxu0
  %v10884 = vadd.f32 %v9052, %v10883
  %v10885 = vpop.f32.mrf.mxu0
  %10886 = vmatprep.mubr.bf16.mxu0 0
  %10887 = vmatmul.mubr.bf16.gmra.mxu0 %v9689
  %v10888 = vpop.f32.mrf.mxu0
  %v10889 = vadd.f32 %v9052, %v10888
  %v10890 = vpop.f32.mrf.mxu0
  %v10891 = vpop.f32.mrf.mxu0
  %v10892 = vadd.f32 %v9052, %v10891
  %v10893 = vpop.f32.mrf.mxu0
  %10894 = vmatprep.mubr.bf16.mxu0 0
  %10895 = vmatmul.mubr.bf16.gmra.mxu0 %v9690
  %v10896 = vpop.f32.mrf.mxu0
  %v10897 = vadd.f32 %v9052, %v10896
  %v10898 = vpop.f32.mrf.mxu0
  %v10899 = vpop.f32.mrf.mxu0
  %v10900 = vadd.f32 %v9052, %v10899
  %v10901 = vpop.f32.mrf.mxu0
  %10902 = vmatprep.mubr.bf16.mxu0 0
  %10903 = vmatmul.mubr.bf16.gmra.mxu0 %v9691
  %v10904 = vpop.f32.mrf.mxu0
  %v10905 = vadd.f32 %v9052, %v10904
  %v10906 = vpop.f32.mrf.mxu0
  %v10907 = vpop.f32.mrf.mxu0
  %v10908 = vadd.f32 %v9052, %v10907
  %v10909 = vpop.f32.mrf.mxu0
  %10910 = vmatprep.mubr.bf16.mxu0 0
  %10911 = vmatmul.mubr.bf16.gmra.mxu0 %v9692
  %v10912 = vpop.f32.mrf.mxu0
  %v10913 = vadd.f32 %v9052, %v10912
  %v10914 = vpop.f32.mrf.mxu0
  %v10915 = vpop.f32.mrf.mxu0
  %v10916 = vadd.f32 %v9052, %v10915
  %v10917 = vpop.f32.mrf.mxu0
  %10918 = vmatprep.mubr.bf16.mxu0 0
  %10919 = vmatmul.mubr.bf16.gmra.mxu0 %v9693
  %v10920 = vpop.f32.mrf.mxu0
  %v10921 = vadd.f32 %v9052, %v10920
  %v10922 = vpop.f32.mrf.mxu0
  %v10923 = vpop.f32.mrf.mxu0
  %v10924 = vadd.f32 %v9052, %v10923
  %v10925 = vpop.f32.mrf.mxu0
  %10926 = vdwg.mxu0
  %v10927 = vmax.f32 %v9905, 0.0
  %v10928 = vmax.f32 %v9908, 0.0
  %v10929 = vmax.f32 %v9913, 0.0
  %v10930 = vmax.f32 %v9916, 0.0
  %v10931 = vmax.f32 %v9921, 0.0
  %v10932 = vmax.f32 %v9924, 0.0
  %v10933 = vmax.f32 %v9929, 0.0
  %v10934 = vmax.f32 %v9932, 0.0
  %v10935 = vmax.f32 %v9937, 0.0
  %v10936 = vmax.f32 %v9940, 0.0
  %v10937 = vmax.f32 %v9945, 0.0
  %v10938 = vmax.f32 %v9948, 0.0
  %v10939 = vmax.f32 %v9953, 0.0
  %v10940 = vmax.f32 %v9956, 0.0
  %v10941 = vmax.f32 %v9961, 0.0
  %v10942 = vmax.f32 %v9964, 0.0
  %v10943 = vmax.f32 %v9969, 0.0
  %v10944 = vmax.f32 %v9972, 0.0
  %v10945 = vmax.f32 %v9977, 0.0
  %v10946 = vmax.f32 %v9980, 0.0
  %v10947 = vmax.f32 %v9985, 0.0
  %v10948 = vmax.f32 %v9988, 0.0
  %v10949 = vmax.f32 %v9993, 0.0
  %v10950 = vmax.f32 %v9996, 0.0
  %v10951 = vmax.f32 %v10001, 0.0
  %v10952 = vmax.f32 %v10004, 0.0
  %v10953 = vmax.f32 %v10009, 0.0
  %v10954 = vmax.f32 %v10012, 0.0
  %v10955 = vmax.f32 %v10017, 0.0
  %v10956 = vmax.f32 %v10020, 0.0
  %v10957 = vmax.f32 %v10025, 0.0
  %v10958 = vmax.f32 %v10028, 0.0
  %v10959 = vmax.f32 %v10033, 0.0
  %v10960 = vmax.f32 %v10036, 0.0
  %v10961 = vmax.f32 %v10041, 0.0
  %v10962 = vmax.f32 %v10044, 0.0
  %v10963 = vmax.f32 %v10049, 0.0
  %v10964 = vmax.f32 %v10052, 0.0
  %v10965 = vmax.f32 %v10057, 0.0
  %v10966 = vmax.f32 %v10060, 0.0
  %v10967 = vmax.f32 %v10065, 0.0
  %v10968 = vmax.f32 %v10068, 0.0
  %v10969 = vmax.f32 %v10073, 0.0
  %v10970 = vmax.f32 %v10076, 0.0
  %v10971 = vmax.f32 %v10081, 0.0
  %v10972 = vmax.f32 %v10084, 0.0
  %v10973 = vmax.f32 %v10089, 0.0
  %v10974 = vmax.f32 %v10092, 0.0
  %v10975 = vmax.f32 %v10097, 0.0
  %v10976 = vmax.f32 %v10100, 0.0
  %v10977 = vmax.f32 %v10105, 0.0
  %v10978 = vmax.f32 %v10108, 0.0
  %v10979 = vmax.f32 %v10113, 0.0
  %v10980 = vmax.f32 %v10116, 0.0
  %v10981 = vmax.f32 %v10121, 0.0
  %v10982 = vmax.f32 %v10124, 0.0
  %v10983 = vmax.f32 %v10129, 0.0
  %v10984 = vmax.f32 %v10132, 0.0
  %v10985 = vmax.f32 %v10137, 0.0
  %v10986 = vmax.f32 %v10140, 0.0
  %v10987 = vmax.f32 %v10145, 0.0
  %v10988 = vmax.f32 %v10148, 0.0
  %v10989 = vmax.f32 %v10153, 0.0
  %v10990 = vmax.f32 %v10156, 0.0
  %v10991 = vmax.f32 %v10161, 0.0
  %v10992 = vmax.f32 %v10164, 0.0
  %v10993 = vmax.f32 %v10169, 0.0
  %v10994 = vmax.f32 %v10172, 0.0
  %v10995 = vmax.f32 %v10177, 0.0
  %v10996 = vmax.f32 %v10180, 0.0
  %v10997 = vmax.f32 %v10185, 0.0
  %v10998 = vmax.f32 %v10188, 0.0
  %v10999 = vmax.f32 %v10193, 0.0
  %v11000 = vmax.f32 %v10196, 0.0
  %v11001 = vmax.f32 %v10201, 0.0
  %v11002 = vmax.f32 %v10204, 0.0
  %v11003 = vmax.f32 %v10209, 0.0
  %v11004 = vmax.f32 %v10212, 0.0
  %v11005 = vmax.f32 %v10217, 0.0
  %v11006 = vmax.f32 %v10220, 0.0
  %v11007 = vmax.f32 %v10225, 0.0
  %v11008 = vmax.f32 %v10228, 0.0
  %v11009 = vmax.f32 %v10233, 0.0
  %v11010 = vmax.f32 %v10236, 0.0
  %v11011 = vmax.f32 %v10241, 0.0
  %v11012 = vmax.f32 %v10244, 0.0
  %v11013 = vmax.f32 %v10249, 0.0
  %v11014 = vmax.f32 %v10252, 0.0
  %v11015 = vmax.f32 %v10257, 0.0
  %v11016 = vmax.f32 %v10260, 0.0
  %v11017 = vmax.f32 %v10265, 0.0
  %v11018 = vmax.f32 %v10268, 0.0
  %v11019 = vmax.f32 %v10273, 0.0
  %v11020 = vmax.f32 %v10276, 0.0
  %v11021 = vmax.f32 %v10281, 0.0
  %v11022 = vmax.f32 %v10284, 0.0
  %v11023 = vmax.f32 %v10289, 0.0
  %v11024 = vmax.f32 %v10292, 0.0
  %v11025 = vmax.f32 %v10297, 0.0
  %v11026 = vmax.f32 %v10300, 0.0
  %v11027 = vmax.f32 %v10305, 0.0
  %v11028 = vmax.f32 %v10308, 0.0
  %v11029 = vmax.f32 %v10313, 0.0
  %v11030 = vmax.f32 %v10316, 0.0
  %v11031 = vmax.f32 %v10321, 0.0
  %v11032 = vmax.f32 %v10324, 0.0
  %v11033 = vmax.f32 %v10329, 0.0
  %v11034 = vmax.f32 %v10332, 0.0
  %v11035 = vmax.f32 %v10337, 0.0
  %v11036 = vmax.f32 %v10340, 0.0
  %v11037 = vmax.f32 %v10345, 0.0
  %v11038 = vmax.f32 %v10348, 0.0
  %v11039 = vmax.f32 %v10353, 0.0
  %v11040 = vmax.f32 %v10356, 0.0
  %v11041 = vmax.f32 %v10361, 0.0
  %v11042 = vmax.f32 %v10364, 0.0
  %v11043 = vmax.f32 %v10369, 0.0
  %v11044 = vmax.f32 %v10372, 0.0
  %v11045 = vmax.f32 %v10377, 0.0
  %v11046 = vmax.f32 %v10380, 0.0
  %v11047 = vmax.f32 %v10385, 0.0
  %v11048 = vmax.f32 %v10388, 0.0
  %v11049 = vmax.f32 %v10393, 0.0
  %v11050 = vmax.f32 %v10396, 0.0
  %v11051 = vmax.f32 %v10401, 0.0
  %v11052 = vmax.f32 %v10404, 0.0
  %v11053 = vmax.f32 %v10409, 0.0
  %v11054 = vmax.f32 %v10412, 0.0
  %v11055 = vmax.f32 %v10417, 0.0
  %v11056 = vmax.f32 %v10420, 0.0
  %v11057 = vmax.f32 %v10425, 0.0
  %v11058 = vmax.f32 %v10428, 0.0
  %v11059 = vmax.f32 %v10433, 0.0
  %v11060 = vmax.f32 %v10436, 0.0
  %v11061 = vmax.f32 %v10441, 0.0
  %v11062 = vmax.f32 %v10444, 0.0
  %v11063 = vmax.f32 %v10449, 0.0
  %v11064 = vmax.f32 %v10452, 0.0
  %v11065 = vmax.f32 %v10457, 0.0
  %v11066 = vmax.f32 %v10460, 0.0
  %v11067 = vmax.f32 %v10465, 0.0
  %v11068 = vmax.f32 %v10468, 0.0
  %v11069 = vmax.f32 %v10473, 0.0
  %v11070 = vmax.f32 %v10476, 0.0
  %v11071 = vmax.f32 %v10481, 0.0
  %v11072 = vmax.f32 %v10484, 0.0
  %v11073 = vmax.f32 %v10489, 0.0
  %v11074 = vmax.f32 %v10492, 0.0
  %v11075 = vmax.f32 %v10497, 0.0
  %v11076 = vmax.f32 %v10500, 0.0
  %v11077 = vmax.f32 %v10505, 0.0
  %v11078 = vmax.f32 %v10508, 0.0
  %v11079 = vmax.f32 %v10513, 0.0
  %v11080 = vmax.f32 %v10516, 0.0
  %v11081 = vmax.f32 %v10521, 0.0
  %v11082 = vmax.f32 %v10524, 0.0
  %v11083 = vmax.f32 %v10529, 0.0
  %v11084 = vmax.f32 %v10532, 0.0
  %v11085 = vmax.f32 %v10537, 0.0
  %v11086 = vmax.f32 %v10540, 0.0
  %v11087 = vmax.f32 %v10545, 0.0
  %v11088 = vmax.f32 %v10548, 0.0
  %v11089 = vmax.f32 %v10553, 0.0
  %v11090 = vmax.f32 %v10556, 0.0
  %v11091 = vmax.f32 %v10561, 0.0
  %v11092 = vmax.f32 %v10564, 0.0
  %v11093 = vmax.f32 %v10569, 0.0
  %v11094 = vmax.f32 %v10572, 0.0
  %v11095 = vmax.f32 %v10577, 0.0
  %v11096 = vmax.f32 %v10580, 0.0
  %v11097 = vmax.f32 %v10585, 0.0
  %v11098 = vmax.f32 %v10588, 0.0
  %v11099 = vmax.f32 %v10593, 0.0
  %v11100 = vmax.f32 %v10596, 0.0
  %v11101 = vmax.f32 %v10601, 0.0
  %v11102 = vmax.f32 %v10604, 0.0
  %v11103 = vmax.f32 %v10609, 0.0
  %v11104 = vmax.f32 %v10612, 0.0
  %v11105 = vmax.f32 %v10617, 0.0
  %v11106 = vmax.f32 %v10620, 0.0
  %v11107 = vmax.f32 %v10625, 0.0
  %v11108 = vmax.f32 %v10628, 0.0
  %v11109 = vmax.f32 %v10633, 0.0
  %v11110 = vmax.f32 %v10636, 0.0
  %v11111 = vmax.f32 %v10641, 0.0
  %v11112 = vmax.f32 %v10644, 0.0
  %v11113 = vmax.f32 %v10649, 0.0
  %v11114 = vmax.f32 %v10652, 0.0
  %v11115 = vmax.f32 %v10657, 0.0
  %v11116 = vmax.f32 %v10660, 0.0
  %v11117 = vmax.f32 %v10665, 0.0
  %v11118 = vmax.f32 %v10668, 0.0
  %v11119 = vmax.f32 %v10673, 0.0
  %v11120 = vmax.f32 %v10676, 0.0
  %v11121 = vmax.f32 %v10681, 0.0
  %v11122 = vmax.f32 %v10684, 0.0
  %v11123 = vmax.f32 %v10689, 0.0
  %v11124 = vmax.f32 %v10692, 0.0
  %v11125 = vmax.f32 %v10697, 0.0
  %v11126 = vmax.f32 %v10700, 0.0
  %v11127 = vmax.f32 %v10705, 0.0
  %v11128 = vmax.f32 %v10708, 0.0
  %v11129 = vmax.f32 %v10713, 0.0
  %v11130 = vmax.f32 %v10716, 0.0
  %v11131 = vmax.f32 %v10721, 0.0
  %v11132 = vmax.f32 %v10724, 0.0
  %v11133 = vmax.f32 %v10729, 0.0
  %v11134 = vmax.f32 %v10732, 0.0
  %v11135 = vmax.f32 %v10737, 0.0
  %v11136 = vmax.f32 %v10740, 0.0
  %v11137 = vmax.f32 %v10745, 0.0
  %v11138 = vmax.f32 %v10748, 0.0
  %v11139 = vmax.f32 %v10753, 0.0
  %v11140 = vmax.f32 %v10756, 0.0
  %v11141 = vmax.f32 %v10761, 0.0
  %v11142 = vmax.f32 %v10764, 0.0
  %v11143 = vmax.f32 %v10769, 0.0
  %v11144 = vmax.f32 %v10772, 0.0
  %v11145 = vmax.f32 %v10777, 0.0
  %v11146 = vmax.f32 %v10780, 0.0
  %v11147 = vmax.f32 %v10785, 0.0
  %v11148 = vmax.f32 %v10788, 0.0
  %v11149 = vmax.f32 %v10793, 0.0
  %v11150 = vmax.f32 %v10796, 0.0
  %v11151 = vmax.f32 %v10801, 0.0
  %v11152 = vmax.f32 %v10804, 0.0
  %v11153 = vmax.f32 %v10809, 0.0
  %v11154 = vmax.f32 %v10812, 0.0
  %v11155 = vmax.f32 %v10817, 0.0
  %v11156 = vmax.f32 %v10820, 0.0
  %v11157 = vmax.f32 %v10825, 0.0
  %v11158 = vmax.f32 %v10828, 0.0
  %v11159 = vmax.f32 %v10833, 0.0
  %v11160 = vmax.f32 %v10836, 0.0
  %v11161 = vmax.f32 %v10841, 0.0
  %v11162 = vmax.f32 %v10844, 0.0
  %v11163 = vmax.f32 %v10849, 0.0
  %v11164 = vmax.f32 %v10852, 0.0
  %v11165 = vmax.f32 %v10857, 0.0
  %v11166 = vmax.f32 %v10860, 0.0
  %v11167 = vmax.f32 %v10865, 0.0
  %v11168 = vmax.f32 %v10868, 0.0
  %v11169 = vmax.f32 %v10873, 0.0
  %v11170 = vmax.f32 %v10876, 0.0
  %v11171 = vmax.f32 %v10881, 0.0
  %v11172 = vmax.f32 %v10884, 0.0
  %v11173 = vmax.f32 %v10889, 0.0
  %v11174 = vmax.f32 %v10892, 0.0
  %v11175 = vmax.f32 %v10897, 0.0
  %v11176 = vmax.f32 %v10900, 0.0
  %v11177 = vmax.f32 %v10905, 0.0
  %v11178 = vmax.f32 %v10908, 0.0
  %v11179 = vmax.f32 %v10913, 0.0
  %v11180 = vmax.f32 %v10916, 0.0
  %v11181 = vmax.f32 %v10921, 0.0
  %v11182 = vmax.f32 %v10924, 0.0
  %11183 = vmax.xlane.f32.xlu0 %v10927
  %v11184 = vpop.xlane.xlu0 %11183
  %11185 = vmax.xlane.f32.xlu0 %v10928
  %v11186 = vpop.xlane.xlu0 %11185
  %11187 = vmax.xlane.f32.xlu0 %v10929
  %v11188 = vpop.xlane.xlu0 %11187
  %11189 = vmax.xlane.f32.xlu0 %v10930
  %v11190 = vpop.xlane.xlu0 %11189
  %11191 = vmax.xlane.f32.xlu0 %v10931
  %v11192 = vpop.xlane.xlu0 %11191
  %11193 = vmax.xlane.f32.xlu0 %v10932
  %v11194 = vpop.xlane.xlu0 %11193
  %11195 = vmax.xlane.f32.xlu0 %v10933
  %v11196 = vpop.xlane.xlu0 %11195
  %11197 = vmax.xlane.f32.xlu0 %v10934
  %v11198 = vpop.xlane.xlu0 %11197
  %11199 = vmax.xlane.f32.xlu0 %v10935
  %v11200 = vpop.xlane.xlu0 %11199
  %11201 = vmax.xlane.f32.xlu0 %v10936
  %v11202 = vpop.xlane.xlu0 %11201
  %11203 = vmax.xlane.f32.xlu0 %v10937
  %v11204 = vpop.xlane.xlu0 %11203
  %11205 = vmax.xlane.f32.xlu0 %v10938
  %v11206 = vpop.xlane.xlu0 %11205
  %11207 = vmax.xlane.f32.xlu0 %v10939
  %v11208 = vpop.xlane.xlu0 %11207
  %11209 = vmax.xlane.f32.xlu0 %v10940
  %v11210 = vpop.xlane.xlu0 %11209
  %11211 = vmax.xlane.f32.xlu0 %v10941
  %v11212 = vpop.xlane.xlu0 %11211
  %11213 = vmax.xlane.f32.xlu0 %v10942
  %v11214 = vpop.xlane.xlu0 %11213
  %11215 = vmax.xlane.f32.xlu0 %v10943
  %v11216 = vpop.xlane.xlu0 %11215
  %11217 = vmax.xlane.f32.xlu0 %v10944
  %v11218 = vpop.xlane.xlu0 %11217
  %11219 = vmax.xlane.f32.xlu0 %v10945
  %v11220 = vpop.xlane.xlu0 %11219
  %11221 = vmax.xlane.f32.xlu0 %v10946
  %v11222 = vpop.xlane.xlu0 %11221
  %11223 = vmax.xlane.f32.xlu0 %v10947
  %v11224 = vpop.xlane.xlu0 %11223
  %11225 = vmax.xlane.f32.xlu0 %v10948
  %v11226 = vpop.xlane.xlu0 %11225
  %11227 = vmax.xlane.f32.xlu0 %v10949
  %v11228 = vpop.xlane.xlu0 %11227
  %11229 = vmax.xlane.f32.xlu0 %v10950
  %v11230 = vpop.xlane.xlu0 %11229
  %11231 = vmax.xlane.f32.xlu0 %v10951
  %v11232 = vpop.xlane.xlu0 %11231
  %11233 = vmax.xlane.f32.xlu0 %v10952
  %v11234 = vpop.xlane.xlu0 %11233
  %11235 = vmax.xlane.f32.xlu0 %v10953
  %v11236 = vpop.xlane.xlu0 %11235
  %11237 = vmax.xlane.f32.xlu0 %v10954
  %v11238 = vpop.xlane.xlu0 %11237
  %11239 = vmax.xlane.f32.xlu0 %v10955
  %v11240 = vpop.xlane.xlu0 %11239
  %11241 = vmax.xlane.f32.xlu0 %v10956
  %v11242 = vpop.xlane.xlu0 %11241
  %11243 = vmax.xlane.f32.xlu0 %v10957
  %v11244 = vpop.xlane.xlu0 %11243
  %11245 = vmax.xlane.f32.xlu0 %v10958
  %v11246 = vpop.xlane.xlu0 %11245
  %11247 = vmax.xlane.f32.xlu0 %v10959
  %v11248 = vpop.xlane.xlu0 %11247
  %11249 = vmax.xlane.f32.xlu0 %v10960
  %v11250 = vpop.xlane.xlu0 %11249
  %11251 = vmax.xlane.f32.xlu0 %v10961
  %v11252 = vpop.xlane.xlu0 %11251
  %11253 = vmax.xlane.f32.xlu0 %v10962
  %v11254 = vpop.xlane.xlu0 %11253
  %11255 = vmax.xlane.f32.xlu0 %v10963
  %v11256 = vpop.xlane.xlu0 %11255
  %11257 = vmax.xlane.f32.xlu0 %v10964
  %v11258 = vpop.xlane.xlu0 %11257
  %11259 = vmax.xlane.f32.xlu0 %v10965
  %v11260 = vpop.xlane.xlu0 %11259
  %11261 = vmax.xlane.f32.xlu0 %v10966
  %v11262 = vpop.xlane.xlu0 %11261
  %11263 = vmax.xlane.f32.xlu0 %v10967
  %v11264 = vpop.xlane.xlu0 %11263
  %11265 = vmax.xlane.f32.xlu0 %v10968
  %v11266 = vpop.xlane.xlu0 %11265
  %11267 = vmax.xlane.f32.xlu0 %v10969
  %v11268 = vpop.xlane.xlu0 %11267
  %11269 = vmax.xlane.f32.xlu0 %v10970
  %v11270 = vpop.xlane.xlu0 %11269
  %11271 = vmax.xlane.f32.xlu0 %v10971
  %v11272 = vpop.xlane.xlu0 %11271
  %11273 = vmax.xlane.f32.xlu0 %v10972
  %v11274 = vpop.xlane.xlu0 %11273
  %11275 = vmax.xlane.f32.xlu0 %v10973
  %v11276 = vpop.xlane.xlu0 %11275
  %11277 = vmax.xlane.f32.xlu0 %v10974
  %v11278 = vpop.xlane.xlu0 %11277
  %11279 = vmax.xlane.f32.xlu0 %v10975
  %v11280 = vpop.xlane.xlu0 %11279
  %11281 = vmax.xlane.f32.xlu0 %v10976
  %v11282 = vpop.xlane.xlu0 %11281
  %11283 = vmax.xlane.f32.xlu0 %v10977
  %v11284 = vpop.xlane.xlu0 %11283
  %11285 = vmax.xlane.f32.xlu0 %v10978
  %v11286 = vpop.xlane.xlu0 %11285
  %11287 = vmax.xlane.f32.xlu0 %v10979
  %v11288 = vpop.xlane.xlu0 %11287
  %11289 = vmax.xlane.f32.xlu0 %v10980
  %v11290 = vpop.xlane.xlu0 %11289
  %11291 = vmax.xlane.f32.xlu0 %v10981
  %v11292 = vpop.xlane.xlu0 %11291
  %11293 = vmax.xlane.f32.xlu0 %v10982
  %v11294 = vpop.xlane.xlu0 %11293
  %11295 = vmax.xlane.f32.xlu0 %v10983
  %v11296 = vpop.xlane.xlu0 %11295
  %11297 = vmax.xlane.f32.xlu0 %v10984
  %v11298 = vpop.xlane.xlu0 %11297
  %11299 = vmax.xlane.f32.xlu0 %v10985
  %v11300 = vpop.xlane.xlu0 %11299
  %11301 = vmax.xlane.f32.xlu0 %v10986
  %v11302 = vpop.xlane.xlu0 %11301
  %11303 = vmax.xlane.f32.xlu0 %v10987
  %v11304 = vpop.xlane.xlu0 %11303
  %11305 = vmax.xlane.f32.xlu0 %v10988
  %v11306 = vpop.xlane.xlu0 %11305
  %11307 = vmax.xlane.f32.xlu0 %v10989
  %v11308 = vpop.xlane.xlu0 %11307
  %11309 = vmax.xlane.f32.xlu0 %v10990
  %v11310 = vpop.xlane.xlu0 %11309
  %11311 = vmax.xlane.f32.xlu0 %v10991
  %v11312 = vpop.xlane.xlu0 %11311
  %11313 = vmax.xlane.f32.xlu0 %v10992
  %v11314 = vpop.xlane.xlu0 %11313
  %11315 = vmax.xlane.f32.xlu0 %v10993
  %v11316 = vpop.xlane.xlu0 %11315
  %11317 = vmax.xlane.f32.xlu0 %v10994
  %v11318 = vpop.xlane.xlu0 %11317
  %11319 = vmax.xlane.f32.xlu0 %v10995
  %v11320 = vpop.xlane.xlu0 %11319
  %11321 = vmax.xlane.f32.xlu0 %v10996
  %v11322 = vpop.xlane.xlu0 %11321
  %11323 = vmax.xlane.f32.xlu0 %v10997
  %v11324 = vpop.xlane.xlu0 %11323
  %11325 = vmax.xlane.f32.xlu0 %v10998
  %v11326 = vpop.xlane.xlu0 %11325
  %11327 = vmax.xlane.f32.xlu0 %v10999
  %v11328 = vpop.xlane.xlu0 %11327
  %11329 = vmax.xlane.f32.xlu0 %v11000
  %v11330 = vpop.xlane.xlu0 %11329
  %11331 = vmax.xlane.f32.xlu0 %v11001
  %v11332 = vpop.xlane.xlu0 %11331
  %11333 = vmax.xlane.f32.xlu0 %v11002
  %v11334 = vpop.xlane.xlu0 %11333
  %11335 = vmax.xlane.f32.xlu0 %v11003
  %v11336 = vpop.xlane.xlu0 %11335
  %11337 = vmax.xlane.f32.xlu0 %v11004
  %v11338 = vpop.xlane.xlu0 %11337
  %11339 = vmax.xlane.f32.xlu0 %v11005
  %v11340 = vpop.xlane.xlu0 %11339
  %11341 = vmax.xlane.f32.xlu0 %v11006
  %v11342 = vpop.xlane.xlu0 %11341
  %11343 = vmax.xlane.f32.xlu0 %v11007
  %v11344 = vpop.xlane.xlu0 %11343
  %11345 = vmax.xlane.f32.xlu0 %v11008
  %v11346 = vpop.xlane.xlu0 %11345
  %11347 = vmax.xlane.f32.xlu0 %v11009
  %v11348 = vpop.xlane.xlu0 %11347
  %11349 = vmax.xlane.f32.xlu0 %v11010
  %v11350 = vpop.xlane.xlu0 %11349
  %11351 = vmax.xlane.f32.xlu0 %v11011
  %v11352 = vpop.xlane.xlu0 %11351
  %11353 = vmax.xlane.f32.xlu0 %v11012
  %v11354 = vpop.xlane.xlu0 %11353
  %11355 = vmax.xlane.f32.xlu0 %v11013
  %v11356 = vpop.xlane.xlu0 %11355
  %11357 = vmax.xlane.f32.xlu0 %v11014
  %v11358 = vpop.xlane.xlu0 %11357
  %11359 = vmax.xlane.f32.xlu0 %v11015
  %v11360 = vpop.xlane.xlu0 %11359
  %11361 = vmax.xlane.f32.xlu0 %v11016
  %v11362 = vpop.xlane.xlu0 %11361
  %11363 = vmax.xlane.f32.xlu0 %v11017
  %v11364 = vpop.xlane.xlu0 %11363
  %11365 = vmax.xlane.f32.xlu0 %v11018
  %v11366 = vpop.xlane.xlu0 %11365
  %11367 = vmax.xlane.f32.xlu0 %v11019
  %v11368 = vpop.xlane.xlu0 %11367
  %11369 = vmax.xlane.f32.xlu0 %v11020
  %v11370 = vpop.xlane.xlu0 %11369
  %11371 = vmax.xlane.f32.xlu0 %v11021
  %v11372 = vpop.xlane.xlu0 %11371
  %11373 = vmax.xlane.f32.xlu0 %v11022
  %v11374 = vpop.xlane.xlu0 %11373
  %11375 = vmax.xlane.f32.xlu0 %v11023
  %v11376 = vpop.xlane.xlu0 %11375
  %11377 = vmax.xlane.f32.xlu0 %v11024
  %v11378 = vpop.xlane.xlu0 %11377
  %11379 = vmax.xlane.f32.xlu0 %v11025
  %v11380 = vpop.xlane.xlu0 %11379
  %11381 = vmax.xlane.f32.xlu0 %v11026
  %v11382 = vpop.xlane.xlu0 %11381
  %11383 = vmax.xlane.f32.xlu0 %v11027
  %v11384 = vpop.xlane.xlu0 %11383
  %11385 = vmax.xlane.f32.xlu0 %v11028
  %v11386 = vpop.xlane.xlu0 %11385
  %11387 = vmax.xlane.f32.xlu0 %v11029
  %v11388 = vpop.xlane.xlu0 %11387
  %11389 = vmax.xlane.f32.xlu0 %v11030
  %v11390 = vpop.xlane.xlu0 %11389
  %11391 = vmax.xlane.f32.xlu0 %v11031
  %v11392 = vpop.xlane.xlu0 %11391
  %11393 = vmax.xlane.f32.xlu0 %v11032
  %v11394 = vpop.xlane.xlu0 %11393
  %11395 = vmax.xlane.f32.xlu0 %v11033
  %v11396 = vpop.xlane.xlu0 %11395
  %11397 = vmax.xlane.f32.xlu0 %v11034
  %v11398 = vpop.xlane.xlu0 %11397
  %11399 = vmax.xlane.f32.xlu0 %v11035
  %v11400 = vpop.xlane.xlu0 %11399
  %11401 = vmax.xlane.f32.xlu0 %v11036
  %v11402 = vpop.xlane.xlu0 %11401
  %11403 = vmax.xlane.f32.xlu0 %v11037
  %v11404 = vpop.xlane.xlu0 %11403
  %11405 = vmax.xlane.f32.xlu0 %v11038
  %v11406 = vpop.xlane.xlu0 %11405
  %11407 = vmax.xlane.f32.xlu0 %v11039
  %v11408 = vpop.xlane.xlu0 %11407
  %11409 = vmax.xlane.f32.xlu0 %v11040
  %v11410 = vpop.xlane.xlu0 %11409
  %11411 = vmax.xlane.f32.xlu0 %v11041
  %v11412 = vpop.xlane.xlu0 %11411
  %11413 = vmax.xlane.f32.xlu0 %v11042
  %v11414 = vpop.xlane.xlu0 %11413
  %11415 = vmax.xlane.f32.xlu0 %v11043
  %v11416 = vpop.xlane.xlu0 %11415
  %11417 = vmax.xlane.f32.xlu0 %v11044
  %v11418 = vpop.xlane.xlu0 %11417
  %11419 = vmax.xlane.f32.xlu0 %v11045
  %v11420 = vpop.xlane.xlu0 %11419
  %11421 = vmax.xlane.f32.xlu0 %v11046
  %v11422 = vpop.xlane.xlu0 %11421
  %11423 = vmax.xlane.f32.xlu0 %v11047
  %v11424 = vpop.xlane.xlu0 %11423
  %11425 = vmax.xlane.f32.xlu0 %v11048
  %v11426 = vpop.xlane.xlu0 %11425
  %11427 = vmax.xlane.f32.xlu0 %v11049
  %v11428 = vpop.xlane.xlu0 %11427
  %11429 = vmax.xlane.f32.xlu0 %v11050
  %v11430 = vpop.xlane.xlu0 %11429
  %11431 = vmax.xlane.f32.xlu0 %v11051
  %v11432 = vpop.xlane.xlu0 %11431
  %11433 = vmax.xlane.f32.xlu0 %v11052
  %v11434 = vpop.xlane.xlu0 %11433
  %11435 = vmax.xlane.f32.xlu0 %v11053
  %v11436 = vpop.xlane.xlu0 %11435
  %11437 = vmax.xlane.f32.xlu0 %v11054
  %v11438 = vpop.xlane.xlu0 %11437
  %11439 = vmax.xlane.f32.xlu0 %v11055
  %v11440 = vpop.xlane.xlu0 %11439
  %11441 = vmax.xlane.f32.xlu0 %v11056
  %v11442 = vpop.xlane.xlu0 %11441
  %11443 = vmax.xlane.f32.xlu0 %v11057
  %v11444 = vpop.xlane.xlu0 %11443
  %11445 = vmax.xlane.f32.xlu0 %v11058
  %v11446 = vpop.xlane.xlu0 %11445
  %11447 = vmax.xlane.f32.xlu0 %v11059
  %v11448 = vpop.xlane.xlu0 %11447
  %11449 = vmax.xlane.f32.xlu0 %v11060
  %v11450 = vpop.xlane.xlu0 %11449
  %11451 = vmax.xlane.f32.xlu0 %v11061
  %v11452 = vpop.xlane.xlu0 %11451
  %11453 = vmax.xlane.f32.xlu0 %v11062
  %v11454 = vpop.xlane.xlu0 %11453
  %11455 = vmax.xlane.f32.xlu0 %v11063
  %v11456 = vpop.xlane.xlu0 %11455
  %11457 = vmax.xlane.f32.xlu0 %v11064
  %v11458 = vpop.xlane.xlu0 %11457
  %11459 = vmax.xlane.f32.xlu0 %v11065
  %v11460 = vpop.xlane.xlu0 %11459
  %11461 = vmax.xlane.f32.xlu0 %v11066
  %v11462 = vpop.xlane.xlu0 %11461
  %11463 = vmax.xlane.f32.xlu0 %v11067
  %v11464 = vpop.xlane.xlu0 %11463
  %11465 = vmax.xlane.f32.xlu0 %v11068
  %v11466 = vpop.xlane.xlu0 %11465
  %11467 = vmax.xlane.f32.xlu0 %v11069
  %v11468 = vpop.xlane.xlu0 %11467
  %11469 = vmax.xlane.f32.xlu0 %v11070
  %v11470 = vpop.xlane.xlu0 %11469
  %11471 = vmax.xlane.f32.xlu0 %v11071
  %v11472 = vpop.xlane.xlu0 %11471
  %11473 = vmax.xlane.f32.xlu0 %v11072
  %v11474 = vpop.xlane.xlu0 %11473
  %11475 = vmax.xlane.f32.xlu0 %v11073
  %v11476 = vpop.xlane.xlu0 %11475
  %11477 = vmax.xlane.f32.xlu0 %v11074
  %v11478 = vpop.xlane.xlu0 %11477
  %11479 = vmax.xlane.f32.xlu0 %v11075
  %v11480 = vpop.xlane.xlu0 %11479
  %11481 = vmax.xlane.f32.xlu0 %v11076
  %v11482 = vpop.xlane.xlu0 %11481
  %11483 = vmax.xlane.f32.xlu0 %v11077
  %v11484 = vpop.xlane.xlu0 %11483
  %11485 = vmax.xlane.f32.xlu0 %v11078
  %v11486 = vpop.xlane.xlu0 %11485
  %11487 = vmax.xlane.f32.xlu0 %v11079
  %v11488 = vpop.xlane.xlu0 %11487
  %11489 = vmax.xlane.f32.xlu0 %v11080
  %v11490 = vpop.xlane.xlu0 %11489
  %11491 = vmax.xlane.f32.xlu0 %v11081
  %v11492 = vpop.xlane.xlu0 %11491
  %11493 = vmax.xlane.f32.xlu0 %v11082
  %v11494 = vpop.xlane.xlu0 %11493
  %11495 = vmax.xlane.f32.xlu0 %v11083
  %v11496 = vpop.xlane.xlu0 %11495
  %11497 = vmax.xlane.f32.xlu0 %v11084
  %v11498 = vpop.xlane.xlu0 %11497
  %11499 = vmax.xlane.f32.xlu0 %v11085
  %v11500 = vpop.xlane.xlu0 %11499
  %11501 = vmax.xlane.f32.xlu0 %v11086
  %v11502 = vpop.xlane.xlu0 %11501
  %11503 = vmax.xlane.f32.xlu0 %v11087
  %v11504 = vpop.xlane.xlu0 %11503
  %11505 = vmax.xlane.f32.xlu0 %v11088
  %v11506 = vpop.xlane.xlu0 %11505
  %11507 = vmax.xlane.f32.xlu0 %v11089
  %v11508 = vpop.xlane.xlu0 %11507
  %11509 = vmax.xlane.f32.xlu0 %v11090
  %v11510 = vpop.xlane.xlu0 %11509
  %11511 = vmax.xlane.f32.xlu0 %v11091
  %v11512 = vpop.xlane.xlu0 %11511
  %11513 = vmax.xlane.f32.xlu0 %v11092
  %v11514 = vpop.xlane.xlu0 %11513
  %11515 = vmax.xlane.f32.xlu0 %v11093
  %v11516 = vpop.xlane.xlu0 %11515
  %11517 = vmax.xlane.f32.xlu0 %v11094
  %v11518 = vpop.xlane.xlu0 %11517
  %11519 = vmax.xlane.f32.xlu0 %v11095
  %v11520 = vpop.xlane.xlu0 %11519
  %11521 = vmax.xlane.f32.xlu0 %v11096
  %v11522 = vpop.xlane.xlu0 %11521
  %11523 = vmax.xlane.f32.xlu0 %v11097
  %v11524 = vpop.xlane.xlu0 %11523
  %11525 = vmax.xlane.f32.xlu0 %v11098
  %v11526 = vpop.xlane.xlu0 %11525
  %11527 = vmax.xlane.f32.xlu0 %v11099
  %v11528 = vpop.xlane.xlu0 %11527
  %11529 = vmax.xlane.f32.xlu0 %v11100
  %v11530 = vpop.xlane.xlu0 %11529
  %11531 = vmax.xlane.f32.xlu0 %v11101
  %v11532 = vpop.xlane.xlu0 %11531
  %11533 = vmax.xlane.f32.xlu0 %v11102
  %v11534 = vpop.xlane.xlu0 %11533
  %11535 = vmax.xlane.f32.xlu0 %v11103
  %v11536 = vpop.xlane.xlu0 %11535
  %11537 = vmax.xlane.f32.xlu0 %v11104
  %v11538 = vpop.xlane.xlu0 %11537
  %11539 = vmax.xlane.f32.xlu0 %v11105
  %v11540 = vpop.xlane.xlu0 %11539
  %11541 = vmax.xlane.f32.xlu0 %v11106
  %v11542 = vpop.xlane.xlu0 %11541
  %11543 = vmax.xlane.f32.xlu0 %v11107
  %v11544 = vpop.xlane.xlu0 %11543
  %11545 = vmax.xlane.f32.xlu0 %v11108
  %v11546 = vpop.xlane.xlu0 %11545
  %11547 = vmax.xlane.f32.xlu0 %v11109
  %v11548 = vpop.xlane.xlu0 %11547
  %11549 = vmax.xlane.f32.xlu0 %v11110
  %v11550 = vpop.xlane.xlu0 %11549
  %11551 = vmax.xlane.f32.xlu0 %v11111
  %v11552 = vpop.xlane.xlu0 %11551
  %11553 = vmax.xlane.f32.xlu0 %v11112
  %v11554 = vpop.xlane.xlu0 %11553
  %11555 = vmax.xlane.f32.xlu0 %v11113
  %v11556 = vpop.xlane.xlu0 %11555
  %11557 = vmax.xlane.f32.xlu0 %v11114
  %v11558 = vpop.xlane.xlu0 %11557
  %11559 = vmax.xlane.f32.xlu0 %v11115
  %v11560 = vpop.xlane.xlu0 %11559
  %11561 = vmax.xlane.f32.xlu0 %v11116
  %v11562 = vpop.xlane.xlu0 %11561
  %11563 = vmax.xlane.f32.xlu0 %v11117
  %v11564 = vpop.xlane.xlu0 %11563
  %11565 = vmax.xlane.f32.xlu0 %v11118
  %v11566 = vpop.xlane.xlu0 %11565
  %11567 = vmax.xlane.f32.xlu0 %v11119
  %v11568 = vpop.xlane.xlu0 %11567
  %11569 = vmax.xlane.f32.xlu0 %v11120
  %v11570 = vpop.xlane.xlu0 %11569
  %11571 = vmax.xlane.f32.xlu0 %v11121
  %v11572 = vpop.xlane.xlu0 %11571
  %11573 = vmax.xlane.f32.xlu0 %v11122
  %v11574 = vpop.xlane.xlu0 %11573
  %11575 = vmax.xlane.f32.xlu0 %v11123
  %v11576 = vpop.xlane.xlu0 %11575
  %11577 = vmax.xlane.f32.xlu0 %v11124
  %v11578 = vpop.xlane.xlu0 %11577
  %11579 = vmax.xlane.f32.xlu0 %v11125
  %v11580 = vpop.xlane.xlu0 %11579
  %11581 = vmax.xlane.f32.xlu0 %v11126
  %v11582 = vpop.xlane.xlu0 %11581
  %11583 = vmax.xlane.f32.xlu0 %v11127
  %v11584 = vpop.xlane.xlu0 %11583
  %11585 = vmax.xlane.f32.xlu0 %v11128
  %v11586 = vpop.xlane.xlu0 %11585
  %11587 = vmax.xlane.f32.xlu0 %v11129
  %v11588 = vpop.xlane.xlu0 %11587
  %11589 = vmax.xlane.f32.xlu0 %v11130
  %v11590 = vpop.xlane.xlu0 %11589
  %11591 = vmax.xlane.f32.xlu0 %v11131
  %v11592 = vpop.xlane.xlu0 %11591
  %11593 = vmax.xlane.f32.xlu0 %v11132
  %v11594 = vpop.xlane.xlu0 %11593
  %11595 = vmax.xlane.f32.xlu0 %v11133
  %v11596 = vpop.xlane.xlu0 %11595
  %11597 = vmax.xlane.f32.xlu0 %v11134
  %v11598 = vpop.xlane.xlu0 %11597
  %11599 = vmax.xlane.f32.xlu0 %v11135
  %v11600 = vpop.xlane.xlu0 %11599
  %11601 = vmax.xlane.f32.xlu0 %v11136
  %v11602 = vpop.xlane.xlu0 %11601
  %11603 = vmax.xlane.f32.xlu0 %v11137
  %v11604 = vpop.xlane.xlu0 %11603
  %11605 = vmax.xlane.f32.xlu0 %v11138
  %v11606 = vpop.xlane.xlu0 %11605
  %11607 = vmax.xlane.f32.xlu0 %v11139
  %v11608 = vpop.xlane.xlu0 %11607
  %11609 = vmax.xlane.f32.xlu0 %v11140
  %v11610 = vpop.xlane.xlu0 %11609
  %11611 = vmax.xlane.f32.xlu0 %v11141
  %v11612 = vpop.xlane.xlu0 %11611
  %11613 = vmax.xlane.f32.xlu0 %v11142
  %v11614 = vpop.xlane.xlu0 %11613
  %11615 = vmax.xlane.f32.xlu0 %v11143
  %v11616 = vpop.xlane.xlu0 %11615
  %11617 = vmax.xlane.f32.xlu0 %v11144
  %v11618 = vpop.xlane.xlu0 %11617
  %11619 = vmax.xlane.f32.xlu0 %v11145
  %v11620 = vpop.xlane.xlu0 %11619
  %11621 = vmax.xlane.f32.xlu0 %v11146
  %v11622 = vpop.xlane.xlu0 %11621
  %11623 = vmax.xlane.f32.xlu0 %v11147
  %v11624 = vpop.xlane.xlu0 %11623
  %11625 = vmax.xlane.f32.xlu0 %v11148
  %v11626 = vpop.xlane.xlu0 %11625
  %11627 = vmax.xlane.f32.xlu0 %v11149
  %v11628 = vpop.xlane.xlu0 %11627
  %11629 = vmax.xlane.f32.xlu0 %v11150
  %v11630 = vpop.xlane.xlu0 %11629
  %11631 = vmax.xlane.f32.xlu0 %v11151
  %v11632 = vpop.xlane.xlu0 %11631
  %11633 = vmax.xlane.f32.xlu0 %v11152
  %v11634 = vpop.xlane.xlu0 %11633
  %11635 = vmax.xlane.f32.xlu0 %v11153
  %v11636 = vpop.xlane.xlu0 %11635
  %11637 = vmax.xlane.f32.xlu0 %v11154
  %v11638 = vpop.xlane.xlu0 %11637
  %11639 = vmax.xlane.f32.xlu0 %v11155
  %v11640 = vpop.xlane.xlu0 %11639
  %11641 = vmax.xlane.f32.xlu0 %v11156
  %v11642 = vpop.xlane.xlu0 %11641
  %11643 = vmax.xlane.f32.xlu0 %v11157
  %v11644 = vpop.xlane.xlu0 %11643
  %11645 = vmax.xlane.f32.xlu0 %v11158
  %v11646 = vpop.xlane.xlu0 %11645
  %11647 = vmax.xlane.f32.xlu0 %v11159
  %v11648 = vpop.xlane.xlu0 %11647
  %11649 = vmax.xlane.f32.xlu0 %v11160
  %v11650 = vpop.xlane.xlu0 %11649
  %11651 = vmax.xlane.f32.xlu0 %v11161
  %v11652 = vpop.xlane.xlu0 %11651
  %11653 = vmax.xlane.f32.xlu0 %v11162
  %v11654 = vpop.xlane.xlu0 %11653
  %11655 = vmax.xlane.f32.xlu0 %v11163
  %v11656 = vpop.xlane.xlu0 %11655
  %11657 = vmax.xlane.f32.xlu0 %v11164
  %v11658 = vpop.xlane.xlu0 %11657
  %11659 = vmax.xlane.f32.xlu0 %v11165
  %v11660 = vpop.xlane.xlu0 %11659
  %11661 = vmax.xlane.f32.xlu0 %v11166
  %v11662 = vpop.xlane.xlu0 %11661
  %11663 = vmax.xlane.f32.xlu0 %v11167
  %v11664 = vpop.xlane.xlu0 %11663
  %11665 = vmax.xlane.f32.xlu0 %v11168
  %v11666 = vpop.xlane.xlu0 %11665
  %11667 = vmax.xlane.f32.xlu0 %v11169
  %v11668 = vpop.xlane.xlu0 %11667
  %11669 = vmax.xlane.f32.xlu0 %v11170
  %v11670 = vpop.xlane.xlu0 %11669
  %11671 = vmax.xlane.f32.xlu0 %v11171
  %v11672 = vpop.xlane.xlu0 %11671
  %11673 = vmax.xlane.f32.xlu0 %v11172
  %v11674 = vpop.xlane.xlu0 %11673
  %11675 = vmax.xlane.f32.xlu0 %v11173
  %v11676 = vpop.xlane.xlu0 %11675
  %11677 = vmax.xlane.f32.xlu0 %v11174
  %v11678 = vpop.xlane.xlu0 %11677
  %11679 = vmax.xlane.f32.xlu0 %v11175
  %v11680 = vpop.xlane.xlu0 %11679
  %11681 = vmax.xlane.f32.xlu0 %v11176
  %v11682 = vpop.xlane.xlu0 %11681
  %11683 = vmax.xlane.f32.xlu0 %v11177
  %v11684 = vpop.xlane.xlu0 %11683
  %11685 = vmax.xlane.f32.xlu0 %v11178
  %v11686 = vpop.xlane.xlu0 %11685
  %11687 = vmax.xlane.f32.xlu0 %v11179
  %v11688 = vpop.xlane.xlu0 %11687
  %11689 = vmax.xlane.f32.xlu0 %v11180
  %v11690 = vpop.xlane.xlu0 %11689
  %11691 = vmax.xlane.f32.xlu0 %v11181
  %v11692 = vpop.xlane.xlu0 %11691
  %11693 = vmax.xlane.f32.xlu0 %v11182
  %v11694 = vpop.xlane.xlu0 %11693
  %v11695 = vld [vmem:[%s3] sm:$0x1]
  %v11697 = vlaneseq
  %v11698 = vshrl.u32 %v11697, 7
  %v11699 = vsub.s32 0, %v11698
  %v11700 = vrot.slane %v11695, %v11699
  %11702 = vbcast.lane.b32.xlu0 %v11700, 256
  %v11703 = vpop.permute.xlu0 %11702
  %s11705 = sor.u32 256, 8
  %11706 = vbcast.lane.b32.xlu0 %v11700, %s11705
  %v11707 = vpop.permute.xlu0 %11706
  %s11709 = sor.u32 256, 16
  %11710 = vbcast.lane.b32.xlu0 %v11700, %s11709
  %v11711 = vpop.permute.xlu0 %11710
  %s11713 = sor.u32 256, 24
  %11714 = vbcast.lane.b32.xlu0 %v11700, %s11713
  %v11715 = vpop.permute.xlu0 %11714
  %s11717 = sor.u32 256, 32
  %11718 = vbcast.lane.b32.xlu0 %v11700, %s11717
  %v11719 = vpop.permute.xlu0 %11718
  %s11721 = sor.u32 256, 40
  %11722 = vbcast.lane.b32.xlu0 %v11700, %s11721
  %v11723 = vpop.permute.xlu0 %11722
  %s11725 = sor.u32 256, 48
  %11726 = vbcast.lane.b32.xlu0 %v11700, %s11725
  %v11727 = vpop.permute.xlu0 %11726
  %s11729 = sor.u32 256, 56
  %11730 = vbcast.lane.b32.xlu0 %v11700, %s11729
  %v11731 = vpop.permute.xlu0 %11730
  %s11733 = sor.u32 256, 64
  %11734 = vbcast.lane.b32.xlu0 %v11700, %s11733
  %v11735 = vpop.permute.xlu0 %11734
  %s11737 = sor.u32 256, 72
  %11738 = vbcast.lane.b32.xlu0 %v11700, %s11737
  %v11739 = vpop.permute.xlu0 %11738
  %s11741 = sor.u32 256, 80
  %11742 = vbcast.lane.b32.xlu0 %v11700, %s11741
  %v11743 = vpop.permute.xlu0 %11742
  %s11745 = sor.u32 256, 88
  %11746 = vbcast.lane.b32.xlu0 %v11700, %s11745
  %v11747 = vpop.permute.xlu0 %11746
  %s11749 = sor.u32 256, 96
  %11750 = vbcast.lane.b32.xlu0 %v11700, %s11749
  %v11751 = vpop.permute.xlu0 %11750
  %s11753 = sor.u32 256, 104
  %11754 = vbcast.lane.b32.xlu0 %v11700, %s11753
  %v11755 = vpop.permute.xlu0 %11754
  %s11757 = sor.u32 256, 112
  %11758 = vbcast.lane.b32.xlu0 %v11700, %s11757
  %v11759 = vpop.permute.xlu0 %11758
  %s11761 = sor.u32 256, 120
  %11762 = vbcast.lane.b32.xlu0 %v11700, %s11761
  %v11763 = vpop.permute.xlu0 %11762
  %v11780 = vmul.f32 %v11184, %v11703
  %v11781 = vmul.f32 %v11186, %v11707
  %v11782 = vmul.f32 %v11188, %v11711
  %v11783 = vmul.f32 %v11190, %v11715
  %v11784 = vmul.f32 %v11192, %v11719
  %v11785 = vmul.f32 %v11194, %v11723
  %v11786 = vmul.f32 %v11196, %v11727
  %v11787 = vmul.f32 %v11198, %v11731
  %v11788 = vmul.f32 %v11200, %v11735
  %v11789 = vmul.f32 %v11202, %v11739
  %v11790 = vmul.f32 %v11204, %v11743
  %v11791 = vmul.f32 %v11206, %v11747
  %v11792 = vmul.f32 %v11208, %v11751
  %v11793 = vmul.f32 %v11210, %v11755
  %v11794 = vmul.f32 %v11212, %v11759
  %v11795 = vmul.f32 %v11214, %v11763
  %v11796 = vmul.f32 %v11216, %v11703
  %v11797 = vmul.f32 %v11218, %v11707
  %v11798 = vmul.f32 %v11220, %v11711
  %v11799 = vmul.f32 %v11222, %v11715
  %v11800 = vmul.f32 %v11224, %v11719
  %v11801 = vmul.f32 %v11226, %v11723
  %v11802 = vmul.f32 %v11228, %v11727
  %v11803 = vmul.f32 %v11230, %v11731
  %v11804 = vmul.f32 %v11232, %v11735
  %v11805 = vmul.f32 %v11234, %v11739
  %v11806 = vmul.f32 %v11236, %v11743
  %v11807 = vmul.f32 %v11238, %v11747
  %v11808 = vmul.f32 %v11240, %v11751
  %v11809 = vmul.f32 %v11242, %v11755
  %v11810 = vmul.f32 %v11244, %v11759
  %v11811 = vmul.f32 %v11246, %v11763
  %v11812 = vmul.f32 %v11248, %v11703
  %v11813 = vmul.f32 %v11250, %v11707
  %v11814 = vmul.f32 %v11252, %v11711
  %v11815 = vmul.f32 %v11254, %v11715
  %v11816 = vmul.f32 %v11256, %v11719
  %v11817 = vmul.f32 %v11258, %v11723
  %v11818 = vmul.f32 %v11260, %v11727
  %v11819 = vmul.f32 %v11262, %v11731
  %v11820 = vmul.f32 %v11264, %v11735
  %v11821 = vmul.f32 %v11266, %v11739
  %v11822 = vmul.f32 %v11268, %v11743
  %v11823 = vmul.f32 %v11270, %v11747
  %v11824 = vmul.f32 %v11272, %v11751
  %v11825 = vmul.f32 %v11274, %v11755
  %v11826 = vmul.f32 %v11276, %v11759
  %v11827 = vmul.f32 %v11278, %v11763
  %v11828 = vmul.f32 %v11280, %v11703
  %v11829 = vmul.f32 %v11282, %v11707
  %v11830 = vmul.f32 %v11284, %v11711
  %v11831 = vmul.f32 %v11286, %v11715
  %v11832 = vmul.f32 %v11288, %v11719
  %v11833 = vmul.f32 %v11290, %v11723
  %v11834 = vmul.f32 %v11292, %v11727
  %v11835 = vmul.f32 %v11294, %v11731
  %v11836 = vmul.f32 %v11296, %v11735
  %v11837 = vmul.f32 %v11298, %v11739
  %v11838 = vmul.f32 %v11300, %v11743
  %v11839 = vmul.f32 %v11302, %v11747
  %v11840 = vmul.f32 %v11304, %v11751
  %v11841 = vmul.f32 %v11306, %v11755
  %v11842 = vmul.f32 %v11308, %v11759
  %v11843 = vmul.f32 %v11310, %v11763
  %v11844 = vmul.f32 %v11312, %v11703
  %v11845 = vmul.f32 %v11314, %v11707
  %v11846 = vmul.f32 %v11316, %v11711
  %v11847 = vmul.f32 %v11318, %v11715
  %v11848 = vmul.f32 %v11320, %v11719
  %v11849 = vmul.f32 %v11322, %v11723
  %v11850 = vmul.f32 %v11324, %v11727
  %v11851 = vmul.f32 %v11326, %v11731
  %v11852 = vmul.f32 %v11328, %v11735
  %v11853 = vmul.f32 %v11330, %v11739
  %v11854 = vmul.f32 %v11332, %v11743
  %v11855 = vmul.f32 %v11334, %v11747
  %v11856 = vmul.f32 %v11336, %v11751
  %v11857 = vmul.f32 %v11338, %v11755
  %v11858 = vmul.f32 %v11340, %v11759
  %v11859 = vmul.f32 %v11342, %v11763
  %v11860 = vmul.f32 %v11344, %v11703
  %v11861 = vmul.f32 %v11346, %v11707
  %v11862 = vmul.f32 %v11348, %v11711
  %v11863 = vmul.f32 %v11350, %v11715
  %v11864 = vmul.f32 %v11352, %v11719
  %v11865 = vmul.f32 %v11354, %v11723
  %v11866 = vmul.f32 %v11356, %v11727
  %v11867 = vmul.f32 %v11358, %v11731
  %v11868 = vmul.f32 %v11360, %v11735
  %v11869 = vmul.f32 %v11362, %v11739
  %v11870 = vmul.f32 %v11364, %v11743
  %v11871 = vmul.f32 %v11366, %v11747
  %v11872 = vmul.f32 %v11368, %v11751
  %v11873 = vmul.f32 %v11370, %v11755
  %v11874 = vmul.f32 %v11372, %v11759
  %v11875 = vmul.f32 %v11374, %v11763
  %v11876 = vmul.f32 %v11376, %v11703
  %v11877 = vmul.f32 %v11378, %v11707
  %v11878 = vmul.f32 %v11380, %v11711
  %v11879 = vmul.f32 %v11382, %v11715
  %v11880 = vmul.f32 %v11384, %v11719
  %v11881 = vmul.f32 %v11386, %v11723
  %v11882 = vmul.f32 %v11388, %v11727
  %v11883 = vmul.f32 %v11390, %v11731
  %v11884 = vmul.f32 %v11392, %v11735
  %v11885 = vmul.f32 %v11394, %v11739
  %v11886 = vmul.f32 %v11396, %v11743
  %v11887 = vmul.f32 %v11398, %v11747
  %v11888 = vmul.f32 %v11400, %v11751
  %v11889 = vmul.f32 %v11402, %v11755
  %v11890 = vmul.f32 %v11404, %v11759
  %v11891 = vmul.f32 %v11406, %v11763
  %v11892 = vmul.f32 %v11408, %v11703
  %v11893 = vmul.f32 %v11410, %v11707
  %v11894 = vmul.f32 %v11412, %v11711
  %v11895 = vmul.f32 %v11414, %v11715
  %v11896 = vmul.f32 %v11416, %v11719
  %v11897 = vmul.f32 %v11418, %v11723
  %v11898 = vmul.f32 %v11420, %v11727
  %v11899 = vmul.f32 %v11422, %v11731
  %v11900 = vmul.f32 %v11424, %v11735
  %v11901 = vmul.f32 %v11426, %v11739
  %v11902 = vmul.f32 %v11428, %v11743
  %v11903 = vmul.f32 %v11430, %v11747
  %v11904 = vmul.f32 %v11432, %v11751
  %v11905 = vmul.f32 %v11434, %v11755
  %v11906 = vmul.f32 %v11436, %v11759
  %v11907 = vmul.f32 %v11438, %v11763
  %v11908 = vmul.f32 %v11440, %v11703
  %v11909 = vmul.f32 %v11442, %v11707
  %v11910 = vmul.f32 %v11444, %v11711
  %v11911 = vmul.f32 %v11446, %v11715
  %v11912 = vmul.f32 %v11448, %v11719
  %v11913 = vmul.f32 %v11450, %v11723
  %v11914 = vmul.f32 %v11452, %v11727
  %v11915 = vmul.f32 %v11454, %v11731
  %v11916 = vmul.f32 %v11456, %v11735
  %v11917 = vmul.f32 %v11458, %v11739
  %v11918 = vmul.f32 %v11460, %v11743
  %v11919 = vmul.f32 %v11462, %v11747
  %v11920 = vmul.f32 %v11464, %v11751
  %v11921 = vmul.f32 %v11466, %v11755
  %v11922 = vmul.f32 %v11468, %v11759
  %v11923 = vmul.f32 %v11470, %v11763
  %v11924 = vmul.f32 %v11472, %v11703
  %v11925 = vmul.f32 %v11474, %v11707
  %v11926 = vmul.f32 %v11476, %v11711
  %v11927 = vmul.f32 %v11478, %v11715
  %v11928 = vmul.f32 %v11480, %v11719
  %v11929 = vmul.f32 %v11482, %v11723
  %v11930 = vmul.f32 %v11484, %v11727
  %v11931 = vmul.f32 %v11486, %v11731
  %v11932 = vmul.f32 %v11488, %v11735
  %v11933 = vmul.f32 %v11490, %v11739
  %v11934 = vmul.f32 %v11492, %v11743
  %v11935 = vmul.f32 %v11494, %v11747
  %v11936 = vmul.f32 %v11496, %v11751
  %v11937 = vmul.f32 %v11498, %v11755
  %v11938 = vmul.f32 %v11500, %v11759
  %v11939 = vmul.f32 %v11502, %v11763
  %v11940 = vmul.f32 %v11504, %v11703
  %v11941 = vmul.f32 %v11506, %v11707
  %v11942 = vmul.f32 %v11508, %v11711
  %v11943 = vmul.f32 %v11510, %v11715
  %v11944 = vmul.f32 %v11512, %v11719
  %v11945 = vmul.f32 %v11514, %v11723
  %v11946 = vmul.f32 %v11516, %v11727
  %v11947 = vmul.f32 %v11518, %v11731
  %v11948 = vmul.f32 %v11520, %v11735
  %v11949 = vmul.f32 %v11522, %v11739
  %v11950 = vmul.f32 %v11524, %v11743
  %v11951 = vmul.f32 %v11526, %v11747
  %v11952 = vmul.f32 %v11528, %v11751
  %v11953 = vmul.f32 %v11530, %v11755
  %v11954 = vmul.f32 %v11532, %v11759
  %v11955 = vmul.f32 %v11534, %v11763
  %v11956 = vmul.f32 %v11536, %v11703
  %v11957 = vmul.f32 %v11538, %v11707
  %v11958 = vmul.f32 %v11540, %v11711
  %v11959 = vmul.f32 %v11542, %v11715
  %v11960 = vmul.f32 %v11544, %v11719
  %v11961 = vmul.f32 %v11546, %v11723
  %v11962 = vmul.f32 %v11548, %v11727
  %v11963 = vmul.f32 %v11550, %v11731
  %v11964 = vmul.f32 %v11552, %v11735
  %v11965 = vmul.f32 %v11554, %v11739
  %v11966 = vmul.f32 %v11556, %v11743
  %v11967 = vmul.f32 %v11558, %v11747
  %v11968 = vmul.f32 %v11560, %v11751
  %v11969 = vmul.f32 %v11562, %v11755
  %v11970 = vmul.f32 %v11564, %v11759
  %v11971 = vmul.f32 %v11566, %v11763
  %v11972 = vmul.f32 %v11568, %v11703
  %v11973 = vmul.f32 %v11570, %v11707
  %v11974 = vmul.f32 %v11572, %v11711
  %v11975 = vmul.f32 %v11574, %v11715
  %v11976 = vmul.f32 %v11576, %v11719
  %v11977 = vmul.f32 %v11578, %v11723
  %v11978 = vmul.f32 %v11580, %v11727
  %v11979 = vmul.f32 %v11582, %v11731
  %v11980 = vmul.f32 %v11584, %v11735
  %v11981 = vmul.f32 %v11586, %v11739
  %v11982 = vmul.f32 %v11588, %v11743
  %v11983 = vmul.f32 %v11590, %v11747
  %v11984 = vmul.f32 %v11592, %v11751
  %v11985 = vmul.f32 %v11594, %v11755
  %v11986 = vmul.f32 %v11596, %v11759
  %v11987 = vmul.f32 %v11598, %v11763
  %v11988 = vmul.f32 %v11600, %v11703
  %v11989 = vmul.f32 %v11602, %v11707
  %v11990 = vmul.f32 %v11604, %v11711
  %v11991 = vmul.f32 %v11606, %v11715
  %v11992 = vmul.f32 %v11608, %v11719
  %v11993 = vmul.f32 %v11610, %v11723
  %v11994 = vmul.f32 %v11612, %v11727
  %v11995 = vmul.f32 %v11614, %v11731
  %v11996 = vmul.f32 %v11616, %v11735
  %v11997 = vmul.f32 %v11618, %v11739
  %v11998 = vmul.f32 %v11620, %v11743
  %v11999 = vmul.f32 %v11622, %v11747
  %v12000 = vmul.f32 %v11624, %v11751
  %v12001 = vmul.f32 %v11626, %v11755
  %v12002 = vmul.f32 %v11628, %v11759
  %v12003 = vmul.f32 %v11630, %v11763
  %v12004 = vmul.f32 %v11632, %v11703
  %v12005 = vmul.f32 %v11634, %v11707
  %v12006 = vmul.f32 %v11636, %v11711
  %v12007 = vmul.f32 %v11638, %v11715
  %v12008 = vmul.f32 %v11640, %v11719
  %v12009 = vmul.f32 %v11642, %v11723
  %v12010 = vmul.f32 %v11644, %v11727
  %v12011 = vmul.f32 %v11646, %v11731
  %v12012 = vmul.f32 %v11648, %v11735
  %v12013 = vmul.f32 %v11650, %v11739
  %v12014 = vmul.f32 %v11652, %v11743
  %v12015 = vmul.f32 %v11654, %v11747
  %v12016 = vmul.f32 %v11656, %v11751
  %v12017 = vmul.f32 %v11658, %v11755
  %v12018 = vmul.f32 %v11660, %v11759
  %v12019 = vmul.f32 %v11662, %v11763
  %v12020 = vmul.f32 %v11664, %v11703
  %v12021 = vmul.f32 %v11666, %v11707
  %v12022 = vmul.f32 %v11668, %v11711
  %v12023 = vmul.f32 %v11670, %v11715
  %v12024 = vmul.f32 %v11672, %v11719
  %v12025 = vmul.f32 %v11674, %v11723
  %v12026 = vmul.f32 %v11676, %v11727
  %v12027 = vmul.f32 %v11678, %v11731
  %v12028 = vmul.f32 %v11680, %v11735
  %v12029 = vmul.f32 %v11682, %v11739
  %v12030 = vmul.f32 %v11684, %v11743
  %v12031 = vmul.f32 %v11686, %v11747
  %v12032 = vmul.f32 %v11688, %v11751
  %v12033 = vmul.f32 %v11690, %v11755
  %v12034 = vmul.f32 %v11692, %v11759
  %v12035 = vmul.f32 %v11694, %v11763
  %12292 = vset.pattern.permute.xlu0 0
  %12293 = vperm.xlu0 %12292, %v11780
  %v12294 = vpop.permute.xlu0 %12293
  %12295 = vset.pattern.permute.xlu0 0
  %12296 = vperm.xlu0 %12295, %v11781
  %v12297 = vpop.permute.xlu0 %12296
  %12298 = vset.pattern.permute.xlu0 0
  %12299 = vperm.xlu0 %12298, %v11782
  %v12300 = vpop.permute.xlu0 %12299
  %12301 = vset.pattern.permute.xlu0 0
  %12302 = vperm.xlu0 %12301, %v11783
  %v12303 = vpop.permute.xlu0 %12302
  %12304 = vset.pattern.permute.xlu0 0
  %12305 = vperm.xlu0 %12304, %v11784
  %v12306 = vpop.permute.xlu0 %12305
  %12307 = vset.pattern.permute.xlu0 0
  %12308 = vperm.xlu0 %12307, %v11785
  %v12309 = vpop.permute.xlu0 %12308
  %12310 = vset.pattern.permute.xlu0 0
  %12311 = vperm.xlu0 %12310, %v11786
  %v12312 = vpop.permute.xlu0 %12311
  %12313 = vset.pattern.permute.xlu0 0
  %12314 = vperm.xlu0 %12313, %v11787
  %v12315 = vpop.permute.xlu0 %12314
  %12316 = vset.pattern.permute.xlu0 0
  %12317 = vperm.xlu0 %12316, %v11788
  %v12318 = vpop.permute.xlu0 %12317
  %12319 = vset.pattern.permute.xlu0 0
  %12320 = vperm.xlu0 %12319, %v11789
  %v12321 = vpop.permute.xlu0 %12320
  %12322 = vset.pattern.permute.xlu0 0
  %12323 = vperm.xlu0 %12322, %v11790
  %v12324 = vpop.permute.xlu0 %12323
  %12325 = vset.pattern.permute.xlu0 0
  %12326 = vperm.xlu0 %12325, %v11791
  %v12327 = vpop.permute.xlu0 %12326
  %12328 = vset.pattern.permute.xlu0 0
  %12329 = vperm.xlu0 %12328, %v11792
  %v12330 = vpop.permute.xlu0 %12329
  %12331 = vset.pattern.permute.xlu0 0
  %12332 = vperm.xlu0 %12331, %v11793
  %v12333 = vpop.permute.xlu0 %12332
  %12334 = vset.pattern.permute.xlu0 0
  %12335 = vperm.xlu0 %12334, %v11794
  %v12336 = vpop.permute.xlu0 %12335
  %12337 = vset.pattern.permute.xlu0 0
  %12338 = vperm.xlu0 %12337, %v11795
  %v12339 = vpop.permute.xlu0 %12338
  %12340 = vset.pattern.permute.xlu0 0
  %12341 = vperm.xlu0 %12340, %v11796
  %v12342 = vpop.permute.xlu0 %12341
  %12343 = vset.pattern.permute.xlu0 0
  %12344 = vperm.xlu0 %12343, %v11797
  %v12345 = vpop.permute.xlu0 %12344
  %12346 = vset.pattern.permute.xlu0 0
  %12347 = vperm.xlu0 %12346, %v11798
  %v12348 = vpop.permute.xlu0 %12347
  %12349 = vset.pattern.permute.xlu0 0
  %12350 = vperm.xlu0 %12349, %v11799
  %v12351 = vpop.permute.xlu0 %12350
  %12352 = vset.pattern.permute.xlu0 0
  %12353 = vperm.xlu0 %12352, %v11800
  %v12354 = vpop.permute.xlu0 %12353
  %12355 = vset.pattern.permute.xlu0 0
  %12356 = vperm.xlu0 %12355, %v11801
  %v12357 = vpop.permute.xlu0 %12356
  %12358 = vset.pattern.permute.xlu0 0
  %12359 = vperm.xlu0 %12358, %v11802
  %v12360 = vpop.permute.xlu0 %12359
  %12361 = vset.pattern.permute.xlu0 0
  %12362 = vperm.xlu0 %12361, %v11803
  %v12363 = vpop.permute.xlu0 %12362
  %12364 = vset.pattern.permute.xlu0 0
  %12365 = vperm.xlu0 %12364, %v11804
  %v12366 = vpop.permute.xlu0 %12365
  %12367 = vset.pattern.permute.xlu0 0
  %12368 = vperm.xlu0 %12367, %v11805
  %v12369 = vpop.permute.xlu0 %12368
  %12370 = vset.pattern.permute.xlu0 0
  %12371 = vperm.xlu0 %12370, %v11806
  %v12372 = vpop.permute.xlu0 %12371
  %12373 = vset.pattern.permute.xlu0 0
  %12374 = vperm.xlu0 %12373, %v11807
  %v12375 = vpop.permute.xlu0 %12374
  %12376 = vset.pattern.permute.xlu0 0
  %12377 = vperm.xlu0 %12376, %v11808
  %v12378 = vpop.permute.xlu0 %12377
  %12379 = vset.pattern.permute.xlu0 0
  %12380 = vperm.xlu0 %12379, %v11809
  %v12381 = vpop.permute.xlu0 %12380
  %12382 = vset.pattern.permute.xlu0 0
  %12383 = vperm.xlu0 %12382, %v11810
  %v12384 = vpop.permute.xlu0 %12383
  %12385 = vset.pattern.permute.xlu0 0
  %12386 = vperm.xlu0 %12385, %v11811
  %v12387 = vpop.permute.xlu0 %12386
  %12388 = vset.pattern.permute.xlu0 0
  %12389 = vperm.xlu0 %12388, %v11812
  %v12390 = vpop.permute.xlu0 %12389
  %12391 = vset.pattern.permute.xlu0 0
  %12392 = vperm.xlu0 %12391, %v11813
  %v12393 = vpop.permute.xlu0 %12392
  %12394 = vset.pattern.permute.xlu0 0
  %12395 = vperm.xlu0 %12394, %v11814
  %v12396 = vpop.permute.xlu0 %12395
  %12397 = vset.pattern.permute.xlu0 0
  %12398 = vperm.xlu0 %12397, %v11815
  %v12399 = vpop.permute.xlu0 %12398
  %12400 = vset.pattern.permute.xlu0 0
  %12401 = vperm.xlu0 %12400, %v11816
  %v12402 = vpop.permute.xlu0 %12401
  %12403 = vset.pattern.permute.xlu0 0
  %12404 = vperm.xlu0 %12403, %v11817
  %v12405 = vpop.permute.xlu0 %12404
  %12406 = vset.pattern.permute.xlu0 0
  %12407 = vperm.xlu0 %12406, %v11818
  %v12408 = vpop.permute.xlu0 %12407
  %12409 = vset.pattern.permute.xlu0 0
  %12410 = vperm.xlu0 %12409, %v11819
  %v12411 = vpop.permute.xlu0 %12410
  %12412 = vset.pattern.permute.xlu0 0
  %12413 = vperm.xlu0 %12412, %v11820
  %v12414 = vpop.permute.xlu0 %12413
  %12415 = vset.pattern.permute.xlu0 0
  %12416 = vperm.xlu0 %12415, %v11821
  %v12417 = vpop.permute.xlu0 %12416
  %12418 = vset.pattern.permute.xlu0 0
  %12419 = vperm.xlu0 %12418, %v11822
  %v12420 = vpop.permute.xlu0 %12419
  %12421 = vset.pattern.permute.xlu0 0
  %12422 = vperm.xlu0 %12421, %v11823
  %v12423 = vpop.permute.xlu0 %12422
  %12424 = vset.pattern.permute.xlu0 0
  %12425 = vperm.xlu0 %12424, %v11824
  %v12426 = vpop.permute.xlu0 %12425
  %12427 = vset.pattern.permute.xlu0 0
  %12428 = vperm.xlu0 %12427, %v11825
  %v12429 = vpop.permute.xlu0 %12428
  %12430 = vset.pattern.permute.xlu0 0
  %12431 = vperm.xlu0 %12430, %v11826
  %v12432 = vpop.permute.xlu0 %12431
  %12433 = vset.pattern.permute.xlu0 0
  %12434 = vperm.xlu0 %12433, %v11827
  %v12435 = vpop.permute.xlu0 %12434
  %12436 = vset.pattern.permute.xlu0 0
  %12437 = vperm.xlu0 %12436, %v11828
  %v12438 = vpop.permute.xlu0 %12437
  %12439 = vset.pattern.permute.xlu0 0
  %12440 = vperm.xlu0 %12439, %v11829
  %v12441 = vpop.permute.xlu0 %12440
  %12442 = vset.pattern.permute.xlu0 0
  %12443 = vperm.xlu0 %12442, %v11830
  %v12444 = vpop.permute.xlu0 %12443
  %12445 = vset.pattern.permute.xlu0 0
  %12446 = vperm.xlu0 %12445, %v11831
  %v12447 = vpop.permute.xlu0 %12446
  %12448 = vset.pattern.permute.xlu0 0
  %12449 = vperm.xlu0 %12448, %v11832
  %v12450 = vpop.permute.xlu0 %12449
  %12451 = vset.pattern.permute.xlu0 0
  %12452 = vperm.xlu0 %12451, %v11833
  %v12453 = vpop.permute.xlu0 %12452
  %12454 = vset.pattern.permute.xlu0 0
  %12455 = vperm.xlu0 %12454, %v11834
  %v12456 = vpop.permute.xlu0 %12455
  %12457 = vset.pattern.permute.xlu0 0
  %12458 = vperm.xlu0 %12457, %v11835
  %v12459 = vpop.permute.xlu0 %12458
  %12460 = vset.pattern.permute.xlu0 0
  %12461 = vperm.xlu0 %12460, %v11836
  %v12462 = vpop.permute.xlu0 %12461
  %12463 = vset.pattern.permute.xlu0 0
  %12464 = vperm.xlu0 %12463, %v11837
  %v12465 = vpop.permute.xlu0 %12464
  %12466 = vset.pattern.permute.xlu0 0
  %12467 = vperm.xlu0 %12466, %v11838
  %v12468 = vpop.permute.xlu0 %12467
  %12469 = vset.pattern.permute.xlu0 0
  %12470 = vperm.xlu0 %12469, %v11839
  %v12471 = vpop.permute.xlu0 %12470
  %12472 = vset.pattern.permute.xlu0 0
  %12473 = vperm.xlu0 %12472, %v11840
  %v12474 = vpop.permute.xlu0 %12473
  %12475 = vset.pattern.permute.xlu0 0
  %12476 = vperm.xlu0 %12475, %v11841
  %v12477 = vpop.permute.xlu0 %12476
  %12478 = vset.pattern.permute.xlu0 0
  %12479 = vperm.xlu0 %12478, %v11842
  %v12480 = vpop.permute.xlu0 %12479
  %12481 = vset.pattern.permute.xlu0 0
  %12482 = vperm.xlu0 %12481, %v11843
  %v12483 = vpop.permute.xlu0 %12482
  %12484 = vset.pattern.permute.xlu0 0
  %12485 = vperm.xlu0 %12484, %v11844
  %v12486 = vpop.permute.xlu0 %12485
  %12487 = vset.pattern.permute.xlu0 0
  %12488 = vperm.xlu0 %12487, %v11845
  %v12489 = vpop.permute.xlu0 %12488
  %12490 = vset.pattern.permute.xlu0 0
  %12491 = vperm.xlu0 %12490, %v11846
  %v12492 = vpop.permute.xlu0 %12491
  %12493 = vset.pattern.permute.xlu0 0
  %12494 = vperm.xlu0 %12493, %v11847
  %v12495 = vpop.permute.xlu0 %12494
  %12496 = vset.pattern.permute.xlu0 0
  %12497 = vperm.xlu0 %12496, %v11848
  %v12498 = vpop.permute.xlu0 %12497
  %12499 = vset.pattern.permute.xlu0 0
  %12500 = vperm.xlu0 %12499, %v11849
  %v12501 = vpop.permute.xlu0 %12500
  %12502 = vset.pattern.permute.xlu0 0
  %12503 = vperm.xlu0 %12502, %v11850
  %v12504 = vpop.permute.xlu0 %12503
  %12505 = vset.pattern.permute.xlu0 0
  %12506 = vperm.xlu0 %12505, %v11851
  %v12507 = vpop.permute.xlu0 %12506
  %12508 = vset.pattern.permute.xlu0 0
  %12509 = vperm.xlu0 %12508, %v11852
  %v12510 = vpop.permute.xlu0 %12509
  %12511 = vset.pattern.permute.xlu0 0
  %12512 = vperm.xlu0 %12511, %v11853
  %v12513 = vpop.permute.xlu0 %12512
  %12514 = vset.pattern.permute.xlu0 0
  %12515 = vperm.xlu0 %12514, %v11854
  %v12516 = vpop.permute.xlu0 %12515
  %12517 = vset.pattern.permute.xlu0 0
  %12518 = vperm.xlu0 %12517, %v11855
  %v12519 = vpop.permute.xlu0 %12518
  %12520 = vset.pattern.permute.xlu0 0
  %12521 = vperm.xlu0 %12520, %v11856
  %v12522 = vpop.permute.xlu0 %12521
  %12523 = vset.pattern.permute.xlu0 0
  %12524 = vperm.xlu0 %12523, %v11857
  %v12525 = vpop.permute.xlu0 %12524
  %12526 = vset.pattern.permute.xlu0 0
  %12527 = vperm.xlu0 %12526, %v11858
  %v12528 = vpop.permute.xlu0 %12527
  %12529 = vset.pattern.permute.xlu0 0
  %12530 = vperm.xlu0 %12529, %v11859
  %v12531 = vpop.permute.xlu0 %12530
  %12532 = vset.pattern.permute.xlu0 0
  %12533 = vperm.xlu0 %12532, %v11860
  %v12534 = vpop.permute.xlu0 %12533
  %12535 = vset.pattern.permute.xlu0 0
  %12536 = vperm.xlu0 %12535, %v11861
  %v12537 = vpop.permute.xlu0 %12536
  %12538 = vset.pattern.permute.xlu0 0
  %12539 = vperm.xlu0 %12538, %v11862
  %v12540 = vpop.permute.xlu0 %12539
  %12541 = vset.pattern.permute.xlu0 0
  %12542 = vperm.xlu0 %12541, %v11863
  %v12543 = vpop.permute.xlu0 %12542
  %12544 = vset.pattern.permute.xlu0 0
  %12545 = vperm.xlu0 %12544, %v11864
  %v12546 = vpop.permute.xlu0 %12545
  %12547 = vset.pattern.permute.xlu0 0
  %12548 = vperm.xlu0 %12547, %v11865
  %v12549 = vpop.permute.xlu0 %12548
  %12550 = vset.pattern.permute.xlu0 0
  %12551 = vperm.xlu0 %12550, %v11866
  %v12552 = vpop.permute.xlu0 %12551
  %12553 = vset.pattern.permute.xlu0 0
  %12554 = vperm.xlu0 %12553, %v11867
  %v12555 = vpop.permute.xlu0 %12554
  %12556 = vset.pattern.permute.xlu0 0
  %12557 = vperm.xlu0 %12556, %v11868
  %v12558 = vpop.permute.xlu0 %12557
  %12559 = vset.pattern.permute.xlu0 0
  %12560 = vperm.xlu0 %12559, %v11869
  %v12561 = vpop.permute.xlu0 %12560
  %12562 = vset.pattern.permute.xlu0 0
  %12563 = vperm.xlu0 %12562, %v11870
  %v12564 = vpop.permute.xlu0 %12563
  %12565 = vset.pattern.permute.xlu0 0
  %12566 = vperm.xlu0 %12565, %v11871
  %v12567 = vpop.permute.xlu0 %12566
  %12568 = vset.pattern.permute.xlu0 0
  %12569 = vperm.xlu0 %12568, %v11872
  %v12570 = vpop.permute.xlu0 %12569
  %12571 = vset.pattern.permute.xlu0 0
  %12572 = vperm.xlu0 %12571, %v11873
  %v12573 = vpop.permute.xlu0 %12572
  %12574 = vset.pattern.permute.xlu0 0
  %12575 = vperm.xlu0 %12574, %v11874
  %v12576 = vpop.permute.xlu0 %12575
  %12577 = vset.pattern.permute.xlu0 0
  %12578 = vperm.xlu0 %12577, %v11875
  %v12579 = vpop.permute.xlu0 %12578
  %12580 = vset.pattern.permute.xlu0 0
  %12581 = vperm.xlu0 %12580, %v11876
  %v12582 = vpop.permute.xlu0 %12581
  %12583 = vset.pattern.permute.xlu0 0
  %12584 = vperm.xlu0 %12583, %v11877
  %v12585 = vpop.permute.xlu0 %12584
  %12586 = vset.pattern.permute.xlu0 0
  %12587 = vperm.xlu0 %12586, %v11878
  %v12588 = vpop.permute.xlu0 %12587
  %12589 = vset.pattern.permute.xlu0 0
  %12590 = vperm.xlu0 %12589, %v11879
  %v12591 = vpop.permute.xlu0 %12590
  %12592 = vset.pattern.permute.xlu0 0
  %12593 = vperm.xlu0 %12592, %v11880
  %v12594 = vpop.permute.xlu0 %12593
  %12595 = vset.pattern.permute.xlu0 0
  %12596 = vperm.xlu0 %12595, %v11881
  %v12597 = vpop.permute.xlu0 %12596
  %12598 = vset.pattern.permute.xlu0 0
  %12599 = vperm.xlu0 %12598, %v11882
  %v12600 = vpop.permute.xlu0 %12599
  %12601 = vset.pattern.permute.xlu0 0
  %12602 = vperm.xlu0 %12601, %v11883
  %v12603 = vpop.permute.xlu0 %12602
  %12604 = vset.pattern.permute.xlu0 0
  %12605 = vperm.xlu0 %12604, %v11884
  %v12606 = vpop.permute.xlu0 %12605
  %12607 = vset.pattern.permute.xlu0 0
  %12608 = vperm.xlu0 %12607, %v11885
  %v12609 = vpop.permute.xlu0 %12608
  %12610 = vset.pattern.permute.xlu0 0
  %12611 = vperm.xlu0 %12610, %v11886
  %v12612 = vpop.permute.xlu0 %12611
  %12613 = vset.pattern.permute.xlu0 0
  %12614 = vperm.xlu0 %12613, %v11887
  %v12615 = vpop.permute.xlu0 %12614
  %12616 = vset.pattern.permute.xlu0 0
  %12617 = vperm.xlu0 %12616, %v11888
  %v12618 = vpop.permute.xlu0 %12617
  %12619 = vset.pattern.permute.xlu0 0
  %12620 = vperm.xlu0 %12619, %v11889
  %v12621 = vpop.permute.xlu0 %12620
  %12622 = vset.pattern.permute.xlu0 0
  %12623 = vperm.xlu0 %12622, %v11890
  %v12624 = vpop.permute.xlu0 %12623
  %12625 = vset.pattern.permute.xlu0 0
  %12626 = vperm.xlu0 %12625, %v11891
  %v12627 = vpop.permute.xlu0 %12626
  %12628 = vset.pattern.permute.xlu0 0
  %12629 = vperm.xlu0 %12628, %v11892
  %v12630 = vpop.permute.xlu0 %12629
  %12631 = vset.pattern.permute.xlu0 0
  %12632 = vperm.xlu0 %12631, %v11893
  %v12633 = vpop.permute.xlu0 %12632
  %12634 = vset.pattern.permute.xlu0 0
  %12635 = vperm.xlu0 %12634, %v11894
  %v12636 = vpop.permute.xlu0 %12635
  %12637 = vset.pattern.permute.xlu0 0
  %12638 = vperm.xlu0 %12637, %v11895
  %v12639 = vpop.permute.xlu0 %12638
  %12640 = vset.pattern.permute.xlu0 0
  %12641 = vperm.xlu0 %12640, %v11896
  %v12642 = vpop.permute.xlu0 %12641
  %12643 = vset.pattern.permute.xlu0 0
  %12644 = vperm.xlu0 %12643, %v11897
  %v12645 = vpop.permute.xlu0 %12644
  %12646 = vset.pattern.permute.xlu0 0
  %12647 = vperm.xlu0 %12646, %v11898
  %v12648 = vpop.permute.xlu0 %12647
  %12649 = vset.pattern.permute.xlu0 0
  %12650 = vperm.xlu0 %12649, %v11899
  %v12651 = vpop.permute.xlu0 %12650
  %12652 = vset.pattern.permute.xlu0 0
  %12653 = vperm.xlu0 %12652, %v11900
  %v12654 = vpop.permute.xlu0 %12653
  %12655 = vset.pattern.permute.xlu0 0
  %12656 = vperm.xlu0 %12655, %v11901
  %v12657 = vpop.permute.xlu0 %12656
  %12658 = vset.pattern.permute.xlu0 0
  %12659 = vperm.xlu0 %12658, %v11902
  %v12660 = vpop.permute.xlu0 %12659
  %12661 = vset.pattern.permute.xlu0 0
  %12662 = vperm.xlu0 %12661, %v11903
  %v12663 = vpop.permute.xlu0 %12662
  %12664 = vset.pattern.permute.xlu0 0
  %12665 = vperm.xlu0 %12664, %v11904
  %v12666 = vpop.permute.xlu0 %12665
  %12667 = vset.pattern.permute.xlu0 0
  %12668 = vperm.xlu0 %12667, %v11905
  %v12669 = vpop.permute.xlu0 %12668
  %12670 = vset.pattern.permute.xlu0 0
  %12671 = vperm.xlu0 %12670, %v11906
  %v12672 = vpop.permute.xlu0 %12671
  %12673 = vset.pattern.permute.xlu0 0
  %12674 = vperm.xlu0 %12673, %v11907
  %v12675 = vpop.permute.xlu0 %12674
  %12676 = vset.pattern.permute.xlu0 0
  %12677 = vperm.xlu0 %12676, %v11908
  %v12678 = vpop.permute.xlu0 %12677
  %12679 = vset.pattern.permute.xlu0 0
  %12680 = vperm.xlu0 %12679, %v11909
  %v12681 = vpop.permute.xlu0 %12680
  %12682 = vset.pattern.permute.xlu0 0
  %12683 = vperm.xlu0 %12682, %v11910
  %v12684 = vpop.permute.xlu0 %12683
  %12685 = vset.pattern.permute.xlu0 0
  %12686 = vperm.xlu0 %12685, %v11911
  %v12687 = vpop.permute.xlu0 %12686
  %12688 = vset.pattern.permute.xlu0 0
  %12689 = vperm.xlu0 %12688, %v11912
  %v12690 = vpop.permute.xlu0 %12689
  %12691 = vset.pattern.permute.xlu0 0
  %12692 = vperm.xlu0 %12691, %v11913
  %v12693 = vpop.permute.xlu0 %12692
  %12694 = vset.pattern.permute.xlu0 0
  %12695 = vperm.xlu0 %12694, %v11914
  %v12696 = vpop.permute.xlu0 %12695
  %12697 = vset.pattern.permute.xlu0 0
  %12698 = vperm.xlu0 %12697, %v11915
  %v12699 = vpop.permute.xlu0 %12698
  %12700 = vset.pattern.permute.xlu0 0
  %12701 = vperm.xlu0 %12700, %v11916
  %v12702 = vpop.permute.xlu0 %12701
  %12703 = vset.pattern.permute.xlu0 0
  %12704 = vperm.xlu0 %12703, %v11917
  %v12705 = vpop.permute.xlu0 %12704
  %12706 = vset.pattern.permute.xlu0 0
  %12707 = vperm.xlu0 %12706, %v11918
  %v12708 = vpop.permute.xlu0 %12707
  %12709 = vset.pattern.permute.xlu0 0
  %12710 = vperm.xlu0 %12709, %v11919
  %v12711 = vpop.permute.xlu0 %12710
  %12712 = vset.pattern.permute.xlu0 0
  %12713 = vperm.xlu0 %12712, %v11920
  %v12714 = vpop.permute.xlu0 %12713
  %12715 = vset.pattern.permute.xlu0 0
  %12716 = vperm.xlu0 %12715, %v11921
  %v12717 = vpop.permute.xlu0 %12716
  %12718 = vset.pattern.permute.xlu0 0
  %12719 = vperm.xlu0 %12718, %v11922
  %v12720 = vpop.permute.xlu0 %12719
  %12721 = vset.pattern.permute.xlu0 0
  %12722 = vperm.xlu0 %12721, %v11923
  %v12723 = vpop.permute.xlu0 %12722
  %12724 = vset.pattern.permute.xlu0 0
  %12725 = vperm.xlu0 %12724, %v11924
  %v12726 = vpop.permute.xlu0 %12725
  %12727 = vset.pattern.permute.xlu0 0
  %12728 = vperm.xlu0 %12727, %v11925
  %v12729 = vpop.permute.xlu0 %12728
  %12730 = vset.pattern.permute.xlu0 0
  %12731 = vperm.xlu0 %12730, %v11926
  %v12732 = vpop.permute.xlu0 %12731
  %12733 = vset.pattern.permute.xlu0 0
  %12734 = vperm.xlu0 %12733, %v11927
  %v12735 = vpop.permute.xlu0 %12734
  %12736 = vset.pattern.permute.xlu0 0
  %12737 = vperm.xlu0 %12736, %v11928
  %v12738 = vpop.permute.xlu0 %12737
  %12739 = vset.pattern.permute.xlu0 0
  %12740 = vperm.xlu0 %12739, %v11929
  %v12741 = vpop.permute.xlu0 %12740
  %12742 = vset.pattern.permute.xlu0 0
  %12743 = vperm.xlu0 %12742, %v11930
  %v12744 = vpop.permute.xlu0 %12743
  %12745 = vset.pattern.permute.xlu0 0
  %12746 = vperm.xlu0 %12745, %v11931
  %v12747 = vpop.permute.xlu0 %12746
  %12748 = vset.pattern.permute.xlu0 0
  %12749 = vperm.xlu0 %12748, %v11932
  %v12750 = vpop.permute.xlu0 %12749
  %12751 = vset.pattern.permute.xlu0 0
  %12752 = vperm.xlu0 %12751, %v11933
  %v12753 = vpop.permute.xlu0 %12752
  %12754 = vset.pattern.permute.xlu0 0
  %12755 = vperm.xlu0 %12754, %v11934
  %v12756 = vpop.permute.xlu0 %12755
  %12757 = vset.pattern.permute.xlu0 0
  %12758 = vperm.xlu0 %12757, %v11935
  %v12759 = vpop.permute.xlu0 %12758
  %12760 = vset.pattern.permute.xlu0 0
  %12761 = vperm.xlu0 %12760, %v11936
  %v12762 = vpop.permute.xlu0 %12761
  %12763 = vset.pattern.permute.xlu0 0
  %12764 = vperm.xlu0 %12763, %v11937
  %v12765 = vpop.permute.xlu0 %12764
  %12766 = vset.pattern.permute.xlu0 0
  %12767 = vperm.xlu0 %12766, %v11938
  %v12768 = vpop.permute.xlu0 %12767
  %12769 = vset.pattern.permute.xlu0 0
  %12770 = vperm.xlu0 %12769, %v11939
  %v12771 = vpop.permute.xlu0 %12770
  %12772 = vset.pattern.permute.xlu0 0
  %12773 = vperm.xlu0 %12772, %v11940
  %v12774 = vpop.permute.xlu0 %12773
  %12775 = vset.pattern.permute.xlu0 0
  %12776 = vperm.xlu0 %12775, %v11941
  %v12777 = vpop.permute.xlu0 %12776
  %12778 = vset.pattern.permute.xlu0 0
  %12779 = vperm.xlu0 %12778, %v11942
  %v12780 = vpop.permute.xlu0 %12779
  %12781 = vset.pattern.permute.xlu0 0
  %12782 = vperm.xlu0 %12781, %v11943
  %v12783 = vpop.permute.xlu0 %12782
  %12784 = vset.pattern.permute.xlu0 0
  %12785 = vperm.xlu0 %12784, %v11944
  %v12786 = vpop.permute.xlu0 %12785
  %12787 = vset.pattern.permute.xlu0 0
  %12788 = vperm.xlu0 %12787, %v11945
  %v12789 = vpop.permute.xlu0 %12788
  %12790 = vset.pattern.permute.xlu0 0
  %12791 = vperm.xlu0 %12790, %v11946
  %v12792 = vpop.permute.xlu0 %12791
  %12793 = vset.pattern.permute.xlu0 0
  %12794 = vperm.xlu0 %12793, %v11947
  %v12795 = vpop.permute.xlu0 %12794
  %12796 = vset.pattern.permute.xlu0 0
  %12797 = vperm.xlu0 %12796, %v11948
  %v12798 = vpop.permute.xlu0 %12797
  %12799 = vset.pattern.permute.xlu0 0
  %12800 = vperm.xlu0 %12799, %v11949
  %v12801 = vpop.permute.xlu0 %12800
  %12802 = vset.pattern.permute.xlu0 0
  %12803 = vperm.xlu0 %12802, %v11950
  %v12804 = vpop.permute.xlu0 %12803
  %12805 = vset.pattern.permute.xlu0 0
  %12806 = vperm.xlu0 %12805, %v11951
  %v12807 = vpop.permute.xlu0 %12806
  %12808 = vset.pattern.permute.xlu0 0
  %12809 = vperm.xlu0 %12808, %v11952
  %v12810 = vpop.permute.xlu0 %12809
  %12811 = vset.pattern.permute.xlu0 0
  %12812 = vperm.xlu0 %12811, %v11953
  %v12813 = vpop.permute.xlu0 %12812
  %12814 = vset.pattern.permute.xlu0 0
  %12815 = vperm.xlu0 %12814, %v11954
  %v12816 = vpop.permute.xlu0 %12815
  %12817 = vset.pattern.permute.xlu0 0
  %12818 = vperm.xlu0 %12817, %v11955
  %v12819 = vpop.permute.xlu0 %12818
  %12820 = vset.pattern.permute.xlu0 0
  %12821 = vperm.xlu0 %12820, %v11956
  %v12822 = vpop.permute.xlu0 %12821
  %12823 = vset.pattern.permute.xlu0 0
  %12824 = vperm.xlu0 %12823, %v11957
  %v12825 = vpop.permute.xlu0 %12824
  %12826 = vset.pattern.permute.xlu0 0
  %12827 = vperm.xlu0 %12826, %v11958
  %v12828 = vpop.permute.xlu0 %12827
  %12829 = vset.pattern.permute.xlu0 0
  %12830 = vperm.xlu0 %12829, %v11959
  %v12831 = vpop.permute.xlu0 %12830
  %12832 = vset.pattern.permute.xlu0 0
  %12833 = vperm.xlu0 %12832, %v11960
  %v12834 = vpop.permute.xlu0 %12833
  %12835 = vset.pattern.permute.xlu0 0
  %12836 = vperm.xlu0 %12835, %v11961
  %v12837 = vpop.permute.xlu0 %12836
  %12838 = vset.pattern.permute.xlu0 0
  %12839 = vperm.xlu0 %12838, %v11962
  %v12840 = vpop.permute.xlu0 %12839
  %12841 = vset.pattern.permute.xlu0 0
  %12842 = vperm.xlu0 %12841, %v11963
  %v12843 = vpop.permute.xlu0 %12842
  %12844 = vset.pattern.permute.xlu0 0
  %12845 = vperm.xlu0 %12844, %v11964
  %v12846 = vpop.permute.xlu0 %12845
  %12847 = vset.pattern.permute.xlu0 0
  %12848 = vperm.xlu0 %12847, %v11965
  %v12849 = vpop.permute.xlu0 %12848
  %12850 = vset.pattern.permute.xlu0 0
  %12851 = vperm.xlu0 %12850, %v11966
  %v12852 = vpop.permute.xlu0 %12851
  %12853 = vset.pattern.permute.xlu0 0
  %12854 = vperm.xlu0 %12853, %v11967
  %v12855 = vpop.permute.xlu0 %12854
  %12856 = vset.pattern.permute.xlu0 0
  %12857 = vperm.xlu0 %12856, %v11968
  %v12858 = vpop.permute.xlu0 %12857
  %12859 = vset.pattern.permute.xlu0 0
  %12860 = vperm.xlu0 %12859, %v11969
  %v12861 = vpop.permute.xlu0 %12860
  %12862 = vset.pattern.permute.xlu0 0
  %12863 = vperm.xlu0 %12862, %v11970
  %v12864 = vpop.permute.xlu0 %12863
  %12865 = vset.pattern.permute.xlu0 0
  %12866 = vperm.xlu0 %12865, %v11971
  %v12867 = vpop.permute.xlu0 %12866
  %12868 = vset.pattern.permute.xlu0 0
  %12869 = vperm.xlu0 %12868, %v11972
  %v12870 = vpop.permute.xlu0 %12869
  %12871 = vset.pattern.permute.xlu0 0
  %12872 = vperm.xlu0 %12871, %v11973
  %v12873 = vpop.permute.xlu0 %12872
  %12874 = vset.pattern.permute.xlu0 0
  %12875 = vperm.xlu0 %12874, %v11974
  %v12876 = vpop.permute.xlu0 %12875
  %12877 = vset.pattern.permute.xlu0 0
  %12878 = vperm.xlu0 %12877, %v11975
  %v12879 = vpop.permute.xlu0 %12878
  %12880 = vset.pattern.permute.xlu0 0
  %12881 = vperm.xlu0 %12880, %v11976
  %v12882 = vpop.permute.xlu0 %12881
  %12883 = vset.pattern.permute.xlu0 0
  %12884 = vperm.xlu0 %12883, %v11977
  %v12885 = vpop.permute.xlu0 %12884
  %12886 = vset.pattern.permute.xlu0 0
  %12887 = vperm.xlu0 %12886, %v11978
  %v12888 = vpop.permute.xlu0 %12887
  %12889 = vset.pattern.permute.xlu0 0
  %12890 = vperm.xlu0 %12889, %v11979
  %v12891 = vpop.permute.xlu0 %12890
  %12892 = vset.pattern.permute.xlu0 0
  %12893 = vperm.xlu0 %12892, %v11980
  %v12894 = vpop.permute.xlu0 %12893
  %12895 = vset.pattern.permute.xlu0 0
  %12896 = vperm.xlu0 %12895, %v11981
  %v12897 = vpop.permute.xlu0 %12896
  %12898 = vset.pattern.permute.xlu0 0
  %12899 = vperm.xlu0 %12898, %v11982
  %v12900 = vpop.permute.xlu0 %12899
  %12901 = vset.pattern.permute.xlu0 0
  %12902 = vperm.xlu0 %12901, %v11983
  %v12903 = vpop.permute.xlu0 %12902
  %12904 = vset.pattern.permute.xlu0 0
  %12905 = vperm.xlu0 %12904, %v11984
  %v12906 = vpop.permute.xlu0 %12905
  %12907 = vset.pattern.permute.xlu0 0
  %12908 = vperm.xlu0 %12907, %v11985
  %v12909 = vpop.permute.xlu0 %12908
  %12910 = vset.pattern.permute.xlu0 0
  %12911 = vperm.xlu0 %12910, %v11986
  %v12912 = vpop.permute.xlu0 %12911
  %12913 = vset.pattern.permute.xlu0 0
  %12914 = vperm.xlu0 %12913, %v11987
  %v12915 = vpop.permute.xlu0 %12914
  %12916 = vset.pattern.permute.xlu0 0
  %12917 = vperm.xlu0 %12916, %v11988
  %v12918 = vpop.permute.xlu0 %12917
  %12919 = vset.pattern.permute.xlu0 0
  %12920 = vperm.xlu0 %12919, %v11989
  %v12921 = vpop.permute.xlu0 %12920
  %12922 = vset.pattern.permute.xlu0 0
  %12923 = vperm.xlu0 %12922, %v11990
  %v12924 = vpop.permute.xlu0 %12923
  %12925 = vset.pattern.permute.xlu0 0
  %12926 = vperm.xlu0 %12925, %v11991
  %v12927 = vpop.permute.xlu0 %12926
  %12928 = vset.pattern.permute.xlu0 0
  %12929 = vperm.xlu0 %12928, %v11992
  %v12930 = vpop.permute.xlu0 %12929
  %12931 = vset.pattern.permute.xlu0 0
  %12932 = vperm.xlu0 %12931, %v11993
  %v12933 = vpop.permute.xlu0 %12932
  %12934 = vset.pattern.permute.xlu0 0
  %12935 = vperm.xlu0 %12934, %v11994
  %v12936 = vpop.permute.xlu0 %12935
  %12937 = vset.pattern.permute.xlu0 0
  %12938 = vperm.xlu0 %12937, %v11995
  %v12939 = vpop.permute.xlu0 %12938
  %12940 = vset.pattern.permute.xlu0 0
  %12941 = vperm.xlu0 %12940, %v11996
  %v12942 = vpop.permute.xlu0 %12941
  %12943 = vset.pattern.permute.xlu0 0
  %12944 = vperm.xlu0 %12943, %v11997
  %v12945 = vpop.permute.xlu0 %12944
  %12946 = vset.pattern.permute.xlu0 0
  %12947 = vperm.xlu0 %12946, %v11998
  %v12948 = vpop.permute.xlu0 %12947
  %12949 = vset.pattern.permute.xlu0 0
  %12950 = vperm.xlu0 %12949, %v11999
  %v12951 = vpop.permute.xlu0 %12950
  %12952 = vset.pattern.permute.xlu0 0
  %12953 = vperm.xlu0 %12952, %v12000
  %v12954 = vpop.permute.xlu0 %12953
  %12955 = vset.pattern.permute.xlu0 0
  %12956 = vperm.xlu0 %12955, %v12001
  %v12957 = vpop.permute.xlu0 %12956
  %12958 = vset.pattern.permute.xlu0 0
  %12959 = vperm.xlu0 %12958, %v12002
  %v12960 = vpop.permute.xlu0 %12959
  %12961 = vset.pattern.permute.xlu0 0
  %12962 = vperm.xlu0 %12961, %v12003
  %v12963 = vpop.permute.xlu0 %12962
  %12964 = vset.pattern.permute.xlu0 0
  %12965 = vperm.xlu0 %12964, %v12004
  %v12966 = vpop.permute.xlu0 %12965
  %12967 = vset.pattern.permute.xlu0 0
  %12968 = vperm.xlu0 %12967, %v12005
  %v12969 = vpop.permute.xlu0 %12968
  %12970 = vset.pattern.permute.xlu0 0
  %12971 = vperm.xlu0 %12970, %v12006
  %v12972 = vpop.permute.xlu0 %12971
  %12973 = vset.pattern.permute.xlu0 0
  %12974 = vperm.xlu0 %12973, %v12007
  %v12975 = vpop.permute.xlu0 %12974
  %12976 = vset.pattern.permute.xlu0 0
  %12977 = vperm.xlu0 %12976, %v12008
  %v12978 = vpop.permute.xlu0 %12977
  %12979 = vset.pattern.permute.xlu0 0
  %12980 = vperm.xlu0 %12979, %v12009
  %v12981 = vpop.permute.xlu0 %12980
  %12982 = vset.pattern.permute.xlu0 0
  %12983 = vperm.xlu0 %12982, %v12010
  %v12984 = vpop.permute.xlu0 %12983
  %12985 = vset.pattern.permute.xlu0 0
  %12986 = vperm.xlu0 %12985, %v12011
  %v12987 = vpop.permute.xlu0 %12986
  %12988 = vset.pattern.permute.xlu0 0
  %12989 = vperm.xlu0 %12988, %v12012
  %v12990 = vpop.permute.xlu0 %12989
  %12991 = vset.pattern.permute.xlu0 0
  %12992 = vperm.xlu0 %12991, %v12013
  %v12993 = vpop.permute.xlu0 %12992
  %12994 = vset.pattern.permute.xlu0 0
  %12995 = vperm.xlu0 %12994, %v12014
  %v12996 = vpop.permute.xlu0 %12995
  %12997 = vset.pattern.permute.xlu0 0
  %12998 = vperm.xlu0 %12997, %v12015
  %v12999 = vpop.permute.xlu0 %12998
  %13000 = vset.pattern.permute.xlu0 0
  %13001 = vperm.xlu0 %13000, %v12016
  %v13002 = vpop.permute.xlu0 %13001
  %13003 = vset.pattern.permute.xlu0 0
  %13004 = vperm.xlu0 %13003, %v12017
  %v13005 = vpop.permute.xlu0 %13004
  %13006 = vset.pattern.permute.xlu0 0
  %13007 = vperm.xlu0 %13006, %v12018
  %v13008 = vpop.permute.xlu0 %13007
  %13009 = vset.pattern.permute.xlu0 0
  %13010 = vperm.xlu0 %13009, %v12019
  %v13011 = vpop.permute.xlu0 %13010
  %13012 = vset.pattern.permute.xlu0 0
  %13013 = vperm.xlu0 %13012, %v12020
  %v13014 = vpop.permute.xlu0 %13013
  %13015 = vset.pattern.permute.xlu0 0
  %13016 = vperm.xlu0 %13015, %v12021
  %v13017 = vpop.permute.xlu0 %13016
  %13018 = vset.pattern.permute.xlu0 0
  %13019 = vperm.xlu0 %13018, %v12022
  %v13020 = vpop.permute.xlu0 %13019
  %13021 = vset.pattern.permute.xlu0 0
  %13022 = vperm.xlu0 %13021, %v12023
  %v13023 = vpop.permute.xlu0 %13022
  %13024 = vset.pattern.permute.xlu0 0
  %13025 = vperm.xlu0 %13024, %v12024
  %v13026 = vpop.permute.xlu0 %13025
  %13027 = vset.pattern.permute.xlu0 0
  %13028 = vperm.xlu0 %13027, %v12025
  %v13029 = vpop.permute.xlu0 %13028
  %13030 = vset.pattern.permute.xlu0 0
  %13031 = vperm.xlu0 %13030, %v12026
  %v13032 = vpop.permute.xlu0 %13031
  %13033 = vset.pattern.permute.xlu0 0
  %13034 = vperm.xlu0 %13033, %v12027
  %v13035 = vpop.permute.xlu0 %13034
  %13036 = vset.pattern.permute.xlu0 0
  %13037 = vperm.xlu0 %13036, %v12028
  %v13038 = vpop.permute.xlu0 %13037
  %13039 = vset.pattern.permute.xlu0 0
  %13040 = vperm.xlu0 %13039, %v12029
  %v13041 = vpop.permute.xlu0 %13040
  %13042 = vset.pattern.permute.xlu0 0
  %13043 = vperm.xlu0 %13042, %v12030
  %v13044 = vpop.permute.xlu0 %13043
  %13045 = vset.pattern.permute.xlu0 0
  %13046 = vperm.xlu0 %13045, %v12031
  %v13047 = vpop.permute.xlu0 %13046
  %13048 = vset.pattern.permute.xlu0 0
  %13049 = vperm.xlu0 %13048, %v12032
  %v13050 = vpop.permute.xlu0 %13049
  %13051 = vset.pattern.permute.xlu0 0
  %13052 = vperm.xlu0 %13051, %v12033
  %v13053 = vpop.permute.xlu0 %13052
  %13054 = vset.pattern.permute.xlu0 0
  %13055 = vperm.xlu0 %13054, %v12034
  %v13056 = vpop.permute.xlu0 %13055
  %13057 = vset.pattern.permute.xlu0 0
  %13058 = vperm.xlu0 %13057, %v12035
  %v13059 = vpop.permute.xlu0 %13058
  %v13060 = vlaneseq
  %v13061 = vand.u32 %v13060, 127
  %v13062 = vlaneseq
  %v13063 = vshrl.u32 %v13062, 7
  %v13064 = vsub.s32 %v13061, %v13063
  %v13065 = vrot.slane %v12294, %v13064
  %v13066 = vadd.s32 %v13061, 4294967288
  %v13067 = vlaneseq
  %v13068 = vshrl.u32 %v13067, 7
  %v13069 = vsub.s32 %v13066, %v13068
  %v13070 = vrot.slane %v12297, %v13069
  %vm13071 = vcmask 130112
  %v13072 = vsel %vm13071, %v13070, %v13065
  %v13073 = vadd.s32 %v13061, 4294967280
  %v13074 = vlaneseq
  %v13075 = vshrl.u32 %v13074, 7
  %v13076 = vsub.s32 %v13073, %v13075
  %v13077 = vrot.slane %v12300, %v13076
  %vm13078 = vcmask 195712
  %v13079 = vsel %vm13078, %v13077, %v13072
  %v13080 = vadd.s32 %v13061, 4294967272
  %v13081 = vlaneseq
  %v13082 = vshrl.u32 %v13081, 7
  %v13083 = vsub.s32 %v13080, %v13082
  %v13084 = vrot.slane %v12303, %v13083
  %vm13085 = vcmask 261312
  %v13086 = vsel %vm13085, %v13084, %v13079
  %v13087 = vadd.s32 %v13061, 4294967264
  %v13088 = vlaneseq
  %v13089 = vshrl.u32 %v13088, 7
  %v13090 = vsub.s32 %v13087, %v13089
  %v13091 = vrot.slane %v12306, %v13090
  %vm13092 = vcmask 326912
  %v13093 = vsel %vm13092, %v13091, %v13086
  %v13094 = vadd.s32 %v13061, 4294967256
  %v13095 = vlaneseq
  %v13096 = vshrl.u32 %v13095, 7
  %v13097 = vsub.s32 %v13094, %v13096
  %v13098 = vrot.slane %v12309, %v13097
  %vm13099 = vcmask 392512
  %v13100 = vsel %vm13099, %v13098, %v13093
  %v13101 = vadd.s32 %v13061, 4294967248
  %v13102 = vlaneseq
  %v13103 = vshrl.u32 %v13102, 7
  %v13104 = vsub.s32 %v13101, %v13103
  %v13105 = vrot.slane %v12312, %v13104
  %vm13106 = vcmask 458112
  %v13107 = vsel %vm13106, %v13105, %v13100
  %v13108 = vadd.s32 %v13061, 4294967240
  %v13109 = vlaneseq
  %v13110 = vshrl.u32 %v13109, 7
  %v13111 = vsub.s32 %v13108, %v13110
  %v13112 = vrot.slane %v12315, %v13111
  %vm13113 = vcmask 523712
  %v13114 = vsel %vm13113, %v13112, %v13107
  %v13115 = vadd.s32 %v13061, 4294967232
  %v13116 = vlaneseq
  %v13117 = vshrl.u32 %v13116, 7
  %v13118 = vsub.s32 %v13115, %v13117
  %v13119 = vrot.slane %v12318, %v13118
  %vm13120 = vcmask 589312
  %v13121 = vsel %vm13120, %v13119, %v13114
  %v13122 = vadd.s32 %v13061, 4294967224
  %v13123 = vlaneseq
  %v13124 = vshrl.u32 %v13123, 7
  %v13125 = vsub.s32 %v13122, %v13124
  %v13126 = vrot.slane %v12321, %v13125
  %vm13127 = vcmask 654912
  %v13128 = vsel %vm13127, %v13126, %v13121
  %v13129 = vadd.s32 %v13061, 4294967216
  %v13130 = vlaneseq
  %v13131 = vshrl.u32 %v13130, 7
  %v13132 = vsub.s32 %v13129, %v13131
  %v13133 = vrot.slane %v12324, %v13132
  %vm13134 = vcmask 720512
  %v13135 = vsel %vm13134, %v13133, %v13128
  %v13136 = vadd.s32 %v13061, 4294967208
  %v13137 = vlaneseq
  %v13138 = vshrl.u32 %v13137, 7
  %v13139 = vsub.s32 %v13136, %v13138
  %v13140 = vrot.slane %v12327, %v13139
  %vm13141 = vcmask 786112
  %v13142 = vsel %vm13141, %v13140, %v13135
  %v13143 = vadd.s32 %v13061, 4294967200
  %v13144 = vlaneseq
  %v13145 = vshrl.u32 %v13144, 7
  %v13146 = vsub.s32 %v13143, %v13145
  %v13147 = vrot.slane %v12330, %v13146
  %vm13148 = vcmask 851712
  %v13149 = vsel %vm13148, %v13147, %v13142
  %v13150 = vadd.s32 %v13061, 4294967192
  %v13151 = vlaneseq
  %v13152 = vshrl.u32 %v13151, 7
  %v13153 = vsub.s32 %v13150, %v13152
  %v13154 = vrot.slane %v12333, %v13153
  %vm13155 = vcmask 917312
  %v13156 = vsel %vm13155, %v13154, %v13149
  %v13157 = vadd.s32 %v13061, 4294967184
  %v13158 = vlaneseq
  %v13159 = vshrl.u32 %v13158, 7
  %v13160 = vsub.s32 %v13157, %v13159
  %v13161 = vrot.slane %v12336, %v13160
  %vm13162 = vcmask 982912
  %v13163 = vsel %vm13162, %v13161, %v13156
  %v13164 = vadd.s32 %v13061, 4294967176
  %v13165 = vlaneseq
  %v13166 = vshrl.u32 %v13165, 7
  %v13167 = vsub.s32 %v13164, %v13166
  %v13168 = vrot.slane %v12339, %v13167
  %vm13169 = vcmask 1048512
  %v13170 = vsel %vm13169, %v13168, %v13163
  %v13171 = vlaneseq
  %v13172 = vshrl.u32 %v13171, 7
  %v13173 = vsub.s32 %v13061, %v13172
  %v13174 = vrot.slane %v12342, %v13173
  %v13175 = vlaneseq
  %v13176 = vshrl.u32 %v13175, 7
  %v13177 = vsub.s32 %v13066, %v13176
  %v13178 = vrot.slane %v12345, %v13177
  %v13179 = vsel %vm13071, %v13178, %v13174
  %v13180 = vlaneseq
  %v13181 = vshrl.u32 %v13180, 7
  %v13182 = vsub.s32 %v13073, %v13181
  %v13183 = vrot.slane %v12348, %v13182
  %v13184 = vsel %vm13078, %v13183, %v13179
  %v13185 = vlaneseq
  %v13186 = vshrl.u32 %v13185, 7
  %v13187 = vsub.s32 %v13080, %v13186
  %v13188 = vrot.slane %v12351, %v13187
  %v13189 = vsel %vm13085, %v13188, %v13184
  %v13190 = vlaneseq
  %v13191 = vshrl.u32 %v13190, 7
  %v13192 = vsub.s32 %v13087, %v13191
  %v13193 = vrot.slane %v12354, %v13192
  %v13194 = vsel %vm13092, %v13193, %v13189
  %v13195 = vlaneseq
  %v13196 = vshrl.u32 %v13195, 7
  %v13197 = vsub.s32 %v13094, %v13196
  %v13198 = vrot.slane %v12357, %v13197
  %v13199 = vsel %vm13099, %v13198, %v13194
  %v13200 = vlaneseq
  %v13201 = vshrl.u32 %v13200, 7
  %v13202 = vsub.s32 %v13101, %v13201
  %v13203 = vrot.slane %v12360, %v13202
  %v13204 = vsel %vm13106, %v13203, %v13199
  %v13205 = vlaneseq
  %v13206 = vshrl.u32 %v13205, 7
  %v13207 = vsub.s32 %v13108, %v13206
  %v13208 = vrot.slane %v12363, %v13207
  %v13209 = vsel %vm13113, %v13208, %v13204
  %v13210 = vlaneseq
  %v13211 = vshrl.u32 %v13210, 7
  %v13212 = vsub.s32 %v13115, %v13211
  %v13213 = vrot.slane %v12366, %v13212
  %v13214 = vsel %vm13120, %v13213, %v13209
  %v13215 = vlaneseq
  %v13216 = vshrl.u32 %v13215, 7
  %v13217 = vsub.s32 %v13122, %v13216
  %v13218 = vrot.slane %v12369, %v13217
  %v13219 = vsel %vm13127, %v13218, %v13214
  %v13220 = vlaneseq
  %v13221 = vshrl.u32 %v13220, 7
  %v13222 = vsub.s32 %v13129, %v13221
  %v13223 = vrot.slane %v12372, %v13222
  %v13224 = vsel %vm13134, %v13223, %v13219
  %v13225 = vlaneseq
  %v13226 = vshrl.u32 %v13225, 7
  %v13227 = vsub.s32 %v13136, %v13226
  %v13228 = vrot.slane %v12375, %v13227
  %v13229 = vsel %vm13141, %v13228, %v13224
  %v13230 = vlaneseq
  %v13231 = vshrl.u32 %v13230, 7
  %v13232 = vsub.s32 %v13143, %v13231
  %v13233 = vrot.slane %v12378, %v13232
  %v13234 = vsel %vm13148, %v13233, %v13229
  %v13235 = vlaneseq
  %v13236 = vshrl.u32 %v13235, 7
  %v13237 = vsub.s32 %v13150, %v13236
  %v13238 = vrot.slane %v12381, %v13237
  %v13239 = vsel %vm13155, %v13238, %v13234
  %v13240 = vlaneseq
  %v13241 = vshrl.u32 %v13240, 7
  %v13242 = vsub.s32 %v13157, %v13241
  %v13243 = vrot.slane %v12384, %v13242
  %v13244 = vsel %vm13162, %v13243, %v13239
  %v13245 = vlaneseq
  %v13246 = vshrl.u32 %v13245, 7
  %v13247 = vsub.s32 %v13164, %v13246
  %v13248 = vrot.slane %v12387, %v13247
  %v13249 = vsel %vm13169, %v13248, %v13244
  %v13250 = vlaneseq
  %v13251 = vshrl.u32 %v13250, 7
  %v13252 = vsub.s32 %v13061, %v13251
  %v13253 = vrot.slane %v12390, %v13252
  %v13254 = vlaneseq
  %v13255 = vshrl.u32 %v13254, 7
  %v13256 = vsub.s32 %v13066, %v13255
  %v13257 = vrot.slane %v12393, %v13256
  %v13258 = vsel %vm13071, %v13257, %v13253
  %v13259 = vlaneseq
  %v13260 = vshrl.u32 %v13259, 7
  %v13261 = vsub.s32 %v13073, %v13260
  %v13262 = vrot.slane %v12396, %v13261
  %v13263 = vsel %vm13078, %v13262, %v13258
  %v13264 = vlaneseq
  %v13265 = vshrl.u32 %v13264, 7
  %v13266 = vsub.s32 %v13080, %v13265
  %v13267 = vrot.slane %v12399, %v13266
  %v13268 = vsel %vm13085, %v13267, %v13263
  %v13269 = vlaneseq
  %v13270 = vshrl.u32 %v13269, 7
  %v13271 = vsub.s32 %v13087, %v13270
  %v13272 = vrot.slane %v12402, %v13271
  %v13273 = vsel %vm13092, %v13272, %v13268
  %v13274 = vlaneseq
  %v13275 = vshrl.u32 %v13274, 7
  %v13276 = vsub.s32 %v13094, %v13275
  %v13277 = vrot.slane %v12405, %v13276
  %v13278 = vsel %vm13099, %v13277, %v13273
  %v13279 = vlaneseq
  %v13280 = vshrl.u32 %v13279, 7
  %v13281 = vsub.s32 %v13101, %v13280
  %v13282 = vrot.slane %v12408, %v13281
  %v13283 = vsel %vm13106, %v13282, %v13278
  %v13284 = vlaneseq
  %v13285 = vshrl.u32 %v13284, 7
  %v13286 = vsub.s32 %v13108, %v13285
  %v13287 = vrot.slane %v12411, %v13286
  %v13288 = vsel %vm13113, %v13287, %v13283
  %v13289 = vlaneseq
  %v13290 = vshrl.u32 %v13289, 7
  %v13291 = vsub.s32 %v13115, %v13290
  %v13292 = vrot.slane %v12414, %v13291
  %v13293 = vsel %vm13120, %v13292, %v13288
  %v13294 = vlaneseq
  %v13295 = vshrl.u32 %v13294, 7
  %v13296 = vsub.s32 %v13122, %v13295
  %v13297 = vrot.slane %v12417, %v13296
  %v13298 = vsel %vm13127, %v13297, %v13293
  %v13299 = vlaneseq
  %v13300 = vshrl.u32 %v13299, 7
  %v13301 = vsub.s32 %v13129, %v13300
  %v13302 = vrot.slane %v12420, %v13301
  %v13303 = vsel %vm13134, %v13302, %v13298
  %v13304 = vlaneseq
  %v13305 = vshrl.u32 %v13304, 7
  %v13306 = vsub.s32 %v13136, %v13305
  %v13307 = vrot.slane %v12423, %v13306
  %v13308 = vsel %vm13141, %v13307, %v13303
  %v13309 = vlaneseq
  %v13310 = vshrl.u32 %v13309, 7
  %v13311 = vsub.s32 %v13143, %v13310
  %v13312 = vrot.slane %v12426, %v13311
  %v13313 = vsel %vm13148, %v13312, %v13308
  %v13314 = vlaneseq
  %v13315 = vshrl.u32 %v13314, 7
  %v13316 = vsub.s32 %v13150, %v13315
  %v13317 = vrot.slane %v12429, %v13316
  %v13318 = vsel %vm13155, %v13317, %v13313
  %v13319 = vlaneseq
  %v13320 = vshrl.u32 %v13319, 7
  %v13321 = vsub.s32 %v13157, %v13320
  %v13322 = vrot.slane %v12432, %v13321
  %v13323 = vsel %vm13162, %v13322, %v13318
  %v13324 = vlaneseq
  %v13325 = vshrl.u32 %v13324, 7
  %v13326 = vsub.s32 %v13164, %v13325
  %v13327 = vrot.slane %v12435, %v13326
  %v13328 = vsel %vm13169, %v13327, %v13323
  %v13329 = vlaneseq
  %v13330 = vshrl.u32 %v13329, 7
  %v13331 = vsub.s32 %v13061, %v13330
  %v13332 = vrot.slane %v12438, %v13331
  %v13333 = vlaneseq
  %v13334 = vshrl.u32 %v13333, 7
  %v13335 = vsub.s32 %v13066, %v13334
  %v13336 = vrot.slane %v12441, %v13335
  %v13337 = vsel %vm13071, %v13336, %v13332
  %v13338 = vlaneseq
  %v13339 = vshrl.u32 %v13338, 7
  %v13340 = vsub.s32 %v13073, %v13339
  %v13341 = vrot.slane %v12444, %v13340
  %v13342 = vsel %vm13078, %v13341, %v13337
  %v13343 = vlaneseq
  %v13344 = vshrl.u32 %v13343, 7
  %v13345 = vsub.s32 %v13080, %v13344
  %v13346 = vrot.slane %v12447, %v13345
  %v13347 = vsel %vm13085, %v13346, %v13342
  %v13348 = vlaneseq
  %v13349 = vshrl.u32 %v13348, 7
  %v13350 = vsub.s32 %v13087, %v13349
  %v13351 = vrot.slane %v12450, %v13350
  %v13352 = vsel %vm13092, %v13351, %v13347
  %v13353 = vlaneseq
  %v13354 = vshrl.u32 %v13353, 7
  %v13355 = vsub.s32 %v13094, %v13354
  %v13356 = vrot.slane %v12453, %v13355
  %v13357 = vsel %vm13099, %v13356, %v13352
  %v13358 = vlaneseq
  %v13359 = vshrl.u32 %v13358, 7
  %v13360 = vsub.s32 %v13101, %v13359
  %v13361 = vrot.slane %v12456, %v13360
  %v13362 = vsel %vm13106, %v13361, %v13357
  %v13363 = vlaneseq
  %v13364 = vshrl.u32 %v13363, 7
  %v13365 = vsub.s32 %v13108, %v13364
  %v13366 = vrot.slane %v12459, %v13365
  %v13367 = vsel %vm13113, %v13366, %v13362
  %v13368 = vlaneseq
  %v13369 = vshrl.u32 %v13368, 7
  %v13370 = vsub.s32 %v13115, %v13369
  %v13371 = vrot.slane %v12462, %v13370
  %v13372 = vsel %vm13120, %v13371, %v13367
  %v13373 = vlaneseq
  %v13374 = vshrl.u32 %v13373, 7
  %v13375 = vsub.s32 %v13122, %v13374
  %v13376 = vrot.slane %v12465, %v13375
  %v13377 = vsel %vm13127, %v13376, %v13372
  %v13378 = vlaneseq
  %v13379 = vshrl.u32 %v13378, 7
  %v13380 = vsub.s32 %v13129, %v13379
  %v13381 = vrot.slane %v12468, %v13380
  %v13382 = vsel %vm13134, %v13381, %v13377
  %v13383 = vlaneseq
  %v13384 = vshrl.u32 %v13383, 7
  %v13385 = vsub.s32 %v13136, %v13384
  %v13386 = vrot.slane %v12471, %v13385
  %v13387 = vsel %vm13141, %v13386, %v13382
  %v13388 = vlaneseq
  %v13389 = vshrl.u32 %v13388, 7
  %v13390 = vsub.s32 %v13143, %v13389
  %v13391 = vrot.slane %v12474, %v13390
  %v13392 = vsel %vm13148, %v13391, %v13387
  %v13393 = vlaneseq
  %v13394 = vshrl.u32 %v13393, 7
  %v13395 = vsub.s32 %v13150, %v13394
  %v13396 = vrot.slane %v12477, %v13395
  %v13397 = vsel %vm13155, %v13396, %v13392
  %v13398 = vlaneseq
  %v13399 = vshrl.u32 %v13398, 7
  %v13400 = vsub.s32 %v13157, %v13399
  %v13401 = vrot.slane %v12480, %v13400
  %v13402 = vsel %vm13162, %v13401, %v13397
  %v13403 = vlaneseq
  %v13404 = vshrl.u32 %v13403, 7
  %v13405 = vsub.s32 %v13164, %v13404
  %v13406 = vrot.slane %v12483, %v13405
  %v13407 = vsel %vm13169, %v13406, %v13402
  %v13408 = vlaneseq
  %v13409 = vshrl.u32 %v13408, 7
  %v13410 = vsub.s32 %v13061, %v13409
  %v13411 = vrot.slane %v12486, %v13410
  %v13412 = vlaneseq
  %v13413 = vshrl.u32 %v13412, 7
  %v13414 = vsub.s32 %v13066, %v13413
  %v13415 = vrot.slane %v12489, %v13414
  %v13416 = vsel %vm13071, %v13415, %v13411
  %v13417 = vlaneseq
  %v13418 = vshrl.u32 %v13417, 7
  %v13419 = vsub.s32 %v13073, %v13418
  %v13420 = vrot.slane %v12492, %v13419
  %v13421 = vsel %vm13078, %v13420, %v13416
  %v13422 = vlaneseq
  %v13423 = vshrl.u32 %v13422, 7
  %v13424 = vsub.s32 %v13080, %v13423
  %v13425 = vrot.slane %v12495, %v13424
  %v13426 = vsel %vm13085, %v13425, %v13421
  %v13427 = vlaneseq
  %v13428 = vshrl.u32 %v13427, 7
  %v13429 = vsub.s32 %v13087, %v13428
  %v13430 = vrot.slane %v12498, %v13429
  %v13431 = vsel %vm13092, %v13430, %v13426
  %v13432 = vlaneseq
  %v13433 = vshrl.u32 %v13432, 7
  %v13434 = vsub.s32 %v13094, %v13433
  %v13435 = vrot.slane %v12501, %v13434
  %v13436 = vsel %vm13099, %v13435, %v13431
  %v13437 = vlaneseq
  %v13438 = vshrl.u32 %v13437, 7
  %v13439 = vsub.s32 %v13101, %v13438
  %v13440 = vrot.slane %v12504, %v13439
  %v13441 = vsel %vm13106, %v13440, %v13436
  %v13442 = vlaneseq
  %v13443 = vshrl.u32 %v13442, 7
  %v13444 = vsub.s32 %v13108, %v13443
  %v13445 = vrot.slane %v12507, %v13444
  %v13446 = vsel %vm13113, %v13445, %v13441
  %v13447 = vlaneseq
  %v13448 = vshrl.u32 %v13447, 7
  %v13449 = vsub.s32 %v13115, %v13448
  %v13450 = vrot.slane %v12510, %v13449
  %v13451 = vsel %vm13120, %v13450, %v13446
  %v13452 = vlaneseq
  %v13453 = vshrl.u32 %v13452, 7
  %v13454 = vsub.s32 %v13122, %v13453
  %v13455 = vrot.slane %v12513, %v13454
  %v13456 = vsel %vm13127, %v13455, %v13451
  %v13457 = vlaneseq
  %v13458 = vshrl.u32 %v13457, 7
  %v13459 = vsub.s32 %v13129, %v13458
  %v13460 = vrot.slane %v12516, %v13459
  %v13461 = vsel %vm13134, %v13460, %v13456
  %v13462 = vlaneseq
  %v13463 = vshrl.u32 %v13462, 7
  %v13464 = vsub.s32 %v13136, %v13463
  %v13465 = vrot.slane %v12519, %v13464
  %v13466 = vsel %vm13141, %v13465, %v13461
  %v13467 = vlaneseq
  %v13468 = vshrl.u32 %v13467, 7
  %v13469 = vsub.s32 %v13143, %v13468
  %v13470 = vrot.slane %v12522, %v13469
  %v13471 = vsel %vm13148, %v13470, %v13466
  %v13472 = vlaneseq
  %v13473 = vshrl.u32 %v13472, 7
  %v13474 = vsub.s32 %v13150, %v13473
  %v13475 = vrot.slane %v12525, %v13474
  %v13476 = vsel %vm13155, %v13475, %v13471
  %v13477 = vlaneseq
  %v13478 = vshrl.u32 %v13477, 7
  %v13479 = vsub.s32 %v13157, %v13478
  %v13480 = vrot.slane %v12528, %v13479
  %v13481 = vsel %vm13162, %v13480, %v13476
  %v13482 = vlaneseq
  %v13483 = vshrl.u32 %v13482, 7
  %v13484 = vsub.s32 %v13164, %v13483
  %v13485 = vrot.slane %v12531, %v13484
  %v13486 = vsel %vm13169, %v13485, %v13481
  %v13487 = vlaneseq
  %v13488 = vshrl.u32 %v13487, 7
  %v13489 = vsub.s32 %v13061, %v13488
  %v13490 = vrot.slane %v12534, %v13489
  %v13491 = vlaneseq
  %v13492 = vshrl.u32 %v13491, 7
  %v13493 = vsub.s32 %v13066, %v13492
  %v13494 = vrot.slane %v12537, %v13493
  %v13495 = vsel %vm13071, %v13494, %v13490
  %v13496 = vlaneseq
  %v13497 = vshrl.u32 %v13496, 7
  %v13498 = vsub.s32 %v13073, %v13497
  %v13499 = vrot.slane %v12540, %v13498
  %v13500 = vsel %vm13078, %v13499, %v13495
  %v13501 = vlaneseq
  %v13502 = vshrl.u32 %v13501, 7
  %v13503 = vsub.s32 %v13080, %v13502
  %v13504 = vrot.slane %v12543, %v13503
  %v13505 = vsel %vm13085, %v13504, %v13500
  %v13506 = vlaneseq
  %v13507 = vshrl.u32 %v13506, 7
  %v13508 = vsub.s32 %v13087, %v13507
  %v13509 = vrot.slane %v12546, %v13508
  %v13510 = vsel %vm13092, %v13509, %v13505
  %v13511 = vlaneseq
  %v13512 = vshrl.u32 %v13511, 7
  %v13513 = vsub.s32 %v13094, %v13512
  %v13514 = vrot.slane %v12549, %v13513
  %v13515 = vsel %vm13099, %v13514, %v13510
  %v13516 = vlaneseq
  %v13517 = vshrl.u32 %v13516, 7
  %v13518 = vsub.s32 %v13101, %v13517
  %v13519 = vrot.slane %v12552, %v13518
  %v13520 = vsel %vm13106, %v13519, %v13515
  %v13521 = vlaneseq
  %v13522 = vshrl.u32 %v13521, 7
  %v13523 = vsub.s32 %v13108, %v13522
  %v13524 = vrot.slane %v12555, %v13523
  %v13525 = vsel %vm13113, %v13524, %v13520
  %v13526 = vlaneseq
  %v13527 = vshrl.u32 %v13526, 7
  %v13528 = vsub.s32 %v13115, %v13527
  %v13529 = vrot.slane %v12558, %v13528
  %v13530 = vsel %vm13120, %v13529, %v13525
  %v13531 = vlaneseq
  %v13532 = vshrl.u32 %v13531, 7
  %v13533 = vsub.s32 %v13122, %v13532
  %v13534 = vrot.slane %v12561, %v13533
  %v13535 = vsel %vm13127, %v13534, %v13530
  %v13536 = vlaneseq
  %v13537 = vshrl.u32 %v13536, 7
  %v13538 = vsub.s32 %v13129, %v13537
  %v13539 = vrot.slane %v12564, %v13538
  %v13540 = vsel %vm13134, %v13539, %v13535
  %v13541 = vlaneseq
  %v13542 = vshrl.u32 %v13541, 7
  %v13543 = vsub.s32 %v13136, %v13542
  %v13544 = vrot.slane %v12567, %v13543
  %v13545 = vsel %vm13141, %v13544, %v13540
  %v13546 = vlaneseq
  %v13547 = vshrl.u32 %v13546, 7
  %v13548 = vsub.s32 %v13143, %v13547
  %v13549 = vrot.slane %v12570, %v13548
  %v13550 = vsel %vm13148, %v13549, %v13545
  %v13551 = vlaneseq
  %v13552 = vshrl.u32 %v13551, 7
  %v13553 = vsub.s32 %v13150, %v13552
  %v13554 = vrot.slane %v12573, %v13553
  %v13555 = vsel %vm13155, %v13554, %v13550
  %v13556 = vlaneseq
  %v13557 = vshrl.u32 %v13556, 7
  %v13558 = vsub.s32 %v13157, %v13557
  %v13559 = vrot.slane %v12576, %v13558
  %v13560 = vsel %vm13162, %v13559, %v13555
  %v13561 = vlaneseq
  %v13562 = vshrl.u32 %v13561, 7
  %v13563 = vsub.s32 %v13164, %v13562
  %v13564 = vrot.slane %v12579, %v13563
  %v13565 = vsel %vm13169, %v13564, %v13560
  %v13566 = vlaneseq
  %v13567 = vshrl.u32 %v13566, 7
  %v13568 = vsub.s32 %v13061, %v13567
  %v13569 = vrot.slane %v12582, %v13568
  %v13570 = vlaneseq
  %v13571 = vshrl.u32 %v13570, 7
  %v13572 = vsub.s32 %v13066, %v13571
  %v13573 = vrot.slane %v12585, %v13572
  %v13574 = vsel %vm13071, %v13573, %v13569
  %v13575 = vlaneseq
  %v13576 = vshrl.u32 %v13575, 7
  %v13577 = vsub.s32 %v13073, %v13576
  %v13578 = vrot.slane %v12588, %v13577
  %v13579 = vsel %vm13078, %v13578, %v13574
  %v13580 = vlaneseq
  %v13581 = vshrl.u32 %v13580, 7
  %v13582 = vsub.s32 %v13080, %v13581
  %v13583 = vrot.slane %v12591, %v13582
  %v13584 = vsel %vm13085, %v13583, %v13579
  %v13585 = vlaneseq
  %v13586 = vshrl.u32 %v13585, 7
  %v13587 = vsub.s32 %v13087, %v13586
  %v13588 = vrot.slane %v12594, %v13587
  %v13589 = vsel %vm13092, %v13588, %v13584
  %v13590 = vlaneseq
  %v13591 = vshrl.u32 %v13590, 7
  %v13592 = vsub.s32 %v13094, %v13591
  %v13593 = vrot.slane %v12597, %v13592
  %v13594 = vsel %vm13099, %v13593, %v13589
  %v13595 = vlaneseq
  %v13596 = vshrl.u32 %v13595, 7
  %v13597 = vsub.s32 %v13101, %v13596
  %v13598 = vrot.slane %v12600, %v13597
  %v13599 = vsel %vm13106, %v13598, %v13594
  %v13600 = vlaneseq
  %v13601 = vshrl.u32 %v13600, 7
  %v13602 = vsub.s32 %v13108, %v13601
  %v13603 = vrot.slane %v12603, %v13602
  %v13604 = vsel %vm13113, %v13603, %v13599
  %v13605 = vlaneseq
  %v13606 = vshrl.u32 %v13605, 7
  %v13607 = vsub.s32 %v13115, %v13606
  %v13608 = vrot.slane %v12606, %v13607
  %v13609 = vsel %vm13120, %v13608, %v13604
  %v13610 = vlaneseq
  %v13611 = vshrl.u32 %v13610, 7
  %v13612 = vsub.s32 %v13122, %v13611
  %v13613 = vrot.slane %v12609, %v13612
  %v13614 = vsel %vm13127, %v13613, %v13609
  %v13615 = vlaneseq
  %v13616 = vshrl.u32 %v13615, 7
  %v13617 = vsub.s32 %v13129, %v13616
  %v13618 = vrot.slane %v12612, %v13617
  %v13619 = vsel %vm13134, %v13618, %v13614
  %v13620 = vlaneseq
  %v13621 = vshrl.u32 %v13620, 7
  %v13622 = vsub.s32 %v13136, %v13621
  %v13623 = vrot.slane %v12615, %v13622
  %v13624 = vsel %vm13141, %v13623, %v13619
  %v13625 = vlaneseq
  %v13626 = vshrl.u32 %v13625, 7
  %v13627 = vsub.s32 %v13143, %v13626
  %v13628 = vrot.slane %v12618, %v13627
  %v13629 = vsel %vm13148, %v13628, %v13624
  %v13630 = vlaneseq
  %v13631 = vshrl.u32 %v13630, 7
  %v13632 = vsub.s32 %v13150, %v13631
  %v13633 = vrot.slane %v12621, %v13632
  %v13634 = vsel %vm13155, %v13633, %v13629
  %v13635 = vlaneseq
  %v13636 = vshrl.u32 %v13635, 7
  %v13637 = vsub.s32 %v13157, %v13636
  %v13638 = vrot.slane %v12624, %v13637
  %v13639 = vsel %vm13162, %v13638, %v13634
  %v13640 = vlaneseq
  %v13641 = vshrl.u32 %v13640, 7
  %v13642 = vsub.s32 %v13164, %v13641
  %v13643 = vrot.slane %v12627, %v13642
  %v13644 = vsel %vm13169, %v13643, %v13639
  %v13645 = vlaneseq
  %v13646 = vshrl.u32 %v13645, 7
  %v13647 = vsub.s32 %v13061, %v13646
  %v13648 = vrot.slane %v12630, %v13647
  %v13649 = vlaneseq
  %v13650 = vshrl.u32 %v13649, 7
  %v13651 = vsub.s32 %v13066, %v13650
  %v13652 = vrot.slane %v12633, %v13651
  %v13653 = vsel %vm13071, %v13652, %v13648
  %v13654 = vlaneseq
  %v13655 = vshrl.u32 %v13654, 7
  %v13656 = vsub.s32 %v13073, %v13655
  %v13657 = vrot.slane %v12636, %v13656
  %v13658 = vsel %vm13078, %v13657, %v13653
  %v13659 = vlaneseq
  %v13660 = vshrl.u32 %v13659, 7
  %v13661 = vsub.s32 %v13080, %v13660
  %v13662 = vrot.slane %v12639, %v13661
  %v13663 = vsel %vm13085, %v13662, %v13658
  %v13664 = vlaneseq
  %v13665 = vshrl.u32 %v13664, 7
  %v13666 = vsub.s32 %v13087, %v13665
  %v13667 = vrot.slane %v12642, %v13666
  %v13668 = vsel %vm13092, %v13667, %v13663
  %v13669 = vlaneseq
  %v13670 = vshrl.u32 %v13669, 7
  %v13671 = vsub.s32 %v13094, %v13670
  %v13672 = vrot.slane %v12645, %v13671
  %v13673 = vsel %vm13099, %v13672, %v13668
  %v13674 = vlaneseq
  %v13675 = vshrl.u32 %v13674, 7
  %v13676 = vsub.s32 %v13101, %v13675
  %v13677 = vrot.slane %v12648, %v13676
  %v13678 = vsel %vm13106, %v13677, %v13673
  %v13679 = vlaneseq
  %v13680 = vshrl.u32 %v13679, 7
  %v13681 = vsub.s32 %v13108, %v13680
  %v13682 = vrot.slane %v12651, %v13681
  %v13683 = vsel %vm13113, %v13682, %v13678
  %v13684 = vlaneseq
  %v13685 = vshrl.u32 %v13684, 7
  %v13686 = vsub.s32 %v13115, %v13685
  %v13687 = vrot.slane %v12654, %v13686
  %v13688 = vsel %vm13120, %v13687, %v13683
  %v13689 = vlaneseq
  %v13690 = vshrl.u32 %v13689, 7
  %v13691 = vsub.s32 %v13122, %v13690
  %v13692 = vrot.slane %v12657, %v13691
  %v13693 = vsel %vm13127, %v13692, %v13688
  %v13694 = vlaneseq
  %v13695 = vshrl.u32 %v13694, 7
  %v13696 = vsub.s32 %v13129, %v13695
  %v13697 = vrot.slane %v12660, %v13696
  %v13698 = vsel %vm13134, %v13697, %v13693
  %v13699 = vlaneseq
  %v13700 = vshrl.u32 %v13699, 7
  %v13701 = vsub.s32 %v13136, %v13700
  %v13702 = vrot.slane %v12663, %v13701
  %v13703 = vsel %vm13141, %v13702, %v13698
  %v13704 = vlaneseq
  %v13705 = vshrl.u32 %v13704, 7
  %v13706 = vsub.s32 %v13143, %v13705
  %v13707 = vrot.slane %v12666, %v13706
  %v13708 = vsel %vm13148, %v13707, %v13703
  %v13709 = vlaneseq
  %v13710 = vshrl.u32 %v13709, 7
  %v13711 = vsub.s32 %v13150, %v13710
  %v13712 = vrot.slane %v12669, %v13711
  %v13713 = vsel %vm13155, %v13712, %v13708
  %v13714 = vlaneseq
  %v13715 = vshrl.u32 %v13714, 7
  %v13716 = vsub.s32 %v13157, %v13715
  %v13717 = vrot.slane %v12672, %v13716
  %v13718 = vsel %vm13162, %v13717, %v13713
  %v13719 = vlaneseq
  %v13720 = vshrl.u32 %v13719, 7
  %v13721 = vsub.s32 %v13164, %v13720
  %v13722 = vrot.slane %v12675, %v13721
  %v13723 = vsel %vm13169, %v13722, %v13718
  %v13724 = vlaneseq
  %v13725 = vshrl.u32 %v13724, 7
  %v13726 = vsub.s32 %v13061, %v13725
  %v13727 = vrot.slane %v12678, %v13726
  %v13728 = vlaneseq
  %v13729 = vshrl.u32 %v13728, 7
  %v13730 = vsub.s32 %v13066, %v13729
  %v13731 = vrot.slane %v12681, %v13730
  %v13732 = vsel %vm13071, %v13731, %v13727
  %v13733 = vlaneseq
  %v13734 = vshrl.u32 %v13733, 7
  %v13735 = vsub.s32 %v13073, %v13734
  %v13736 = vrot.slane %v12684, %v13735
  %v13737 = vsel %vm13078, %v13736, %v13732
  %v13738 = vlaneseq
  %v13739 = vshrl.u32 %v13738, 7
  %v13740 = vsub.s32 %v13080, %v13739
  %v13741 = vrot.slane %v12687, %v13740
  %v13742 = vsel %vm13085, %v13741, %v13737
  %v13743 = vlaneseq
  %v13744 = vshrl.u32 %v13743, 7
  %v13745 = vsub.s32 %v13087, %v13744
  %v13746 = vrot.slane %v12690, %v13745
  %v13747 = vsel %vm13092, %v13746, %v13742
  %v13748 = vlaneseq
  %v13749 = vshrl.u32 %v13748, 7
  %v13750 = vsub.s32 %v13094, %v13749
  %v13751 = vrot.slane %v12693, %v13750
  %v13752 = vsel %vm13099, %v13751, %v13747
  %v13753 = vlaneseq
  %v13754 = vshrl.u32 %v13753, 7
  %v13755 = vsub.s32 %v13101, %v13754
  %v13756 = vrot.slane %v12696, %v13755
  %v13757 = vsel %vm13106, %v13756, %v13752
  %v13758 = vlaneseq
  %v13759 = vshrl.u32 %v13758, 7
  %v13760 = vsub.s32 %v13108, %v13759
  %v13761 = vrot.slane %v12699, %v13760
  %v13762 = vsel %vm13113, %v13761, %v13757
  %v13763 = vlaneseq
  %v13764 = vshrl.u32 %v13763, 7
  %v13765 = vsub.s32 %v13115, %v13764
  %v13766 = vrot.slane %v12702, %v13765
  %v13767 = vsel %vm13120, %v13766, %v13762
  %v13768 = vlaneseq
  %v13769 = vshrl.u32 %v13768, 7
  %v13770 = vsub.s32 %v13122, %v13769
  %v13771 = vrot.slane %v12705, %v13770
  %v13772 = vsel %vm13127, %v13771, %v13767
  %v13773 = vlaneseq
  %v13774 = vshrl.u32 %v13773, 7
  %v13775 = vsub.s32 %v13129, %v13774
  %v13776 = vrot.slane %v12708, %v13775
  %v13777 = vsel %vm13134, %v13776, %v13772
  %v13778 = vlaneseq
  %v13779 = vshrl.u32 %v13778, 7
  %v13780 = vsub.s32 %v13136, %v13779
  %v13781 = vrot.slane %v12711, %v13780
  %v13782 = vsel %vm13141, %v13781, %v13777
  %v13783 = vlaneseq
  %v13784 = vshrl.u32 %v13783, 7
  %v13785 = vsub.s32 %v13143, %v13784
  %v13786 = vrot.slane %v12714, %v13785
  %v13787 = vsel %vm13148, %v13786, %v13782
  %v13788 = vlaneseq
  %v13789 = vshrl.u32 %v13788, 7
  %v13790 = vsub.s32 %v13150, %v13789
  %v13791 = vrot.slane %v12717, %v13790
  %v13792 = vsel %vm13155, %v13791, %v13787
  %v13793 = vlaneseq
  %v13794 = vshrl.u32 %v13793, 7
  %v13795 = vsub.s32 %v13157, %v13794
  %v13796 = vrot.slane %v12720, %v13795
  %v13797 = vsel %vm13162, %v13796, %v13792
  %v13798 = vlaneseq
  %v13799 = vshrl.u32 %v13798, 7
  %v13800 = vsub.s32 %v13164, %v13799
  %v13801 = vrot.slane %v12723, %v13800
  %v13802 = vsel %vm13169, %v13801, %v13797
  %v13803 = vlaneseq
  %v13804 = vshrl.u32 %v13803, 7
  %v13805 = vsub.s32 %v13061, %v13804
  %v13806 = vrot.slane %v12726, %v13805
  %v13807 = vlaneseq
  %v13808 = vshrl.u32 %v13807, 7
  %v13809 = vsub.s32 %v13066, %v13808
  %v13810 = vrot.slane %v12729, %v13809
  %v13811 = vsel %vm13071, %v13810, %v13806
  %v13812 = vlaneseq
  %v13813 = vshrl.u32 %v13812, 7
  %v13814 = vsub.s32 %v13073, %v13813
  %v13815 = vrot.slane %v12732, %v13814
  %v13816 = vsel %vm13078, %v13815, %v13811
  %v13817 = vlaneseq
  %v13818 = vshrl.u32 %v13817, 7
  %v13819 = vsub.s32 %v13080, %v13818
  %v13820 = vrot.slane %v12735, %v13819
  %v13821 = vsel %vm13085, %v13820, %v13816
  %v13822 = vlaneseq
  %v13823 = vshrl.u32 %v13822, 7
  %v13824 = vsub.s32 %v13087, %v13823
  %v13825 = vrot.slane %v12738, %v13824
  %v13826 = vsel %vm13092, %v13825, %v13821
  %v13827 = vlaneseq
  %v13828 = vshrl.u32 %v13827, 7
  %v13829 = vsub.s32 %v13094, %v13828
  %v13830 = vrot.slane %v12741, %v13829
  %v13831 = vsel %vm13099, %v13830, %v13826
  %v13832 = vlaneseq
  %v13833 = vshrl.u32 %v13832, 7
  %v13834 = vsub.s32 %v13101, %v13833
  %v13835 = vrot.slane %v12744, %v13834
  %v13836 = vsel %vm13106, %v13835, %v13831
  %v13837 = vlaneseq
  %v13838 = vshrl.u32 %v13837, 7
  %v13839 = vsub.s32 %v13108, %v13838
  %v13840 = vrot.slane %v12747, %v13839
  %v13841 = vsel %vm13113, %v13840, %v13836
  %v13842 = vlaneseq
  %v13843 = vshrl.u32 %v13842, 7
  %v13844 = vsub.s32 %v13115, %v13843
  %v13845 = vrot.slane %v12750, %v13844
  %v13846 = vsel %vm13120, %v13845, %v13841
  %v13847 = vlaneseq
  %v13848 = vshrl.u32 %v13847, 7
  %v13849 = vsub.s32 %v13122, %v13848
  %v13850 = vrot.slane %v12753, %v13849
  %v13851 = vsel %vm13127, %v13850, %v13846
  %v13852 = vlaneseq
  %v13853 = vshrl.u32 %v13852, 7
  %v13854 = vsub.s32 %v13129, %v13853
  %v13855 = vrot.slane %v12756, %v13854
  %v13856 = vsel %vm13134, %v13855, %v13851
  %v13857 = vlaneseq
  %v13858 = vshrl.u32 %v13857, 7
  %v13859 = vsub.s32 %v13136, %v13858
  %v13860 = vrot.slane %v12759, %v13859
  %v13861 = vsel %vm13141, %v13860, %v13856
  %v13862 = vlaneseq
  %v13863 = vshrl.u32 %v13862, 7
  %v13864 = vsub.s32 %v13143, %v13863
  %v13865 = vrot.slane %v12762, %v13864
  %v13866 = vsel %vm13148, %v13865, %v13861
  %v13867 = vlaneseq
  %v13868 = vshrl.u32 %v13867, 7
  %v13869 = vsub.s32 %v13150, %v13868
  %v13870 = vrot.slane %v12765, %v13869
  %v13871 = vsel %vm13155, %v13870, %v13866
  %v13872 = vlaneseq
  %v13873 = vshrl.u32 %v13872, 7
  %v13874 = vsub.s32 %v13157, %v13873
  %v13875 = vrot.slane %v12768, %v13874
  %v13876 = vsel %vm13162, %v13875, %v13871
  %v13877 = vlaneseq
  %v13878 = vshrl.u32 %v13877, 7
  %v13879 = vsub.s32 %v13164, %v13878
  %v13880 = vrot.slane %v12771, %v13879
  %v13881 = vsel %vm13169, %v13880, %v13876
  %v13882 = vlaneseq
  %v13883 = vshrl.u32 %v13882, 7
  %v13884 = vsub.s32 %v13061, %v13883
  %v13885 = vrot.slane %v12774, %v13884
  %v13886 = vlaneseq
  %v13887 = vshrl.u32 %v13886, 7
  %v13888 = vsub.s32 %v13066, %v13887
  %v13889 = vrot.slane %v12777, %v13888
  %v13890 = vsel %vm13071, %v13889, %v13885
  %v13891 = vlaneseq
  %v13892 = vshrl.u32 %v13891, 7
  %v13893 = vsub.s32 %v13073, %v13892
  %v13894 = vrot.slane %v12780, %v13893
  %v13895 = vsel %vm13078, %v13894, %v13890
  %v13896 = vlaneseq
  %v13897 = vshrl.u32 %v13896, 7
  %v13898 = vsub.s32 %v13080, %v13897
  %v13899 = vrot.slane %v12783, %v13898
  %v13900 = vsel %vm13085, %v13899, %v13895
  %v13901 = vlaneseq
  %v13902 = vshrl.u32 %v13901, 7
  %v13903 = vsub.s32 %v13087, %v13902
  %v13904 = vrot.slane %v12786, %v13903
  %v13905 = vsel %vm13092, %v13904, %v13900
  %v13906 = vlaneseq
  %v13907 = vshrl.u32 %v13906, 7
  %v13908 = vsub.s32 %v13094, %v13907
  %v13909 = vrot.slane %v12789, %v13908
  %v13910 = vsel %vm13099, %v13909, %v13905
  %v13911 = vlaneseq
  %v13912 = vshrl.u32 %v13911, 7
  %v13913 = vsub.s32 %v13101, %v13912
  %v13914 = vrot.slane %v12792, %v13913
  %v13915 = vsel %vm13106, %v13914, %v13910
  %v13916 = vlaneseq
  %v13917 = vshrl.u32 %v13916, 7
  %v13918 = vsub.s32 %v13108, %v13917
  %v13919 = vrot.slane %v12795, %v13918
  %v13920 = vsel %vm13113, %v13919, %v13915
  %v13921 = vlaneseq
  %v13922 = vshrl.u32 %v13921, 7
  %v13923 = vsub.s32 %v13115, %v13922
  %v13924 = vrot.slane %v12798, %v13923
  %v13925 = vsel %vm13120, %v13924, %v13920
  %v13926 = vlaneseq
  %v13927 = vshrl.u32 %v13926, 7
  %v13928 = vsub.s32 %v13122, %v13927
  %v13929 = vrot.slane %v12801, %v13928
  %v13930 = vsel %vm13127, %v13929, %v13925
  %v13931 = vlaneseq
  %v13932 = vshrl.u32 %v13931, 7
  %v13933 = vsub.s32 %v13129, %v13932
  %v13934 = vrot.slane %v12804, %v13933
  %v13935 = vsel %vm13134, %v13934, %v13930
  %v13936 = vlaneseq
  %v13937 = vshrl.u32 %v13936, 7
  %v13938 = vsub.s32 %v13136, %v13937
  %v13939 = vrot.slane %v12807, %v13938
  %v13940 = vsel %vm13141, %v13939, %v13935
  %v13941 = vlaneseq
  %v13942 = vshrl.u32 %v13941, 7
  %v13943 = vsub.s32 %v13143, %v13942
  %v13944 = vrot.slane %v12810, %v13943
  %v13945 = vsel %vm13148, %v13944, %v13940
  %v13946 = vlaneseq
  %v13947 = vshrl.u32 %v13946, 7
  %v13948 = vsub.s32 %v13150, %v13947
  %v13949 = vrot.slane %v12813, %v13948
  %v13950 = vsel %vm13155, %v13949, %v13945
  %v13951 = vlaneseq
  %v13952 = vshrl.u32 %v13951, 7
  %v13953 = vsub.s32 %v13157, %v13952
  %v13954 = vrot.slane %v12816, %v13953
  %v13955 = vsel %vm13162, %v13954, %v13950
  %v13956 = vlaneseq
  %v13957 = vshrl.u32 %v13956, 7
  %v13958 = vsub.s32 %v13164, %v13957
  %v13959 = vrot.slane %v12819, %v13958
  %v13960 = vsel %vm13169, %v13959, %v13955
  %v13961 = vlaneseq
  %v13962 = vshrl.u32 %v13961, 7
  %v13963 = vsub.s32 %v13061, %v13962
  %v13964 = vrot.slane %v12822, %v13963
  %v13965 = vlaneseq
  %v13966 = vshrl.u32 %v13965, 7
  %v13967 = vsub.s32 %v13066, %v13966
  %v13968 = vrot.slane %v12825, %v13967
  %v13969 = vsel %vm13071, %v13968, %v13964
  %v13970 = vlaneseq
  %v13971 = vshrl.u32 %v13970, 7
  %v13972 = vsub.s32 %v13073, %v13971
  %v13973 = vrot.slane %v12828, %v13972
  %v13974 = vsel %vm13078, %v13973, %v13969
  %v13975 = vlaneseq
  %v13976 = vshrl.u32 %v13975, 7
  %v13977 = vsub.s32 %v13080, %v13976
  %v13978 = vrot.slane %v12831, %v13977
  %v13979 = vsel %vm13085, %v13978, %v13974
  %v13980 = vlaneseq
  %v13981 = vshrl.u32 %v13980, 7
  %v13982 = vsub.s32 %v13087, %v13981
  %v13983 = vrot.slane %v12834, %v13982
  %v13984 = vsel %vm13092, %v13983, %v13979
  %v13985 = vlaneseq
  %v13986 = vshrl.u32 %v13985, 7
  %v13987 = vsub.s32 %v13094, %v13986
  %v13988 = vrot.slane %v12837, %v13987
  %v13989 = vsel %vm13099, %v13988, %v13984
  %v13990 = vlaneseq
  %v13991 = vshrl.u32 %v13990, 7
  %v13992 = vsub.s32 %v13101, %v13991
  %v13993 = vrot.slane %v12840, %v13992
  %v13994 = vsel %vm13106, %v13993, %v13989
  %v13995 = vlaneseq
  %v13996 = vshrl.u32 %v13995, 7
  %v13997 = vsub.s32 %v13108, %v13996
  %v13998 = vrot.slane %v12843, %v13997
  %v13999 = vsel %vm13113, %v13998, %v13994
  %v14000 = vlaneseq
  %v14001 = vshrl.u32 %v14000, 7
  %v14002 = vsub.s32 %v13115, %v14001
  %v14003 = vrot.slane %v12846, %v14002
  %v14004 = vsel %vm13120, %v14003, %v13999
  %v14005 = vlaneseq
  %v14006 = vshrl.u32 %v14005, 7
  %v14007 = vsub.s32 %v13122, %v14006
  %v14008 = vrot.slane %v12849, %v14007
  %v14009 = vsel %vm13127, %v14008, %v14004
  %v14010 = vlaneseq
  %v14011 = vshrl.u32 %v14010, 7
  %v14012 = vsub.s32 %v13129, %v14011
  %v14013 = vrot.slane %v12852, %v14012
  %v14014 = vsel %vm13134, %v14013, %v14009
  %v14015 = vlaneseq
  %v14016 = vshrl.u32 %v14015, 7
  %v14017 = vsub.s32 %v13136, %v14016
  %v14018 = vrot.slane %v12855, %v14017
  %v14019 = vsel %vm13141, %v14018, %v14014
  %v14020 = vlaneseq
  %v14021 = vshrl.u32 %v14020, 7
  %v14022 = vsub.s32 %v13143, %v14021
  %v14023 = vrot.slane %v12858, %v14022
  %v14024 = vsel %vm13148, %v14023, %v14019
  %v14025 = vlaneseq
  %v14026 = vshrl.u32 %v14025, 7
  %v14027 = vsub.s32 %v13150, %v14026
  %v14028 = vrot.slane %v12861, %v14027
  %v14029 = vsel %vm13155, %v14028, %v14024
  %v14030 = vlaneseq
  %v14031 = vshrl.u32 %v14030, 7
  %v14032 = vsub.s32 %v13157, %v14031
  %v14033 = vrot.slane %v12864, %v14032
  %v14034 = vsel %vm13162, %v14033, %v14029
  %v14035 = vlaneseq
  %v14036 = vshrl.u32 %v14035, 7
  %v14037 = vsub.s32 %v13164, %v14036
  %v14038 = vrot.slane %v12867, %v14037
  %v14039 = vsel %vm13169, %v14038, %v14034
  %v14040 = vlaneseq
  %v14041 = vshrl.u32 %v14040, 7
  %v14042 = vsub.s32 %v13061, %v14041
  %v14043 = vrot.slane %v12870, %v14042
  %v14044 = vlaneseq
  %v14045 = vshrl.u32 %v14044, 7
  %v14046 = vsub.s32 %v13066, %v14045
  %v14047 = vrot.slane %v12873, %v14046
  %v14048 = vsel %vm13071, %v14047, %v14043
  %v14049 = vlaneseq
  %v14050 = vshrl.u32 %v14049, 7
  %v14051 = vsub.s32 %v13073, %v14050
  %v14052 = vrot.slane %v12876, %v14051
  %v14053 = vsel %vm13078, %v14052, %v14048
  %v14054 = vlaneseq
  %v14055 = vshrl.u32 %v14054, 7
  %v14056 = vsub.s32 %v13080, %v14055
  %v14057 = vrot.slane %v12879, %v14056
  %v14058 = vsel %vm13085, %v14057, %v14053
  %v14059 = vlaneseq
  %v14060 = vshrl.u32 %v14059, 7
  %v14061 = vsub.s32 %v13087, %v14060
  %v14062 = vrot.slane %v12882, %v14061
  %v14063 = vsel %vm13092, %v14062, %v14058
  %v14064 = vlaneseq
  %v14065 = vshrl.u32 %v14064, 7
  %v14066 = vsub.s32 %v13094, %v14065
  %v14067 = vrot.slane %v12885, %v14066
  %v14068 = vsel %vm13099, %v14067, %v14063
  %v14069 = vlaneseq
  %v14070 = vshrl.u32 %v14069, 7
  %v14071 = vsub.s32 %v13101, %v14070
  %v14072 = vrot.slane %v12888, %v14071
  %v14073 = vsel %vm13106, %v14072, %v14068
  %v14074 = vlaneseq
  %v14075 = vshrl.u32 %v14074, 7
  %v14076 = vsub.s32 %v13108, %v14075
  %v14077 = vrot.slane %v12891, %v14076
  %v14078 = vsel %vm13113, %v14077, %v14073
  %v14079 = vlaneseq
  %v14080 = vshrl.u32 %v14079, 7
  %v14081 = vsub.s32 %v13115, %v14080
  %v14082 = vrot.slane %v12894, %v14081
  %v14083 = vsel %vm13120, %v14082, %v14078
  %v14084 = vlaneseq
  %v14085 = vshrl.u32 %v14084, 7
  %v14086 = vsub.s32 %v13122, %v14085
  %v14087 = vrot.slane %v12897, %v14086
  %v14088 = vsel %vm13127, %v14087, %v14083
  %v14089 = vlaneseq
  %v14090 = vshrl.u32 %v14089, 7
  %v14091 = vsub.s32 %v13129, %v14090
  %v14092 = vrot.slane %v12900, %v14091
  %v14093 = vsel %vm13134, %v14092, %v14088
  %v14094 = vlaneseq
  %v14095 = vshrl.u32 %v14094, 7
  %v14096 = vsub.s32 %v13136, %v14095
  %v14097 = vrot.slane %v12903, %v14096
  %v14098 = vsel %vm13141, %v14097, %v14093
  %v14099 = vlaneseq
  %v14100 = vshrl.u32 %v14099, 7
  %v14101 = vsub.s32 %v13143, %v14100
  %v14102 = vrot.slane %v12906, %v14101
  %v14103 = vsel %vm13148, %v14102, %v14098
  %v14104 = vlaneseq
  %v14105 = vshrl.u32 %v14104, 7
  %v14106 = vsub.s32 %v13150, %v14105
  %v14107 = vrot.slane %v12909, %v14106
  %v14108 = vsel %vm13155, %v14107, %v14103
  %v14109 = vlaneseq
  %v14110 = vshrl.u32 %v14109, 7
  %v14111 = vsub.s32 %v13157, %v14110
  %v14112 = vrot.slane %v12912, %v14111
  %v14113 = vsel %vm13162, %v14112, %v14108
  %v14114 = vlaneseq
  %v14115 = vshrl.u32 %v14114, 7
  %v14116 = vsub.s32 %v13164, %v14115
  %v14117 = vrot.slane %v12915, %v14116
  %v14118 = vsel %vm13169, %v14117, %v14113
  %v14119 = vlaneseq
  %v14120 = vshrl.u32 %v14119, 7
  %v14121 = vsub.s32 %v13061, %v14120
  %v14122 = vrot.slane %v12918, %v14121
  %v14123 = vlaneseq
  %v14124 = vshrl.u32 %v14123, 7
  %v14125 = vsub.s32 %v13066, %v14124
  %v14126 = vrot.slane %v12921, %v14125
  %v14127 = vsel %vm13071, %v14126, %v14122
  %v14128 = vlaneseq
  %v14129 = vshrl.u32 %v14128, 7
  %v14130 = vsub.s32 %v13073, %v14129
  %v14131 = vrot.slane %v12924, %v14130
  %v14132 = vsel %vm13078, %v14131, %v14127
  %v14133 = vlaneseq
  %v14134 = vshrl.u32 %v14133, 7
  %v14135 = vsub.s32 %v13080, %v14134
  %v14136 = vrot.slane %v12927, %v14135
  %v14137 = vsel %vm13085, %v14136, %v14132
  %v14138 = vlaneseq
  %v14139 = vshrl.u32 %v14138, 7
  %v14140 = vsub.s32 %v13087, %v14139
  %v14141 = vrot.slane %v12930, %v14140
  %v14142 = vsel %vm13092, %v14141, %v14137
  %v14143 = vlaneseq
  %v14144 = vshrl.u32 %v14143, 7
  %v14145 = vsub.s32 %v13094, %v14144
  %v14146 = vrot.slane %v12933, %v14145
  %v14147 = vsel %vm13099, %v14146, %v14142
  %v14148 = vlaneseq
  %v14149 = vshrl.u32 %v14148, 7
  %v14150 = vsub.s32 %v13101, %v14149
  %v14151 = vrot.slane %v12936, %v14150
  %v14152 = vsel %vm13106, %v14151, %v14147
  %v14153 = vlaneseq
  %v14154 = vshrl.u32 %v14153, 7
  %v14155 = vsub.s32 %v13108, %v14154
  %v14156 = vrot.slane %v12939, %v14155
  %v14157 = vsel %vm13113, %v14156, %v14152
  %v14158 = vlaneseq
  %v14159 = vshrl.u32 %v14158, 7
  %v14160 = vsub.s32 %v13115, %v14159
  %v14161 = vrot.slane %v12942, %v14160
  %v14162 = vsel %vm13120, %v14161, %v14157
  %v14163 = vlaneseq
  %v14164 = vshrl.u32 %v14163, 7
  %v14165 = vsub.s32 %v13122, %v14164
  %v14166 = vrot.slane %v12945, %v14165
  %v14167 = vsel %vm13127, %v14166, %v14162
  %v14168 = vlaneseq
  %v14169 = vshrl.u32 %v14168, 7
  %v14170 = vsub.s32 %v13129, %v14169
  %v14171 = vrot.slane %v12948, %v14170
  %v14172 = vsel %vm13134, %v14171, %v14167
  %v14173 = vlaneseq
  %v14174 = vshrl.u32 %v14173, 7
  %v14175 = vsub.s32 %v13136, %v14174
  %v14176 = vrot.slane %v12951, %v14175
  %v14177 = vsel %vm13141, %v14176, %v14172
  %v14178 = vlaneseq
  %v14179 = vshrl.u32 %v14178, 7
  %v14180 = vsub.s32 %v13143, %v14179
  %v14181 = vrot.slane %v12954, %v14180
  %v14182 = vsel %vm13148, %v14181, %v14177
  %v14183 = vlaneseq
  %v14184 = vshrl.u32 %v14183, 7
  %v14185 = vsub.s32 %v13150, %v14184
  %v14186 = vrot.slane %v12957, %v14185
  %v14187 = vsel %vm13155, %v14186, %v14182
  %v14188 = vlaneseq
  %v14189 = vshrl.u32 %v14188, 7
  %v14190 = vsub.s32 %v13157, %v14189
  %v14191 = vrot.slane %v12960, %v14190
  %v14192 = vsel %vm13162, %v14191, %v14187
  %v14193 = vlaneseq
  %v14194 = vshrl.u32 %v14193, 7
  %v14195 = vsub.s32 %v13164, %v14194
  %v14196 = vrot.slane %v12963, %v14195
  %v14197 = vsel %vm13169, %v14196, %v14192
  %v14198 = vlaneseq
  %v14199 = vshrl.u32 %v14198, 7
  %v14200 = vsub.s32 %v13061, %v14199
  %v14201 = vrot.slane %v12966, %v14200
  %v14202 = vlaneseq
  %v14203 = vshrl.u32 %v14202, 7
  %v14204 = vsub.s32 %v13066, %v14203
  %v14205 = vrot.slane %v12969, %v14204
  %v14206 = vsel %vm13071, %v14205, %v14201
  %v14207 = vlaneseq
  %v14208 = vshrl.u32 %v14207, 7
  %v14209 = vsub.s32 %v13073, %v14208
  %v14210 = vrot.slane %v12972, %v14209
  %v14211 = vsel %vm13078, %v14210, %v14206
  %v14212 = vlaneseq
  %v14213 = vshrl.u32 %v14212, 7
  %v14214 = vsub.s32 %v13080, %v14213
  %v14215 = vrot.slane %v12975, %v14214
  %v14216 = vsel %vm13085, %v14215, %v14211
  %v14217 = vlaneseq
  %v14218 = vshrl.u32 %v14217, 7
  %v14219 = vsub.s32 %v13087, %v14218
  %v14220 = vrot.slane %v12978, %v14219
  %v14221 = vsel %vm13092, %v14220, %v14216
  %v14222 = vlaneseq
  %v14223 = vshrl.u32 %v14222, 7
  %v14224 = vsub.s32 %v13094, %v14223
  %v14225 = vrot.slane %v12981, %v14224
  %v14226 = vsel %vm13099, %v14225, %v14221
  %v14227 = vlaneseq
  %v14228 = vshrl.u32 %v14227, 7
  %v14229 = vsub.s32 %v13101, %v14228
  %v14230 = vrot.slane %v12984, %v14229
  %v14231 = vsel %vm13106, %v14230, %v14226
  %v14232 = vlaneseq
  %v14233 = vshrl.u32 %v14232, 7
  %v14234 = vsub.s32 %v13108, %v14233
  %v14235 = vrot.slane %v12987, %v14234
  %v14236 = vsel %vm13113, %v14235, %v14231
  %v14237 = vlaneseq
  %v14238 = vshrl.u32 %v14237, 7
  %v14239 = vsub.s32 %v13115, %v14238
  %v14240 = vrot.slane %v12990, %v14239
  %v14241 = vsel %vm13120, %v14240, %v14236
  %v14242 = vlaneseq
  %v14243 = vshrl.u32 %v14242, 7
  %v14244 = vsub.s32 %v13122, %v14243
  %v14245 = vrot.slane %v12993, %v14244
  %v14246 = vsel %vm13127, %v14245, %v14241
  %v14247 = vlaneseq
  %v14248 = vshrl.u32 %v14247, 7
  %v14249 = vsub.s32 %v13129, %v14248
  %v14250 = vrot.slane %v12996, %v14249
  %v14251 = vsel %vm13134, %v14250, %v14246
  %v14252 = vlaneseq
  %v14253 = vshrl.u32 %v14252, 7
  %v14254 = vsub.s32 %v13136, %v14253
  %v14255 = vrot.slane %v12999, %v14254
  %v14256 = vsel %vm13141, %v14255, %v14251
  %v14257 = vlaneseq
  %v14258 = vshrl.u32 %v14257, 7
  %v14259 = vsub.s32 %v13143, %v14258
  %v14260 = vrot.slane %v13002, %v14259
  %v14261 = vsel %vm13148, %v14260, %v14256
  %v14262 = vlaneseq
  %v14263 = vshrl.u32 %v14262, 7
  %v14264 = vsub.s32 %v13150, %v14263
  %v14265 = vrot.slane %v13005, %v14264
  %v14266 = vsel %vm13155, %v14265, %v14261
  %v14267 = vlaneseq
  %v14268 = vshrl.u32 %v14267, 7
  %v14269 = vsub.s32 %v13157, %v14268
  %v14270 = vrot.slane %v13008, %v14269
  %v14271 = vsel %vm13162, %v14270, %v14266
  %v14272 = vlaneseq
  %v14273 = vshrl.u32 %v14272, 7
  %v14274 = vsub.s32 %v13164, %v14273
  %v14275 = vrot.slane %v13011, %v14274
  %v14276 = vsel %vm13169, %v14275, %v14271
  %v14277 = vlaneseq
  %v14278 = vshrl.u32 %v14277, 7
  %v14279 = vsub.s32 %v13061, %v14278
  %v14280 = vrot.slane %v13014, %v14279
  %v14281 = vlaneseq
  %v14282 = vshrl.u32 %v14281, 7
  %v14283 = vsub.s32 %v13066, %v14282
  %v14284 = vrot.slane %v13017, %v14283
  %v14285 = vsel %vm13071, %v14284, %v14280
  %v14286 = vlaneseq
  %v14287 = vshrl.u32 %v14286, 7
  %v14288 = vsub.s32 %v13073, %v14287
  %v14289 = vrot.slane %v13020, %v14288
  %v14290 = vsel %vm13078, %v14289, %v14285
  %v14291 = vlaneseq
  %v14292 = vshrl.u32 %v14291, 7
  %v14293 = vsub.s32 %v13080, %v14292
  %v14294 = vrot.slane %v13023, %v14293
  %v14295 = vsel %vm13085, %v14294, %v14290
  %v14296 = vlaneseq
  %v14297 = vshrl.u32 %v14296, 7
  %v14298 = vsub.s32 %v13087, %v14297
  %v14299 = vrot.slane %v13026, %v14298
  %v14300 = vsel %vm13092, %v14299, %v14295
  %v14301 = vlaneseq
  %v14302 = vshrl.u32 %v14301, 7
  %v14303 = vsub.s32 %v13094, %v14302
  %v14304 = vrot.slane %v13029, %v14303
  %v14305 = vsel %vm13099, %v14304, %v14300
  %v14306 = vlaneseq
  %v14307 = vshrl.u32 %v14306, 7
  %v14308 = vsub.s32 %v13101, %v14307
  %v14309 = vrot.slane %v13032, %v14308
  %v14310 = vsel %vm13106, %v14309, %v14305
  %v14311 = vlaneseq
  %v14312 = vshrl.u32 %v14311, 7
  %v14313 = vsub.s32 %v13108, %v14312
  %v14314 = vrot.slane %v13035, %v14313
  %v14315 = vsel %vm13113, %v14314, %v14310
  %v14316 = vlaneseq
  %v14317 = vshrl.u32 %v14316, 7
  %v14318 = vsub.s32 %v13115, %v14317
  %v14319 = vrot.slane %v13038, %v14318
  %v14320 = vsel %vm13120, %v14319, %v14315
  %v14321 = vlaneseq
  %v14322 = vshrl.u32 %v14321, 7
  %v14323 = vsub.s32 %v13122, %v14322
  %v14324 = vrot.slane %v13041, %v14323
  %v14325 = vsel %vm13127, %v14324, %v14320
  %v14326 = vlaneseq
  %v14327 = vshrl.u32 %v14326, 7
  %v14328 = vsub.s32 %v13129, %v14327
  %v14329 = vrot.slane %v13044, %v14328
  %v14330 = vsel %vm13134, %v14329, %v14325
  %v14331 = vlaneseq
  %v14332 = vshrl.u32 %v14331, 7
  %v14333 = vsub.s32 %v13136, %v14332
  %v14334 = vrot.slane %v13047, %v14333
  %v14335 = vsel %vm13141, %v14334, %v14330
  %v14336 = vlaneseq
  %v14337 = vshrl.u32 %v14336, 7
  %v14338 = vsub.s32 %v13143, %v14337
  %v14339 = vrot.slane %v13050, %v14338
  %v14340 = vsel %vm13148, %v14339, %v14335
  %v14341 = vlaneseq
  %v14342 = vshrl.u32 %v14341, 7
  %v14343 = vsub.s32 %v13150, %v14342
  %v14344 = vrot.slane %v13053, %v14343
  %v14345 = vsel %vm13155, %v14344, %v14340
  %v14346 = vlaneseq
  %v14347 = vshrl.u32 %v14346, 7
  %v14348 = vsub.s32 %v13157, %v14347
  %v14349 = vrot.slane %v13056, %v14348
  %v14350 = vsel %vm13162, %v14349, %v14345
  %v14351 = vlaneseq
  %v14352 = vshrl.u32 %v14351, 7
  %v14353 = vsub.s32 %v13164, %v14352
  %v14354 = vrot.slane %v13059, %v14353
  %v14355 = vsel %vm13169, %v14354, %v14350
  %vm14356 = vcmask 1041409
  %v14357 = vsel %vm14356, %v13249, %v13170
  %vm14358 = vcmask 1042434
  %v14359 = vsel %vm14358, %v13328, %v14357
  %vm14360 = vcmask 1043459
  %v14361 = vsel %vm14360, %v13407, %v14359
  %vm14362 = vcmask 1044484
  %v14363 = vsel %vm14362, %v13486, %v14361
  %vm14364 = vcmask 1045509
  %v14365 = vsel %vm14364, %v13565, %v14363
  %vm14366 = vcmask 1046534
  %v14367 = vsel %vm14366, %v13644, %v14365
  %vm14368 = vcmask 1047559
  %v14369 = vsel %vm14368, %v13723, %v14367
  %v14370 = vsel %vm14356, %v13881, %v13802
  %v14371 = vsel %vm14358, %v13960, %v14370
  %v14372 = vsel %vm14360, %v14039, %v14371
  %v14373 = vsel %vm14362, %v14118, %v14372
  %v14374 = vsel %vm14364, %v14197, %v14373
  %v14375 = vsel %vm14366, %v14276, %v14374
  %v14376 = vsel %vm14368, %v14355, %v14375
  %14379 = vadd.xlane.f32.xlu0 %v14369
  %v14380 = vpop.xlane.xlu0 %14379
  %14381 = vadd.xlane.f32.xlu0 %v14376
  %v14382 = vpop.xlane.xlu0 %14381
  %v14383 = vld [vmem:[#allocation3] sm:$0x1]
  %v14385 = vlaneseq
  %v14386 = vshrl.u32 %v14385, 7
  %v14387 = vsub.s32 0, %v14386
  %v14388 = vrot.slane %v14383, %v14387
  %v14390 = vadd.f32 %v14380, %v14388
  %v14391 = vadd.f32 %v14382, %v14388
  %vm14392 = vcmask 7168
  %14393 = vst.msk [vmem:[%s5] sm:$0xff] %vm14392, %v14390
  %14394 = vst.msk [vmem:[%s5 + $0x8] sm:$0xff] %vm14392, %v14391
  // Predicated region
  $region22: #{tpu_custom_call.1} parent=0 // pred_check
    _
  $region23: #{tpu_custom_call.1} parent=0 // pred_check_branch
    %14396 = sbr.rel (0) target = $region25
  $region24: #{tpu_custom_call.1} parent=0 // pred_region
    _
  $region25: #{tpu_custom_call.1} parent=0 // pred_fallthru
    _
  // Predicated region
  $region26: #{tpu_custom_call.1} parent=0 // pred_check
    _
  $region27: #{tpu_custom_call.1} parent=0 // pred_check_branch
    %14398 = sbr.rel (0) target = $region29
  $region28: #{tpu_custom_call.1} parent=0 // pred_region
    _
  $region29: #{tpu_custom_call.1} parent=0 // pred_fallthru
    _

</llo_original>
